<compile_context>
chip_gen: v7x
topology: tpu7x:2x2x1
jax: 0.10.0
libtpu: 0.0.40
codegen_flags: <defaults>
</compile_context>

<pallas_src>
import functools

import numpy as np
import jax
import jax.numpy as jnp
from jax.experimental import pallas as pl
from jax.experimental.pallas import tpu as pltpu


MXU_DTYPE = jnp.bfloat16   # weight / matmul-operand dtype (f32 accumulation)


# ------------------------------ fused kernel ---------------------------------

def _grafei_kernel(num_layers, num_hid, hid,
                   x_ref, e_ref, u_ref, w_ref, b_ref,
                   s_row_ref, s_col_ref, s_nb_ref,
                   s_colT_ref, s_nbT_ref, s_ebT_ref, p_rev_ref,
                   inv_e2n_ref, inv_n2g_ref, inv_e2g_ref,
                   x_out_ref, e_out_ref, u_out_ref):
    """Full GraFEI forward: num_layers MetaLayers + final edge symmetrization.

    All feature tensors are `hid` (=128) lanes wide (zero padded). Weights are
    packed row-wise into w_ref (bf16, all matrices 128 columns); biases into
    b_ref (f32, one 128-wide row each). Static row offsets, so every weight
    slice is tile-aligned (multiples of 128 rows).
    """
    f32 = jnp.float32
    bf16 = MXU_DTYPE

    def dot(a, b):
        return jnp.dot(a, b, preferred_element_type=f32)   # MXU, f32 accumulate

    def elu(v):                                             # F.elu, alpha = 1
        return jnp.where(v > 0, v, jnp.exp(v) - 1.0)

    # topology, loaded once and reused by every MetaLayer (bf16 one-hots)
    s_row, s_col, s_nb = s_row_ref[...], s_col_ref[...], s_nb_ref[...]
    s_colT, s_nbT, s_ebT = s_colT_ref[...], s_nbT_ref[...], s_ebT_ref[...]
    inv_e2n = inv_e2n_ref[...]          # (N, 1) f32   1 / in-degree(col)
    inv_n2g = inv_n2g_ref[...]          # (B, 1) f32   1 / nodes-per-graph
    inv_e2g = inv_e2g_ref[...]          # (B, 1) f32   1 / edges-per-graph

    # running offsets into the packed weight / bias buffers (trace-time ints)
    w_off = 0
    b_off = 0
    bias_rows = num_hid + 2             # b_in, b_hid..., b_out per MLP block

    def mlp(pieces_bf16, k):
        """lin_in (K-merged) -> ELU -> hidden linears (+skip) -> lin_out (BN folded)."""
        nonlocal w_off, b_off
        hin = (pieces_bf16[0] if len(pieces_bf16) == 1
               else jnp.concatenate(pieces_bf16, axis=-1))          # (rows, k*hid)
        w_in = w_ref[w_off: w_off + k * hid, :]
        h = elu(dot(hin, w_in) + b_ref[b_off: b_off + 1, :])
        h_skip = h
        for l in range(num_hid):
            w = w_ref[w_off + (k + l) * hid: w_off + (k + l + 1) * hid, :]
            b = b_ref[b_off + 1 + l: b_off + 2 + l, :]
            h = elu(dot(h.astype(bf16), w) + b)
        if num_hid > 1:
            h = h + h_skip
        w_out = w_ref[w_off + (k + num_hid) * hid:
                      w_off + (k + num_hid + 1) * hid, :]
        b_out = b_ref[b_off + 1 + num_hid: b_off + 2 + num_hid, :]
        out = dot(h.astype(bf16), w_out) + b_out
        w_off += (k + num_hid + 1) * hid
        b_off += bias_rows
        return out

    x = x_ref[...]                      # (N, hid) f32 (zero padded features)
    e = e_ref[...]                      # (E, hid) f32
    u = u_ref[...]                      # (B, hid) f32

    for li in range(num_layers):
        residual = 0 < li < num_layers - 1      # intermediate MetaLayers only
        x_b = x.astype(bf16)
        e_b = e.astype(bf16)
        u_b = u.astype(bf16)

        # shared gathers (exact: one-hot bf16 x bf16 with f32 accumulation)
        u_per_node = dot(s_nb, u_b)                      # u[batch]        (N, hid)
        u_pn_b = u_per_node.astype(bf16)

        # ------------------------------ EdgeLayer -----------------------------
        x_src_b = dot(s_row, x_b).astype(bf16)           # x[row]          (E, hid)
        x_dst_b = dot(s_col, x_b).astype(bf16)           # x[col]          (E, hid)
        u_pe_b = dot(s_row, u_pn_b).astype(bf16)         # u[batch[row]]   (E, hid)
        e_new = mlp([x_src_b, x_dst_b, e_b, u_pe_b], 4)  #                 (E, hid)

        # ------------------------------ NodeLayer -----------------------------
        e_new_b = e_new.astype(bf16)
        agg = dot(s_colT, e_new_b) * inv_e2n             # scatter_mean(e'->col)
        x_new = mlp([x_b, agg.astype(bf16), u_pn_b], 3)  #                 (N, hid)

        # ----------------------------- GlobalLayer ----------------------------
        x_new_b = x_new.astype(bf16)
        node_mean = dot(s_nbT, x_new_b) * inv_n2g        # per-graph mean  (B, hid)
        edge_mean = dot(s_ebT, e_new_b) * inv_e2g        # per-graph mean  (B, hid)
        u_new = mlp([u_b, node_mean.astype(bf16), edge_mean.astype(bf16)], 3)

        if residual:                                     # fused skip connections
            x_new = x_new + x
            e_new = e_new + e
            u_new = u_new + u

        x, e, u = x_new, e_new, u_new

    # edge symmetrization 0.5*(E + E[reverse]) — reverse-edge permutation gather
    e = 0.5 * (e + dot(p_rev_ref[...], e.astype(bf16)))

    x_out_ref[...] = x
    e_out_ref[...] = e
    u_out_ref[...] = u


# --------------------------------- wrapper ------------------------------------

def grafei_forward(cfg, weights, topo, x, u, edge_attr):
    """Full GraFEIModel forward in a single fused pallas_call."""
    hid = cfg["hidden"]
    n_nodes, n_edges, n_graphs = x.shape[0], edge_attr.shape[0], u.shape[0]

    # zero-pad input features to 128 lanes (matching zero rows in lin_in)
    xp = jnp.pad(x, ((0, 0), (0, hid - x.shape[1])))
    ep = jnp.pad(edge_attr, ((0, 0), (0, hid - edge_attr.shape[1])))
    up = jnp.pad(u, ((0, 0), (0, hid - u.shape[1])))

    args = [xp, ep, up, weights["W"], weights["B"],
            topo["s_row"], topo["s_col"], topo["s_nb"],
            topo["s_colT"], topo["s_nbT"], topo["s_ebT"], topo["p_rev"],
            topo["inv_e2n"], topo["inv_n2g"], topo["inv_e2g"]]

    vmem = pl.BlockSpec(memory_space=pltpu.MemorySpace.VMEM)
    kernel = functools.partial(
        _grafei_kernel, cfg["num_layers"], cfg["num_hid"], hid)

    x_o, e_o, u_o = pl.pallas_call(
        kernel,
        out_shape=(jax.ShapeDtypeStruct((n_nodes, hid), jnp.float32),
                   jax.ShapeDtypeStruct((n_edges, hid), jnp.float32),
                   jax.ShapeDtypeStruct((n_graphs, hid), jnp.float32)),
        in_specs=[vmem] * len(args),
        out_specs=(vmem, vmem, vmem),
        compiler_params=pltpu.CompilerParams(vmem_limit_bytes=32 * 1024 * 1024),
    )(*args)

    # slice the real (unpadded) output columns outside the kernel
    return (x_o[:, :cfg["x_classes"]],
            e_o[:, :cfg["edge_classes"]],
            u_o[:, :1])


# --------------------------- parameter building -------------------------------

def _init_linear(key, in_dim, out_dim, bias=True):
    kw, kb = jax.random.split(key)
    bound = 1.0 / np.sqrt(float(in_dim))
    w = jax.random.uniform(kw, (in_dim, out_dim), jnp.float32, -bound, bound)
    if bias:
        b = jax.random.uniform(kb, (1, out_dim), jnp.float32, -bound, bound)
    else:
        b = jnp.zeros((1, out_dim), jnp.float32)
    return w, b


def _build_block(key, in_dims, hid, out_dim, num_hid, normalize):
    """One EdgeLayer/NodeLayer/GlobalLayer MLP, packed row-wise & 128-padded.

    lin_in is initialized over the full concat dim (PyTorch fan-in semantics),
    split by real piece dims and each piece zero-padded to `hid` rows so the
    kernel can feed 128-padded activations. lin_out is zero-padded to `hid`
    columns. Eval-mode BatchNorm1d (default running stats) folded into lin_out.
    TODO(synk): fold actual trained running stats / affine params for a trained
    model; folding here assumes mean=0, var=1, gamma=1, beta=0.
    """
    keys = jax.random.split(key, num_hid + 2)
    in_total = int(sum(in_dims))
    w_in, b_in = _init_linear(keys[0], in_total, hid)

    split_pts = np.cumsum(np.asarray(in_dims[:-1])).tolist()
    pieces = jnp.split(w_in, split_pts, axis=0)
    w_rows = []
    for p, d in zip(pieces, in_dims):
        if d < hid:
            p = jnp.concatenate([p, jnp.zeros((hid - d, hid), jnp.float32)], 0)
        w_rows.append(p)
    b_rows = [b_in]

    for l in range(num_hid):
        w, b = _init_linear(keys[1 + l], hid, hid)
        w_rows.append(w)
        b_rows.append(b)

    w_out, b_out = _init_linear(keys[-1], hid, out_dim, bias=not normalize)
    if normalize:
        eps = 1e-5                                   # BatchNorm1d eval fold
        scale = 1.0 / np.sqrt(1.0 + eps)
        w_out = w_out * scale
        b_out = b_out * scale
    if out_dim < hid:                                # lane-dense padded output
        w_out = jnp.concatenate(
            [w_out, jnp.zeros((hid, hid - out_dim), jnp.float32)], 1)
        b_out = jnp.concatenate(
            [b_out, jnp.zeros((1, hid - out_dim), jnp.float32)], 1)
    w_rows.append(w_out)
    b_rows.append(b_out)

    return jnp.concatenate(w_rows, 0), jnp.concatenate(b_rows, 0)


def init_grafei(key, nfeat, efeat, gfeat, edge_classes=6, x_classes=7,
                hidden=128, num_hid=1, num_ML=1):
    H = hidden
    # (real concat in_dims, out_dim, normalize) — concat orders:
    #   edge:   [x[row], x[col], e, u[batch[row]]]
    #   node:   [x, scatter_mean(e'->col), u[batch]]
    #   global: [u, mean(x'), mean(e')]
    blocks = [((nfeat, nfeat, efeat, gfeat), H, True),
              ((nfeat, H, gfeat),            H, True),
              ((gfeat, H, H),                H, True)]
    for _ in range(num_ML):
        blocks += [((H, H, H, H), H, True),
                   ((H, H, H),    H, True),
                   ((H, H, H),    H, True)]
    blocks += [((H, H, H, H),                 edge_classes, False),
               ((H, edge_classes, H),         x_classes,    False),
               ((H, x_classes, edge_classes), 1,            False)]

    keys = jax.random.split(key, len(blocks))
    Ws, Bs = [], []
    for k_, (in_dims, out_dim, normalize) in zip(keys, blocks):
        w, b = _build_block(k_, in_dims, H, out_dim, num_hid, normalize)
        Ws.append(w)
        Bs.append(b)

    weights = {"W": jnp.concatenate(Ws, 0).astype(MXU_DTYPE),   # (R, 128) bf16
               "B": jnp.concatenate(Bs, 0)}                     # (nb, 128) f32
    cfg = {"num_layers": 2 + num_ML, "num_hid": num_hid, "hidden": H,
           "edge_classes": edge_classes, "x_classes": x_classes}
    return weights, cfg


# --------------------------- static topology ----------------------------------

def build_topology(edge_index, batch, n_nodes, n_graphs):
    """Precompute (once per static topology) the bf16 one-hot gather matrices
    and f32 inverse-count scale vectors used by the fused kernel."""
    ei = np.asarray(edge_index)
    row, col = ei[0], ei[1]
    bt = np.asarray(batch)
    n_edges = int(row.shape[0])
    ar_e = np.arange(n_edges)
    ar_n = np.arange(n_nodes)

    s_row = np.zeros((n_edges, n_nodes), np.float32); s_row[ar_e, row] = 1.0
    s_col = np.zeros((n_edges, n_nodes), np.float32); s_col[ar_e, col] = 1.0
    s_nb = np.zeros((n_nodes, n_graphs), np.float32); s_nb[ar_n, bt] = 1.0
    s_eb = np.zeros((n_edges, n_graphs), np.float32); s_eb[ar_e, bt[row]] = 1.0

    # inverse counts (kept f32 so scatter_mean / per-graph means stay exact)
    inv_e2n = 1.0 / np.maximum(s_col.sum(0), 1.0)[:, None]     # (N, 1)
    inv_n2g = 1.0 / np.maximum(s_nb.sum(0), 1.0)[:, None]      # (B, 1)
    inv_e2g = 1.0 / np.maximum(s_eb.sum(0), 1.0)[:, None]      # (B, 1)

    # Reverse-edge permutation for 0.5*(E + E[rev]). Matches the torch.sparse
    # coalesce path for graFEI's fully-connected, duplicate-free, bidirectional,
    # row-major-sorted edge_index.
    # TODO(synk): torch.sparse coalesce for arbitrary (unsorted / duplicated /
    # non-bidirectional) edge_index has no clean static-matrix equivalent.
    pair_to_idx = {(int(r), int(c)): i for i, (r, c) in enumerate(zip(row, col))}
    p_rev = np.zeros((n_edges, n_edges), np.float32)
    for i, (r, c) in enumerate(zip(row, col)):
        p_rev[i, pair_to_idx.get((int(c), int(r)), i)] = 1.0

    bf = lambda a: jnp.asarray(a, MXU_DTYPE)      # 0/1 entries: exact in bf16
    return {"s_row": bf(s_row), "s_col": bf(s_col), "s_nb": bf(s_nb),
            "s_colT": bf(s_col.T), "s_nbT": bf(s_nb.T), "s_ebT": bf(s_eb.T),
            "p_rev": bf(p_rev),
            "inv_e2n": jnp.asarray(inv_e2n, jnp.float32),
            "inv_n2g": jnp.asarray(inv_n2g, jnp.float32),
            "inv_e2g": jnp.asarray(inv_e2g, jnp.float32)}


# ----------------------------------- main --------------------------------------

if __name__ == "__main__":
    key = jax.random.PRNGKey(0)
    nfeat, efeat, gfeat = 5, 3, 2
    hidden = 128                       # module default; lane-dense on the MXU
    edge_classes, x_classes = 6, 7
    num_hid_layers, num_ML = 1, 1
    B, nodes_per_graph = 2, 4

    # Batched fully-connected graphs (no self-loops), edges sorted row-major.
    edges, batch_list = [], []
    offset = 0
    for g in range(B):
        batch_list += [g] * nodes_per_graph
        for i in range(nodes_per_graph):
            for j in range(nodes_per_graph):
                if i != j:
                    edges.append((offset + i, offset + j))
        offset += nodes_per_graph
    edge_index = np.array(edges, dtype=np.int32).T          # (2, N_edges)
    batch = np.array(batch_list, dtype=np.int32)            # (N_nodes,)
    n_nodes = B * nodes_per_graph
    n_edges = edge_index.shape[1]

    topo = build_topology(edge_index, batch, n_nodes, B)

    kx, ke, ku, kp = jax.random.split(key, 4)
    x = jax.random.normal(kx, (n_nodes, nfeat), jnp.float32)
    edge_attr = jax.random.normal(ke, (n_edges, efeat), jnp.float32)
    u = jax.random.normal(ku, (B, gfeat), jnp.float32)

    weights, cfg = init_grafei(kp, nfeat, efeat, gfeat,
                               edge_classes=edge_classes, x_classes=x_classes,
                               hidden=hidden, num_hid=num_hid_layers,
                               num_ML=num_ML)

    fwd = jax.jit(functools.partial(grafei_forward, cfg))
    x_out, e_out, u_out = fwd(weights, topo, x, u, edge_attr)
    jax.block_until_ready((x_out, e_out, u_out))

    assert x_out.shape == (n_nodes, x_classes)
    assert e_out.shape == (n_edges, edge_classes)
    assert u_out.shape == (B, 1)
    print("KERNEL_OK")
</pallas_src>

<mosaic_0001>
module attributes {stable_mosaic.version = 11 : i64} {
  func.func @_grafei_kernel(%arg0: memref<8x128xf32, #tpu.memory_space<vmem>>, %arg1: memref<24x128xf32, #tpu.memory_space<vmem>>, %arg2: memref<2x128xf32, #tpu.memory_space<vmem>>, %arg3: memref<6144x128xbf16, #tpu.memory_space<vmem>>, %arg4: memref<27x128xf32, #tpu.memory_space<vmem>>, %arg5: memref<24x8xbf16, #tpu.memory_space<vmem>>, %arg6: memref<24x8xbf16, #tpu.memory_space<vmem>>, %arg7: memref<8x2xbf16, #tpu.memory_space<vmem>>, %arg8: memref<8x24xbf16, #tpu.memory_space<vmem>>, %arg9: memref<2x8xbf16, #tpu.memory_space<vmem>>, %arg10: memref<2x24xbf16, #tpu.memory_space<vmem>>, %arg11: memref<24x24xbf16, #tpu.memory_space<vmem>>, %arg12: memref<8x1xf32, #tpu.memory_space<vmem>>, %arg13: memref<2x1xf32, #tpu.memory_space<vmem>>, %arg14: memref<2x1xf32, #tpu.memory_space<vmem>>, %arg15: memref<8x128xf32, #tpu.memory_space<vmem>>, %arg16: memref<24x128xf32, #tpu.memory_space<vmem>>, %arg17: memref<2x128xf32, #tpu.memory_space<vmem>>) attributes {dimension_semantics = [], scalar_prefetch = 0 : i64, scratch_operands = 0 : i64, tpu.core_type = #tpu.core_type<tc>} {
    %c0 = arith.constant 0 : index
    %c0_0 = arith.constant 0 : index
    %0 = vector.load %arg5[%c0, %c0_0] : memref<24x8xbf16, #tpu.memory_space<vmem>>, vector<24x8xbf16>
    %c0_1 = arith.constant 0 : index
    %c0_2 = arith.constant 0 : index
    %1 = vector.load %arg6[%c0_1, %c0_2] : memref<24x8xbf16, #tpu.memory_space<vmem>>, vector<24x8xbf16>
    %c0_3 = arith.constant 0 : index
    %c0_4 = arith.constant 0 : index
    %2 = vector.load %arg7[%c0_3, %c0_4] : memref<8x2xbf16, #tpu.memory_space<vmem>>, vector<8x2xbf16>
    %c0_5 = arith.constant 0 : index
    %c0_6 = arith.constant 0 : index
    %3 = vector.load %arg8[%c0_5, %c0_6] : memref<8x24xbf16, #tpu.memory_space<vmem>>, vector<8x24xbf16>
    %c0_7 = arith.constant 0 : index
    %c0_8 = arith.constant 0 : index
    %4 = vector.load %arg9[%c0_7, %c0_8] : memref<2x8xbf16, #tpu.memory_space<vmem>>, vector<2x8xbf16>
    %c0_9 = arith.constant 0 : index
    %c0_10 = arith.constant 0 : index
    %5 = vector.load %arg10[%c0_9, %c0_10] : memref<2x24xbf16, #tpu.memory_space<vmem>>, vector<2x24xbf16>
    %c0_11 = arith.constant 0 : index
    %c0_12 = arith.constant 0 : index
    %6 = vector.load %arg12[%c0_11, %c0_12] : memref<8x1xf32, #tpu.memory_space<vmem>>, vector<8x1xf32>
    %c0_13 = arith.constant 0 : index
    %c0_14 = arith.constant 0 : index
    %7 = vector.load %arg13[%c0_13, %c0_14] : memref<2x1xf32, #tpu.memory_space<vmem>>, vector<2x1xf32>
    %c0_15 = arith.constant 0 : index
    %c0_16 = arith.constant 0 : index
    %8 = vector.load %arg14[%c0_15, %c0_16] : memref<2x1xf32, #tpu.memory_space<vmem>>, vector<2x1xf32>
    %c0_17 = arith.constant 0 : index
    %c0_18 = arith.constant 0 : index
    %9 = vector.load %arg0[%c0_17, %c0_18] : memref<8x128xf32, #tpu.memory_space<vmem>>, vector<8x128xf32>
    %c0_19 = arith.constant 0 : index
    %c0_20 = arith.constant 0 : index
    %10 = vector.load %arg1[%c0_19, %c0_20] : memref<24x128xf32, #tpu.memory_space<vmem>>, vector<24x128xf32>
    %c0_21 = arith.constant 0 : index
    %c0_22 = arith.constant 0 : index
    %11 = vector.load %arg2[%c0_21, %c0_22] : memref<2x128xf32, #tpu.memory_space<vmem>>, vector<2x128xf32>
    %12 = arith.truncf %9 : vector<8x128xf32> to vector<8x128xbf16>
    %13 = arith.truncf %10 : vector<24x128xf32> to vector<24x128xbf16>
    %14 = arith.truncf %11 : vector<2x128xf32> to vector<2x128xbf16>
    %cst = arith.constant dense<0.000000e+00> : vector<8x128xf32>
    %15 = tpu.matmul %2, %14, %cst {dimension_numbers = #tpu.dot_dimension_numbers<[1], [0], [0], [1], [0, 0, 1, 1], [], []>} : vector<8x2xbf16>, vector<2x128xbf16>, vector<8x128xf32> -> vector<8x128xf32>
    %16 = arith.truncf %15 : vector<8x128xf32> to vector<8x128xbf16>
    %cst_23 = arith.constant dense<0.000000e+00> : vector<24x128xf32>
    %17 = tpu.matmul %0, %12, %cst_23 {dimension_numbers = #tpu.dot_dimension_numbers<[1], [0], [0], [1], [0, 0, 1, 1], [], []>} : vector<24x8xbf16>, vector<8x128xbf16>, vector<24x128xf32> -> vector<24x128xf32>
    %18 = arith.truncf %17 : vector<24x128xf32> to vector<24x128xbf16>
    %cst_24 = arith.constant dense<0.000000e+00> : vector<24x128xf32>
    %19 = tpu.matmul %1, %12, %cst_24 {dimension_numbers = #tpu.dot_dimension_numbers<[1], [0], [0], [1], [0, 0, 1, 1], [], []>} : vector<24x8xbf16>, vector<8x128xbf16>, vector<24x128xf32> -> vector<24x128xf32>
    %20 = arith.truncf %19 : vector<24x128xf32> to vector<24x128xbf16>
    %cst_25 = arith.constant dense<0.000000e+00> : vector<24x128xf32>
    %21 = tpu.matmul %0, %16, %cst_25 {dimension_numbers = #tpu.dot_dimension_numbers<[1], [0], [0], [1], [0, 0, 1, 1], [], []>} : vector<24x8xbf16>, vector<8x128xbf16>, vector<24x128xf32> -> vector<24x128xf32>
    %22 = arith.truncf %21 : vector<24x128xf32> to vector<24x128xbf16>
    %23 = tpu.concatenate %18, %20, %13, %22 in 1 : vector<24x128xbf16>, vector<24x128xbf16>, vector<24x128xbf16>, vector<24x128xbf16> -> vector<24x512xbf16>
    %c0_26 = arith.constant 0 : index
    %c0_27 = arith.constant 0 : index
    %24 = vector.load %arg3[%c0_26, %c0_27] : memref<6144x128xbf16, #tpu.memory_space<vmem>>, vector<512x128xbf16>
    %cst_28 = arith.constant dense<0.000000e+00> : vector<24x128xf32>
    %25 = tpu.matmul %23, %24, %cst_28 {dimension_numbers = #tpu.dot_dimension_numbers<[1], [0], [0], [1], [0, 0, 1, 1], [], []>} : vector<24x512xbf16>, vector<512x128xbf16>, vector<24x128xf32> -> vector<24x128xf32>
    %c0_29 = arith.constant 0 : index
    %c0_30 = arith.constant 0 : index
    %26 = vector.load %arg4[%c0_29, %c0_30] : memref<27x128xf32, #tpu.memory_space<vmem>>, vector<1x128xf32>
    %27 = vector.broadcast %26 : vector<1x128xf32> to vector<24x128xf32>
    %28 = arith.addf %25, %27 : vector<24x128xf32>
    %cst_31 = arith.constant 0.000000e+00 : f32
    %29 = vector.broadcast %cst_31 : f32 to vector<24x128xf32>
    %30 = arith.cmpf ogt, %28, %29 : vector<24x128xf32>
    %31 = math.exp %28 : vector<24x128xf32>
    %cst_32 = arith.constant 1.000000e+00 : f32
    %32 = vector.broadcast %cst_32 : f32 to vector<24x128xf32>
    %33 = arith.subf %31, %32 : vector<24x128xf32>
    %34 = arith.select %30, %28, %33 : vector<24x128xi1>, vector<24x128xf32>
    %c512 = arith.constant 512 : index
    %c0_33 = arith.constant 0 : index
    %35 = vector.load %arg3[%c512, %c0_33] : memref<6144x128xbf16, #tpu.memory_space<vmem>>, vector<128x128xbf16>
    %c1 = arith.constant 1 : index
    %c0_34 = arith.constant 0 : index
    %36 = vector.load %arg4[%c1, %c0_34] : memref<27x128xf32, #tpu.memory_space<vmem>>, vector<1x128xf32>
    %37 = arith.truncf %34 : vector<24x128xf32> to vector<24x128xbf16>
    %cst_35 = arith.constant dense<0.000000e+00> : vector<24x128xf32>
    %38 = tpu.matmul %37, %35, %cst_35 {dimension_numbers = #tpu.dot_dimension_numbers<[1], [0], [0], [1], [0, 0, 1, 1], [], []>} : vector<24x128xbf16>, vector<128x128xbf16>, vector<24x128xf32> -> vector<24x128xf32>
    %39 = vector.broadcast %36 : vector<1x128xf32> to vector<24x128xf32>
    %40 = arith.addf %38, %39 : vector<24x128xf32>
    %cst_36 = arith.constant 0.000000e+00 : f32
    %41 = vector.broadcast %cst_36 : f32 to vector<24x128xf32>
    %42 = arith.cmpf ogt, %40, %41 : vector<24x128xf32>
    %43 = math.exp %40 : vector<24x128xf32>
    %cst_37 = arith.constant 1.000000e+00 : f32
    %44 = vector.broadcast %cst_37 : f32 to vector<24x128xf32>
    %45 = arith.subf %43, %44 : vector<24x128xf32>
    %46 = arith.select %42, %40, %45 : vector<24x128xi1>, vector<24x128xf32>
    %c640 = arith.constant 640 : index
    %c0_38 = arith.constant 0 : index
    %47 = vector.load %arg3[%c640, %c0_38] : memref<6144x128xbf16, #tpu.memory_space<vmem>>, vector<128x128xbf16>
    %c2 = arith.constant 2 : index
    %c0_39 = arith.constant 0 : index
    %48 = vector.load %arg4[%c2, %c0_39] : memref<27x128xf32, #tpu.memory_space<vmem>>, vector<1x128xf32>
    %49 = arith.truncf %46 : vector<24x128xf32> to vector<24x128xbf16>
    %cst_40 = arith.constant dense<0.000000e+00> : vector<24x128xf32>
    %50 = tpu.matmul %49, %47, %cst_40 {dimension_numbers = #tpu.dot_dimension_numbers<[1], [0], [0], [1], [0, 0, 1, 1], [], []>} : vector<24x128xbf16>, vector<128x128xbf16>, vector<24x128xf32> -> vector<24x128xf32>
    %51 = vector.broadcast %48 : vector<1x128xf32> to vector<24x128xf32>
    %52 = arith.addf %50, %51 : vector<24x128xf32>
    %53 = arith.truncf %52 : vector<24x128xf32> to vector<24x128xbf16>
    %cst_41 = arith.constant dense<0.000000e+00> : vector<8x128xf32>
    %54 = tpu.matmul %3, %53, %cst_41 {dimension_numbers = #tpu.dot_dimension_numbers<[1], [0], [0], [1], [0, 0, 1, 1], [], []>} : vector<8x24xbf16>, vector<24x128xbf16>, vector<8x128xf32> -> vector<8x128xf32>
    %55 = vector.broadcast %6 : vector<8x1xf32> to vector<8x128xf32>
    %56 = arith.mulf %54, %55 : vector<8x128xf32>
    %57 = arith.truncf %56 : vector<8x128xf32> to vector<8x128xbf16>
    %58 = tpu.concatenate %12, %57, %16 in 1 : vector<8x128xbf16>, vector<8x128xbf16>, vector<8x128xbf16> -> vector<8x384xbf16>
    %c768 = arith.constant 768 : index
    %c0_42 = arith.constant 0 : index
    %59 = vector.load %arg3[%c768, %c0_42] : memref<6144x128xbf16, #tpu.memory_space<vmem>>, vector<384x128xbf16>
    %cst_43 = arith.constant dense<0.000000e+00> : vector<8x128xf32>
    %60 = tpu.matmul %58, %59, %cst_43 {dimension_numbers = #tpu.dot_dimension_numbers<[1], [0], [0], [1], [0, 0, 1, 1], [], []>} : vector<8x384xbf16>, vector<384x128xbf16>, vector<8x128xf32> -> vector<8x128xf32>
    %c3 = arith.constant 3 : index
    %c0_44 = arith.constant 0 : index
    %61 = vector.load %arg4[%c3, %c0_44] : memref<27x128xf32, #tpu.memory_space<vmem>>, vector<1x128xf32>
    %62 = vector.broadcast %61 : vector<1x128xf32> to vector<8x128xf32>
    %63 = arith.addf %60, %62 : vector<8x128xf32>
    %cst_45 = arith.constant 0.000000e+00 : f32
    %64 = vector.broadcast %cst_45 : f32 to vector<8x128xf32>
    %65 = arith.cmpf ogt, %63, %64 : vector<8x128xf32>
    %66 = math.exp %63 : vector<8x128xf32>
    %cst_46 = arith.constant 1.000000e+00 : f32
    %67 = vector.broadcast %cst_46 : f32 to vector<8x128xf32>
    %68 = arith.subf %66, %67 : vector<8x128xf32>
    %69 = arith.select %65, %63, %68 : vector<8x128xi1>, vector<8x128xf32>
    %c1152 = arith.constant 1152 : index
    %c0_47 = arith.constant 0 : index
    %70 = vector.load %arg3[%c1152, %c0_47] : memref<6144x128xbf16, #tpu.memory_space<vmem>>, vector<128x128xbf16>
    %c4 = arith.constant 4 : index
    %c0_48 = arith.constant 0 : index
    %71 = vector.load %arg4[%c4, %c0_48] : memref<27x128xf32, #tpu.memory_space<vmem>>, vector<1x128xf32>
    %72 = arith.truncf %69 : vector<8x128xf32> to vector<8x128xbf16>
    %cst_49 = arith.constant dense<0.000000e+00> : vector<8x128xf32>
    %73 = tpu.matmul %72, %70, %cst_49 {dimension_numbers = #tpu.dot_dimension_numbers<[1], [0], [0], [1], [0, 0, 1, 1], [], []>} : vector<8x128xbf16>, vector<128x128xbf16>, vector<8x128xf32> -> vector<8x128xf32>
    %74 = vector.broadcast %71 : vector<1x128xf32> to vector<8x128xf32>
    %75 = arith.addf %73, %74 : vector<8x128xf32>
    %cst_50 = arith.constant 0.000000e+00 : f32
    %76 = vector.broadcast %cst_50 : f32 to vector<8x128xf32>
    %77 = arith.cmpf ogt, %75, %76 : vector<8x128xf32>
    %78 = math.exp %75 : vector<8x128xf32>
    %cst_51 = arith.constant 1.000000e+00 : f32
    %79 = vector.broadcast %cst_51 : f32 to vector<8x128xf32>
    %80 = arith.subf %78, %79 : vector<8x128xf32>
    %81 = arith.select %77, %75, %80 : vector<8x128xi1>, vector<8x128xf32>
    %c1280 = arith.constant 1280 : index
    %c0_52 = arith.constant 0 : index
    %82 = vector.load %arg3[%c1280, %c0_52] : memref<6144x128xbf16, #tpu.memory_space<vmem>>, vector<128x128xbf16>
    %c5 = arith.constant 5 : index
    %c0_53 = arith.constant 0 : index
    %83 = vector.load %arg4[%c5, %c0_53] : memref<27x128xf32, #tpu.memory_space<vmem>>, vector<1x128xf32>
    %84 = arith.truncf %81 : vector<8x128xf32> to vector<8x128xbf16>
    %cst_54 = arith.constant dense<0.000000e+00> : vector<8x128xf32>
    %85 = tpu.matmul %84, %82, %cst_54 {dimension_numbers = #tpu.dot_dimension_numbers<[1], [0], [0], [1], [0, 0, 1, 1], [], []>} : vector<8x128xbf16>, vector<128x128xbf16>, vector<8x128xf32> -> vector<8x128xf32>
    %86 = vector.broadcast %83 : vector<1x128xf32> to vector<8x128xf32>
    %87 = arith.addf %85, %86 : vector<8x128xf32>
    %88 = arith.truncf %87 : vector<8x128xf32> to vector<8x128xbf16>
    %cst_55 = arith.constant dense<0.000000e+00> : vector<2x128xf32>
    %89 = tpu.matmul %4, %88, %cst_55 {dimension_numbers = #tpu.dot_dimension_numbers<[1], [0], [0], [1], [0, 0, 1, 1], [], []>} : vector<2x8xbf16>, vector<8x128xbf16>, vector<2x128xf32> -> vector<2x128xf32>
    %90 = vector.broadcast %7 : vector<2x1xf32> to vector<2x128xf32>
    %91 = arith.mulf %89, %90 : vector<2x128xf32>
    %cst_56 = arith.constant dense<0.000000e+00> : vector<2x128xf32>
    %92 = tpu.matmul %5, %53, %cst_56 {dimension_numbers = #tpu.dot_dimension_numbers<[1], [0], [0], [1], [0, 0, 1, 1], [], []>} : vector<2x24xbf16>, vector<24x128xbf16>, vector<2x128xf32> -> vector<2x128xf32>
    %93 = vector.broadcast %8 : vector<2x1xf32> to vector<2x128xf32>
    %94 = arith.mulf %92, %93 : vector<2x128xf32>
    %95 = arith.truncf %91 : vector<2x128xf32> to vector<2x128xbf16>
    %96 = arith.truncf %94 : vector<2x128xf32> to vector<2x128xbf16>
    %97 = tpu.concatenate %14, %95, %96 in 1 : vector<2x128xbf16>, vector<2x128xbf16>, vector<2x128xbf16> -> vector<2x384xbf16>
    %c1408 = arith.constant 1408 : index
    %c0_57 = arith.constant 0 : index
    %98 = vector.load %arg3[%c1408, %c0_57] : memref<6144x128xbf16, #tpu.memory_space<vmem>>, vector<384x128xbf16>
    %cst_58 = arith.constant dense<0.000000e+00> : vector<2x128xf32>
    %99 = tpu.matmul %97, %98, %cst_58 {dimension_numbers = #tpu.dot_dimension_numbers<[1], [0], [0], [1], [0, 0, 1, 1], [], []>} : vector<2x384xbf16>, vector<384x128xbf16>, vector<2x128xf32> -> vector<2x128xf32>
    %c6 = arith.constant 6 : index
    %c0_59 = arith.constant 0 : index
    %100 = vector.load %arg4[%c6, %c0_59] : memref<27x128xf32, #tpu.memory_space<vmem>>, vector<1x128xf32>
    %101 = vector.broadcast %100 : vector<1x128xf32> to vector<2x128xf32>
    %102 = arith.addf %99, %101 : vector<2x128xf32>
    %cst_60 = arith.constant 0.000000e+00 : f32
    %103 = vector.broadcast %cst_60 : f32 to vector<2x128xf32>
    %104 = arith.cmpf ogt, %102, %103 : vector<2x128xf32>
    %105 = math.exp %102 : vector<2x128xf32>
    %cst_61 = arith.constant 1.000000e+00 : f32
    %106 = vector.broadcast %cst_61 : f32 to vector<2x128xf32>
    %107 = arith.subf %105, %106 : vector<2x128xf32>
    %108 = arith.select %104, %102, %107 : vector<2x128xi1>, vector<2x128xf32>
    %c1792 = arith.constant 1792 : index
    %c0_62 = arith.constant 0 : index
    %109 = vector.load %arg3[%c1792, %c0_62] : memref<6144x128xbf16, #tpu.memory_space<vmem>>, vector<128x128xbf16>
    %c7 = arith.constant 7 : index
    %c0_63 = arith.constant 0 : index
    %110 = vector.load %arg4[%c7, %c0_63] : memref<27x128xf32, #tpu.memory_space<vmem>>, vector<1x128xf32>
    %111 = arith.truncf %108 : vector<2x128xf32> to vector<2x128xbf16>
    %cst_64 = arith.constant dense<0.000000e+00> : vector<2x128xf32>
    %112 = tpu.matmul %111, %109, %cst_64 {dimension_numbers = #tpu.dot_dimension_numbers<[1], [0], [0], [1], [0, 0, 1, 1], [], []>} : vector<2x128xbf16>, vector<128x128xbf16>, vector<2x128xf32> -> vector<2x128xf32>
    %113 = vector.broadcast %110 : vector<1x128xf32> to vector<2x128xf32>
    %114 = arith.addf %112, %113 : vector<2x128xf32>
    %cst_65 = arith.constant 0.000000e+00 : f32
    %115 = vector.broadcast %cst_65 : f32 to vector<2x128xf32>
    %116 = arith.cmpf ogt, %114, %115 : vector<2x128xf32>
    %117 = math.exp %114 : vector<2x128xf32>
    %cst_66 = arith.constant 1.000000e+00 : f32
    %118 = vector.broadcast %cst_66 : f32 to vector<2x128xf32>
    %119 = arith.subf %117, %118 : vector<2x128xf32>
    %120 = arith.select %116, %114, %119 : vector<2x128xi1>, vector<2x128xf32>
    %c1920 = arith.constant 1920 : index
    %c0_67 = arith.constant 0 : index
    %121 = vector.load %arg3[%c1920, %c0_67] : memref<6144x128xbf16, #tpu.memory_space<vmem>>, vector<128x128xbf16>
    %c8 = arith.constant 8 : index
    %c0_68 = arith.constant 0 : index
    %122 = vector.load %arg4[%c8, %c0_68] : memref<27x128xf32, #tpu.memory_space<vmem>>, vector<1x128xf32>
    %123 = arith.truncf %120 : vector<2x128xf32> to vector<2x128xbf16>
    %cst_69 = arith.constant dense<0.000000e+00> : vector<2x128xf32>
    %124 = tpu.matmul %123, %121, %cst_69 {dimension_numbers = #tpu.dot_dimension_numbers<[1], [0], [0], [1], [0, 0, 1, 1], [], []>} : vector<2x128xbf16>, vector<128x128xbf16>, vector<2x128xf32> -> vector<2x128xf32>
    %125 = vector.broadcast %122 : vector<1x128xf32> to vector<2x128xf32>
    %126 = arith.addf %124, %125 : vector<2x128xf32>
    %127 = arith.truncf %87 : vector<8x128xf32> to vector<8x128xbf16>
    %128 = arith.truncf %52 : vector<24x128xf32> to vector<24x128xbf16>
    %129 = arith.truncf %126 : vector<2x128xf32> to vector<2x128xbf16>
    %cst_70 = arith.constant dense<0.000000e+00> : vector<8x128xf32>
    %130 = tpu.matmul %2, %129, %cst_70 {dimension_numbers = #tpu.dot_dimension_numbers<[1], [0], [0], [1], [0, 0, 1, 1], [], []>} : vector<8x2xbf16>, vector<2x128xbf16>, vector<8x128xf32> -> vector<8x128xf32>
    %131 = arith.truncf %130 : vector<8x128xf32> to vector<8x128xbf16>
    %cst_71 = arith.constant dense<0.000000e+00> : vector<24x128xf32>
    %132 = tpu.matmul %0, %127, %cst_71 {dimension_numbers = #tpu.dot_dimension_numbers<[1], [0], [0], [1], [0, 0, 1, 1], [], []>} : vector<24x8xbf16>, vector<8x128xbf16>, vector<24x128xf32> -> vector<24x128xf32>
    %133 = arith.truncf %132 : vector<24x128xf32> to vector<24x128xbf16>
    %cst_72 = arith.constant dense<0.000000e+00> : vector<24x128xf32>
    %134 = tpu.matmul %1, %127, %cst_72 {dimension_numbers = #tpu.dot_dimension_numbers<[1], [0], [0], [1], [0, 0, 1, 1], [], []>} : vector<24x8xbf16>, vector<8x128xbf16>, vector<24x128xf32> -> vector<24x128xf32>
    %135 = arith.truncf %134 : vector<24x128xf32> to vector<24x128xbf16>
    %cst_73 = arith.constant dense<0.000000e+00> : vector<24x128xf32>
    %136 = tpu.matmul %0, %131, %cst_73 {dimension_numbers = #tpu.dot_dimension_numbers<[1], [0], [0], [1], [0, 0, 1, 1], [], []>} : vector<24x8xbf16>, vector<8x128xbf16>, vector<24x128xf32> -> vector<24x128xf32>
    %137 = arith.truncf %136 : vector<24x128xf32> to vector<24x128xbf16>
    %138 = tpu.concatenate %133, %135, %128, %137 in 1 : vector<24x128xbf16>, vector<24x128xbf16>, vector<24x128xbf16>, vector<24x128xbf16> -> vector<24x512xbf16>
    %c2048 = arith.constant 2048 : index
    %c0_74 = arith.constant 0 : index
    %139 = vector.load %arg3[%c2048, %c0_74] : memref<6144x128xbf16, #tpu.memory_space<vmem>>, vector<512x128xbf16>
    %cst_75 = arith.constant dense<0.000000e+00> : vector<24x128xf32>
    %140 = tpu.matmul %138, %139, %cst_75 {dimension_numbers = #tpu.dot_dimension_numbers<[1], [0], [0], [1], [0, 0, 1, 1], [], []>} : vector<24x512xbf16>, vector<512x128xbf16>, vector<24x128xf32> -> vector<24x128xf32>
    %c9 = arith.constant 9 : index
    %c0_76 = arith.constant 0 : index
    %141 = vector.load %arg4[%c9, %c0_76] : memref<27x128xf32, #tpu.memory_space<vmem>>, vector<1x128xf32>
    %142 = vector.broadcast %141 : vector<1x128xf32> to vector<24x128xf32>
    %143 = arith.addf %140, %142 : vector<24x128xf32>
    %cst_77 = arith.constant 0.000000e+00 : f32
    %144 = vector.broadcast %cst_77 : f32 to vector<24x128xf32>
    %145 = arith.cmpf ogt, %143, %144 : vector<24x128xf32>
    %146 = math.exp %143 : vector<24x128xf32>
    %cst_78 = arith.constant 1.000000e+00 : f32
    %147 = vector.broadcast %cst_78 : f32 to vector<24x128xf32>
    %148 = arith.subf %146, %147 : vector<24x128xf32>
    %149 = arith.select %145, %143, %148 : vector<24x128xi1>, vector<24x128xf32>
    %c2560 = arith.constant 2560 : index
    %c0_79 = arith.constant 0 : index
    %150 = vector.load %arg3[%c2560, %c0_79] : memref<6144x128xbf16, #tpu.memory_space<vmem>>, vector<128x128xbf16>
    %c10 = arith.constant 10 : index
    %c0_80 = arith.constant 0 : index
    %151 = vector.load %arg4[%c10, %c0_80] : memref<27x128xf32, #tpu.memory_space<vmem>>, vector<1x128xf32>
    %152 = arith.truncf %149 : vector<24x128xf32> to vector<24x128xbf16>
    %cst_81 = arith.constant dense<0.000000e+00> : vector<24x128xf32>
    %153 = tpu.matmul %152, %150, %cst_81 {dimension_numbers = #tpu.dot_dimension_numbers<[1], [0], [0], [1], [0, 0, 1, 1], [], []>} : vector<24x128xbf16>, vector<128x128xbf16>, vector<24x128xf32> -> vector<24x128xf32>
    %154 = vector.broadcast %151 : vector<1x128xf32> to vector<24x128xf32>
    %155 = arith.addf %153, %154 : vector<24x128xf32>
    %cst_82 = arith.constant 0.000000e+00 : f32
    %156 = vector.broadcast %cst_82 : f32 to vector<24x128xf32>
    %157 = arith.cmpf ogt, %155, %156 : vector<24x128xf32>
    %158 = math.exp %155 : vector<24x128xf32>
    %cst_83 = arith.constant 1.000000e+00 : f32
    %159 = vector.broadcast %cst_83 : f32 to vector<24x128xf32>
    %160 = arith.subf %158, %159 : vector<24x128xf32>
    %161 = arith.select %157, %155, %160 : vector<24x128xi1>, vector<24x128xf32>
    %c2688 = arith.constant 2688 : index
    %c0_84 = arith.constant 0 : index
    %162 = vector.load %arg3[%c2688, %c0_84] : memref<6144x128xbf16, #tpu.memory_space<vmem>>, vector<128x128xbf16>
    %c11 = arith.constant 11 : index
    %c0_85 = arith.constant 0 : index
    %163 = vector.load %arg4[%c11, %c0_85] : memref<27x128xf32, #tpu.memory_space<vmem>>, vector<1x128xf32>
    %164 = arith.truncf %161 : vector<24x128xf32> to vector<24x128xbf16>
    %cst_86 = arith.constant dense<0.000000e+00> : vector<24x128xf32>
    %165 = tpu.matmul %164, %162, %cst_86 {dimension_numbers = #tpu.dot_dimension_numbers<[1], [0], [0], [1], [0, 0, 1, 1], [], []>} : vector<24x128xbf16>, vector<128x128xbf16>, vector<24x128xf32> -> vector<24x128xf32>
    %166 = vector.broadcast %163 : vector<1x128xf32> to vector<24x128xf32>
    %167 = arith.addf %165, %166 : vector<24x128xf32>
    %168 = arith.truncf %167 : vector<24x128xf32> to vector<24x128xbf16>
    %cst_87 = arith.constant dense<0.000000e+00> : vector<8x128xf32>
    %169 = tpu.matmul %3, %168, %cst_87 {dimension_numbers = #tpu.dot_dimension_numbers<[1], [0], [0], [1], [0, 0, 1, 1], [], []>} : vector<8x24xbf16>, vector<24x128xbf16>, vector<8x128xf32> -> vector<8x128xf32>
    %170 = vector.broadcast %6 : vector<8x1xf32> to vector<8x128xf32>
    %171 = arith.mulf %169, %170 : vector<8x128xf32>
    %172 = arith.truncf %171 : vector<8x128xf32> to vector<8x128xbf16>
    %173 = tpu.concatenate %127, %172, %131 in 1 : vector<8x128xbf16>, vector<8x128xbf16>, vector<8x128xbf16> -> vector<8x384xbf16>
    %c2816 = arith.constant 2816 : index
    %c0_88 = arith.constant 0 : index
    %174 = vector.load %arg3[%c2816, %c0_88] : memref<6144x128xbf16, #tpu.memory_space<vmem>>, vector<384x128xbf16>
    %cst_89 = arith.constant dense<0.000000e+00> : vector<8x128xf32>
    %175 = tpu.matmul %173, %174, %cst_89 {dimension_numbers = #tpu.dot_dimension_numbers<[1], [0], [0], [1], [0, 0, 1, 1], [], []>} : vector<8x384xbf16>, vector<384x128xbf16>, vector<8x128xf32> -> vector<8x128xf32>
    %c12 = arith.constant 12 : index
    %c0_90 = arith.constant 0 : index
    %176 = vector.load %arg4[%c12, %c0_90] : memref<27x128xf32, #tpu.memory_space<vmem>>, vector<1x128xf32>
    %177 = vector.broadcast %176 : vector<1x128xf32> to vector<8x128xf32>
    %178 = arith.addf %175, %177 : vector<8x128xf32>
    %cst_91 = arith.constant 0.000000e+00 : f32
    %179 = vector.broadcast %cst_91 : f32 to vector<8x128xf32>
    %180 = arith.cmpf ogt, %178, %179 : vector<8x128xf32>
    %181 = math.exp %178 : vector<8x128xf32>
    %cst_92 = arith.constant 1.000000e+00 : f32
    %182 = vector.broadcast %cst_92 : f32 to vector<8x128xf32>
    %183 = arith.subf %181, %182 : vector<8x128xf32>
    %184 = arith.select %180, %178, %183 : vector<8x128xi1>, vector<8x128xf32>
    %c3200 = arith.constant 3200 : index
    %c0_93 = arith.constant 0 : index
    %185 = vector.load %arg3[%c3200, %c0_93] : memref<6144x128xbf16, #tpu.memory_space<vmem>>, vector<128x128xbf16>
    %c13 = arith.constant 13 : index
    %c0_94 = arith.constant 0 : index
    %186 = vector.load %arg4[%c13, %c0_94] : memref<27x128xf32, #tpu.memory_space<vmem>>, vector<1x128xf32>
    %187 = arith.truncf %184 : vector<8x128xf32> to vector<8x128xbf16>
    %cst_95 = arith.constant dense<0.000000e+00> : vector<8x128xf32>
    %188 = tpu.matmul %187, %185, %cst_95 {dimension_numbers = #tpu.dot_dimension_numbers<[1], [0], [0], [1], [0, 0, 1, 1], [], []>} : vector<8x128xbf16>, vector<128x128xbf16>, vector<8x128xf32> -> vector<8x128xf32>
    %189 = vector.broadcast %186 : vector<1x128xf32> to vector<8x128xf32>
    %190 = arith.addf %188, %189 : vector<8x128xf32>
    %cst_96 = arith.constant 0.000000e+00 : f32
    %191 = vector.broadcast %cst_96 : f32 to vector<8x128xf32>
    %192 = arith.cmpf ogt, %190, %191 : vector<8x128xf32>
    %193 = math.exp %190 : vector<8x128xf32>
    %cst_97 = arith.constant 1.000000e+00 : f32
    %194 = vector.broadcast %cst_97 : f32 to vector<8x128xf32>
    %195 = arith.subf %193, %194 : vector<8x128xf32>
    %196 = arith.select %192, %190, %195 : vector<8x128xi1>, vector<8x128xf32>
    %c3328 = arith.constant 3328 : index
    %c0_98 = arith.constant 0 : index
    %197 = vector.load %arg3[%c3328, %c0_98] : memref<6144x128xbf16, #tpu.memory_space<vmem>>, vector<128x128xbf16>
    %c14 = arith.constant 14 : index
    %c0_99 = arith.constant 0 : index
    %198 = vector.load %arg4[%c14, %c0_99] : memref<27x128xf32, #tpu.memory_space<vmem>>, vector<1x128xf32>
    %199 = arith.truncf %196 : vector<8x128xf32> to vector<8x128xbf16>
    %cst_100 = arith.constant dense<0.000000e+00> : vector<8x128xf32>
    %200 = tpu.matmul %199, %197, %cst_100 {dimension_numbers = #tpu.dot_dimension_numbers<[1], [0], [0], [1], [0, 0, 1, 1], [], []>} : vector<8x128xbf16>, vector<128x128xbf16>, vector<8x128xf32> -> vector<8x128xf32>
    %201 = vector.broadcast %198 : vector<1x128xf32> to vector<8x128xf32>
    %202 = arith.addf %200, %201 : vector<8x128xf32>
    %203 = arith.truncf %202 : vector<8x128xf32> to vector<8x128xbf16>
    %cst_101 = arith.constant dense<0.000000e+00> : vector<2x128xf32>
    %204 = tpu.matmul %4, %203, %cst_101 {dimension_numbers = #tpu.dot_dimension_numbers<[1], [0], [0], [1], [0, 0, 1, 1], [], []>} : vector<2x8xbf16>, vector<8x128xbf16>, vector<2x128xf32> -> vector<2x128xf32>
    %205 = vector.broadcast %7 : vector<2x1xf32> to vector<2x128xf32>
    %206 = arith.mulf %204, %205 : vector<2x128xf32>
    %cst_102 = arith.constant dense<0.000000e+00> : vector<2x128xf32>
    %207 = tpu.matmul %5, %168, %cst_102 {dimension_numbers = #tpu.dot_dimension_numbers<[1], [0], [0], [1], [0, 0, 1, 1], [], []>} : vector<2x24xbf16>, vector<24x128xbf16>, vector<2x128xf32> -> vector<2x128xf32>
    %208 = vector.broadcast %8 : vector<2x1xf32> to vector<2x128xf32>
    %209 = arith.mulf %207, %208 : vector<2x128xf32>
    %210 = arith.truncf %206 : vector<2x128xf32> to vector<2x128xbf16>
    %211 = arith.truncf %209 : vector<2x128xf32> to vector<2x128xbf16>
    %212 = tpu.concatenate %129, %210, %211 in 1 : vector<2x128xbf16>, vector<2x128xbf16>, vector<2x128xbf16> -> vector<2x384xbf16>
    %c3456 = arith.constant 3456 : index
    %c0_103 = arith.constant 0 : index
    %213 = vector.load %arg3[%c3456, %c0_103] : memref<6144x128xbf16, #tpu.memory_space<vmem>>, vector<384x128xbf16>
    %cst_104 = arith.constant dense<0.000000e+00> : vector<2x128xf32>
    %214 = tpu.matmul %212, %213, %cst_104 {dimension_numbers = #tpu.dot_dimension_numbers<[1], [0], [0], [1], [0, 0, 1, 1], [], []>} : vector<2x384xbf16>, vector<384x128xbf16>, vector<2x128xf32> -> vector<2x128xf32>
    %c15 = arith.constant 15 : index
    %c0_105 = arith.constant 0 : index
    %215 = vector.load %arg4[%c15, %c0_105] : memref<27x128xf32, #tpu.memory_space<vmem>>, vector<1x128xf32>
    %216 = vector.broadcast %215 : vector<1x128xf32> to vector<2x128xf32>
    %217 = arith.addf %214, %216 : vector<2x128xf32>
    %cst_106 = arith.constant 0.000000e+00 : f32
    %218 = vector.broadcast %cst_106 : f32 to vector<2x128xf32>
    %219 = arith.cmpf ogt, %217, %218 : vector<2x128xf32>
    %220 = math.exp %217 : vector<2x128xf32>
    %cst_107 = arith.constant 1.000000e+00 : f32
    %221 = vector.broadcast %cst_107 : f32 to vector<2x128xf32>
    %222 = arith.subf %220, %221 : vector<2x128xf32>
    %223 = arith.select %219, %217, %222 : vector<2x128xi1>, vector<2x128xf32>
    %c3840 = arith.constant 3840 : index
    %c0_108 = arith.constant 0 : index
    %224 = vector.load %arg3[%c3840, %c0_108] : memref<6144x128xbf16, #tpu.memory_space<vmem>>, vector<128x128xbf16>
    %c16 = arith.constant 16 : index
    %c0_109 = arith.constant 0 : index
    %225 = vector.load %arg4[%c16, %c0_109] : memref<27x128xf32, #tpu.memory_space<vmem>>, vector<1x128xf32>
    %226 = arith.truncf %223 : vector<2x128xf32> to vector<2x128xbf16>
    %cst_110 = arith.constant dense<0.000000e+00> : vector<2x128xf32>
    %227 = tpu.matmul %226, %224, %cst_110 {dimension_numbers = #tpu.dot_dimension_numbers<[1], [0], [0], [1], [0, 0, 1, 1], [], []>} : vector<2x128xbf16>, vector<128x128xbf16>, vector<2x128xf32> -> vector<2x128xf32>
    %228 = vector.broadcast %225 : vector<1x128xf32> to vector<2x128xf32>
    %229 = arith.addf %227, %228 : vector<2x128xf32>
    %cst_111 = arith.constant 0.000000e+00 : f32
    %230 = vector.broadcast %cst_111 : f32 to vector<2x128xf32>
    %231 = arith.cmpf ogt, %229, %230 : vector<2x128xf32>
    %232 = math.exp %229 : vector<2x128xf32>
    %cst_112 = arith.constant 1.000000e+00 : f32
    %233 = vector.broadcast %cst_112 : f32 to vector<2x128xf32>
    %234 = arith.subf %232, %233 : vector<2x128xf32>
    %235 = arith.select %231, %229, %234 : vector<2x128xi1>, vector<2x128xf32>
    %c3968 = arith.constant 3968 : index
    %c0_113 = arith.constant 0 : index
    %236 = vector.load %arg3[%c3968, %c0_113] : memref<6144x128xbf16, #tpu.memory_space<vmem>>, vector<128x128xbf16>
    %c17 = arith.constant 17 : index
    %c0_114 = arith.constant 0 : index
    %237 = vector.load %arg4[%c17, %c0_114] : memref<27x128xf32, #tpu.memory_space<vmem>>, vector<1x128xf32>
    %238 = arith.truncf %235 : vector<2x128xf32> to vector<2x128xbf16>
    %cst_115 = arith.constant dense<0.000000e+00> : vector<2x128xf32>
    %239 = tpu.matmul %238, %236, %cst_115 {dimension_numbers = #tpu.dot_dimension_numbers<[1], [0], [0], [1], [0, 0, 1, 1], [], []>} : vector<2x128xbf16>, vector<128x128xbf16>, vector<2x128xf32> -> vector<2x128xf32>
    %240 = vector.broadcast %237 : vector<1x128xf32> to vector<2x128xf32>
    %241 = arith.addf %239, %240 : vector<2x128xf32>
    %242 = arith.addf %202, %87 : vector<8x128xf32>
    %243 = arith.addf %167, %52 : vector<24x128xf32>
    %244 = arith.addf %241, %126 : vector<2x128xf32>
    %245 = arith.truncf %242 : vector<8x128xf32> to vector<8x128xbf16>
    %246 = arith.truncf %243 : vector<24x128xf32> to vector<24x128xbf16>
    %247 = arith.truncf %244 : vector<2x128xf32> to vector<2x128xbf16>
    %cst_116 = arith.constant dense<0.000000e+00> : vector<8x128xf32>
    %248 = tpu.matmul %2, %247, %cst_116 {dimension_numbers = #tpu.dot_dimension_numbers<[1], [0], [0], [1], [0, 0, 1, 1], [], []>} : vector<8x2xbf16>, vector<2x128xbf16>, vector<8x128xf32> -> vector<8x128xf32>
    %249 = arith.truncf %248 : vector<8x128xf32> to vector<8x128xbf16>
    %cst_117 = arith.constant dense<0.000000e+00> : vector<24x128xf32>
    %250 = tpu.matmul %0, %245, %cst_117 {dimension_numbers = #tpu.dot_dimension_numbers<[1], [0], [0], [1], [0, 0, 1, 1], [], []>} : vector<24x8xbf16>, vector<8x128xbf16>, vector<24x128xf32> -> vector<24x128xf32>
    %251 = arith.truncf %250 : vector<24x128xf32> to vector<24x128xbf16>
    %cst_118 = arith.constant dense<0.000000e+00> : vector<24x128xf32>
    %252 = tpu.matmul %1, %245, %cst_118 {dimension_numbers = #tpu.dot_dimension_numbers<[1], [0], [0], [1], [0, 0, 1, 1], [], []>} : vector<24x8xbf16>, vector<8x128xbf16>, vector<24x128xf32> -> vector<24x128xf32>
    %253 = arith.truncf %252 : vector<24x128xf32> to vector<24x128xbf16>
    %cst_119 = arith.constant dense<0.000000e+00> : vector<24x128xf32>
    %254 = tpu.matmul %0, %249, %cst_119 {dimension_numbers = #tpu.dot_dimension_numbers<[1], [0], [0], [1], [0, 0, 1, 1], [], []>} : vector<24x8xbf16>, vector<8x128xbf16>, vector<24x128xf32> -> vector<24x128xf32>
    %255 = arith.truncf %254 : vector<24x128xf32> to vector<24x128xbf16>
    %256 = tpu.concatenate %251, %253, %246, %255 in 1 : vector<24x128xbf16>, vector<24x128xbf16>, vector<24x128xbf16>, vector<24x128xbf16> -> vector<24x512xbf16>
    %c4096 = arith.constant 4096 : index
    %c0_120 = arith.constant 0 : index
    %257 = vector.load %arg3[%c4096, %c0_120] : memref<6144x128xbf16, #tpu.memory_space<vmem>>, vector<512x128xbf16>
    %cst_121 = arith.constant dense<0.000000e+00> : vector<24x128xf32>
    %258 = tpu.matmul %256, %257, %cst_121 {dimension_numbers = #tpu.dot_dimension_numbers<[1], [0], [0], [1], [0, 0, 1, 1], [], []>} : vector<24x512xbf16>, vector<512x128xbf16>, vector<24x128xf32> -> vector<24x128xf32>
    %c18 = arith.constant 18 : index
    %c0_122 = arith.constant 0 : index
    %259 = vector.load %arg4[%c18, %c0_122] : memref<27x128xf32, #tpu.memory_space<vmem>>, vector<1x128xf32>
    %260 = vector.broadcast %259 : vector<1x128xf32> to vector<24x128xf32>
    %261 = arith.addf %258, %260 : vector<24x128xf32>
    %cst_123 = arith.constant 0.000000e+00 : f32
    %262 = vector.broadcast %cst_123 : f32 to vector<24x128xf32>
    %263 = arith.cmpf ogt, %261, %262 : vector<24x128xf32>
    %264 = math.exp %261 : vector<24x128xf32>
    %cst_124 = arith.constant 1.000000e+00 : f32
    %265 = vector.broadcast %cst_124 : f32 to vector<24x128xf32>
    %266 = arith.subf %264, %265 : vector<24x128xf32>
    %267 = arith.select %263, %261, %266 : vector<24x128xi1>, vector<24x128xf32>
    %c4608 = arith.constant 4608 : index
    %c0_125 = arith.constant 0 : index
    %268 = vector.load %arg3[%c4608, %c0_125] : memref<6144x128xbf16, #tpu.memory_space<vmem>>, vector<128x128xbf16>
    %c19 = arith.constant 19 : index
    %c0_126 = arith.constant 0 : index
    %269 = vector.load %arg4[%c19, %c0_126] : memref<27x128xf32, #tpu.memory_space<vmem>>, vector<1x128xf32>
    %270 = arith.truncf %267 : vector<24x128xf32> to vector<24x128xbf16>
    %cst_127 = arith.constant dense<0.000000e+00> : vector<24x128xf32>
    %271 = tpu.matmul %270, %268, %cst_127 {dimension_numbers = #tpu.dot_dimension_numbers<[1], [0], [0], [1], [0, 0, 1, 1], [], []>} : vector<24x128xbf16>, vector<128x128xbf16>, vector<24x128xf32> -> vector<24x128xf32>
    %272 = vector.broadcast %269 : vector<1x128xf32> to vector<24x128xf32>
    %273 = arith.addf %271, %272 : vector<24x128xf32>
    %cst_128 = arith.constant 0.000000e+00 : f32
    %274 = vector.broadcast %cst_128 : f32 to vector<24x128xf32>
    %275 = arith.cmpf ogt, %273, %274 : vector<24x128xf32>
    %276 = math.exp %273 : vector<24x128xf32>
    %cst_129 = arith.constant 1.000000e+00 : f32
    %277 = vector.broadcast %cst_129 : f32 to vector<24x128xf32>
    %278 = arith.subf %276, %277 : vector<24x128xf32>
    %279 = arith.select %275, %273, %278 : vector<24x128xi1>, vector<24x128xf32>
    %c4736 = arith.constant 4736 : index
    %c0_130 = arith.constant 0 : index
    %280 = vector.load %arg3[%c4736, %c0_130] : memref<6144x128xbf16, #tpu.memory_space<vmem>>, vector<128x128xbf16>
    %c20 = arith.constant 20 : index
    %c0_131 = arith.constant 0 : index
    %281 = vector.load %arg4[%c20, %c0_131] : memref<27x128xf32, #tpu.memory_space<vmem>>, vector<1x128xf32>
    %282 = arith.truncf %279 : vector<24x128xf32> to vector<24x128xbf16>
    %cst_132 = arith.constant dense<0.000000e+00> : vector<24x128xf32>
    %283 = tpu.matmul %282, %280, %cst_132 {dimension_numbers = #tpu.dot_dimension_numbers<[1], [0], [0], [1], [0, 0, 1, 1], [], []>} : vector<24x128xbf16>, vector<128x128xbf16>, vector<24x128xf32> -> vector<24x128xf32>
    %284 = vector.broadcast %281 : vector<1x128xf32> to vector<24x128xf32>
    %285 = arith.addf %283, %284 : vector<24x128xf32>
    %286 = arith.truncf %285 : vector<24x128xf32> to vector<24x128xbf16>
    %cst_133 = arith.constant dense<0.000000e+00> : vector<8x128xf32>
    %287 = tpu.matmul %3, %286, %cst_133 {dimension_numbers = #tpu.dot_dimension_numbers<[1], [0], [0], [1], [0, 0, 1, 1], [], []>} : vector<8x24xbf16>, vector<24x128xbf16>, vector<8x128xf32> -> vector<8x128xf32>
    %288 = vector.broadcast %6 : vector<8x1xf32> to vector<8x128xf32>
    %289 = arith.mulf %287, %288 : vector<8x128xf32>
    %290 = arith.truncf %289 : vector<8x128xf32> to vector<8x128xbf16>
    %291 = tpu.concatenate %245, %290, %249 in 1 : vector<8x128xbf16>, vector<8x128xbf16>, vector<8x128xbf16> -> vector<8x384xbf16>
    %c4864 = arith.constant 4864 : index
    %c0_134 = arith.constant 0 : index
    %292 = vector.load %arg3[%c4864, %c0_134] : memref<6144x128xbf16, #tpu.memory_space<vmem>>, vector<384x128xbf16>
    %cst_135 = arith.constant dense<0.000000e+00> : vector<8x128xf32>
    %293 = tpu.matmul %291, %292, %cst_135 {dimension_numbers = #tpu.dot_dimension_numbers<[1], [0], [0], [1], [0, 0, 1, 1], [], []>} : vector<8x384xbf16>, vector<384x128xbf16>, vector<8x128xf32> -> vector<8x128xf32>
    %c21 = arith.constant 21 : index
    %c0_136 = arith.constant 0 : index
    %294 = vector.load %arg4[%c21, %c0_136] : memref<27x128xf32, #tpu.memory_space<vmem>>, vector<1x128xf32>
    %295 = vector.broadcast %294 : vector<1x128xf32> to vector<8x128xf32>
    %296 = arith.addf %293, %295 : vector<8x128xf32>
    %cst_137 = arith.constant 0.000000e+00 : f32
    %297 = vector.broadcast %cst_137 : f32 to vector<8x128xf32>
    %298 = arith.cmpf ogt, %296, %297 : vector<8x128xf32>
    %299 = math.exp %296 : vector<8x128xf32>
    %cst_138 = arith.constant 1.000000e+00 : f32
    %300 = vector.broadcast %cst_138 : f32 to vector<8x128xf32>
    %301 = arith.subf %299, %300 : vector<8x128xf32>
    %302 = arith.select %298, %296, %301 : vector<8x128xi1>, vector<8x128xf32>
    %c5248 = arith.constant 5248 : index
    %c0_139 = arith.constant 0 : index
    %303 = vector.load %arg3[%c5248, %c0_139] : memref<6144x128xbf16, #tpu.memory_space<vmem>>, vector<128x128xbf16>
    %c22 = arith.constant 22 : index
    %c0_140 = arith.constant 0 : index
    %304 = vector.load %arg4[%c22, %c0_140] : memref<27x128xf32, #tpu.memory_space<vmem>>, vector<1x128xf32>
    %305 = arith.truncf %302 : vector<8x128xf32> to vector<8x128xbf16>
    %cst_141 = arith.constant dense<0.000000e+00> : vector<8x128xf32>
    %306 = tpu.matmul %305, %303, %cst_141 {dimension_numbers = #tpu.dot_dimension_numbers<[1], [0], [0], [1], [0, 0, 1, 1], [], []>} : vector<8x128xbf16>, vector<128x128xbf16>, vector<8x128xf32> -> vector<8x128xf32>
    %307 = vector.broadcast %304 : vector<1x128xf32> to vector<8x128xf32>
    %308 = arith.addf %306, %307 : vector<8x128xf32>
    %cst_142 = arith.constant 0.000000e+00 : f32
    %309 = vector.broadcast %cst_142 : f32 to vector<8x128xf32>
    %310 = arith.cmpf ogt, %308, %309 : vector<8x128xf32>
    %311 = math.exp %308 : vector<8x128xf32>
    %cst_143 = arith.constant 1.000000e+00 : f32
    %312 = vector.broadcast %cst_143 : f32 to vector<8x128xf32>
    %313 = arith.subf %311, %312 : vector<8x128xf32>
    %314 = arith.select %310, %308, %313 : vector<8x128xi1>, vector<8x128xf32>
    %c5376 = arith.constant 5376 : index
    %c0_144 = arith.constant 0 : index
    %315 = vector.load %arg3[%c5376, %c0_144] : memref<6144x128xbf16, #tpu.memory_space<vmem>>, vector<128x128xbf16>
    %c23 = arith.constant 23 : index
    %c0_145 = arith.constant 0 : index
    %316 = vector.load %arg4[%c23, %c0_145] : memref<27x128xf32, #tpu.memory_space<vmem>>, vector<1x128xf32>
    %317 = arith.truncf %314 : vector<8x128xf32> to vector<8x128xbf16>
    %cst_146 = arith.constant dense<0.000000e+00> : vector<8x128xf32>
    %318 = tpu.matmul %317, %315, %cst_146 {dimension_numbers = #tpu.dot_dimension_numbers<[1], [0], [0], [1], [0, 0, 1, 1], [], []>} : vector<8x128xbf16>, vector<128x128xbf16>, vector<8x128xf32> -> vector<8x128xf32>
    %319 = vector.broadcast %316 : vector<1x128xf32> to vector<8x128xf32>
    %320 = arith.addf %318, %319 : vector<8x128xf32>
    %321 = arith.truncf %320 : vector<8x128xf32> to vector<8x128xbf16>
    %cst_147 = arith.constant dense<0.000000e+00> : vector<2x128xf32>
    %322 = tpu.matmul %4, %321, %cst_147 {dimension_numbers = #tpu.dot_dimension_numbers<[1], [0], [0], [1], [0, 0, 1, 1], [], []>} : vector<2x8xbf16>, vector<8x128xbf16>, vector<2x128xf32> -> vector<2x128xf32>
    %323 = vector.broadcast %7 : vector<2x1xf32> to vector<2x128xf32>
    %324 = arith.mulf %322, %323 : vector<2x128xf32>
    %cst_148 = arith.constant dense<0.000000e+00> : vector<2x128xf32>
    %325 = tpu.matmul %5, %286, %cst_148 {dimension_numbers = #tpu.dot_dimension_numbers<[1], [0], [0], [1], [0, 0, 1, 1], [], []>} : vector<2x24xbf16>, vector<24x128xbf16>, vector<2x128xf32> -> vector<2x128xf32>
    %326 = vector.broadcast %8 : vector<2x1xf32> to vector<2x128xf32>
    %327 = arith.mulf %325, %326 : vector<2x128xf32>
    %328 = arith.truncf %324 : vector<2x128xf32> to vector<2x128xbf16>
    %329 = arith.truncf %327 : vector<2x128xf32> to vector<2x128xbf16>
    %330 = tpu.concatenate %247, %328, %329 in 1 : vector<2x128xbf16>, vector<2x128xbf16>, vector<2x128xbf16> -> vector<2x384xbf16>
    %c5504 = arith.constant 5504 : index
    %c0_149 = arith.constant 0 : index
    %331 = vector.load %arg3[%c5504, %c0_149] : memref<6144x128xbf16, #tpu.memory_space<vmem>>, vector<384x128xbf16>
    %cst_150 = arith.constant dense<0.000000e+00> : vector<2x128xf32>
    %332 = tpu.matmul %330, %331, %cst_150 {dimension_numbers = #tpu.dot_dimension_numbers<[1], [0], [0], [1], [0, 0, 1, 1], [], []>} : vector<2x384xbf16>, vector<384x128xbf16>, vector<2x128xf32> -> vector<2x128xf32>
    %c24 = arith.constant 24 : index
    %c0_151 = arith.constant 0 : index
    %333 = vector.load %arg4[%c24, %c0_151] : memref<27x128xf32, #tpu.memory_space<vmem>>, vector<1x128xf32>
    %334 = vector.broadcast %333 : vector<1x128xf32> to vector<2x128xf32>
    %335 = arith.addf %332, %334 : vector<2x128xf32>
    %cst_152 = arith.constant 0.000000e+00 : f32
    %336 = vector.broadcast %cst_152 : f32 to vector<2x128xf32>
    %337 = arith.cmpf ogt, %335, %336 : vector<2x128xf32>
    %338 = math.exp %335 : vector<2x128xf32>
    %cst_153 = arith.constant 1.000000e+00 : f32
    %339 = vector.broadcast %cst_153 : f32 to vector<2x128xf32>
    %340 = arith.subf %338, %339 : vector<2x128xf32>
    %341 = arith.select %337, %335, %340 : vector<2x128xi1>, vector<2x128xf32>
    %c5888 = arith.constant 5888 : index
    %c0_154 = arith.constant 0 : index
    %342 = vector.load %arg3[%c5888, %c0_154] : memref<6144x128xbf16, #tpu.memory_space<vmem>>, vector<128x128xbf16>
    %c25 = arith.constant 25 : index
    %c0_155 = arith.constant 0 : index
    %343 = vector.load %arg4[%c25, %c0_155] : memref<27x128xf32, #tpu.memory_space<vmem>>, vector<1x128xf32>
    %344 = arith.truncf %341 : vector<2x128xf32> to vector<2x128xbf16>
    %cst_156 = arith.constant dense<0.000000e+00> : vector<2x128xf32>
    %345 = tpu.matmul %344, %342, %cst_156 {dimension_numbers = #tpu.dot_dimension_numbers<[1], [0], [0], [1], [0, 0, 1, 1], [], []>} : vector<2x128xbf16>, vector<128x128xbf16>, vector<2x128xf32> -> vector<2x128xf32>
    %346 = vector.broadcast %343 : vector<1x128xf32> to vector<2x128xf32>
    %347 = arith.addf %345, %346 : vector<2x128xf32>
    %cst_157 = arith.constant 0.000000e+00 : f32
    %348 = vector.broadcast %cst_157 : f32 to vector<2x128xf32>
    %349 = arith.cmpf ogt, %347, %348 : vector<2x128xf32>
    %350 = math.exp %347 : vector<2x128xf32>
    %cst_158 = arith.constant 1.000000e+00 : f32
    %351 = vector.broadcast %cst_158 : f32 to vector<2x128xf32>
    %352 = arith.subf %350, %351 : vector<2x128xf32>
    %353 = arith.select %349, %347, %352 : vector<2x128xi1>, vector<2x128xf32>
    %c6016 = arith.constant 6016 : index
    %c0_159 = arith.constant 0 : index
    %354 = vector.load %arg3[%c6016, %c0_159] : memref<6144x128xbf16, #tpu.memory_space<vmem>>, vector<128x128xbf16>
    %c26 = arith.constant 26 : index
    %c0_160 = arith.constant 0 : index
    %355 = vector.load %arg4[%c26, %c0_160] : memref<27x128xf32, #tpu.memory_space<vmem>>, vector<1x128xf32>
    %356 = arith.truncf %353 : vector<2x128xf32> to vector<2x128xbf16>
    %cst_161 = arith.constant dense<0.000000e+00> : vector<2x128xf32>
    %357 = tpu.matmul %356, %354, %cst_161 {dimension_numbers = #tpu.dot_dimension_numbers<[1], [0], [0], [1], [0, 0, 1, 1], [], []>} : vector<2x128xbf16>, vector<128x128xbf16>, vector<2x128xf32> -> vector<2x128xf32>
    %358 = vector.broadcast %355 : vector<1x128xf32> to vector<2x128xf32>
    %359 = arith.addf %357, %358 : vector<2x128xf32>
    %c0_162 = arith.constant 0 : index
    %c0_163 = arith.constant 0 : index
    %360 = vector.load %arg11[%c0_162, %c0_163] : memref<24x24xbf16, #tpu.memory_space<vmem>>, vector<24x24xbf16>
    %361 = arith.truncf %285 : vector<24x128xf32> to vector<24x128xbf16>
    %cst_164 = arith.constant dense<0.000000e+00> : vector<24x128xf32>
    %362 = tpu.matmul %360, %361, %cst_164 {dimension_numbers = #tpu.dot_dimension_numbers<[1], [0], [0], [1], [0, 0, 1, 1], [], []>} : vector<24x24xbf16>, vector<24x128xbf16>, vector<24x128xf32> -> vector<24x128xf32>
    %363 = arith.addf %285, %362 : vector<24x128xf32>
    %cst_165 = arith.constant 5.000000e-01 : f32
    %364 = vector.broadcast %cst_165 : f32 to vector<24x128xf32>
    %365 = arith.mulf %364, %363 : vector<24x128xf32>
    %c0_166 = arith.constant 0 : index
    %c0_167 = arith.constant 0 : index
    %366 = vector.load %arg15[%c0_166, %c0_167] : memref<8x128xf32, #tpu.memory_space<vmem>>, vector<8x128xf32>
    tpu.vector_store %arg15[%c0_166, %c0_167], %320 {strides = array<i32>} : memref<8x128xf32, #tpu.memory_space<vmem>>, vector<8x128xf32>,
    %c0_168 = arith.constant 0 : index
    %c0_169 = arith.constant 0 : index
    %367 = vector.load %arg16[%c0_168, %c0_169] : memref<24x128xf32, #tpu.memory_space<vmem>>, vector<24x128xf32>
    tpu.vector_store %arg16[%c0_168, %c0_169], %365 {strides = array<i32>} : memref<24x128xf32, #tpu.memory_space<vmem>>, vector<24x128xf32>,
    %c0_170 = arith.constant 0 : index
    %c0_171 = arith.constant 0 : index
    %368 = vector.load %arg17[%c0_170, %c0_171] : memref<2x128xf32, #tpu.memory_space<vmem>>, vector<2x128xf32>
    tpu.vector_store %arg17[%c0_170, %c0_171], %359 {strides = array<i32>} : memref<2x128xf32, #tpu.memory_space<vmem>>, vector<2x128xf32>,
    return
  }
}

</mosaic_0001>

<llo_original>
// kernel: grafei_forward.1
$region0: #{grafei_forward.1}
  #allocation0 [shape = 'u32[]', space=smem, size = 0x4, offset = 0x4, fixed_abs, tag = 'smem constant byte address 0x4 - core index']
  #allocation1 [shape = 'u32[144,128]{1,0:T(1,128)}', space=vmem, size = 0x12000, scoped, tag = 'internal scratch']
  %s0 = inlined_call_operand.vmem [shape: f32[8,128], index: 0, kind: input, shape index: {}]
  %s1 = inlined_call_operand.vmem [shape: f32[24,128], index: 1, kind: input, shape index: {}]
  %s2 = inlined_call_operand.vmem [shape: f32[2,128], index: 2, kind: input, shape index: {}]
  %s3 = inlined_call_operand.hbm [shape: bf16[6144,128], index: 3, kind: input, shape index: {}]
  %s4 = inlined_call_operand.hbm [shape: f32[27,128], index: 4, kind: input, shape index: {}]
  %s5 = inlined_call_operand.vmem [shape: bf16[24,8], index: 5, kind: input, shape index: {}]
  %s6 = inlined_call_operand.vmem [shape: bf16[24,8], index: 6, kind: input, shape index: {}]
  %s7 = inlined_call_operand.vmem [shape: bf16[8,2], index: 7, kind: input, shape index: {}]
  %s8 = inlined_call_operand.hbm [shape: bf16[8,24], index: 8, kind: input, shape index: {}]
  %s9 = inlined_call_operand.hbm [shape: bf16[2,8], index: 9, kind: input, shape index: {}]
  %s10 = inlined_call_operand.hbm [shape: bf16[2,24], index: 10, kind: input, shape index: {}]
  %s11 = inlined_call_operand.hbm [shape: bf16[24,24], index: 11, kind: input, shape index: {}]
  %s12 = inlined_call_operand.vmem [shape: f32[8,1], index: 12, kind: input, shape index: {}]
  %s13 = inlined_call_operand.vmem [shape: f32[2,1], index: 13, kind: input, shape index: {}]
  %s14 = inlined_call_operand.vmem [shape: f32[2,1], index: 14, kind: input, shape index: {}]
  %s15 = inlined_call_operand.hbm [shape: f32[8,128], index: 15, kind: output, shape index: {0}]
  %s16 = inlined_call_operand.vmem [shape: f32[24,128], index: 16, kind: output, shape index: {1}]
  %s17 = inlined_call_operand.vmem [shape: f32[2,128], index: 17, kind: output, shape index: {2}]
  %18 = xla_tuple %s15, %s16, %s17
  %s19 = sld [smem:[#allocation0]]
  $region110: #{grafei_forward.1} parent=0
    _
  %s21 = ssub.s32 1, %s19
  %s22 = scalar_select 0, %s21, %s19
  $region1: #{grafei_forward.1} parent=0
    #allocation2 [shape = 'u8[1572864]{0}', space=vmem, size = 0x180000, scoped, tag = 'input window, operand 3, single buffered']
    #allocation3 [shape = 's32[1]{0}', space=sflag, size = 0x4, scoped, tag = 'scoped memory for grafei_forward.1']
    #allocation4 [shape = 's32[1]{0}', space=sflag, size = 0x4, scoped, tag = 'scoped memory for grafei_forward.1']
    #allocation5 [shape = 'u8[16384]{0}', space=vmem, size = 0x4000, scoped, tag = 'input window, operand 4, single buffered']
    #allocation6 [shape = 's32[1]{0}', space=sflag, size = 0x4, scoped, tag = 'scoped memory for grafei_forward.1']
    #allocation7 [shape = 'u8[2048]{0}', space=vmem, size = 0x800, scoped, tag = 'input window, operand 8, single buffered']
    #allocation8 [shape = 'u8[512]{0}', space=vmem, size = 0x400, scoped, tag = 'input window, operand 9, single buffered']
    #allocation9 [shape = 's32[1]{0}', space=sflag, size = 0x4, scoped, tag = 'scoped memory for grafei_forward.1']
    #allocation10 [shape = 'u8[512]{0}', space=vmem, size = 0x400, scoped, tag = 'input window, operand 10, single buffered']
    #allocation11 [shape = 'u8[6144]{0}', space=vmem, size = 0x1800, scoped, tag = 'input window, operand 11, single buffered']
    #allocation12 [shape = 's32[1]{0}', space=sflag, size = 0x4, scoped, tag = 'scoped memory for grafei_forward.1']
    #allocation13 [shape = 'u8[4096]{0}', space=vmem, size = 0x1000, scoped, tag = 'output window, operand 0, single buffered']
    %23 = vsyncpa [#allocation3], 0
    %24 = vsyncpa [#allocation6], 0
    %25 = vsyncpa [#allocation9], 0
    %26 = vsyncpa [#allocation12], 0
    %27 = vsyncpa [#allocation4], 0
    // Predicated region
    $region2: #{grafei_forward.1} parent=1 // pred_check
      _
    $region3: #{grafei_forward.1} parent=1 // pred_check_branch
      %29 = sbr.rel (0) target = $region5
    $region4: #{grafei_forward.1} parent=1 // pred_region
      _
    $region5: #{grafei_forward.1} parent=1 // pred_fallthru
      _
    // Predicated region
    $region6: #{grafei_forward.1} parent=1 // pred_check
      _
    $region7: #{grafei_forward.1} parent=1 // pred_check_branch
      %31 = sbr.rel (0) target = $region9
    $region8: #{grafei_forward.1} parent=1 // pred_region
      _
    $region9: #{grafei_forward.1} parent=1 // pred_fallthru
      _
    // Predicated region
    $region10: #{grafei_forward.1} parent=1 // pred_check
      _
    $region11: #{grafei_forward.1} parent=1 // pred_check_branch
      %33 = sbr.rel (0) target = $region13
    $region12: #{grafei_forward.1} parent=1 // pred_region
      _
    $region13: #{grafei_forward.1} parent=1 // pred_fallthru
      _
    // Predicated region
    $region14: #{grafei_forward.1} parent=1 // pred_check
      _
    $region15: #{grafei_forward.1} parent=1 // pred_check_branch
      %35 = sbr.rel (0) target = $region17
    $region16: #{grafei_forward.1} parent=1 // pred_region
      %s37 = ssub.s32 49152, 49152
      %38 = vsyncadd [#allocation3], %s37
      %s39 = sshll.u32 [#allocation2], 4
      %s40 = int_to_ptr.vmem [resolvable:$true] %s39
      %45 = dma.hbm_to_vmem [thread:$0]  %s3, 49152, %s40, [#allocation3], 64, 64, 4
    $region17: #{grafei_forward.1} parent=1 // pred_fallthru
      _
    // Predicated region
    $region18: #{grafei_forward.1} parent=1 // pred_check
      _
    $region19: #{grafei_forward.1} parent=1 // pred_check_branch
      %47 = sbr.rel (0) target = $region21
    $region20: #{grafei_forward.1} parent=1 // pred_region
      %s49 = ssub.s32 512, 512
      %50 = vsyncadd [#allocation6], %s49
      %s51 = sshll.u32 [#allocation5], 4
      %s52 = int_to_ptr.vmem [resolvable:$true] %s51
      %57 = dma.hbm_to_vmem [thread:$0]  %s4, 512, %s52, [#allocation6], 128, 128, 8
    $region21: #{grafei_forward.1} parent=1 // pred_fallthru
      _
    // Predicated region
    $region22: #{grafei_forward.1} parent=1 // pred_check
      _
    $region23: #{grafei_forward.1} parent=1 // pred_check_branch
      %59 = sbr.rel (0) target = $region25
    $region24: #{grafei_forward.1} parent=1 // pred_region
      _
    $region25: #{grafei_forward.1} parent=1 // pred_fallthru
      _
    // Predicated region
    $region26: #{grafei_forward.1} parent=1 // pred_check
      _
    $region27: #{grafei_forward.1} parent=1 // pred_check_branch
      %61 = sbr.rel (0) target = $region29
    $region28: #{grafei_forward.1} parent=1 // pred_region
      _
    $region29: #{grafei_forward.1} parent=1 // pred_fallthru
      _
    // Predicated region
    $region30: #{grafei_forward.1} parent=1 // pred_check
      _
    $region31: #{grafei_forward.1} parent=1 // pred_check_branch
      %63 = sbr.rel (0) target = $region33
    $region32: #{grafei_forward.1} parent=1 // pred_region
      _
    $region33: #{grafei_forward.1} parent=1 // pred_fallthru
      _
    // Predicated region
    $region34: #{grafei_forward.1} parent=1 // pred_check
      _
    $region35: #{grafei_forward.1} parent=1 // pred_check_branch
      %65 = sbr.rel (0) target = $region37
    $region36: #{grafei_forward.1} parent=1 // pred_region
      %s67 = ssub.s32 64, 64
      %68 = vsyncadd [#allocation6], %s67
      %s70 = sshll.u32 [#allocation7], 4
      %s71 = int_to_ptr.vmem [resolvable:$true] %s70
      %73 = dma.hbm_to_vmem [thread:$0]  %s8, 64, %s71, [#allocation6]
    $region37: #{grafei_forward.1} parent=1 // pred_fallthru
      _
    // Predicated region
    $region38: #{grafei_forward.1} parent=1 // pred_check
      _
    $region39: #{grafei_forward.1} parent=1 // pred_check_branch
      %75 = sbr.rel (0) target = $region41
    $region40: #{grafei_forward.1} parent=1 // pred_region
      %s77 = ssub.s32 16, 16
      %78 = vsyncadd [#allocation9], %s77
      %s80 = sshll.u32 [#allocation8], 4
      %s81 = int_to_ptr.vmem [resolvable:$true] %s80
      %83 = dma.hbm_to_vmem [thread:$0]  %s9, 16, %s81, [#allocation9]
    $region41: #{grafei_forward.1} parent=1 // pred_fallthru
      _
    // Predicated region
    $region42: #{grafei_forward.1} parent=1 // pred_check
      _
    $region43: #{grafei_forward.1} parent=1 // pred_check_branch
      %85 = sbr.rel (0) target = $region45
    $region44: #{grafei_forward.1} parent=1 // pred_region
      %s87 = ssub.s32 16, 16
      %88 = vsyncadd [#allocation9], %s87
      %s90 = sshll.u32 [#allocation10], 4
      %s91 = int_to_ptr.vmem [resolvable:$true] %s90
      %93 = dma.hbm_to_vmem [thread:$0]  %s10, 16, %s91, [#allocation9]
    $region45: #{grafei_forward.1} parent=1 // pred_fallthru
      _
    // Predicated region
    $region46: #{grafei_forward.1} parent=1 // pred_check
      _
    $region47: #{grafei_forward.1} parent=1 // pred_check_branch
      %95 = sbr.rel (0) target = $region49
    $region48: #{grafei_forward.1} parent=1 // pred_region
      %s97 = ssub.s32 192, 192
      %98 = vsyncadd [#allocation12], %s97
      %s99 = sshll.u32 [#allocation11], 4
      %s100 = int_to_ptr.vmem [resolvable:$true] %s99
      %105 = dma.hbm_to_vmem [thread:$0]  %s11, 192, %s100, [#allocation12], 64, 64, 4
    $region49: #{grafei_forward.1} parent=1 // pred_fallthru
      _
    // Predicated region
    $region50: #{grafei_forward.1} parent=1 // pred_check
      _
    $region51: #{grafei_forward.1} parent=1 // pred_check_branch
      %107 = sbr.rel (0) target = $region53
    $region52: #{grafei_forward.1} parent=1 // pred_region
      _
    $region53: #{grafei_forward.1} parent=1 // pred_fallthru
      _
    // Predicated region
    $region54: #{grafei_forward.1} parent=1 // pred_check
      _
    $region55: #{grafei_forward.1} parent=1 // pred_check_branch
      %109 = sbr.rel (0) target = $region57
    $region56: #{grafei_forward.1} parent=1 // pred_region
      _
    $region57: #{grafei_forward.1} parent=1 // pred_fallthru
      _
    // Predicated region
    $region58: #{grafei_forward.1} parent=1 // pred_check
      _
    $region59: #{grafei_forward.1} parent=1 // pred_check_branch
      %111 = sbr.rel (0) target = $region61
    $region60: #{grafei_forward.1} parent=1 // pred_region
      _
    $region61: #{grafei_forward.1} parent=1 // pred_fallthru
      _
    // Predicated region
    $region62: #{grafei_forward.1} parent=1 // pred_check
      _
    $region63: #{grafei_forward.1} parent=1 // pred_check_branch
      %113 = sbr.rel (0) target = $region65
    $region64: #{grafei_forward.1} parent=1 // pred_region
      %114 = dma.done [#allocation3], 49152
    $region65: #{grafei_forward.1} parent=1 // pred_fallthru
      _
    // Predicated region
    $region66: #{grafei_forward.1} parent=1 // pred_check
      _
    $region67: #{grafei_forward.1} parent=1 // pred_check_branch
      %116 = sbr.rel (0) target = $region69
    $region68: #{grafei_forward.1} parent=1 // pred_region
      %117 = dma.done [#allocation6], 512
    $region69: #{grafei_forward.1} parent=1 // pred_fallthru
      _
    // Predicated region
    $region70: #{grafei_forward.1} parent=1 // pred_check
      _
    $region71: #{grafei_forward.1} parent=1 // pred_check_branch
      %119 = sbr.rel (0) target = $region73
    $region72: #{grafei_forward.1} parent=1 // pred_region
      %120 = dma.done [#allocation6], 64
    $region73: #{grafei_forward.1} parent=1 // pred_fallthru
      _
    // Predicated region
    $region74: #{grafei_forward.1} parent=1 // pred_check
      _
    $region75: #{grafei_forward.1} parent=1 // pred_check_branch
      %122 = sbr.rel (0) target = $region77
    $region76: #{grafei_forward.1} parent=1 // pred_region
      %123 = dma.done [#allocation9], 16
    $region77: #{grafei_forward.1} parent=1 // pred_fallthru
      _
    // Predicated region
    $region78: #{grafei_forward.1} parent=1 // pred_check
      _
    $region79: #{grafei_forward.1} parent=1 // pred_check_branch
      %125 = sbr.rel (0) target = $region81
    $region80: #{grafei_forward.1} parent=1 // pred_region
      %126 = dma.done [#allocation9], 16
    $region81: #{grafei_forward.1} parent=1 // pred_fallthru
      _
    // Predicated region
    $region82: #{grafei_forward.1} parent=1 // pred_check
      _
    $region83: #{grafei_forward.1} parent=1 // pred_check_branch
      %128 = sbr.rel (0) target = $region85
    $region84: #{grafei_forward.1} parent=1 // pred_region
      %129 = dma.done [#allocation12], 192
    $region85: #{grafei_forward.1} parent=1 // pred_fallthru
      _
    %v131 = vld [vmem:[%s5] sm:$0xf]
    %v132 = vld [vmem:[%s5 + $0x4] sm:$0xf]
    %v133 = vld [vmem:[%s5 + $0x8] sm:$0xf]
    %v134 = vld [vmem:[%s6] sm:$0xf]
    %v135 = vld [vmem:[%s6 + $0x4] sm:$0xf]
    %v136 = vld [vmem:[%s6 + $0x8] sm:$0xf]
    %v137 = vld [vmem:[%s7] sm:$0xf]
    %v138 = vld [vmem:[#allocation7] sm:$0xf]
    %v139 = vld [vmem:[#allocation8] sm:$0x1]
    %v140 = vld [vmem:[#allocation10] sm:$0x1]
    %v141 = vld [vmem:[%s12] sm:$0xff]
    %v142 = vld [vmem:[%s13] sm:$0x3]
    %v143 = vld [vmem:[%s14] sm:$0x3]
    %v144 = vld [vmem:[%s0] sm:$0xff]
    %v145 = vld [vmem:[%s1] sm:$0xff]
    %v146 = vld [vmem:[%s1 + $0x8] sm:$0xff]
    %v147 = vld [vmem:[%s1 + $0x10] sm:$0xff]
    %v148 = vld [vmem:[%s2] sm:$0x3]
    %v149 = vpack.c.bf16 %v144, %v144
    %v150 = vpack.c.bf16 %v146, %v145
    %v151 = vpack.c.bf16 %v147, %v147
    %v152 = vpack.c.bf16 %v148, %v148
    %vm153 = vcmask 15360
    %v155 = vsel %vm153, %v137, 0
    %vm157 = vcmask 1040384
    %v159 = vsel %vm157, %v152, 0
    %161 = vmatprep.subr.bf16.mxu0 0
    %162 = vmatpush1.bf16.msra.mxu0 %v159
    %163 = vmatprep.subr.bf16.mxu0 0
    %164 = vmatpush1.bf16.msra.mxu0 0
    %165 = vmatprep.subr.bf16.mxu0 0
    %166 = vmatpush1.bf16.msra.mxu0 0
    %167 = vmatprep.subr.bf16.mxu0 0
    %168 = vmatpush1.bf16.msra.mxu0 0
    %169 = vmatprep.subr.bf16.mxu0 0
    %170 = vmatpush1.bf16.msra.mxu0 0
    %171 = vmatprep.subr.bf16.mxu0 0
    %172 = vmatpush1.bf16.msra.mxu0 0
    %173 = vmatprep.subr.bf16.mxu0 0
    %174 = vmatpush1.bf16.msra.mxu0 0
    %175 = vmatprep.subr.bf16.mxu0 0
    %176 = vmatpush1.bf16.msra.mxu0 0
    %177 = vmatprep.subr.bf16.mxu0 0
    %178 = vmatpush1.bf16.msra.mxu0 0
    %179 = vmatprep.subr.bf16.mxu0 0
    %180 = vmatpush1.bf16.msra.mxu0 0
    %181 = vmatprep.subr.bf16.mxu0 0
    %182 = vmatpush1.bf16.msra.mxu0 0
    %183 = vmatprep.subr.bf16.mxu0 0
    %184 = vmatpush1.bf16.msra.mxu0 0
    %185 = vmatprep.subr.bf16.mxu0 0
    %186 = vmatpush1.bf16.msra.mxu0 0
    %187 = vmatprep.subr.bf16.mxu0 0
    %188 = vmatpush1.bf16.msra.mxu0 0
    %189 = vmatprep.subr.bf16.mxu0 0
    %190 = vmatpush1.bf16.msra.mxu0 0
    %191 = vmatprep.subr.bf16.mxu0 0
    %192 = vmatpush1.bf16.msra.mxu0 0
    %193 = vmatprep.mubr.bf16.mxu0 0
    %194 = vmatmul.mubr.bf16.gmra.mrb[0].mxu0 %v155
    %v195 = vpop.f32.mrb[0].mxu0
    %v196 = vadd.f32 0.0, %v195
    %v197 = vpop.f32.mrb[0].mxu0
    %v198 = vpop.f32.mrb[0].mxu0
    %v199 = vpop.f32.mrb[0].mxu0
    %200 = vdwg.mxu0
    %v201 = vpack.c.bf16 %v196, %v196
    %v205 = vunpack.c.l.b16 %v131
    %v206 = vunpack.c.l.b16 %v132
    %v207 = vunpack.c.l.b16 %v133
    %v208 = vpack.c.b16 %v206, %v205
    %v209 = vpack.c.b16 %v207, %v207
    %vm210 = vcmask 64512
    %v212 = vsel %vm210, %v208, 0
    %v215 = vsel %vm210, %v209, 0
    %vm217 = vcmask 1043456
    %v219 = vsel %vm217, %v149, 0
    %221 = vmatprep.subr.bf16.mxu0 0
    %222 = vmatpush1.bf16.msra.mxu0 %v219
    %223 = vmatprep.subr.bf16.mxu0 0
    %224 = vmatpush1.bf16.msra.mxu0 0
    %225 = vmatprep.subr.bf16.mxu0 0
    %226 = vmatpush1.bf16.msra.mxu0 0
    %227 = vmatprep.subr.bf16.mxu0 0
    %228 = vmatpush1.bf16.msra.mxu0 0
    %229 = vmatprep.subr.bf16.mxu0 0
    %230 = vmatpush1.bf16.msra.mxu0 0
    %231 = vmatprep.subr.bf16.mxu0 0
    %232 = vmatpush1.bf16.msra.mxu0 0
    %233 = vmatprep.subr.bf16.mxu0 0
    %234 = vmatpush1.bf16.msra.mxu0 0
    %235 = vmatprep.subr.bf16.mxu0 0
    %236 = vmatpush1.bf16.msra.mxu0 0
    %237 = vmatprep.subr.bf16.mxu0 0
    %238 = vmatpush1.bf16.msra.mxu0 0
    %239 = vmatprep.subr.bf16.mxu0 0
    %240 = vmatpush1.bf16.msra.mxu0 0
    %241 = vmatprep.subr.bf16.mxu0 0
    %242 = vmatpush1.bf16.msra.mxu0 0
    %243 = vmatprep.subr.bf16.mxu0 0
    %244 = vmatpush1.bf16.msra.mxu0 0
    %245 = vmatprep.subr.bf16.mxu0 0
    %246 = vmatpush1.bf16.msra.mxu0 0
    %247 = vmatprep.subr.bf16.mxu0 0
    %248 = vmatpush1.bf16.msra.mxu0 0
    %249 = vmatprep.subr.bf16.mxu0 0
    %250 = vmatpush1.bf16.msra.mxu0 0
    %251 = vmatprep.subr.bf16.mxu0 0
    %252 = vmatpush1.bf16.msra.mxu0 0
    %253 = vmatprep.mubr.bf16.mxu0 0
    %254 = vmatmul.mubr.bf16.gmra.mrb[0].mxu0 %v212
    %v255 = vpop.f32.mrb[0].mxu0
    %v256 = vadd.f32 0.0, %v255
    %v257 = vpop.f32.mrb[0].mxu0
    %v258 = vpop.f32.mrb[0].mxu0
    %v259 = vadd.f32 0.0, %v258
    %v260 = vpop.f32.mrb[0].mxu0
    %261 = vmatprep.mubr.bf16.mxu0 0
    %262 = vmatmul.mubr.bf16.gmra.mrb[0].mxu0 %v215
    %v263 = vpop.f32.mrb[0].mxu0
    %v264 = vadd.f32 0.0, %v263
    %v265 = vpop.f32.mrb[0].mxu0
    %v266 = vpop.f32.mrb[0].mxu0
    %v267 = vpop.f32.mrb[0].mxu0
    %268 = vdwg.mxu0
    %v269 = vpack.c.bf16 %v259, %v256
    %v270 = vpack.c.bf16 %v264, %v264
    %v274 = vunpack.c.l.b16 %v134
    %v275 = vunpack.c.l.b16 %v135
    %v276 = vunpack.c.l.b16 %v136
    %v277 = vpack.c.b16 %v275, %v274
    %v278 = vpack.c.b16 %v276, %v276
    %v280 = vsel %vm210, %v277, 0
    %v283 = vsel %vm210, %v278, 0
    %285 = vmatprep.subr.bf16.mxu0 0
    %286 = vmatpush1.bf16.msra.mxu0 %v219
    %287 = vmatprep.subr.bf16.mxu0 0
    %288 = vmatpush1.bf16.msra.mxu0 0
    %289 = vmatprep.subr.bf16.mxu0 0
    %290 = vmatpush1.bf16.msra.mxu0 0
    %291 = vmatprep.subr.bf16.mxu0 0
    %292 = vmatpush1.bf16.msra.mxu0 0
    %293 = vmatprep.subr.bf16.mxu0 0
    %294 = vmatpush1.bf16.msra.mxu0 0
    %295 = vmatprep.subr.bf16.mxu0 0
    %296 = vmatpush1.bf16.msra.mxu0 0
    %297 = vmatprep.subr.bf16.mxu0 0
    %298 = vmatpush1.bf16.msra.mxu0 0
    %299 = vmatprep.subr.bf16.mxu0 0
    %300 = vmatpush1.bf16.msra.mxu0 0
    %301 = vmatprep.subr.bf16.mxu0 0
    %302 = vmatpush1.bf16.msra.mxu0 0
    %303 = vmatprep.subr.bf16.mxu0 0
    %304 = vmatpush1.bf16.msra.mxu0 0
    %305 = vmatprep.subr.bf16.mxu0 0
    %306 = vmatpush1.bf16.msra.mxu0 0
    %307 = vmatprep.subr.bf16.mxu0 0
    %308 = vmatpush1.bf16.msra.mxu0 0
    %309 = vmatprep.subr.bf16.mxu0 0
    %310 = vmatpush1.bf16.msra.mxu0 0
    %311 = vmatprep.subr.bf16.mxu0 0
    %312 = vmatpush1.bf16.msra.mxu0 0
    %313 = vmatprep.subr.bf16.mxu0 0
    %314 = vmatpush1.bf16.msra.mxu0 0
    %315 = vmatprep.subr.bf16.mxu0 0
    %316 = vmatpush1.bf16.msra.mxu0 0
    %317 = vmatprep.mubr.bf16.mxu0 0
    %318 = vmatmul.mubr.bf16.gmra.mrb[0].mxu0 %v280
    %v319 = vpop.f32.mrb[0].mxu0
    %v320 = vadd.f32 0.0, %v319
    %v321 = vpop.f32.mrb[0].mxu0
    %v322 = vpop.f32.mrb[0].mxu0
    %v323 = vadd.f32 0.0, %v322
    %v324 = vpop.f32.mrb[0].mxu0
    %325 = vmatprep.mubr.bf16.mxu0 0
    %326 = vmatmul.mubr.bf16.gmra.mrb[0].mxu0 %v283
    %v327 = vpop.f32.mrb[0].mxu0
    %v328 = vadd.f32 0.0, %v327
    %v329 = vpop.f32.mrb[0].mxu0
    %v330 = vpop.f32.mrb[0].mxu0
    %v331 = vpop.f32.mrb[0].mxu0
    %332 = vdwg.mxu0
    %v333 = vpack.c.bf16 %v323, %v320
    %v334 = vpack.c.bf16 %v328, %v328
    %v336 = vsel %vm217, %v201, 0
    %338 = vmatprep.subr.bf16.mxu0 0
    %339 = vmatpush1.bf16.msra.mxu0 %v336
    %340 = vmatprep.subr.bf16.mxu0 0
    %341 = vmatpush1.bf16.msra.mxu0 0
    %342 = vmatprep.subr.bf16.mxu0 0
    %343 = vmatpush1.bf16.msra.mxu0 0
    %344 = vmatprep.subr.bf16.mxu0 0
    %345 = vmatpush1.bf16.msra.mxu0 0
    %346 = vmatprep.subr.bf16.mxu0 0
    %347 = vmatpush1.bf16.msra.mxu0 0
    %348 = vmatprep.subr.bf16.mxu0 0
    %349 = vmatpush1.bf16.msra.mxu0 0
    %350 = vmatprep.subr.bf16.mxu0 0
    %351 = vmatpush1.bf16.msra.mxu0 0
    %352 = vmatprep.subr.bf16.mxu0 0
    %353 = vmatpush1.bf16.msra.mxu0 0
    %354 = vmatprep.subr.bf16.mxu0 0
    %355 = vmatpush1.bf16.msra.mxu0 0
    %356 = vmatprep.subr.bf16.mxu0 0
    %357 = vmatpush1.bf16.msra.mxu0 0
    %358 = vmatprep.subr.bf16.mxu0 0
    %359 = vmatpush1.bf16.msra.mxu0 0
    %360 = vmatprep.subr.bf16.mxu0 0
    %361 = vmatpush1.bf16.msra.mxu0 0
    %362 = vmatprep.subr.bf16.mxu0 0
    %363 = vmatpush1.bf16.msra.mxu0 0
    %364 = vmatprep.subr.bf16.mxu0 0
    %365 = vmatpush1.bf16.msra.mxu0 0
    %366 = vmatprep.subr.bf16.mxu0 0
    %367 = vmatpush1.bf16.msra.mxu0 0
    %368 = vmatprep.subr.bf16.mxu0 0
    %369 = vmatpush1.bf16.msra.mxu0 0
    %370 = vmatprep.mubr.bf16.mxu0 0
    %371 = vmatmul.mubr.bf16.gmra.mrb[0].mxu0 %v212
    %v372 = vpop.f32.mrb[0].mxu0
    %v373 = vadd.f32 0.0, %v372
    %v374 = vpop.f32.mrb[0].mxu0
    %v375 = vpop.f32.mrb[0].mxu0
    %v376 = vadd.f32 0.0, %v375
    %v377 = vpop.f32.mrb[0].mxu0
    %378 = vmatprep.mubr.bf16.mxu0 0
    %379 = vmatmul.mubr.bf16.gmra.mrb[0].mxu0 %v215
    %v380 = vpop.f32.mrb[0].mxu0
    %v381 = vadd.f32 0.0, %v380
    %v382 = vpop.f32.mrb[0].mxu0
    %v383 = vpop.f32.mrb[0].mxu0
    %v384 = vpop.f32.mrb[0].mxu0
    %385 = vdwg.mxu0
    %v386 = vpack.c.bf16 %v376, %v373
    %v387 = vpack.c.bf16 %v381, %v381
    %v388 = vld [vmem:[#allocation2] sm:$0xf]
    %v389 = vld [vmem:[#allocation2 + $0x4] sm:$0xf]
    %v390 = vld [vmem:[#allocation2 + $0x8] sm:$0xf]
    %v391 = vld [vmem:[#allocation2 + $0xc] sm:$0xf]
    %v392 = vld [vmem:[#allocation2 + $0x10] sm:$0xf]
    %v393 = vld [vmem:[#allocation2 + $0x14] sm:$0xf]
    %v394 = vld [vmem:[#allocation2 + $0x18] sm:$0xf]
    %v395 = vld [vmem:[#allocation2 + $0x1c] sm:$0xf]
    %v396 = vld [vmem:[#allocation2 + $0x20] sm:$0xf]
    %v397 = vld [vmem:[#allocation2 + $0x24] sm:$0xf]
    %v398 = vld [vmem:[#allocation2 + $0x28] sm:$0xf]
    %v399 = vld [vmem:[#allocation2 + $0x2c] sm:$0xf]
    %v400 = vld [vmem:[#allocation2 + $0x30] sm:$0xf]
    %v401 = vld [vmem:[#allocation2 + $0x34] sm:$0xf]
    %v402 = vld [vmem:[#allocation2 + $0x38] sm:$0xf]
    %v403 = vld [vmem:[#allocation2 + $0x3c] sm:$0xf]
    %v404 = vld [vmem:[#allocation2 + $0x40] sm:$0xf]
    %v405 = vld [vmem:[#allocation2 + $0x44] sm:$0xf]
    %v406 = vld [vmem:[#allocation2 + $0x48] sm:$0xf]
    %v407 = vld [vmem:[#allocation2 + $0x4c] sm:$0xf]
    %v408 = vld [vmem:[#allocation2 + $0x50] sm:$0xf]
    %v409 = vld [vmem:[#allocation2 + $0x54] sm:$0xf]
    %v410 = vld [vmem:[#allocation2 + $0x58] sm:$0xf]
    %v411 = vld [vmem:[#allocation2 + $0x5c] sm:$0xf]
    %v412 = vld [vmem:[#allocation2 + $0x60] sm:$0xf]
    %v413 = vld [vmem:[#allocation2 + $0x64] sm:$0xf]
    %v414 = vld [vmem:[#allocation2 + $0x68] sm:$0xf]
    %v415 = vld [vmem:[#allocation2 + $0x6c] sm:$0xf]
    %v416 = vld [vmem:[#allocation2 + $0x70] sm:$0xf]
    %v417 = vld [vmem:[#allocation2 + $0x74] sm:$0xf]
    %v418 = vld [vmem:[#allocation2 + $0x78] sm:$0xf]
    %v419 = vld [vmem:[#allocation2 + $0x7c] sm:$0xf]
    %v420 = vld [vmem:[#allocation2 + $0x80] sm:$0xf]
    %v421 = vld [vmem:[#allocation2 + $0x84] sm:$0xf]
    %v422 = vld [vmem:[#allocation2 + $0x88] sm:$0xf]
    %v423 = vld [vmem:[#allocation2 + $0x8c] sm:$0xf]
    %v424 = vld [vmem:[#allocation2 + $0x90] sm:$0xf]
    %v425 = vld [vmem:[#allocation2 + $0x94] sm:$0xf]
    %v426 = vld [vmem:[#allocation2 + $0x98] sm:$0xf]
    %v427 = vld [vmem:[#allocation2 + $0x9c] sm:$0xf]
    %v428 = vld [vmem:[#allocation2 + $0xa0] sm:$0xf]
    %v429 = vld [vmem:[#allocation2 + $0xa4] sm:$0xf]
    %v430 = vld [vmem:[#allocation2 + $0xa8] sm:$0xf]
    %v431 = vld [vmem:[#allocation2 + $0xac] sm:$0xf]
    %v432 = vld [vmem:[#allocation2 + $0xb0] sm:$0xf]
    %v433 = vld [vmem:[#allocation2 + $0xb4] sm:$0xf]
    %v434 = vld [vmem:[#allocation2 + $0xb8] sm:$0xf]
    %v435 = vld [vmem:[#allocation2 + $0xbc] sm:$0xf]
    %v436 = vld [vmem:[#allocation2 + $0xc0] sm:$0xf]
    %v437 = vld [vmem:[#allocation2 + $0xc4] sm:$0xf]
    %v438 = vld [vmem:[#allocation2 + $0xc8] sm:$0xf]
    %v439 = vld [vmem:[#allocation2 + $0xcc] sm:$0xf]
    %v440 = vld [vmem:[#allocation2 + $0xd0] sm:$0xf]
    %v441 = vld [vmem:[#allocation2 + $0xd4] sm:$0xf]
    %v442 = vld [vmem:[#allocation2 + $0xd8] sm:$0xf]
    %v443 = vld [vmem:[#allocation2 + $0xdc] sm:$0xf]
    %v444 = vld [vmem:[#allocation2 + $0xe0] sm:$0xf]
    %v445 = vld [vmem:[#allocation2 + $0xe4] sm:$0xf]
    %v446 = vld [vmem:[#allocation2 + $0xe8] sm:$0xf]
    %v447 = vld [vmem:[#allocation2 + $0xec] sm:$0xf]
    %v448 = vld [vmem:[#allocation2 + $0xf0] sm:$0xf]
    %v449 = vld [vmem:[#allocation2 + $0xf4] sm:$0xf]
    %v450 = vld [vmem:[#allocation2 + $0xf8] sm:$0xf]
    %v451 = vld [vmem:[#allocation2 + $0xfc] sm:$0xf]
    %v452 = vld [vmem:[#allocation5] sm:$0x1]
    %v453 = vlaneseq
    %v454 = vshrl.u32 %v453, 7
    %v455 = vsub.s32 0, %v454
    %v456 = vrot.slane %v452, %v455
    %v521 = vunpack.c.l.b16 %v388
    %v522 = vunpack.c.l.b16 %v389
    %v523 = vunpack.c.l.b16 %v390
    %v524 = vunpack.c.l.b16 %v391
    %v525 = vunpack.c.l.b16 %v392
    %v526 = vunpack.c.l.b16 %v393
    %v527 = vunpack.c.l.b16 %v394
    %v528 = vunpack.c.l.b16 %v395
    %v529 = vunpack.c.l.b16 %v396
    %v530 = vunpack.c.l.b16 %v397
    %v531 = vunpack.c.l.b16 %v398
    %v532 = vunpack.c.l.b16 %v399
    %v533 = vunpack.c.l.b16 %v400
    %v534 = vunpack.c.l.b16 %v401
    %v535 = vunpack.c.l.b16 %v402
    %v536 = vunpack.c.l.b16 %v403
    %v537 = vunpack.c.l.b16 %v404
    %v538 = vunpack.c.l.b16 %v405
    %v539 = vunpack.c.l.b16 %v406
    %v540 = vunpack.c.l.b16 %v407
    %v541 = vunpack.c.l.b16 %v408
    %v542 = vunpack.c.l.b16 %v409
    %v543 = vunpack.c.l.b16 %v410
    %v544 = vunpack.c.l.b16 %v411
    %v545 = vunpack.c.l.b16 %v412
    %v546 = vunpack.c.l.b16 %v413
    %v547 = vunpack.c.l.b16 %v414
    %v548 = vunpack.c.l.b16 %v415
    %v549 = vunpack.c.l.b16 %v416
    %v550 = vunpack.c.l.b16 %v417
    %v551 = vunpack.c.l.b16 %v418
    %v552 = vunpack.c.l.b16 %v419
    %v553 = vunpack.c.l.b16 %v420
    %v554 = vunpack.c.l.b16 %v421
    %v555 = vunpack.c.l.b16 %v422
    %v556 = vunpack.c.l.b16 %v423
    %v557 = vunpack.c.l.b16 %v424
    %v558 = vunpack.c.l.b16 %v425
    %v559 = vunpack.c.l.b16 %v426
    %v560 = vunpack.c.l.b16 %v427
    %v561 = vunpack.c.l.b16 %v428
    %v562 = vunpack.c.l.b16 %v429
    %v563 = vunpack.c.l.b16 %v430
    %v564 = vunpack.c.l.b16 %v431
    %v565 = vunpack.c.l.b16 %v432
    %v566 = vunpack.c.l.b16 %v433
    %v567 = vunpack.c.l.b16 %v434
    %v568 = vunpack.c.l.b16 %v435
    %v569 = vunpack.c.l.b16 %v436
    %v570 = vunpack.c.l.b16 %v437
    %v571 = vunpack.c.l.b16 %v438
    %v572 = vunpack.c.l.b16 %v439
    %v573 = vunpack.c.l.b16 %v440
    %v574 = vunpack.c.l.b16 %v441
    %v575 = vunpack.c.l.b16 %v442
    %v576 = vunpack.c.l.b16 %v443
    %v577 = vunpack.c.l.b16 %v444
    %v578 = vunpack.c.l.b16 %v445
    %v579 = vunpack.c.l.b16 %v446
    %v580 = vunpack.c.l.b16 %v447
    %v581 = vunpack.c.l.b16 %v448
    %v582 = vunpack.c.l.b16 %v449
    %v583 = vunpack.c.l.b16 %v450
    %v584 = vunpack.c.l.b16 %v451
    %v585 = vpack.c.b16 %v522, %v521
    %v586 = vpack.c.b16 %v524, %v523
    %v587 = vpack.c.b16 %v526, %v525
    %v588 = vpack.c.b16 %v528, %v527
    %v589 = vpack.c.b16 %v530, %v529
    %v590 = vpack.c.b16 %v532, %v531
    %v591 = vpack.c.b16 %v534, %v533
    %v592 = vpack.c.b16 %v536, %v535
    %v593 = vpack.c.b16 %v538, %v537
    %v594 = vpack.c.b16 %v540, %v539
    %v595 = vpack.c.b16 %v542, %v541
    %v596 = vpack.c.b16 %v544, %v543
    %v597 = vpack.c.b16 %v546, %v545
    %v598 = vpack.c.b16 %v548, %v547
    %v599 = vpack.c.b16 %v550, %v549
    %v600 = vpack.c.b16 %v552, %v551
    %v601 = vpack.c.b16 %v554, %v553
    %v602 = vpack.c.b16 %v556, %v555
    %v603 = vpack.c.b16 %v558, %v557
    %v604 = vpack.c.b16 %v560, %v559
    %v605 = vpack.c.b16 %v562, %v561
    %v606 = vpack.c.b16 %v564, %v563
    %v607 = vpack.c.b16 %v566, %v565
    %v608 = vpack.c.b16 %v568, %v567
    %v609 = vpack.c.b16 %v570, %v569
    %v610 = vpack.c.b16 %v572, %v571
    %v611 = vpack.c.b16 %v574, %v573
    %v612 = vpack.c.b16 %v576, %v575
    %v613 = vpack.c.b16 %v578, %v577
    %v614 = vpack.c.b16 %v580, %v579
    %v615 = vpack.c.b16 %v582, %v581
    %v616 = vpack.c.b16 %v584, %v583
    %649 = vmatprep.subr.bf16.mxu0 0
    %650 = vmatpush1.bf16.msra.mxu0 %v585
    %651 = vmatprep.subr.bf16.mxu0 0
    %652 = vmatpush1.bf16.msra.mxu0 %v586
    %653 = vmatprep.subr.bf16.mxu0 0
    %654 = vmatpush1.bf16.msra.mxu0 %v587
    %655 = vmatprep.subr.bf16.mxu0 0
    %656 = vmatpush1.bf16.msra.mxu0 %v588
    %657 = vmatprep.subr.bf16.mxu0 0
    %658 = vmatpush1.bf16.msra.mxu0 %v589
    %659 = vmatprep.subr.bf16.mxu0 0
    %660 = vmatpush1.bf16.msra.mxu0 %v590
    %661 = vmatprep.subr.bf16.mxu0 0
    %662 = vmatpush1.bf16.msra.mxu0 %v591
    %663 = vmatprep.subr.bf16.mxu0 0
    %664 = vmatpush1.bf16.msra.mxu0 %v592
    %665 = vmatprep.subr.bf16.mxu0 0
    %666 = vmatpush1.bf16.msra.mxu0 %v593
    %667 = vmatprep.subr.bf16.mxu0 0
    %668 = vmatpush1.bf16.msra.mxu0 %v594
    %669 = vmatprep.subr.bf16.mxu0 0
    %670 = vmatpush1.bf16.msra.mxu0 %v595
    %671 = vmatprep.subr.bf16.mxu0 0
    %672 = vmatpush1.bf16.msra.mxu0 %v596
    %673 = vmatprep.subr.bf16.mxu0 0
    %674 = vmatpush1.bf16.msra.mxu0 %v597
    %675 = vmatprep.subr.bf16.mxu0 0
    %676 = vmatpush1.bf16.msra.mxu0 %v598
    %677 = vmatprep.subr.bf16.mxu0 0
    %678 = vmatpush1.bf16.msra.mxu0 %v599
    %679 = vmatprep.subr.bf16.mxu0 0
    %680 = vmatpush1.bf16.msra.mxu0 %v600
    %681 = vmatprep.mubr.bf16.mxu0 %v333
    %682 = vmatmul.mubr.bf16.gmra.mrb[0].mxu0 %v269
    %v683 = vpop.f32.mrb[0].mxu0
    %v684 = vadd.f32 %v456, %v683
    %v685 = vpop.f32.mrb[0].mxu0
    %v686 = vpop.f32.mrb[0].mxu0
    %v687 = vadd.f32 %v456, %v686
    %v688 = vpop.f32.mrb[0].mxu0
    %689 = vmatprep.mubr.bf16.mxu0 %v334
    %690 = vmatmul.mubr.bf16.gmra.mrb[0].mxu0 %v270
    %v691 = vpop.f32.mrb[0].mxu0
    %v692 = vadd.f32 %v456, %v691
    %v693 = vpop.f32.mrb[0].mxu0
    %v694 = vpop.f32.mrb[0].mxu0
    %v695 = vpop.f32.mrb[0].mxu0
    %696 = vdwg.mxu0
    %697 = vmatprep.subr.bf16.mxu0 0
    %698 = vmatpush1.bf16.msra.mxu0 %v601
    %699 = vmatprep.subr.bf16.mxu0 0
    %700 = vmatpush1.bf16.msra.mxu0 %v602
    %701 = vmatprep.subr.bf16.mxu0 0
    %702 = vmatpush1.bf16.msra.mxu0 %v603
    %703 = vmatprep.subr.bf16.mxu0 0
    %704 = vmatpush1.bf16.msra.mxu0 %v604
    %705 = vmatprep.subr.bf16.mxu0 0
    %706 = vmatpush1.bf16.msra.mxu0 %v605
    %707 = vmatprep.subr.bf16.mxu0 0
    %708 = vmatpush1.bf16.msra.mxu0 %v606
    %709 = vmatprep.subr.bf16.mxu0 0
    %710 = vmatpush1.bf16.msra.mxu0 %v607
    %711 = vmatprep.subr.bf16.mxu0 0
    %712 = vmatpush1.bf16.msra.mxu0 %v608
    %713 = vmatprep.subr.bf16.mxu0 0
    %714 = vmatpush1.bf16.msra.mxu0 %v609
    %715 = vmatprep.subr.bf16.mxu0 0
    %716 = vmatpush1.bf16.msra.mxu0 %v610
    %717 = vmatprep.subr.bf16.mxu0 0
    %718 = vmatpush1.bf16.msra.mxu0 %v611
    %719 = vmatprep.subr.bf16.mxu0 0
    %720 = vmatpush1.bf16.msra.mxu0 %v612
    %721 = vmatprep.subr.bf16.mxu0 0
    %722 = vmatpush1.bf16.msra.mxu0 %v613
    %723 = vmatprep.subr.bf16.mxu0 0
    %724 = vmatpush1.bf16.msra.mxu0 %v614
    %725 = vmatprep.subr.bf16.mxu0 0
    %726 = vmatpush1.bf16.msra.mxu0 %v615
    %727 = vmatprep.subr.bf16.mxu0 0
    %728 = vmatpush1.bf16.msra.mxu0 %v616
    %729 = vmatprep.mubr.bf16.mxu0 %v386
    %730 = vmatmul.mubr.bf16.gmra.mrb[0].mxu0 %v150
    %v731 = vpop.f32.mrb[0].mxu0
    %v732 = vadd.f32 %v684, %v731
    %v733 = vpop.f32.mrb[0].mxu0
    %v734 = vpop.f32.mrb[0].mxu0
    %v735 = vadd.f32 %v687, %v734
    %v736 = vpop.f32.mrb[0].mxu0
    %737 = vmatprep.mubr.bf16.mxu0 %v387
    %738 = vmatmul.mubr.bf16.gmra.mrb[0].mxu0 %v151
    %v739 = vpop.f32.mrb[0].mxu0
    %v740 = vadd.f32 %v692, %v739
    %v741 = vpop.f32.mrb[0].mxu0
    %v742 = vpop.f32.mrb[0].mxu0
    %v743 = vpop.f32.mrb[0].mxu0
    %744 = vdwg.mxu0
    %vm745 = vcmp.gt.f32.partialorder %v732, 0.0
    %vm746 = vcmp.gt.f32.partialorder %v735, 0.0
    %vm747 = vcmp.gt.f32.partialorder %v740, 0.0
    %v748 = vmul.f32 %v732, 1.442695
    %v749 = vpow.pop %v748
    %v750 = vmul.f32 %v735, 1.442695
    %v751 = vpow.pop %v750
    %v752 = vmul.f32 %v740, 1.442695
    %v753 = vpow.pop %v752
    %v754 = vsub.f32 %v749, 1.0
    %v755 = vsub.f32 %v751, 1.0
    %v756 = vsub.f32 %v753, 1.0
    %v757 = vsel %vm745, %v732, %v754
    %v758 = vsel %vm746, %v735, %v755
    %v759 = vsel %vm747, %v740, %v756
    %v760 = vld [vmem:[#allocation2 + $0x100] sm:$0xf]
    %v761 = vld [vmem:[#allocation2 + $0x104] sm:$0xf]
    %v762 = vld [vmem:[#allocation2 + $0x108] sm:$0xf]
    %v763 = vld [vmem:[#allocation2 + $0x10c] sm:$0xf]
    %v764 = vld [vmem:[#allocation2 + $0x110] sm:$0xf]
    %v765 = vld [vmem:[#allocation2 + $0x114] sm:$0xf]
    %v766 = vld [vmem:[#allocation2 + $0x118] sm:$0xf]
    %v767 = vld [vmem:[#allocation2 + $0x11c] sm:$0xf]
    %v768 = vld [vmem:[#allocation2 + $0x120] sm:$0xf]
    %v769 = vld [vmem:[#allocation2 + $0x124] sm:$0xf]
    %v770 = vld [vmem:[#allocation2 + $0x128] sm:$0xf]
    %v771 = vld [vmem:[#allocation2 + $0x12c] sm:$0xf]
    %v772 = vld [vmem:[#allocation2 + $0x130] sm:$0xf]
    %v773 = vld [vmem:[#allocation2 + $0x134] sm:$0xf]
    %v774 = vld [vmem:[#allocation2 + $0x138] sm:$0xf]
    %v775 = vld [vmem:[#allocation2 + $0x13c] sm:$0xf]
    %v776 = vld [vmem:[#allocation5 + $0x1] sm:$0x1]
    %v777 = vpack.c.bf16 %v758, %v757
    %v778 = vpack.c.bf16 %v759, %v759
    %v779 = vlaneseq
    %v780 = vshrl.u32 %v779, 7
    %v781 = vsub.s32 0, %v780
    %v782 = vrot.slane %v776, %v781
    %v799 = vunpack.c.l.b16 %v760
    %v800 = vunpack.c.l.b16 %v761
    %v801 = vunpack.c.l.b16 %v762
    %v802 = vunpack.c.l.b16 %v763
    %v803 = vunpack.c.l.b16 %v764
    %v804 = vunpack.c.l.b16 %v765
    %v805 = vunpack.c.l.b16 %v766
    %v806 = vunpack.c.l.b16 %v767
    %v807 = vunpack.c.l.b16 %v768
    %v808 = vunpack.c.l.b16 %v769
    %v809 = vunpack.c.l.b16 %v770
    %v810 = vunpack.c.l.b16 %v771
    %v811 = vunpack.c.l.b16 %v772
    %v812 = vunpack.c.l.b16 %v773
    %v813 = vunpack.c.l.b16 %v774
    %v814 = vunpack.c.l.b16 %v775
    %v815 = vpack.c.b16 %v800, %v799
    %v816 = vpack.c.b16 %v802, %v801
    %v817 = vpack.c.b16 %v804, %v803
    %v818 = vpack.c.b16 %v806, %v805
    %v819 = vpack.c.b16 %v808, %v807
    %v820 = vpack.c.b16 %v810, %v809
    %v821 = vpack.c.b16 %v812, %v811
    %v822 = vpack.c.b16 %v814, %v813
    %831 = vmatprep.subr.bf16.mxu0 0
    %832 = vmatpush1.bf16.msra.mxu0 %v815
    %833 = vmatprep.subr.bf16.mxu0 0
    %834 = vmatpush1.bf16.msra.mxu0 %v816
    %835 = vmatprep.subr.bf16.mxu0 0
    %836 = vmatpush1.bf16.msra.mxu0 %v817
    %837 = vmatprep.subr.bf16.mxu0 0
    %838 = vmatpush1.bf16.msra.mxu0 %v818
    %839 = vmatprep.subr.bf16.mxu0 0
    %840 = vmatpush1.bf16.msra.mxu0 %v819
    %841 = vmatprep.subr.bf16.mxu0 0
    %842 = vmatpush1.bf16.msra.mxu0 %v820
    %843 = vmatprep.subr.bf16.mxu0 0
    %844 = vmatpush1.bf16.msra.mxu0 %v821
    %845 = vmatprep.subr.bf16.mxu0 0
    %846 = vmatpush1.bf16.msra.mxu0 %v822
    %847 = vmatprep.subr.bf16.mxu0 0
    %848 = vmatpush1.bf16.msra.mxu0 0
    %849 = vmatprep.subr.bf16.mxu0 0
    %850 = vmatpush1.bf16.msra.mxu0 0
    %851 = vmatprep.subr.bf16.mxu0 0
    %852 = vmatpush1.bf16.msra.mxu0 0
    %853 = vmatprep.subr.bf16.mxu0 0
    %854 = vmatpush1.bf16.msra.mxu0 0
    %855 = vmatprep.subr.bf16.mxu0 0
    %856 = vmatpush1.bf16.msra.mxu0 0
    %857 = vmatprep.subr.bf16.mxu0 0
    %858 = vmatpush1.bf16.msra.mxu0 0
    %859 = vmatprep.subr.bf16.mxu0 0
    %860 = vmatpush1.bf16.msra.mxu0 0
    %861 = vmatprep.subr.bf16.mxu0 0
    %862 = vmatpush1.bf16.msra.mxu0 0
    %863 = vmatprep.mubr.bf16.mxu0 0
    %864 = vmatmul.mubr.bf16.gmra.mrb[0].mxu0 %v777
    %v865 = vpop.f32.mrb[0].mxu0
    %v866 = vadd.f32 %v782, %v865
    %v867 = vpop.f32.mrb[0].mxu0
    %v868 = vpop.f32.mrb[0].mxu0
    %v869 = vadd.f32 %v782, %v868
    %v870 = vpop.f32.mrb[0].mxu0
    %871 = vmatprep.mubr.bf16.mxu0 0
    %872 = vmatmul.mubr.bf16.gmra.mrb[0].mxu0 %v778
    %v873 = vpop.f32.mrb[0].mxu0
    %v874 = vadd.f32 %v782, %v873
    %v875 = vpop.f32.mrb[0].mxu0
    %v876 = vpop.f32.mrb[0].mxu0
    %v877 = vpop.f32.mrb[0].mxu0
    %878 = vdwg.mxu0
    %vm879 = vcmp.gt.f32.partialorder %v866, 0.0
    %vm880 = vcmp.gt.f32.partialorder %v869, 0.0
    %vm881 = vcmp.gt.f32.partialorder %v874, 0.0
    %v882 = vmul.f32 %v866, 1.442695
    %v883 = vpow.pop %v882
    %v884 = vmul.f32 %v869, 1.442695
    %v885 = vpow.pop %v884
    %v886 = vmul.f32 %v874, 1.442695
    %v887 = vpow.pop %v886
    %v888 = vsub.f32 %v883, 1.0
    %v889 = vsub.f32 %v885, 1.0
    %v890 = vsub.f32 %v887, 1.0
    %v891 = vsel %vm879, %v866, %v888
    %v892 = vsel %vm880, %v869, %v889
    %v893 = vsel %vm881, %v874, %v890
    %v894 = vld [vmem:[#allocation2 + $0x140] sm:$0xf]
    %v895 = vld [vmem:[#allocation2 + $0x144] sm:$0xf]
    %v896 = vld [vmem:[#allocation2 + $0x148] sm:$0xf]
    %v897 = vld [vmem:[#allocation2 + $0x14c] sm:$0xf]
    %v898 = vld [vmem:[#allocation2 + $0x150] sm:$0xf]
    %v899 = vld [vmem:[#allocation2 + $0x154] sm:$0xf]
    %v900 = vld [vmem:[#allocation2 + $0x158] sm:$0xf]
    %v901 = vld [vmem:[#allocation2 + $0x15c] sm:$0xf]
    %v902 = vld [vmem:[#allocation2 + $0x160] sm:$0xf]
    %v903 = vld [vmem:[#allocation2 + $0x164] sm:$0xf]
    %v904 = vld [vmem:[#allocation2 + $0x168] sm:$0xf]
    %v905 = vld [vmem:[#allocation2 + $0x16c] sm:$0xf]
    %v906 = vld [vmem:[#allocation2 + $0x170] sm:$0xf]
    %v907 = vld [vmem:[#allocation2 + $0x174] sm:$0xf]
    %v908 = vld [vmem:[#allocation2 + $0x178] sm:$0xf]
    %v909 = vld [vmem:[#allocation2 + $0x17c] sm:$0xf]
    %v910 = vld [vmem:[#allocation5 + $0x2] sm:$0x1]
    %v911 = vpack.c.bf16 %v892, %v891
    %v912 = vpack.c.bf16 %v893, %v893
    %v913 = vlaneseq
    %v914 = vshrl.u32 %v913, 7
    %v915 = vsub.s32 0, %v914
    %v916 = vrot.slane %v910, %v915
    %v933 = vunpack.c.l.b16 %v894
    %v934 = vunpack.c.l.b16 %v895
    %v935 = vunpack.c.l.b16 %v896
    %v936 = vunpack.c.l.b16 %v897
    %v937 = vunpack.c.l.b16 %v898
    %v938 = vunpack.c.l.b16 %v899
    %v939 = vunpack.c.l.b16 %v900
    %v940 = vunpack.c.l.b16 %v901
    %v941 = vunpack.c.l.b16 %v902
    %v942 = vunpack.c.l.b16 %v903
    %v943 = vunpack.c.l.b16 %v904
    %v944 = vunpack.c.l.b16 %v905
    %v945 = vunpack.c.l.b16 %v906
    %v946 = vunpack.c.l.b16 %v907
    %v947 = vunpack.c.l.b16 %v908
    %v948 = vunpack.c.l.b16 %v909
    %v949 = vpack.c.b16 %v934, %v933
    %v950 = vpack.c.b16 %v936, %v935
    %v951 = vpack.c.b16 %v938, %v937
    %v952 = vpack.c.b16 %v940, %v939
    %v953 = vpack.c.b16 %v942, %v941
    %v954 = vpack.c.b16 %v944, %v943
    %v955 = vpack.c.b16 %v946, %v945
    %v956 = vpack.c.b16 %v948, %v947
    %965 = vmatprep.subr.bf16.mxu0 0
    %966 = vmatpush1.bf16.msra.mxu0 %v949
    %967 = vmatprep.subr.bf16.mxu0 0
    %968 = vmatpush1.bf16.msra.mxu0 %v950
    %969 = vmatprep.subr.bf16.mxu0 0
    %970 = vmatpush1.bf16.msra.mxu0 %v951
    %971 = vmatprep.subr.bf16.mxu0 0
    %972 = vmatpush1.bf16.msra.mxu0 %v952
    %973 = vmatprep.subr.bf16.mxu0 0
    %974 = vmatpush1.bf16.msra.mxu0 %v953
    %975 = vmatprep.subr.bf16.mxu0 0
    %976 = vmatpush1.bf16.msra.mxu0 %v954
    %977 = vmatprep.subr.bf16.mxu0 0
    %978 = vmatpush1.bf16.msra.mxu0 %v955
    %979 = vmatprep.subr.bf16.mxu0 0
    %980 = vmatpush1.bf16.msra.mxu0 %v956
    %981 = vmatprep.subr.bf16.mxu0 0
    %982 = vmatpush1.bf16.msra.mxu0 0
    %983 = vmatprep.subr.bf16.mxu0 0
    %984 = vmatpush1.bf16.msra.mxu0 0
    %985 = vmatprep.subr.bf16.mxu0 0
    %986 = vmatpush1.bf16.msra.mxu0 0
    %987 = vmatprep.subr.bf16.mxu0 0
    %988 = vmatpush1.bf16.msra.mxu0 0
    %989 = vmatprep.subr.bf16.mxu0 0
    %990 = vmatpush1.bf16.msra.mxu0 0
    %991 = vmatprep.subr.bf16.mxu0 0
    %992 = vmatpush1.bf16.msra.mxu0 0
    %993 = vmatprep.subr.bf16.mxu0 0
    %994 = vmatpush1.bf16.msra.mxu0 0
    %995 = vmatprep.subr.bf16.mxu0 0
    %996 = vmatpush1.bf16.msra.mxu0 0
    %997 = vmatprep.mubr.bf16.mxu0 0
    %998 = vmatmul.mubr.bf16.gmra.mrb[0].mxu0 %v911
    %v999 = vpop.f32.mrb[0].mxu0
    %v1000 = vadd.f32 %v916, %v999
    %v1001 = vpop.f32.mrb[0].mxu0
    %v1002 = vpop.f32.mrb[0].mxu0
    %v1003 = vadd.f32 %v916, %v1002
    %v1004 = vpop.f32.mrb[0].mxu0
    %1005 = vmatprep.mubr.bf16.mxu0 0
    %1006 = vmatmul.mubr.bf16.gmra.mrb[0].mxu0 %v912
    %v1007 = vpop.f32.mrb[0].mxu0
    %v1008 = vadd.f32 %v916, %v1007
    %v1009 = vpop.f32.mrb[0].mxu0
    %v1010 = vpop.f32.mrb[0].mxu0
    %v1011 = vpop.f32.mrb[0].mxu0
    %1012 = vdwg.mxu0
    %v1013 = vpack.c.bf16 %v1003, %v1000
    %v1014 = vpack.c.bf16 %v1008, %v1008
    %vm1015 = vcmask 195584
    %v1017 = vsel %vm1015, %v138, 0
    %v1020 = vsel %vm217, %v1014, 0
    %1022 = vmatprep.subr.bf16.mxu0 0
    %1023 = vmatpush1.bf16.msra.mxu0 %v1013
    %1024 = vmatprep.subr.bf16.mxu0 0
    %1025 = vmatpush1.bf16.msra.mxu0 %v1020
    %1026 = vmatprep.subr.bf16.mxu0 0
    %1027 = vmatpush1.bf16.msra.mxu0 0
    %1028 = vmatprep.subr.bf16.mxu0 0
    %1029 = vmatpush1.bf16.msra.mxu0 0
    %1030 = vmatprep.subr.bf16.mxu0 0
    %1031 = vmatpush1.bf16.msra.mxu0 0
    %1032 = vmatprep.subr.bf16.mxu0 0
    %1033 = vmatpush1.bf16.msra.mxu0 0
    %1034 = vmatprep.subr.bf16.mxu0 0
    %1035 = vmatpush1.bf16.msra.mxu0 0
    %1036 = vmatprep.subr.bf16.mxu0 0
    %1037 = vmatpush1.bf16.msra.mxu0 0
    %1038 = vmatprep.subr.bf16.mxu0 0
    %1039 = vmatpush1.bf16.msra.mxu0 0
    %1040 = vmatprep.subr.bf16.mxu0 0
    %1041 = vmatpush1.bf16.msra.mxu0 0
    %1042 = vmatprep.subr.bf16.mxu0 0
    %1043 = vmatpush1.bf16.msra.mxu0 0
    %1044 = vmatprep.subr.bf16.mxu0 0
    %1045 = vmatpush1.bf16.msra.mxu0 0
    %1046 = vmatprep.subr.bf16.mxu0 0
    %1047 = vmatpush1.bf16.msra.mxu0 0
    %1048 = vmatprep.subr.bf16.mxu0 0
    %1049 = vmatpush1.bf16.msra.mxu0 0
    %1050 = vmatprep.subr.bf16.mxu0 0
    %1051 = vmatpush1.bf16.msra.mxu0 0
    %1052 = vmatprep.subr.bf16.mxu0 0
    %1053 = vmatpush1.bf16.msra.mxu0 0
    %1054 = vmatprep.mubr.bf16.mxu0 0
    %1055 = vmatmul.mubr.bf16.gmra.mrb[0].mxu0 %v1017
    %v1056 = vpop.f32.mrb[0].mxu0
    %v1057 = vadd.f32 0.0, %v1056
    %v1058 = vpop.f32.mrb[0].mxu0
    %v1059 = vpop.f32.mrb[0].mxu0
    %v1060 = vpop.f32.mrb[0].mxu0
    %1061 = vdwg.mxu0
    %1063 = vset.pattern.permute.xlu0 0
    %1064 = vperm.xlu0 %1063, %v141
    %v1065 = vpop.permute.xlu0 %1064
    %v1067 = vmul.f32 %v1057, %v1065
    %v1068 = vpack.c.bf16 %v1067, %v1067
    %v1069 = vld [vmem:[#allocation2 + $0x180] sm:$0xf]
    %v1070 = vld [vmem:[#allocation2 + $0x184] sm:$0xf]
    %v1071 = vld [vmem:[#allocation2 + $0x188] sm:$0xf]
    %v1072 = vld [vmem:[#allocation2 + $0x18c] sm:$0xf]
    %v1073 = vld [vmem:[#allocation2 + $0x190] sm:$0xf]
    %v1074 = vld [vmem:[#allocation2 + $0x194] sm:$0xf]
    %v1075 = vld [vmem:[#allocation2 + $0x198] sm:$0xf]
    %v1076 = vld [vmem:[#allocation2 + $0x19c] sm:$0xf]
    %v1077 = vld [vmem:[#allocation2 + $0x1a0] sm:$0xf]
    %v1078 = vld [vmem:[#allocation2 + $0x1a4] sm:$0xf]
    %v1079 = vld [vmem:[#allocation2 + $0x1a8] sm:$0xf]
    %v1080 = vld [vmem:[#allocation2 + $0x1ac] sm:$0xf]
    %v1081 = vld [vmem:[#allocation2 + $0x1b0] sm:$0xf]
    %v1082 = vld [vmem:[#allocation2 + $0x1b4] sm:$0xf]
    %v1083 = vld [vmem:[#allocation2 + $0x1b8] sm:$0xf]
    %v1084 = vld [vmem:[#allocation2 + $0x1bc] sm:$0xf]
    %v1085 = vld [vmem:[#allocation2 + $0x1c0] sm:$0xf]
    %v1086 = vld [vmem:[#allocation2 + $0x1c4] sm:$0xf]
    %v1087 = vld [vmem:[#allocation2 + $0x1c8] sm:$0xf]
    %v1088 = vld [vmem:[#allocation2 + $0x1cc] sm:$0xf]
    %v1089 = vld [vmem:[#allocation2 + $0x1d0] sm:$0xf]
    %v1090 = vld [vmem:[#allocation2 + $0x1d4] sm:$0xf]
    %v1091 = vld [vmem:[#allocation2 + $0x1d8] sm:$0xf]
    %v1092 = vld [vmem:[#allocation2 + $0x1dc] sm:$0xf]
    %v1093 = vld [vmem:[#allocation2 + $0x1e0] sm:$0xf]
    %v1094 = vld [vmem:[#allocation2 + $0x1e4] sm:$0xf]
    %v1095 = vld [vmem:[#allocation2 + $0x1e8] sm:$0xf]
    %v1096 = vld [vmem:[#allocation2 + $0x1ec] sm:$0xf]
    %v1097 = vld [vmem:[#allocation2 + $0x1f0] sm:$0xf]
    %v1098 = vld [vmem:[#allocation2 + $0x1f4] sm:$0xf]
    %v1099 = vld [vmem:[#allocation2 + $0x1f8] sm:$0xf]
    %v1100 = vld [vmem:[#allocation2 + $0x1fc] sm:$0xf]
    %v1101 = vld [vmem:[#allocation2 + $0x200] sm:$0xf]
    %v1102 = vld [vmem:[#allocation2 + $0x204] sm:$0xf]
    %v1103 = vld [vmem:[#allocation2 + $0x208] sm:$0xf]
    %v1104 = vld [vmem:[#allocation2 + $0x20c] sm:$0xf]
    %v1105 = vld [vmem:[#allocation2 + $0x210] sm:$0xf]
    %v1106 = vld [vmem:[#allocation2 + $0x214] sm:$0xf]
    %v1107 = vld [vmem:[#allocation2 + $0x218] sm:$0xf]
    %v1108 = vld [vmem:[#allocation2 + $0x21c] sm:$0xf]
    %v1109 = vld [vmem:[#allocation2 + $0x220] sm:$0xf]
    %v1110 = vld [vmem:[#allocation2 + $0x224] sm:$0xf]
    %v1111 = vld [vmem:[#allocation2 + $0x228] sm:$0xf]
    %v1112 = vld [vmem:[#allocation2 + $0x22c] sm:$0xf]
    %v1113 = vld [vmem:[#allocation2 + $0x230] sm:$0xf]
    %v1114 = vld [vmem:[#allocation2 + $0x234] sm:$0xf]
    %v1115 = vld [vmem:[#allocation2 + $0x238] sm:$0xf]
    %v1116 = vld [vmem:[#allocation2 + $0x23c] sm:$0xf]
    %v1117 = vld [vmem:[#allocation5 + $0x3] sm:$0x1]
    %v1118 = vlaneseq
    %v1119 = vshrl.u32 %v1118, 7
    %v1120 = vsub.s32 0, %v1119
    %v1121 = vrot.slane %v1117, %v1120
    %v1170 = vunpack.c.l.b16 %v1069
    %v1171 = vunpack.c.l.b16 %v1070
    %v1172 = vunpack.c.l.b16 %v1071
    %v1173 = vunpack.c.l.b16 %v1072
    %v1174 = vunpack.c.l.b16 %v1073
    %v1175 = vunpack.c.l.b16 %v1074
    %v1176 = vunpack.c.l.b16 %v1075
    %v1177 = vunpack.c.l.b16 %v1076
    %v1178 = vunpack.c.l.b16 %v1077
    %v1179 = vunpack.c.l.b16 %v1078
    %v1180 = vunpack.c.l.b16 %v1079
    %v1181 = vunpack.c.l.b16 %v1080
    %v1182 = vunpack.c.l.b16 %v1081
    %v1183 = vunpack.c.l.b16 %v1082
    %v1184 = vunpack.c.l.b16 %v1083
    %v1185 = vunpack.c.l.b16 %v1084
    %v1186 = vunpack.c.l.b16 %v1085
    %v1187 = vunpack.c.l.b16 %v1086
    %v1188 = vunpack.c.l.b16 %v1087
    %v1189 = vunpack.c.l.b16 %v1088
    %v1190 = vunpack.c.l.b16 %v1089
    %v1191 = vunpack.c.l.b16 %v1090
    %v1192 = vunpack.c.l.b16 %v1091
    %v1193 = vunpack.c.l.b16 %v1092
    %v1194 = vunpack.c.l.b16 %v1093
    %v1195 = vunpack.c.l.b16 %v1094
    %v1196 = vunpack.c.l.b16 %v1095
    %v1197 = vunpack.c.l.b16 %v1096
    %v1198 = vunpack.c.l.b16 %v1097
    %v1199 = vunpack.c.l.b16 %v1098
    %v1200 = vunpack.c.l.b16 %v1099
    %v1201 = vunpack.c.l.b16 %v1100
    %v1202 = vunpack.c.l.b16 %v1101
    %v1203 = vunpack.c.l.b16 %v1102
    %v1204 = vunpack.c.l.b16 %v1103
    %v1205 = vunpack.c.l.b16 %v1104
    %v1206 = vunpack.c.l.b16 %v1105
    %v1207 = vunpack.c.l.b16 %v1106
    %v1208 = vunpack.c.l.b16 %v1107
    %v1209 = vunpack.c.l.b16 %v1108
    %v1210 = vunpack.c.l.b16 %v1109
    %v1211 = vunpack.c.l.b16 %v1110
    %v1212 = vunpack.c.l.b16 %v1111
    %v1213 = vunpack.c.l.b16 %v1112
    %v1214 = vunpack.c.l.b16 %v1113
    %v1215 = vunpack.c.l.b16 %v1114
    %v1216 = vunpack.c.l.b16 %v1115
    %v1217 = vunpack.c.l.b16 %v1116
    %v1218 = vpack.c.b16 %v1171, %v1170
    %v1219 = vpack.c.b16 %v1173, %v1172
    %v1220 = vpack.c.b16 %v1175, %v1174
    %v1221 = vpack.c.b16 %v1177, %v1176
    %v1222 = vpack.c.b16 %v1179, %v1178
    %v1223 = vpack.c.b16 %v1181, %v1180
    %v1224 = vpack.c.b16 %v1183, %v1182
    %v1225 = vpack.c.b16 %v1185, %v1184
    %v1226 = vpack.c.b16 %v1187, %v1186
    %v1227 = vpack.c.b16 %v1189, %v1188
    %v1228 = vpack.c.b16 %v1191, %v1190
    %v1229 = vpack.c.b16 %v1193, %v1192
    %v1230 = vpack.c.b16 %v1195, %v1194
    %v1231 = vpack.c.b16 %v1197, %v1196
    %v1232 = vpack.c.b16 %v1199, %v1198
    %v1233 = vpack.c.b16 %v1201, %v1200
    %v1234 = vpack.c.b16 %v1203, %v1202
    %v1235 = vpack.c.b16 %v1205, %v1204
    %v1236 = vpack.c.b16 %v1207, %v1206
    %v1237 = vpack.c.b16 %v1209, %v1208
    %v1238 = vpack.c.b16 %v1211, %v1210
    %v1239 = vpack.c.b16 %v1213, %v1212
    %v1240 = vpack.c.b16 %v1215, %v1214
    %v1241 = vpack.c.b16 %v1217, %v1216
    %1266 = vmatprep.subr.bf16.mxu0 0
    %1267 = vmatpush1.bf16.msra.mxu0 %v1218
    %1268 = vmatprep.subr.bf16.mxu0 0
    %1269 = vmatpush1.bf16.msra.mxu0 %v1219
    %1270 = vmatprep.subr.bf16.mxu0 0
    %1271 = vmatpush1.bf16.msra.mxu0 %v1220
    %1272 = vmatprep.subr.bf16.mxu0 0
    %1273 = vmatpush1.bf16.msra.mxu0 %v1221
    %1274 = vmatprep.subr.bf16.mxu0 0
    %1275 = vmatpush1.bf16.msra.mxu0 %v1222
    %1276 = vmatprep.subr.bf16.mxu0 0
    %1277 = vmatpush1.bf16.msra.mxu0 %v1223
    %1278 = vmatprep.subr.bf16.mxu0 0
    %1279 = vmatpush1.bf16.msra.mxu0 %v1224
    %1280 = vmatprep.subr.bf16.mxu0 0
    %1281 = vmatpush1.bf16.msra.mxu0 %v1225
    %1282 = vmatprep.subr.bf16.mxu0 0
    %1283 = vmatpush1.bf16.msra.mxu0 %v1226
    %1284 = vmatprep.subr.bf16.mxu0 0
    %1285 = vmatpush1.bf16.msra.mxu0 %v1227
    %1286 = vmatprep.subr.bf16.mxu0 0
    %1287 = vmatpush1.bf16.msra.mxu0 %v1228
    %1288 = vmatprep.subr.bf16.mxu0 0
    %1289 = vmatpush1.bf16.msra.mxu0 %v1229
    %1290 = vmatprep.subr.bf16.mxu0 0
    %1291 = vmatpush1.bf16.msra.mxu0 %v1230
    %1292 = vmatprep.subr.bf16.mxu0 0
    %1293 = vmatpush1.bf16.msra.mxu0 %v1231
    %1294 = vmatprep.subr.bf16.mxu0 0
    %1295 = vmatpush1.bf16.msra.mxu0 %v1232
    %1296 = vmatprep.subr.bf16.mxu0 0
    %1297 = vmatpush1.bf16.msra.mxu0 %v1233
    %1298 = vmatprep.mubr.bf16.mxu0 %v1068
    %1299 = vmatmul.mubr.bf16.gmra.mrb[0].mxu0 %v149
    %v1300 = vpop.f32.mrb[0].mxu0
    %v1301 = vadd.f32 %v1121, %v1300
    %v1302 = vpop.f32.mrb[0].mxu0
    %v1303 = vpop.f32.mrb[0].mxu0
    %v1304 = vpop.f32.mrb[0].mxu0
    %1305 = vdwg.mxu0
    %1306 = vmatprep.subr.bf16.mxu0 0
    %1307 = vmatpush1.bf16.msra.mxu0 %v1234
    %1308 = vmatprep.subr.bf16.mxu0 0
    %1309 = vmatpush1.bf16.msra.mxu0 %v1235
    %1310 = vmatprep.subr.bf16.mxu0 0
    %1311 = vmatpush1.bf16.msra.mxu0 %v1236
    %1312 = vmatprep.subr.bf16.mxu0 0
    %1313 = vmatpush1.bf16.msra.mxu0 %v1237
    %1314 = vmatprep.subr.bf16.mxu0 0
    %1315 = vmatpush1.bf16.msra.mxu0 %v1238
    %1316 = vmatprep.subr.bf16.mxu0 0
    %1317 = vmatpush1.bf16.msra.mxu0 %v1239
    %1318 = vmatprep.subr.bf16.mxu0 0
    %1319 = vmatpush1.bf16.msra.mxu0 %v1240
    %1320 = vmatprep.subr.bf16.mxu0 0
    %1321 = vmatpush1.bf16.msra.mxu0 %v1241
    %1322 = vmatprep.subr.bf16.mxu0 0
    %1323 = vmatpush1.bf16.msra.mxu0 0
    %1324 = vmatprep.subr.bf16.mxu0 0
    %1325 = vmatpush1.bf16.msra.mxu0 0
    %1326 = vmatprep.subr.bf16.mxu0 0
    %1327 = vmatpush1.bf16.msra.mxu0 0
    %1328 = vmatprep.subr.bf16.mxu0 0
    %1329 = vmatpush1.bf16.msra.mxu0 0
    %1330 = vmatprep.subr.bf16.mxu0 0
    %1331 = vmatpush1.bf16.msra.mxu0 0
    %1332 = vmatprep.subr.bf16.mxu0 0
    %1333 = vmatpush1.bf16.msra.mxu0 0
    %1334 = vmatprep.subr.bf16.mxu0 0
    %1335 = vmatpush1.bf16.msra.mxu0 0
    %1336 = vmatprep.subr.bf16.mxu0 0
    %1337 = vmatpush1.bf16.msra.mxu0 0
    %1338 = vmatprep.mubr.bf16.mxu0 0
    %1339 = vmatmul.mubr.bf16.gmra.mrb[0].mxu0 %v201
    %v1340 = vpop.f32.mrb[0].mxu0
    %v1341 = vadd.f32 %v1301, %v1340
    %v1342 = vpop.f32.mrb[0].mxu0
    %v1343 = vpop.f32.mrb[0].mxu0
    %v1344 = vpop.f32.mrb[0].mxu0
    %1345 = vdwg.mxu0
    %vm1346 = vcmp.gt.f32.partialorder %v1341, 0.0
    %v1347 = vmul.f32 %v1341, 1.442695
    %v1348 = vpow.pop %v1347
    %v1349 = vsub.f32 %v1348, 1.0
    %v1350 = vsel %vm1346, %v1341, %v1349
    %v1351 = vld [vmem:[#allocation2 + $0x240] sm:$0xf]
    %v1352 = vld [vmem:[#allocation2 + $0x244] sm:$0xf]
    %v1353 = vld [vmem:[#allocation2 + $0x248] sm:$0xf]
    %v1354 = vld [vmem:[#allocation2 + $0x24c] sm:$0xf]
    %v1355 = vld [vmem:[#allocation2 + $0x250] sm:$0xf]
    %v1356 = vld [vmem:[#allocation2 + $0x254] sm:$0xf]
    %v1357 = vld [vmem:[#allocation2 + $0x258] sm:$0xf]
    %v1358 = vld [vmem:[#allocation2 + $0x25c] sm:$0xf]
    %v1359 = vld [vmem:[#allocation2 + $0x260] sm:$0xf]
    %v1360 = vld [vmem:[#allocation2 + $0x264] sm:$0xf]
    %v1361 = vld [vmem:[#allocation2 + $0x268] sm:$0xf]
    %v1362 = vld [vmem:[#allocation2 + $0x26c] sm:$0xf]
    %v1363 = vld [vmem:[#allocation2 + $0x270] sm:$0xf]
    %v1364 = vld [vmem:[#allocation2 + $0x274] sm:$0xf]
    %v1365 = vld [vmem:[#allocation2 + $0x278] sm:$0xf]
    %v1366 = vld [vmem:[#allocation2 + $0x27c] sm:$0xf]
    %v1367 = vld [vmem:[#allocation5 + $0x4] sm:$0x1]
    %v1368 = vpack.c.bf16 %v1350, %v1350
    %v1369 = vlaneseq
    %v1370 = vshrl.u32 %v1369, 7
    %v1371 = vsub.s32 0, %v1370
    %v1372 = vrot.slane %v1367, %v1371
    %v1389 = vunpack.c.l.b16 %v1351
    %v1390 = vunpack.c.l.b16 %v1352
    %v1391 = vunpack.c.l.b16 %v1353
    %v1392 = vunpack.c.l.b16 %v1354
    %v1393 = vunpack.c.l.b16 %v1355
    %v1394 = vunpack.c.l.b16 %v1356
    %v1395 = vunpack.c.l.b16 %v1357
    %v1396 = vunpack.c.l.b16 %v1358
    %v1397 = vunpack.c.l.b16 %v1359
    %v1398 = vunpack.c.l.b16 %v1360
    %v1399 = vunpack.c.l.b16 %v1361
    %v1400 = vunpack.c.l.b16 %v1362
    %v1401 = vunpack.c.l.b16 %v1363
    %v1402 = vunpack.c.l.b16 %v1364
    %v1403 = vunpack.c.l.b16 %v1365
    %v1404 = vunpack.c.l.b16 %v1366
    %v1405 = vpack.c.b16 %v1390, %v1389
    %v1406 = vpack.c.b16 %v1392, %v1391
    %v1407 = vpack.c.b16 %v1394, %v1393
    %v1408 = vpack.c.b16 %v1396, %v1395
    %v1409 = vpack.c.b16 %v1398, %v1397
    %v1410 = vpack.c.b16 %v1400, %v1399
    %v1411 = vpack.c.b16 %v1402, %v1401
    %v1412 = vpack.c.b16 %v1404, %v1403
    %1421 = vmatprep.subr.bf16.mxu0 0
    %1422 = vmatpush1.bf16.msra.mxu0 %v1405
    %1423 = vmatprep.subr.bf16.mxu0 0
    %1424 = vmatpush1.bf16.msra.mxu0 %v1406
    %1425 = vmatprep.subr.bf16.mxu0 0
    %1426 = vmatpush1.bf16.msra.mxu0 %v1407
    %1427 = vmatprep.subr.bf16.mxu0 0
    %1428 = vmatpush1.bf16.msra.mxu0 %v1408
    %1429 = vmatprep.subr.bf16.mxu0 0
    %1430 = vmatpush1.bf16.msra.mxu0 %v1409
    %1431 = vmatprep.subr.bf16.mxu0 0
    %1432 = vmatpush1.bf16.msra.mxu0 %v1410
    %1433 = vmatprep.subr.bf16.mxu0 0
    %1434 = vmatpush1.bf16.msra.mxu0 %v1411
    %1435 = vmatprep.subr.bf16.mxu0 0
    %1436 = vmatpush1.bf16.msra.mxu0 %v1412
    %1437 = vmatprep.subr.bf16.mxu0 0
    %1438 = vmatpush1.bf16.msra.mxu0 0
    %1439 = vmatprep.subr.bf16.mxu0 0
    %1440 = vmatpush1.bf16.msra.mxu0 0
    %1441 = vmatprep.subr.bf16.mxu0 0
    %1442 = vmatpush1.bf16.msra.mxu0 0
    %1443 = vmatprep.subr.bf16.mxu0 0
    %1444 = vmatpush1.bf16.msra.mxu0 0
    %1445 = vmatprep.subr.bf16.mxu0 0
    %1446 = vmatpush1.bf16.msra.mxu0 0
    %1447 = vmatprep.subr.bf16.mxu0 0
    %1448 = vmatpush1.bf16.msra.mxu0 0
    %1449 = vmatprep.subr.bf16.mxu0 0
    %1450 = vmatpush1.bf16.msra.mxu0 0
    %1451 = vmatprep.subr.bf16.mxu0 0
    %1452 = vmatpush1.bf16.msra.mxu0 0
    %1453 = vmatprep.mubr.bf16.mxu0 0
    %1454 = vmatmul.mubr.bf16.gmra.mrb[0].mxu0 %v1368
    %v1455 = vpop.f32.mrb[0].mxu0
    %v1456 = vadd.f32 %v1372, %v1455
    %v1457 = vpop.f32.mrb[0].mxu0
    %v1458 = vpop.f32.mrb[0].mxu0
    %v1459 = vpop.f32.mrb[0].mxu0
    %1460 = vdwg.mxu0
    %vm1461 = vcmp.gt.f32.partialorder %v1456, 0.0
    %v1462 = vmul.f32 %v1456, 1.442695
    %v1463 = vpow.pop %v1462
    %v1464 = vsub.f32 %v1463, 1.0
    %v1465 = vsel %vm1461, %v1456, %v1464
    %v1466 = vld [vmem:[#allocation2 + $0x280] sm:$0xf]
    %v1467 = vld [vmem:[#allocation2 + $0x284] sm:$0xf]
    %v1468 = vld [vmem:[#allocation2 + $0x288] sm:$0xf]
    %v1469 = vld [vmem:[#allocation2 + $0x28c] sm:$0xf]
    %v1470 = vld [vmem:[#allocation2 + $0x290] sm:$0xf]
    %v1471 = vld [vmem:[#allocation2 + $0x294] sm:$0xf]
    %v1472 = vld [vmem:[#allocation2 + $0x298] sm:$0xf]
    %v1473 = vld [vmem:[#allocation2 + $0x29c] sm:$0xf]
    %v1474 = vld [vmem:[#allocation2 + $0x2a0] sm:$0xf]
    %v1475 = vld [vmem:[#allocation2 + $0x2a4] sm:$0xf]
    %v1476 = vld [vmem:[#allocation2 + $0x2a8] sm:$0xf]
    %v1477 = vld [vmem:[#allocation2 + $0x2ac] sm:$0xf]
    %v1478 = vld [vmem:[#allocation2 + $0x2b0] sm:$0xf]
    %v1479 = vld [vmem:[#allocation2 + $0x2b4] sm:$0xf]
    %v1480 = vld [vmem:[#allocation2 + $0x2b8] sm:$0xf]
    %v1481 = vld [vmem:[#allocation2 + $0x2bc] sm:$0xf]
    %v1482 = vld [vmem:[#allocation5 + $0x5] sm:$0x1]
    %v1483 = vpack.c.bf16 %v1465, %v1465
    %v1484 = vlaneseq
    %v1485 = vshrl.u32 %v1484, 7
    %v1486 = vsub.s32 0, %v1485
    %v1487 = vrot.slane %v1482, %v1486
    %v1504 = vunpack.c.l.b16 %v1466
    %v1505 = vunpack.c.l.b16 %v1467
    %v1506 = vunpack.c.l.b16 %v1468
    %v1507 = vunpack.c.l.b16 %v1469
    %v1508 = vunpack.c.l.b16 %v1470
    %v1509 = vunpack.c.l.b16 %v1471
    %v1510 = vunpack.c.l.b16 %v1472
    %v1511 = vunpack.c.l.b16 %v1473
    %v1512 = vunpack.c.l.b16 %v1474
    %v1513 = vunpack.c.l.b16 %v1475
    %v1514 = vunpack.c.l.b16 %v1476
    %v1515 = vunpack.c.l.b16 %v1477
    %v1516 = vunpack.c.l.b16 %v1478
    %v1517 = vunpack.c.l.b16 %v1479
    %v1518 = vunpack.c.l.b16 %v1480
    %v1519 = vunpack.c.l.b16 %v1481
    %v1520 = vpack.c.b16 %v1505, %v1504
    %v1521 = vpack.c.b16 %v1507, %v1506
    %v1522 = vpack.c.b16 %v1509, %v1508
    %v1523 = vpack.c.b16 %v1511, %v1510
    %v1524 = vpack.c.b16 %v1513, %v1512
    %v1525 = vpack.c.b16 %v1515, %v1514
    %v1526 = vpack.c.b16 %v1517, %v1516
    %v1527 = vpack.c.b16 %v1519, %v1518
    %1536 = vmatprep.subr.bf16.mxu0 0
    %1537 = vmatpush1.bf16.msra.mxu0 %v1520
    %1538 = vmatprep.subr.bf16.mxu0 0
    %1539 = vmatpush1.bf16.msra.mxu0 %v1521
    %1540 = vmatprep.subr.bf16.mxu0 0
    %1541 = vmatpush1.bf16.msra.mxu0 %v1522
    %1542 = vmatprep.subr.bf16.mxu0 0
    %1543 = vmatpush1.bf16.msra.mxu0 %v1523
    %1544 = vmatprep.subr.bf16.mxu0 0
    %1545 = vmatpush1.bf16.msra.mxu0 %v1524
    %1546 = vmatprep.subr.bf16.mxu0 0
    %1547 = vmatpush1.bf16.msra.mxu0 %v1525
    %1548 = vmatprep.subr.bf16.mxu0 0
    %1549 = vmatpush1.bf16.msra.mxu0 %v1526
    %1550 = vmatprep.subr.bf16.mxu0 0
    %1551 = vmatpush1.bf16.msra.mxu0 %v1527
    %1552 = vmatprep.subr.bf16.mxu0 0
    %1553 = vmatpush1.bf16.msra.mxu0 0
    %1554 = vmatprep.subr.bf16.mxu0 0
    %1555 = vmatpush1.bf16.msra.mxu0 0
    %1556 = vmatprep.subr.bf16.mxu0 0
    %1557 = vmatpush1.bf16.msra.mxu0 0
    %1558 = vmatprep.subr.bf16.mxu0 0
    %1559 = vmatpush1.bf16.msra.mxu0 0
    %1560 = vmatprep.subr.bf16.mxu0 0
    %1561 = vmatpush1.bf16.msra.mxu0 0
    %1562 = vmatprep.subr.bf16.mxu0 0
    %1563 = vmatpush1.bf16.msra.mxu0 0
    %1564 = vmatprep.subr.bf16.mxu0 0
    %1565 = vmatpush1.bf16.msra.mxu0 0
    %1566 = vmatprep.subr.bf16.mxu0 0
    %1567 = vmatpush1.bf16.msra.mxu0 0
    %1568 = vmatprep.mubr.bf16.mxu0 0
    %1569 = vmatmul.mubr.bf16.gmra.mrb[0].mxu0 %v1483
    %v1570 = vpop.f32.mrb[0].mxu0
    %v1571 = vadd.f32 %v1487, %v1570
    %v1572 = vpop.f32.mrb[0].mxu0
    %v1573 = vpop.f32.mrb[0].mxu0
    %v1574 = vpop.f32.mrb[0].mxu0
    %1575 = vdwg.mxu0
    %v1576 = vpack.c.bf16 %v1571, %v1571
    %v1578 = vsel %vm210, %v139, 0
    %v1581 = vsel %vm217, %v1576, 0
    %1583 = vmatprep.subr.bf16.mxu0 0
    %1584 = vmatpush1.bf16.msra.mxu0 %v1581
    %1585 = vmatprep.subr.bf16.mxu0 0
    %1586 = vmatpush1.bf16.msra.mxu0 0
    %1587 = vmatprep.subr.bf16.mxu0 0
    %1588 = vmatpush1.bf16.msra.mxu0 0
    %1589 = vmatprep.subr.bf16.mxu0 0
    %1590 = vmatpush1.bf16.msra.mxu0 0
    %1591 = vmatprep.subr.bf16.mxu0 0
    %1592 = vmatpush1.bf16.msra.mxu0 0
    %1593 = vmatprep.subr.bf16.mxu0 0
    %1594 = vmatpush1.bf16.msra.mxu0 0
    %1595 = vmatprep.subr.bf16.mxu0 0
    %1596 = vmatpush1.bf16.msra.mxu0 0
    %1597 = vmatprep.subr.bf16.mxu0 0
    %1598 = vmatpush1.bf16.msra.mxu0 0
    %1599 = vmatprep.subr.bf16.mxu0 0
    %1600 = vmatpush1.bf16.msra.mxu0 0
    %1601 = vmatprep.subr.bf16.mxu0 0
    %1602 = vmatpush1.bf16.msra.mxu0 0
    %1603 = vmatprep.subr.bf16.mxu0 0
    %1604 = vmatpush1.bf16.msra.mxu0 0
    %1605 = vmatprep.subr.bf16.mxu0 0
    %1606 = vmatpush1.bf16.msra.mxu0 0
    %1607 = vmatprep.subr.bf16.mxu0 0
    %1608 = vmatpush1.bf16.msra.mxu0 0
    %1609 = vmatprep.subr.bf16.mxu0 0
    %1610 = vmatpush1.bf16.msra.mxu0 0
    %1611 = vmatprep.subr.bf16.mxu0 0
    %1612 = vmatpush1.bf16.msra.mxu0 0
    %1613 = vmatprep.subr.bf16.mxu0 0
    %1614 = vmatpush1.bf16.msra.mxu0 0
    %1615 = vmatprep.mubr.bf16.mxu0 0
    %1616 = vmatmul.mubr.bf16.gmra.mrb[0].mxu0 %v1578
    %v1617 = vpop.f32.mrb[0].mxu0
    %v1618 = vadd.f32 0.0, %v1617
    %v1619 = vpop.f32.mrb[0].mxu0
    %v1620 = vpop.f32.mrb[0].mxu0
    %v1621 = vpop.f32.mrb[0].mxu0
    %1622 = vdwg.mxu0
    %1624 = vset.pattern.permute.xlu0 0
    %1625 = vperm.xlu0 %1624, %v142
    %v1626 = vpop.permute.xlu0 %1625
    %v1628 = vmul.f32 %v1618, %v1626
    %v1630 = vsel %vm1015, %v140, 0
    %1632 = vmatprep.subr.bf16.mxu0 0
    %1633 = vmatpush1.bf16.msra.mxu0 %v1013
    %1634 = vmatprep.subr.bf16.mxu0 0
    %1635 = vmatpush1.bf16.msra.mxu0 %v1020
    %1636 = vmatprep.subr.bf16.mxu0 0
    %1637 = vmatpush1.bf16.msra.mxu0 0
    %1638 = vmatprep.subr.bf16.mxu0 0
    %1639 = vmatpush1.bf16.msra.mxu0 0
    %1640 = vmatprep.subr.bf16.mxu0 0
    %1641 = vmatpush1.bf16.msra.mxu0 0
    %1642 = vmatprep.subr.bf16.mxu0 0
    %1643 = vmatpush1.bf16.msra.mxu0 0
    %1644 = vmatprep.subr.bf16.mxu0 0
    %1645 = vmatpush1.bf16.msra.mxu0 0
    %1646 = vmatprep.subr.bf16.mxu0 0
    %1647 = vmatpush1.bf16.msra.mxu0 0
    %1648 = vmatprep.subr.bf16.mxu0 0
    %1649 = vmatpush1.bf16.msra.mxu0 0
    %1650 = vmatprep.subr.bf16.mxu0 0
    %1651 = vmatpush1.bf16.msra.mxu0 0
    %1652 = vmatprep.subr.bf16.mxu0 0
    %1653 = vmatpush1.bf16.msra.mxu0 0
    %1654 = vmatprep.subr.bf16.mxu0 0
    %1655 = vmatpush1.bf16.msra.mxu0 0
    %1656 = vmatprep.subr.bf16.mxu0 0
    %1657 = vmatpush1.bf16.msra.mxu0 0
    %1658 = vmatprep.subr.bf16.mxu0 0
    %1659 = vmatpush1.bf16.msra.mxu0 0
    %1660 = vmatprep.subr.bf16.mxu0 0
    %1661 = vmatpush1.bf16.msra.mxu0 0
    %1662 = vmatprep.subr.bf16.mxu0 0
    %1663 = vmatpush1.bf16.msra.mxu0 0
    %1664 = vmatprep.mubr.bf16.mxu0 0
    %1665 = vmatmul.mubr.bf16.gmra.mrb[0].mxu0 %v1630
    %v1666 = vpop.f32.mrb[0].mxu0
    %v1667 = vadd.f32 0.0, %v1666
    %v1668 = vpop.f32.mrb[0].mxu0
    %v1669 = vpop.f32.mrb[0].mxu0
    %v1670 = vpop.f32.mrb[0].mxu0
    %1671 = vdwg.mxu0
    %1673 = vset.pattern.permute.xlu0 0
    %1674 = vperm.xlu0 %1673, %v143
    %v1675 = vpop.permute.xlu0 %1674
    %v1677 = vmul.f32 %v1667, %v1675
    %v1678 = vpack.c.bf16 %v1628, %v1628
    %v1679 = vpack.c.bf16 %v1677, %v1677
    %v1680 = vld [vmem:[#allocation2 + $0x2c0] sm:$0xf]
    %v1681 = vld [vmem:[#allocation2 + $0x2c4] sm:$0xf]
    %v1682 = vld [vmem:[#allocation2 + $0x2c8] sm:$0xf]
    %v1683 = vld [vmem:[#allocation2 + $0x2cc] sm:$0xf]
    %v1684 = vld [vmem:[#allocation2 + $0x2d0] sm:$0xf]
    %v1685 = vld [vmem:[#allocation2 + $0x2d4] sm:$0xf]
    %v1686 = vld [vmem:[#allocation2 + $0x2d8] sm:$0xf]
    %v1687 = vld [vmem:[#allocation2 + $0x2dc] sm:$0xf]
    %v1688 = vld [vmem:[#allocation2 + $0x2e0] sm:$0xf]
    %v1689 = vld [vmem:[#allocation2 + $0x2e4] sm:$0xf]
    %v1690 = vld [vmem:[#allocation2 + $0x2e8] sm:$0xf]
    %v1691 = vld [vmem:[#allocation2 + $0x2ec] sm:$0xf]
    %v1692 = vld [vmem:[#allocation2 + $0x2f0] sm:$0xf]
    %v1693 = vld [vmem:[#allocation2 + $0x2f4] sm:$0xf]
    %v1694 = vld [vmem:[#allocation2 + $0x2f8] sm:$0xf]
    %v1695 = vld [vmem:[#allocation2 + $0x2fc] sm:$0xf]
    %v1696 = vld [vmem:[#allocation2 + $0x300] sm:$0xf]
    %v1697 = vld [vmem:[#allocation2 + $0x304] sm:$0xf]
    %v1698 = vld [vmem:[#allocation2 + $0x308] sm:$0xf]
    %v1699 = vld [vmem:[#allocation2 + $0x30c] sm:$0xf]
    %v1700 = vld [vmem:[#allocation2 + $0x310] sm:$0xf]
    %v1701 = vld [vmem:[#allocation2 + $0x314] sm:$0xf]
    %v1702 = vld [vmem:[#allocation2 + $0x318] sm:$0xf]
    %v1703 = vld [vmem:[#allocation2 + $0x31c] sm:$0xf]
    %v1704 = vld [vmem:[#allocation2 + $0x320] sm:$0xf]
    %v1705 = vld [vmem:[#allocation2 + $0x324] sm:$0xf]
    %v1706 = vld [vmem:[#allocation2 + $0x328] sm:$0xf]
    %v1707 = vld [vmem:[#allocation2 + $0x32c] sm:$0xf]
    %v1708 = vld [vmem:[#allocation2 + $0x330] sm:$0xf]
    %v1709 = vld [vmem:[#allocation2 + $0x334] sm:$0xf]
    %v1710 = vld [vmem:[#allocation2 + $0x338] sm:$0xf]
    %v1711 = vld [vmem:[#allocation2 + $0x33c] sm:$0xf]
    %v1712 = vld [vmem:[#allocation2 + $0x340] sm:$0xf]
    %v1713 = vld [vmem:[#allocation2 + $0x344] sm:$0xf]
    %v1714 = vld [vmem:[#allocation2 + $0x348] sm:$0xf]
    %v1715 = vld [vmem:[#allocation2 + $0x34c] sm:$0xf]
    %v1716 = vld [vmem:[#allocation2 + $0x350] sm:$0xf]
    %v1717 = vld [vmem:[#allocation2 + $0x354] sm:$0xf]
    %v1718 = vld [vmem:[#allocation2 + $0x358] sm:$0xf]
    %v1719 = vld [vmem:[#allocation2 + $0x35c] sm:$0xf]
    %v1720 = vld [vmem:[#allocation2 + $0x360] sm:$0xf]
    %v1721 = vld [vmem:[#allocation2 + $0x364] sm:$0xf]
    %v1722 = vld [vmem:[#allocation2 + $0x368] sm:$0xf]
    %v1723 = vld [vmem:[#allocation2 + $0x36c] sm:$0xf]
    %v1724 = vld [vmem:[#allocation2 + $0x370] sm:$0xf]
    %v1725 = vld [vmem:[#allocation2 + $0x374] sm:$0xf]
    %v1726 = vld [vmem:[#allocation2 + $0x378] sm:$0xf]
    %v1727 = vld [vmem:[#allocation2 + $0x37c] sm:$0xf]
    %v1728 = vld [vmem:[#allocation5 + $0x6] sm:$0x1]
    %v1729 = vlaneseq
    %v1730 = vshrl.u32 %v1729, 7
    %v1731 = vsub.s32 0, %v1730
    %v1732 = vrot.slane %v1728, %v1731
    %v1781 = vunpack.c.l.b16 %v1680
    %v1782 = vunpack.c.l.b16 %v1681
    %v1783 = vunpack.c.l.b16 %v1682
    %v1784 = vunpack.c.l.b16 %v1683
    %v1785 = vunpack.c.l.b16 %v1684
    %v1786 = vunpack.c.l.b16 %v1685
    %v1787 = vunpack.c.l.b16 %v1686
    %v1788 = vunpack.c.l.b16 %v1687
    %v1789 = vunpack.c.l.b16 %v1688
    %v1790 = vunpack.c.l.b16 %v1689
    %v1791 = vunpack.c.l.b16 %v1690
    %v1792 = vunpack.c.l.b16 %v1691
    %v1793 = vunpack.c.l.b16 %v1692
    %v1794 = vunpack.c.l.b16 %v1693
    %v1795 = vunpack.c.l.b16 %v1694
    %v1796 = vunpack.c.l.b16 %v1695
    %v1797 = vunpack.c.l.b16 %v1696
    %v1798 = vunpack.c.l.b16 %v1697
    %v1799 = vunpack.c.l.b16 %v1698
    %v1800 = vunpack.c.l.b16 %v1699
    %v1801 = vunpack.c.l.b16 %v1700
    %v1802 = vunpack.c.l.b16 %v1701
    %v1803 = vunpack.c.l.b16 %v1702
    %v1804 = vunpack.c.l.b16 %v1703
    %v1805 = vunpack.c.l.b16 %v1704
    %v1806 = vunpack.c.l.b16 %v1705
    %v1807 = vunpack.c.l.b16 %v1706
    %v1808 = vunpack.c.l.b16 %v1707
    %v1809 = vunpack.c.l.b16 %v1708
    %v1810 = vunpack.c.l.b16 %v1709
    %v1811 = vunpack.c.l.b16 %v1710
    %v1812 = vunpack.c.l.b16 %v1711
    %v1813 = vunpack.c.l.b16 %v1712
    %v1814 = vunpack.c.l.b16 %v1713
    %v1815 = vunpack.c.l.b16 %v1714
    %v1816 = vunpack.c.l.b16 %v1715
    %v1817 = vunpack.c.l.b16 %v1716
    %v1818 = vunpack.c.l.b16 %v1717
    %v1819 = vunpack.c.l.b16 %v1718
    %v1820 = vunpack.c.l.b16 %v1719
    %v1821 = vunpack.c.l.b16 %v1720
    %v1822 = vunpack.c.l.b16 %v1721
    %v1823 = vunpack.c.l.b16 %v1722
    %v1824 = vunpack.c.l.b16 %v1723
    %v1825 = vunpack.c.l.b16 %v1724
    %v1826 = vunpack.c.l.b16 %v1725
    %v1827 = vunpack.c.l.b16 %v1726
    %v1828 = vunpack.c.l.b16 %v1727
    %v1829 = vpack.c.b16 %v1782, %v1781
    %v1830 = vpack.c.b16 %v1784, %v1783
    %v1831 = vpack.c.b16 %v1786, %v1785
    %v1832 = vpack.c.b16 %v1788, %v1787
    %v1833 = vpack.c.b16 %v1790, %v1789
    %v1834 = vpack.c.b16 %v1792, %v1791
    %v1835 = vpack.c.b16 %v1794, %v1793
    %v1836 = vpack.c.b16 %v1796, %v1795
    %v1837 = vpack.c.b16 %v1798, %v1797
    %v1838 = vpack.c.b16 %v1800, %v1799
    %v1839 = vpack.c.b16 %v1802, %v1801
    %v1840 = vpack.c.b16 %v1804, %v1803
    %v1841 = vpack.c.b16 %v1806, %v1805
    %v1842 = vpack.c.b16 %v1808, %v1807
    %v1843 = vpack.c.b16 %v1810, %v1809
    %v1844 = vpack.c.b16 %v1812, %v1811
    %v1845 = vpack.c.b16 %v1814, %v1813
    %v1846 = vpack.c.b16 %v1816, %v1815
    %v1847 = vpack.c.b16 %v1818, %v1817
    %v1848 = vpack.c.b16 %v1820, %v1819
    %v1849 = vpack.c.b16 %v1822, %v1821
    %v1850 = vpack.c.b16 %v1824, %v1823
    %v1851 = vpack.c.b16 %v1826, %v1825
    %v1852 = vpack.c.b16 %v1828, %v1827
    %1877 = vmatprep.subr.bf16.mxu0 0
    %1878 = vmatpush1.bf16.msra.mxu0 %v1829
    %1879 = vmatprep.subr.bf16.mxu0 0
    %1880 = vmatpush1.bf16.msra.mxu0 %v1830
    %1881 = vmatprep.subr.bf16.mxu0 0
    %1882 = vmatpush1.bf16.msra.mxu0 %v1831
    %1883 = vmatprep.subr.bf16.mxu0 0
    %1884 = vmatpush1.bf16.msra.mxu0 %v1832
    %1885 = vmatprep.subr.bf16.mxu0 0
    %1886 = vmatpush1.bf16.msra.mxu0 %v1833
    %1887 = vmatprep.subr.bf16.mxu0 0
    %1888 = vmatpush1.bf16.msra.mxu0 %v1834
    %1889 = vmatprep.subr.bf16.mxu0 0
    %1890 = vmatpush1.bf16.msra.mxu0 %v1835
    %1891 = vmatprep.subr.bf16.mxu0 0
    %1892 = vmatpush1.bf16.msra.mxu0 %v1836
    %1893 = vmatprep.subr.bf16.mxu0 0
    %1894 = vmatpush1.bf16.msra.mxu0 %v1837
    %1895 = vmatprep.subr.bf16.mxu0 0
    %1896 = vmatpush1.bf16.msra.mxu0 %v1838
    %1897 = vmatprep.subr.bf16.mxu0 0
    %1898 = vmatpush1.bf16.msra.mxu0 %v1839
    %1899 = vmatprep.subr.bf16.mxu0 0
    %1900 = vmatpush1.bf16.msra.mxu0 %v1840
    %1901 = vmatprep.subr.bf16.mxu0 0
    %1902 = vmatpush1.bf16.msra.mxu0 %v1841
    %1903 = vmatprep.subr.bf16.mxu0 0
    %1904 = vmatpush1.bf16.msra.mxu0 %v1842
    %1905 = vmatprep.subr.bf16.mxu0 0
    %1906 = vmatpush1.bf16.msra.mxu0 %v1843
    %1907 = vmatprep.subr.bf16.mxu0 0
    %1908 = vmatpush1.bf16.msra.mxu0 %v1844
    %1909 = vmatprep.mubr.bf16.mxu0 %v1678
    %1910 = vmatmul.mubr.bf16.gmra.mrb[0].mxu0 %v152
    %v1911 = vpop.f32.mrb[0].mxu0
    %v1912 = vadd.f32 %v1732, %v1911
    %v1913 = vpop.f32.mrb[0].mxu0
    %v1914 = vpop.f32.mrb[0].mxu0
    %v1915 = vpop.f32.mrb[0].mxu0
    %1916 = vdwg.mxu0
    %1917 = vmatprep.subr.bf16.mxu0 0
    %1918 = vmatpush1.bf16.msra.mxu0 %v1845
    %1919 = vmatprep.subr.bf16.mxu0 0
    %1920 = vmatpush1.bf16.msra.mxu0 %v1846
    %1921 = vmatprep.subr.bf16.mxu0 0
    %1922 = vmatpush1.bf16.msra.mxu0 %v1847
    %1923 = vmatprep.subr.bf16.mxu0 0
    %1924 = vmatpush1.bf16.msra.mxu0 %v1848
    %1925 = vmatprep.subr.bf16.mxu0 0
    %1926 = vmatpush1.bf16.msra.mxu0 %v1849
    %1927 = vmatprep.subr.bf16.mxu0 0
    %1928 = vmatpush1.bf16.msra.mxu0 %v1850
    %1929 = vmatprep.subr.bf16.mxu0 0
    %1930 = vmatpush1.bf16.msra.mxu0 %v1851
    %1931 = vmatprep.subr.bf16.mxu0 0
    %1932 = vmatpush1.bf16.msra.mxu0 %v1852
    %1933 = vmatprep.subr.bf16.mxu0 0
    %1934 = vmatpush1.bf16.msra.mxu0 0
    %1935 = vmatprep.subr.bf16.mxu0 0
    %1936 = vmatpush1.bf16.msra.mxu0 0
    %1937 = vmatprep.subr.bf16.mxu0 0
    %1938 = vmatpush1.bf16.msra.mxu0 0
    %1939 = vmatprep.subr.bf16.mxu0 0
    %1940 = vmatpush1.bf16.msra.mxu0 0
    %1941 = vmatprep.subr.bf16.mxu0 0
    %1942 = vmatpush1.bf16.msra.mxu0 0
    %1943 = vmatprep.subr.bf16.mxu0 0
    %1944 = vmatpush1.bf16.msra.mxu0 0
    %1945 = vmatprep.subr.bf16.mxu0 0
    %1946 = vmatpush1.bf16.msra.mxu0 0
    %1947 = vmatprep.subr.bf16.mxu0 0
    %1948 = vmatpush1.bf16.msra.mxu0 0
    %1949 = vmatprep.mubr.bf16.mxu0 0
    %1950 = vmatmul.mubr.bf16.gmra.mrb[0].mxu0 %v1679
    %v1951 = vpop.f32.mrb[0].mxu0
    %v1952 = vadd.f32 %v1912, %v1951
    %v1953 = vpop.f32.mrb[0].mxu0
    %v1954 = vpop.f32.mrb[0].mxu0
    %v1955 = vpop.f32.mrb[0].mxu0
    %1956 = vdwg.mxu0
    %vm1957 = vcmp.gt.f32.partialorder %v1952, 0.0
    %v1958 = vmul.f32 %v1952, 1.442695
    %v1959 = vpow.pop %v1958
    %v1960 = vsub.f32 %v1959, 1.0
    %v1961 = vsel %vm1957, %v1952, %v1960
    %v1962 = vld [vmem:[#allocation2 + $0x380] sm:$0xf]
    %v1963 = vld [vmem:[#allocation2 + $0x384] sm:$0xf]
    %v1964 = vld [vmem:[#allocation2 + $0x388] sm:$0xf]
    %v1965 = vld [vmem:[#allocation2 + $0x38c] sm:$0xf]
    %v1966 = vld [vmem:[#allocation2 + $0x390] sm:$0xf]
    %v1967 = vld [vmem:[#allocation2 + $0x394] sm:$0xf]
    %v1968 = vld [vmem:[#allocation2 + $0x398] sm:$0xf]
    %v1969 = vld [vmem:[#allocation2 + $0x39c] sm:$0xf]
    %v1970 = vld [vmem:[#allocation2 + $0x3a0] sm:$0xf]
    %v1971 = vld [vmem:[#allocation2 + $0x3a4] sm:$0xf]
    %v1972 = vld [vmem:[#allocation2 + $0x3a8] sm:$0xf]
    %v1973 = vld [vmem:[#allocation2 + $0x3ac] sm:$0xf]
    %v1974 = vld [vmem:[#allocation2 + $0x3b0] sm:$0xf]
    %v1975 = vld [vmem:[#allocation2 + $0x3b4] sm:$0xf]
    %v1976 = vld [vmem:[#allocation2 + $0x3b8] sm:$0xf]
    %v1977 = vld [vmem:[#allocation2 + $0x3bc] sm:$0xf]
    %v1978 = vld [vmem:[#allocation5 + $0x7] sm:$0x1]
    %v1979 = vpack.c.bf16 %v1961, %v1961
    %v1980 = vlaneseq
    %v1981 = vshrl.u32 %v1980, 7
    %v1982 = vsub.s32 0, %v1981
    %v1983 = vrot.slane %v1978, %v1982
    %v2000 = vunpack.c.l.b16 %v1962
    %v2001 = vunpack.c.l.b16 %v1963
    %v2002 = vunpack.c.l.b16 %v1964
    %v2003 = vunpack.c.l.b16 %v1965
    %v2004 = vunpack.c.l.b16 %v1966
    %v2005 = vunpack.c.l.b16 %v1967
    %v2006 = vunpack.c.l.b16 %v1968
    %v2007 = vunpack.c.l.b16 %v1969
    %v2008 = vunpack.c.l.b16 %v1970
    %v2009 = vunpack.c.l.b16 %v1971
    %v2010 = vunpack.c.l.b16 %v1972
    %v2011 = vunpack.c.l.b16 %v1973
    %v2012 = vunpack.c.l.b16 %v1974
    %v2013 = vunpack.c.l.b16 %v1975
    %v2014 = vunpack.c.l.b16 %v1976
    %v2015 = vunpack.c.l.b16 %v1977
    %v2016 = vpack.c.b16 %v2001, %v2000
    %v2017 = vpack.c.b16 %v2003, %v2002
    %v2018 = vpack.c.b16 %v2005, %v2004
    %v2019 = vpack.c.b16 %v2007, %v2006
    %v2020 = vpack.c.b16 %v2009, %v2008
    %v2021 = vpack.c.b16 %v2011, %v2010
    %v2022 = vpack.c.b16 %v2013, %v2012
    %v2023 = vpack.c.b16 %v2015, %v2014
    %2032 = vmatprep.subr.bf16.mxu0 0
    %2033 = vmatpush1.bf16.msra.mxu0 %v2016
    %2034 = vmatprep.subr.bf16.mxu0 0
    %2035 = vmatpush1.bf16.msra.mxu0 %v2017
    %2036 = vmatprep.subr.bf16.mxu0 0
    %2037 = vmatpush1.bf16.msra.mxu0 %v2018
    %2038 = vmatprep.subr.bf16.mxu0 0
    %2039 = vmatpush1.bf16.msra.mxu0 %v2019
    %2040 = vmatprep.subr.bf16.mxu0 0
    %2041 = vmatpush1.bf16.msra.mxu0 %v2020
    %2042 = vmatprep.subr.bf16.mxu0 0
    %2043 = vmatpush1.bf16.msra.mxu0 %v2021
    %2044 = vmatprep.subr.bf16.mxu0 0
    %2045 = vmatpush1.bf16.msra.mxu0 %v2022
    %2046 = vmatprep.subr.bf16.mxu0 0
    %2047 = vmatpush1.bf16.msra.mxu0 %v2023
    %2048 = vmatprep.subr.bf16.mxu0 0
    %2049 = vmatpush1.bf16.msra.mxu0 0
    %2050 = vmatprep.subr.bf16.mxu0 0
    %2051 = vmatpush1.bf16.msra.mxu0 0
    %2052 = vmatprep.subr.bf16.mxu0 0
    %2053 = vmatpush1.bf16.msra.mxu0 0
    %2054 = vmatprep.subr.bf16.mxu0 0
    %2055 = vmatpush1.bf16.msra.mxu0 0
    %2056 = vmatprep.subr.bf16.mxu0 0
    %2057 = vmatpush1.bf16.msra.mxu0 0
    %2058 = vmatprep.subr.bf16.mxu0 0
    %2059 = vmatpush1.bf16.msra.mxu0 0
    %2060 = vmatprep.subr.bf16.mxu0 0
    %2061 = vmatpush1.bf16.msra.mxu0 0
    %2062 = vmatprep.subr.bf16.mxu0 0
    %2063 = vmatpush1.bf16.msra.mxu0 0
    %2064 = vmatprep.mubr.bf16.mxu0 0
    %2065 = vmatmul.mubr.bf16.gmra.mrb[0].mxu0 %v1979
    %v2066 = vpop.f32.mrb[0].mxu0
    %v2067 = vadd.f32 %v1983, %v2066
    %v2068 = vpop.f32.mrb[0].mxu0
    %v2069 = vpop.f32.mrb[0].mxu0
    %v2070 = vpop.f32.mrb[0].mxu0
    %2071 = vdwg.mxu0
    %vm2072 = vcmp.gt.f32.partialorder %v2067, 0.0
    %v2073 = vmul.f32 %v2067, 1.442695
    %v2074 = vpow.pop %v2073
    %v2075 = vsub.f32 %v2074, 1.0
    %v2076 = vsel %vm2072, %v2067, %v2075
    %v2077 = vld [vmem:[#allocation2 + $0x3c0] sm:$0xf]
    %v2078 = vld [vmem:[#allocation2 + $0x3c4] sm:$0xf]
    %v2079 = vld [vmem:[#allocation2 + $0x3c8] sm:$0xf]
    %v2080 = vld [vmem:[#allocation2 + $0x3cc] sm:$0xf]
    %v2081 = vld [vmem:[#allocation2 + $0x3d0] sm:$0xf]
    %v2082 = vld [vmem:[#allocation2 + $0x3d4] sm:$0xf]
    %v2083 = vld [vmem:[#allocation2 + $0x3d8] sm:$0xf]
    %v2084 = vld [vmem:[#allocation2 + $0x3dc] sm:$0xf]
    %v2085 = vld [vmem:[#allocation2 + $0x3e0] sm:$0xf]
    %v2086 = vld [vmem:[#allocation2 + $0x3e4] sm:$0xf]
    %v2087 = vld [vmem:[#allocation2 + $0x3e8] sm:$0xf]
    %v2088 = vld [vmem:[#allocation2 + $0x3ec] sm:$0xf]
    %v2089 = vld [vmem:[#allocation2 + $0x3f0] sm:$0xf]
    %v2090 = vld [vmem:[#allocation2 + $0x3f4] sm:$0xf]
    %v2091 = vld [vmem:[#allocation2 + $0x3f8] sm:$0xf]
    %v2092 = vld [vmem:[#allocation2 + $0x3fc] sm:$0xf]
    %v2093 = vld [vmem:[#allocation5 + $0x8] sm:$0x1]
    %v2094 = vpack.c.bf16 %v2076, %v2076
    %v2095 = vlaneseq
    %v2096 = vshrl.u32 %v2095, 7
    %v2097 = vsub.s32 0, %v2096
    %v2098 = vrot.slane %v2093, %v2097
    %v2115 = vunpack.c.l.b16 %v2077
    %v2116 = vunpack.c.l.b16 %v2078
    %v2117 = vunpack.c.l.b16 %v2079
    %v2118 = vunpack.c.l.b16 %v2080
    %v2119 = vunpack.c.l.b16 %v2081
    %v2120 = vunpack.c.l.b16 %v2082
    %v2121 = vunpack.c.l.b16 %v2083
    %v2122 = vunpack.c.l.b16 %v2084
    %v2123 = vunpack.c.l.b16 %v2085
    %v2124 = vunpack.c.l.b16 %v2086
    %v2125 = vunpack.c.l.b16 %v2087
    %v2126 = vunpack.c.l.b16 %v2088
    %v2127 = vunpack.c.l.b16 %v2089
    %v2128 = vunpack.c.l.b16 %v2090
    %v2129 = vunpack.c.l.b16 %v2091
    %v2130 = vunpack.c.l.b16 %v2092
    %v2131 = vpack.c.b16 %v2116, %v2115
    %v2132 = vpack.c.b16 %v2118, %v2117
    %v2133 = vpack.c.b16 %v2120, %v2119
    %v2134 = vpack.c.b16 %v2122, %v2121
    %v2135 = vpack.c.b16 %v2124, %v2123
    %v2136 = vpack.c.b16 %v2126, %v2125
    %v2137 = vpack.c.b16 %v2128, %v2127
    %v2138 = vpack.c.b16 %v2130, %v2129
    %2147 = vmatprep.subr.bf16.mxu0 0
    %2148 = vmatpush1.bf16.msra.mxu0 %v2131
    %2149 = vmatprep.subr.bf16.mxu0 0
    %2150 = vmatpush1.bf16.msra.mxu0 %v2132
    %2151 = vmatprep.subr.bf16.mxu0 0
    %2152 = vmatpush1.bf16.msra.mxu0 %v2133
    %2153 = vmatprep.subr.bf16.mxu0 0
    %2154 = vmatpush1.bf16.msra.mxu0 %v2134
    %2155 = vmatprep.subr.bf16.mxu0 0
    %2156 = vmatpush1.bf16.msra.mxu0 %v2135
    %2157 = vmatprep.subr.bf16.mxu0 0
    %2158 = vmatpush1.bf16.msra.mxu0 %v2136
    %2159 = vmatprep.subr.bf16.mxu0 0
    %2160 = vmatpush1.bf16.msra.mxu0 %v2137
    %2161 = vmatprep.subr.bf16.mxu0 0
    %2162 = vmatpush1.bf16.msra.mxu0 %v2138
    %2163 = vmatprep.subr.bf16.mxu0 0
    %2164 = vmatpush1.bf16.msra.mxu0 0
    %2165 = vmatprep.subr.bf16.mxu0 0
    %2166 = vmatpush1.bf16.msra.mxu0 0
    %2167 = vmatprep.subr.bf16.mxu0 0
    %2168 = vmatpush1.bf16.msra.mxu0 0
    %2169 = vmatprep.subr.bf16.mxu0 0
    %2170 = vmatpush1.bf16.msra.mxu0 0
    %2171 = vmatprep.subr.bf16.mxu0 0
    %2172 = vmatpush1.bf16.msra.mxu0 0
    %2173 = vmatprep.subr.bf16.mxu0 0
    %2174 = vmatpush1.bf16.msra.mxu0 0
    %2175 = vmatprep.subr.bf16.mxu0 0
    %2176 = vmatpush1.bf16.msra.mxu0 0
    %2177 = vmatprep.subr.bf16.mxu0 0
    %2178 = vmatpush1.bf16.msra.mxu0 0
    %2179 = vmatprep.mubr.bf16.mxu0 0
    %2180 = vmatmul.mubr.bf16.gmra.mrb[0].mxu0 %v2094
    %v2181 = vpop.f32.mrb[0].mxu0
    %v2182 = vadd.f32 %v2098, %v2181
    %v2183 = vpop.f32.mrb[0].mxu0
    %v2184 = vpop.f32.mrb[0].mxu0
    %v2185 = vpop.f32.mrb[0].mxu0
    %2186 = vdwg.mxu0
    %v2187 = vpack.c.bf16 %v2182, %v2182
    %v2189 = vsel %vm157, %v2187, 0
    %2191 = vmatprep.subr.bf16.mxu0 0
    %2192 = vmatpush1.bf16.msra.mxu0 %v2189
    %2193 = vmatprep.subr.bf16.mxu0 0
    %2194 = vmatpush1.bf16.msra.mxu0 0
    %2195 = vmatprep.subr.bf16.mxu0 0
    %2196 = vmatpush1.bf16.msra.mxu0 0
    %2197 = vmatprep.subr.bf16.mxu0 0
    %2198 = vmatpush1.bf16.msra.mxu0 0
    %2199 = vmatprep.subr.bf16.mxu0 0
    %2200 = vmatpush1.bf16.msra.mxu0 0
    %2201 = vmatprep.subr.bf16.mxu0 0
    %2202 = vmatpush1.bf16.msra.mxu0 0
    %2203 = vmatprep.subr.bf16.mxu0 0
    %2204 = vmatpush1.bf16.msra.mxu0 0
    %2205 = vmatprep.subr.bf16.mxu0 0
    %2206 = vmatpush1.bf16.msra.mxu0 0
    %2207 = vmatprep.subr.bf16.mxu0 0
    %2208 = vmatpush1.bf16.msra.mxu0 0
    %2209 = vmatprep.subr.bf16.mxu0 0
    %2210 = vmatpush1.bf16.msra.mxu0 0
    %2211 = vmatprep.subr.bf16.mxu0 0
    %2212 = vmatpush1.bf16.msra.mxu0 0
    %2213 = vmatprep.subr.bf16.mxu0 0
    %2214 = vmatpush1.bf16.msra.mxu0 0
    %2215 = vmatprep.subr.bf16.mxu0 0
    %2216 = vmatpush1.bf16.msra.mxu0 0
    %2217 = vmatprep.subr.bf16.mxu0 0
    %2218 = vmatpush1.bf16.msra.mxu0 0
    %2219 = vmatprep.subr.bf16.mxu0 0
    %2220 = vmatpush1.bf16.msra.mxu0 0
    %2221 = vmatprep.subr.bf16.mxu0 0
    %2222 = vmatpush1.bf16.msra.mxu0 0
    %2223 = vmatprep.mubr.bf16.mxu0 0
    %2224 = vmatmul.mubr.bf16.gmra.mrb[0].mxu0 %v155
    %v2225 = vpop.f32.mrb[0].mxu0
    %v2226 = vadd.f32 0.0, %v2225
    %v2227 = vpop.f32.mrb[0].mxu0
    %v2228 = vpop.f32.mrb[0].mxu0
    %v2229 = vpop.f32.mrb[0].mxu0
    %2230 = vdwg.mxu0
    %v2231 = vpack.c.bf16 %v2226, %v2226
    %2232 = vmatprep.subr.bf16.mxu0 0
    %2233 = vmatpush1.bf16.msra.mxu0 %v1581
    %2234 = vmatprep.subr.bf16.mxu0 0
    %2235 = vmatpush1.bf16.msra.mxu0 0
    %2236 = vmatprep.subr.bf16.mxu0 0
    %2237 = vmatpush1.bf16.msra.mxu0 0
    %2238 = vmatprep.subr.bf16.mxu0 0
    %2239 = vmatpush1.bf16.msra.mxu0 0
    %2240 = vmatprep.subr.bf16.mxu0 0
    %2241 = vmatpush1.bf16.msra.mxu0 0
    %2242 = vmatprep.subr.bf16.mxu0 0
    %2243 = vmatpush1.bf16.msra.mxu0 0
    %2244 = vmatprep.subr.bf16.mxu0 0
    %2245 = vmatpush1.bf16.msra.mxu0 0
    %2246 = vmatprep.subr.bf16.mxu0 0
    %2247 = vmatpush1.bf16.msra.mxu0 0
    %2248 = vmatprep.subr.bf16.mxu0 0
    %2249 = vmatpush1.bf16.msra.mxu0 0
    %2250 = vmatprep.subr.bf16.mxu0 0
    %2251 = vmatpush1.bf16.msra.mxu0 0
    %2252 = vmatprep.subr.bf16.mxu0 0
    %2253 = vmatpush1.bf16.msra.mxu0 0
    %2254 = vmatprep.subr.bf16.mxu0 0
    %2255 = vmatpush1.bf16.msra.mxu0 0
    %2256 = vmatprep.subr.bf16.mxu0 0
    %2257 = vmatpush1.bf16.msra.mxu0 0
    %2258 = vmatprep.subr.bf16.mxu0 0
    %2259 = vmatpush1.bf16.msra.mxu0 0
    %2260 = vmatprep.subr.bf16.mxu0 0
    %2261 = vmatpush1.bf16.msra.mxu0 0
    %2262 = vmatprep.subr.bf16.mxu0 0
    %2263 = vmatpush1.bf16.msra.mxu0 0
    %2264 = vmatprep.mubr.bf16.mxu0 0
    %2265 = vmatmul.mubr.bf16.gmra.mrb[0].mxu0 %v212
    %v2266 = vpop.f32.mrb[0].mxu0
    %v2267 = vadd.f32 0.0, %v2266
    %v2268 = vpop.f32.mrb[0].mxu0
    %v2269 = vpop.f32.mrb[0].mxu0
    %v2270 = vadd.f32 0.0, %v2269
    %v2271 = vpop.f32.mrb[0].mxu0
    %2272 = vmatprep.mubr.bf16.mxu0 0
    %2273 = vmatmul.mubr.bf16.gmra.mrb[0].mxu0 %v215
    %v2274 = vpop.f32.mrb[0].mxu0
    %v2275 = vadd.f32 0.0, %v2274
    %v2276 = vpop.f32.mrb[0].mxu0
    %v2277 = vpop.f32.mrb[0].mxu0
    %v2278 = vpop.f32.mrb[0].mxu0
    %2279 = vdwg.mxu0
    %v2280 = vpack.c.bf16 %v2270, %v2267
    %v2281 = vpack.c.bf16 %v2275, %v2275
    %2282 = vmatprep.subr.bf16.mxu0 0
    %2283 = vmatpush1.bf16.msra.mxu0 %v1581
    %2284 = vmatprep.subr.bf16.mxu0 0
    %2285 = vmatpush1.bf16.msra.mxu0 0
    %2286 = vmatprep.subr.bf16.mxu0 0
    %2287 = vmatpush1.bf16.msra.mxu0 0
    %2288 = vmatprep.subr.bf16.mxu0 0
    %2289 = vmatpush1.bf16.msra.mxu0 0
    %2290 = vmatprep.subr.bf16.mxu0 0
    %2291 = vmatpush1.bf16.msra.mxu0 0
    %2292 = vmatprep.subr.bf16.mxu0 0
    %2293 = vmatpush1.bf16.msra.mxu0 0
    %2294 = vmatprep.subr.bf16.mxu0 0
    %2295 = vmatpush1.bf16.msra.mxu0 0
    %2296 = vmatprep.subr.bf16.mxu0 0
    %2297 = vmatpush1.bf16.msra.mxu0 0
    %2298 = vmatprep.subr.bf16.mxu0 0
    %2299 = vmatpush1.bf16.msra.mxu0 0
    %2300 = vmatprep.subr.bf16.mxu0 0
    %2301 = vmatpush1.bf16.msra.mxu0 0
    %2302 = vmatprep.subr.bf16.mxu0 0
    %2303 = vmatpush1.bf16.msra.mxu0 0
    %2304 = vmatprep.subr.bf16.mxu0 0
    %2305 = vmatpush1.bf16.msra.mxu0 0
    %2306 = vmatprep.subr.bf16.mxu0 0
    %2307 = vmatpush1.bf16.msra.mxu0 0
    %2308 = vmatprep.subr.bf16.mxu0 0
    %2309 = vmatpush1.bf16.msra.mxu0 0
    %2310 = vmatprep.subr.bf16.mxu0 0
    %2311 = vmatpush1.bf16.msra.mxu0 0
    %2312 = vmatprep.subr.bf16.mxu0 0
    %2313 = vmatpush1.bf16.msra.mxu0 0
    %2314 = vmatprep.mubr.bf16.mxu0 0
    %2315 = vmatmul.mubr.bf16.gmra.mrb[0].mxu0 %v280
    %v2316 = vpop.f32.mrb[0].mxu0
    %v2317 = vadd.f32 0.0, %v2316
    %v2318 = vpop.f32.mrb[0].mxu0
    %v2319 = vpop.f32.mrb[0].mxu0
    %v2320 = vadd.f32 0.0, %v2319
    %v2321 = vpop.f32.mrb[0].mxu0
    %2322 = vmatprep.mubr.bf16.mxu0 0
    %2323 = vmatmul.mubr.bf16.gmra.mrb[0].mxu0 %v283
    %v2324 = vpop.f32.mrb[0].mxu0
    %v2325 = vadd.f32 0.0, %v2324
    %v2326 = vpop.f32.mrb[0].mxu0
    %v2327 = vpop.f32.mrb[0].mxu0
    %v2328 = vpop.f32.mrb[0].mxu0
    %2329 = vdwg.mxu0
    %v2330 = vpack.c.bf16 %v2320, %v2317
    %v2331 = vpack.c.bf16 %v2325, %v2325
    %v2333 = vsel %vm217, %v2231, 0
    %2335 = vmatprep.subr.bf16.mxu0 0
    %2336 = vmatpush1.bf16.msra.mxu0 %v2333
    %2337 = vmatprep.subr.bf16.mxu0 0
    %2338 = vmatpush1.bf16.msra.mxu0 0
    %2339 = vmatprep.subr.bf16.mxu0 0
    %2340 = vmatpush1.bf16.msra.mxu0 0
    %2341 = vmatprep.subr.bf16.mxu0 0
    %2342 = vmatpush1.bf16.msra.mxu0 0
    %2343 = vmatprep.subr.bf16.mxu0 0
    %2344 = vmatpush1.bf16.msra.mxu0 0
    %2345 = vmatprep.subr.bf16.mxu0 0
    %2346 = vmatpush1.bf16.msra.mxu0 0
    %2347 = vmatprep.subr.bf16.mxu0 0
    %2348 = vmatpush1.bf16.msra.mxu0 0
    %2349 = vmatprep.subr.bf16.mxu0 0
    %2350 = vmatpush1.bf16.msra.mxu0 0
    %2351 = vmatprep.subr.bf16.mxu0 0
    %2352 = vmatpush1.bf16.msra.mxu0 0
    %2353 = vmatprep.subr.bf16.mxu0 0
    %2354 = vmatpush1.bf16.msra.mxu0 0
    %2355 = vmatprep.subr.bf16.mxu0 0
    %2356 = vmatpush1.bf16.msra.mxu0 0
    %2357 = vmatprep.subr.bf16.mxu0 0
    %2358 = vmatpush1.bf16.msra.mxu0 0
    %2359 = vmatprep.subr.bf16.mxu0 0
    %2360 = vmatpush1.bf16.msra.mxu0 0
    %2361 = vmatprep.subr.bf16.mxu0 0
    %2362 = vmatpush1.bf16.msra.mxu0 0
    %2363 = vmatprep.subr.bf16.mxu0 0
    %2364 = vmatpush1.bf16.msra.mxu0 0
    %2365 = vmatprep.subr.bf16.mxu0 0
    %2366 = vmatpush1.bf16.msra.mxu0 0
    %2367 = vmatprep.mubr.bf16.mxu0 0
    %2368 = vmatmul.mubr.bf16.gmra.mrb[0].mxu0 %v212
    %v2369 = vpop.f32.mrb[0].mxu0
    %v2370 = vadd.f32 0.0, %v2369
    %v2371 = vpop.f32.mrb[0].mxu0
    %v2372 = vpop.f32.mrb[0].mxu0
    %v2373 = vadd.f32 0.0, %v2372
    %v2374 = vpop.f32.mrb[0].mxu0
    %2375 = vmatprep.mubr.bf16.mxu0 0
    %2376 = vmatmul.mubr.bf16.gmra.mrb[0].mxu0 %v215
    %v2377 = vpop.f32.mrb[0].mxu0
    %v2378 = vadd.f32 0.0, %v2377
    %v2379 = vpop.f32.mrb[0].mxu0
    %v2380 = vpop.f32.mrb[0].mxu0
    %v2381 = vpop.f32.mrb[0].mxu0
    %2382 = vdwg.mxu0
    %v2383 = vpack.c.bf16 %v2373, %v2370
    %v2384 = vpack.c.bf16 %v2378, %v2378
    %v2385 = vld [vmem:[#allocation2 + $0x400] sm:$0xf]
    %v2386 = vld [vmem:[#allocation2 + $0x404] sm:$0xf]
    %v2387 = vld [vmem:[#allocation2 + $0x408] sm:$0xf]
    %v2388 = vld [vmem:[#allocation2 + $0x40c] sm:$0xf]
    %v2389 = vld [vmem:[#allocation2 + $0x410] sm:$0xf]
    %v2390 = vld [vmem:[#allocation2 + $0x414] sm:$0xf]
    %v2391 = vld [vmem:[#allocation2 + $0x418] sm:$0xf]
    %v2392 = vld [vmem:[#allocation2 + $0x41c] sm:$0xf]
    %v2393 = vld [vmem:[#allocation2 + $0x420] sm:$0xf]
    %v2394 = vld [vmem:[#allocation2 + $0x424] sm:$0xf]
    %v2395 = vld [vmem:[#allocation2 + $0x428] sm:$0xf]
    %v2396 = vld [vmem:[#allocation2 + $0x42c] sm:$0xf]
    %v2397 = vld [vmem:[#allocation2 + $0x430] sm:$0xf]
    %v2398 = vld [vmem:[#allocation2 + $0x434] sm:$0xf]
    %v2399 = vld [vmem:[#allocation2 + $0x438] sm:$0xf]
    %v2400 = vld [vmem:[#allocation2 + $0x43c] sm:$0xf]
    %v2401 = vld [vmem:[#allocation2 + $0x440] sm:$0xf]
    %v2402 = vld [vmem:[#allocation2 + $0x444] sm:$0xf]
    %v2403 = vld [vmem:[#allocation2 + $0x448] sm:$0xf]
    %v2404 = vld [vmem:[#allocation2 + $0x44c] sm:$0xf]
    %v2405 = vld [vmem:[#allocation2 + $0x450] sm:$0xf]
    %v2406 = vld [vmem:[#allocation2 + $0x454] sm:$0xf]
    %v2407 = vld [vmem:[#allocation2 + $0x458] sm:$0xf]
    %v2408 = vld [vmem:[#allocation2 + $0x45c] sm:$0xf]
    %v2409 = vld [vmem:[#allocation2 + $0x460] sm:$0xf]
    %v2410 = vld [vmem:[#allocation2 + $0x464] sm:$0xf]
    %v2411 = vld [vmem:[#allocation2 + $0x468] sm:$0xf]
    %v2412 = vld [vmem:[#allocation2 + $0x46c] sm:$0xf]
    %v2413 = vld [vmem:[#allocation2 + $0x470] sm:$0xf]
    %v2414 = vld [vmem:[#allocation2 + $0x474] sm:$0xf]
    %v2415 = vld [vmem:[#allocation2 + $0x478] sm:$0xf]
    %v2416 = vld [vmem:[#allocation2 + $0x47c] sm:$0xf]
    %v2417 = vld [vmem:[#allocation2 + $0x480] sm:$0xf]
    %v2418 = vld [vmem:[#allocation2 + $0x484] sm:$0xf]
    %v2419 = vld [vmem:[#allocation2 + $0x488] sm:$0xf]
    %v2420 = vld [vmem:[#allocation2 + $0x48c] sm:$0xf]
    %v2421 = vld [vmem:[#allocation2 + $0x490] sm:$0xf]
    %v2422 = vld [vmem:[#allocation2 + $0x494] sm:$0xf]
    %v2423 = vld [vmem:[#allocation2 + $0x498] sm:$0xf]
    %v2424 = vld [vmem:[#allocation2 + $0x49c] sm:$0xf]
    %v2425 = vld [vmem:[#allocation2 + $0x4a0] sm:$0xf]
    %v2426 = vld [vmem:[#allocation2 + $0x4a4] sm:$0xf]
    %v2427 = vld [vmem:[#allocation2 + $0x4a8] sm:$0xf]
    %v2428 = vld [vmem:[#allocation2 + $0x4ac] sm:$0xf]
    %v2429 = vld [vmem:[#allocation2 + $0x4b0] sm:$0xf]
    %v2430 = vld [vmem:[#allocation2 + $0x4b4] sm:$0xf]
    %v2431 = vld [vmem:[#allocation2 + $0x4b8] sm:$0xf]
    %v2432 = vld [vmem:[#allocation2 + $0x4bc] sm:$0xf]
    %v2433 = vld [vmem:[#allocation2 + $0x4c0] sm:$0xf]
    %v2434 = vld [vmem:[#allocation2 + $0x4c4] sm:$0xf]
    %v2435 = vld [vmem:[#allocation2 + $0x4c8] sm:$0xf]
    %v2436 = vld [vmem:[#allocation2 + $0x4cc] sm:$0xf]
    %v2437 = vld [vmem:[#allocation2 + $0x4d0] sm:$0xf]
    %v2438 = vld [vmem:[#allocation2 + $0x4d4] sm:$0xf]
    %v2439 = vld [vmem:[#allocation2 + $0x4d8] sm:$0xf]
    %v2440 = vld [vmem:[#allocation2 + $0x4dc] sm:$0xf]
    %v2441 = vld [vmem:[#allocation2 + $0x4e0] sm:$0xf]
    %v2442 = vld [vmem:[#allocation2 + $0x4e4] sm:$0xf]
    %v2443 = vld [vmem:[#allocation2 + $0x4e8] sm:$0xf]
    %v2444 = vld [vmem:[#allocation2 + $0x4ec] sm:$0xf]
    %v2445 = vld [vmem:[#allocation2 + $0x4f0] sm:$0xf]
    %v2446 = vld [vmem:[#allocation2 + $0x4f4] sm:$0xf]
    %v2447 = vld [vmem:[#allocation2 + $0x4f8] sm:$0xf]
    %v2448 = vld [vmem:[#allocation2 + $0x4fc] sm:$0xf]
    %v2449 = vld [vmem:[#allocation5 + $0x9] sm:$0x1]
    %v2450 = vlaneseq
    %v2451 = vshrl.u32 %v2450, 7
    %v2452 = vsub.s32 0, %v2451
    %v2453 = vrot.slane %v2449, %v2452
    %v2518 = vunpack.c.l.b16 %v2385
    %v2519 = vunpack.c.l.b16 %v2386
    %v2520 = vunpack.c.l.b16 %v2387
    %v2521 = vunpack.c.l.b16 %v2388
    %v2522 = vunpack.c.l.b16 %v2389
    %v2523 = vunpack.c.l.b16 %v2390
    %v2524 = vunpack.c.l.b16 %v2391
    %v2525 = vunpack.c.l.b16 %v2392
    %v2526 = vunpack.c.l.b16 %v2393
    %v2527 = vunpack.c.l.b16 %v2394
    %v2528 = vunpack.c.l.b16 %v2395
    %v2529 = vunpack.c.l.b16 %v2396
    %v2530 = vunpack.c.l.b16 %v2397
    %v2531 = vunpack.c.l.b16 %v2398
    %v2532 = vunpack.c.l.b16 %v2399
    %v2533 = vunpack.c.l.b16 %v2400
    %v2534 = vunpack.c.l.b16 %v2401
    %v2535 = vunpack.c.l.b16 %v2402
    %v2536 = vunpack.c.l.b16 %v2403
    %v2537 = vunpack.c.l.b16 %v2404
    %v2538 = vunpack.c.l.b16 %v2405
    %v2539 = vunpack.c.l.b16 %v2406
    %v2540 = vunpack.c.l.b16 %v2407
    %v2541 = vunpack.c.l.b16 %v2408
    %v2542 = vunpack.c.l.b16 %v2409
    %v2543 = vunpack.c.l.b16 %v2410
    %v2544 = vunpack.c.l.b16 %v2411
    %v2545 = vunpack.c.l.b16 %v2412
    %v2546 = vunpack.c.l.b16 %v2413
    %v2547 = vunpack.c.l.b16 %v2414
    %v2548 = vunpack.c.l.b16 %v2415
    %v2549 = vunpack.c.l.b16 %v2416
    %v2550 = vunpack.c.l.b16 %v2417
    %v2551 = vunpack.c.l.b16 %v2418
    %v2552 = vunpack.c.l.b16 %v2419
    %v2553 = vunpack.c.l.b16 %v2420
    %v2554 = vunpack.c.l.b16 %v2421
    %v2555 = vunpack.c.l.b16 %v2422
    %v2556 = vunpack.c.l.b16 %v2423
    %v2557 = vunpack.c.l.b16 %v2424
    %v2558 = vunpack.c.l.b16 %v2425
    %v2559 = vunpack.c.l.b16 %v2426
    %v2560 = vunpack.c.l.b16 %v2427
    %v2561 = vunpack.c.l.b16 %v2428
    %v2562 = vunpack.c.l.b16 %v2429
    %v2563 = vunpack.c.l.b16 %v2430
    %v2564 = vunpack.c.l.b16 %v2431
    %v2565 = vunpack.c.l.b16 %v2432
    %v2566 = vunpack.c.l.b16 %v2433
    %v2567 = vunpack.c.l.b16 %v2434
    %v2568 = vunpack.c.l.b16 %v2435
    %v2569 = vunpack.c.l.b16 %v2436
    %v2570 = vunpack.c.l.b16 %v2437
    %v2571 = vunpack.c.l.b16 %v2438
    %v2572 = vunpack.c.l.b16 %v2439
    %v2573 = vunpack.c.l.b16 %v2440
    %v2574 = vunpack.c.l.b16 %v2441
    %v2575 = vunpack.c.l.b16 %v2442
    %v2576 = vunpack.c.l.b16 %v2443
    %v2577 = vunpack.c.l.b16 %v2444
    %v2578 = vunpack.c.l.b16 %v2445
    %v2579 = vunpack.c.l.b16 %v2446
    %v2580 = vunpack.c.l.b16 %v2447
    %v2581 = vunpack.c.l.b16 %v2448
    %v2582 = vpack.c.b16 %v2519, %v2518
    %v2583 = vpack.c.b16 %v2521, %v2520
    %v2584 = vpack.c.b16 %v2523, %v2522
    %v2585 = vpack.c.b16 %v2525, %v2524
    %v2586 = vpack.c.b16 %v2527, %v2526
    %v2587 = vpack.c.b16 %v2529, %v2528
    %v2588 = vpack.c.b16 %v2531, %v2530
    %v2589 = vpack.c.b16 %v2533, %v2532
    %v2590 = vpack.c.b16 %v2535, %v2534
    %v2591 = vpack.c.b16 %v2537, %v2536
    %v2592 = vpack.c.b16 %v2539, %v2538
    %v2593 = vpack.c.b16 %v2541, %v2540
    %v2594 = vpack.c.b16 %v2543, %v2542
    %v2595 = vpack.c.b16 %v2545, %v2544
    %v2596 = vpack.c.b16 %v2547, %v2546
    %v2597 = vpack.c.b16 %v2549, %v2548
    %v2598 = vpack.c.b16 %v2551, %v2550
    %v2599 = vpack.c.b16 %v2553, %v2552
    %v2600 = vpack.c.b16 %v2555, %v2554
    %v2601 = vpack.c.b16 %v2557, %v2556
    %v2602 = vpack.c.b16 %v2559, %v2558
    %v2603 = vpack.c.b16 %v2561, %v2560
    %v2604 = vpack.c.b16 %v2563, %v2562
    %v2605 = vpack.c.b16 %v2565, %v2564
    %v2606 = vpack.c.b16 %v2567, %v2566
    %v2607 = vpack.c.b16 %v2569, %v2568
    %v2608 = vpack.c.b16 %v2571, %v2570
    %v2609 = vpack.c.b16 %v2573, %v2572
    %v2610 = vpack.c.b16 %v2575, %v2574
    %v2611 = vpack.c.b16 %v2577, %v2576
    %v2612 = vpack.c.b16 %v2579, %v2578
    %v2613 = vpack.c.b16 %v2581, %v2580
    %2646 = vmatprep.subr.bf16.mxu0 0
    %2647 = vmatpush1.bf16.msra.mxu0 %v2582
    %2648 = vmatprep.subr.bf16.mxu0 0
    %2649 = vmatpush1.bf16.msra.mxu0 %v2583
    %2650 = vmatprep.subr.bf16.mxu0 0
    %2651 = vmatpush1.bf16.msra.mxu0 %v2584
    %2652 = vmatprep.subr.bf16.mxu0 0
    %2653 = vmatpush1.bf16.msra.mxu0 %v2585
    %2654 = vmatprep.subr.bf16.mxu0 0
    %2655 = vmatpush1.bf16.msra.mxu0 %v2586
    %2656 = vmatprep.subr.bf16.mxu0 0
    %2657 = vmatpush1.bf16.msra.mxu0 %v2587
    %2658 = vmatprep.subr.bf16.mxu0 0
    %2659 = vmatpush1.bf16.msra.mxu0 %v2588
    %2660 = vmatprep.subr.bf16.mxu0 0
    %2661 = vmatpush1.bf16.msra.mxu0 %v2589
    %2662 = vmatprep.subr.bf16.mxu0 0
    %2663 = vmatpush1.bf16.msra.mxu0 %v2590
    %2664 = vmatprep.subr.bf16.mxu0 0
    %2665 = vmatpush1.bf16.msra.mxu0 %v2591
    %2666 = vmatprep.subr.bf16.mxu0 0
    %2667 = vmatpush1.bf16.msra.mxu0 %v2592
    %2668 = vmatprep.subr.bf16.mxu0 0
    %2669 = vmatpush1.bf16.msra.mxu0 %v2593
    %2670 = vmatprep.subr.bf16.mxu0 0
    %2671 = vmatpush1.bf16.msra.mxu0 %v2594
    %2672 = vmatprep.subr.bf16.mxu0 0
    %2673 = vmatpush1.bf16.msra.mxu0 %v2595
    %2674 = vmatprep.subr.bf16.mxu0 0
    %2675 = vmatpush1.bf16.msra.mxu0 %v2596
    %2676 = vmatprep.subr.bf16.mxu0 0
    %2677 = vmatpush1.bf16.msra.mxu0 %v2597
    %2678 = vmatprep.mubr.bf16.mxu0 %v2330
    %2679 = vmatmul.mubr.bf16.gmra.mrb[0].mxu0 %v2280
    %v2680 = vpop.f32.mrb[0].mxu0
    %v2681 = vadd.f32 %v2453, %v2680
    %v2682 = vpop.f32.mrb[0].mxu0
    %v2683 = vpop.f32.mrb[0].mxu0
    %v2684 = vadd.f32 %v2453, %v2683
    %v2685 = vpop.f32.mrb[0].mxu0
    %2686 = vmatprep.mubr.bf16.mxu0 %v2331
    %2687 = vmatmul.mubr.bf16.gmra.mrb[0].mxu0 %v2281
    %v2688 = vpop.f32.mrb[0].mxu0
    %v2689 = vadd.f32 %v2453, %v2688
    %v2690 = vpop.f32.mrb[0].mxu0
    %v2691 = vpop.f32.mrb[0].mxu0
    %v2692 = vpop.f32.mrb[0].mxu0
    %2693 = vdwg.mxu0
    %2694 = vmatprep.subr.bf16.mxu0 0
    %2695 = vmatpush1.bf16.msra.mxu0 %v2598
    %2696 = vmatprep.subr.bf16.mxu0 0
    %2697 = vmatpush1.bf16.msra.mxu0 %v2599
    %2698 = vmatprep.subr.bf16.mxu0 0
    %2699 = vmatpush1.bf16.msra.mxu0 %v2600
    %2700 = vmatprep.subr.bf16.mxu0 0
    %2701 = vmatpush1.bf16.msra.mxu0 %v2601
    %2702 = vmatprep.subr.bf16.mxu0 0
    %2703 = vmatpush1.bf16.msra.mxu0 %v2602
    %2704 = vmatprep.subr.bf16.mxu0 0
    %2705 = vmatpush1.bf16.msra.mxu0 %v2603
    %2706 = vmatprep.subr.bf16.mxu0 0
    %2707 = vmatpush1.bf16.msra.mxu0 %v2604
    %2708 = vmatprep.subr.bf16.mxu0 0
    %2709 = vmatpush1.bf16.msra.mxu0 %v2605
    %2710 = vmatprep.subr.bf16.mxu0 0
    %2711 = vmatpush1.bf16.msra.mxu0 %v2606
    %2712 = vmatprep.subr.bf16.mxu0 0
    %2713 = vmatpush1.bf16.msra.mxu0 %v2607
    %2714 = vmatprep.subr.bf16.mxu0 0
    %2715 = vmatpush1.bf16.msra.mxu0 %v2608
    %2716 = vmatprep.subr.bf16.mxu0 0
    %2717 = vmatpush1.bf16.msra.mxu0 %v2609
    %2718 = vmatprep.subr.bf16.mxu0 0
    %2719 = vmatpush1.bf16.msra.mxu0 %v2610
    %2720 = vmatprep.subr.bf16.mxu0 0
    %2721 = vmatpush1.bf16.msra.mxu0 %v2611
    %2722 = vmatprep.subr.bf16.mxu0 0
    %2723 = vmatpush1.bf16.msra.mxu0 %v2612
    %2724 = vmatprep.subr.bf16.mxu0 0
    %2725 = vmatpush1.bf16.msra.mxu0 %v2613
    %2726 = vmatprep.mubr.bf16.mxu0 %v2383
    %2727 = vmatmul.mubr.bf16.gmra.mrb[0].mxu0 %v1013
    %v2728 = vpop.f32.mrb[0].mxu0
    %v2729 = vadd.f32 %v2681, %v2728
    %v2730 = vpop.f32.mrb[0].mxu0
    %v2731 = vpop.f32.mrb[0].mxu0
    %v2732 = vadd.f32 %v2684, %v2731
    %v2733 = vpop.f32.mrb[0].mxu0
    %2734 = vmatprep.mubr.bf16.mxu0 %v2384
    %2735 = vmatmul.mubr.bf16.gmra.mrb[0].mxu0 %v1014
    %v2736 = vpop.f32.mrb[0].mxu0
    %v2737 = vadd.f32 %v2689, %v2736
    %v2738 = vpop.f32.mrb[0].mxu0
    %v2739 = vpop.f32.mrb[0].mxu0
    %v2740 = vpop.f32.mrb[0].mxu0
    %2741 = vdwg.mxu0
    %vm2742 = vcmp.gt.f32.partialorder %v2729, 0.0
    %vm2743 = vcmp.gt.f32.partialorder %v2732, 0.0
    %vm2744 = vcmp.gt.f32.partialorder %v2737, 0.0
    %v2745 = vmul.f32 %v2729, 1.442695
    %v2746 = vpow.pop %v2745
    %v2747 = vmul.f32 %v2732, 1.442695
    %v2748 = vpow.pop %v2747
    %v2749 = vmul.f32 %v2737, 1.442695
    %v2750 = vpow.pop %v2749
    %v2751 = vsub.f32 %v2746, 1.0
    %v2752 = vsub.f32 %v2748, 1.0
    %v2753 = vsub.f32 %v2750, 1.0
    %v2754 = vsel %vm2742, %v2729, %v2751
    %v2755 = vsel %vm2743, %v2732, %v2752
    %v2756 = vsel %vm2744, %v2737, %v2753
    %v2757 = vld [vmem:[#allocation2 + $0x500] sm:$0xf]
    %v2758 = vld [vmem:[#allocation2 + $0x504] sm:$0xf]
    %v2759 = vld [vmem:[#allocation2 + $0x508] sm:$0xf]
    %v2760 = vld [vmem:[#allocation2 + $0x50c] sm:$0xf]
    %v2761 = vld [vmem:[#allocation2 + $0x510] sm:$0xf]
    %v2762 = vld [vmem:[#allocation2 + $0x514] sm:$0xf]
    %v2763 = vld [vmem:[#allocation2 + $0x518] sm:$0xf]
    %v2764 = vld [vmem:[#allocation2 + $0x51c] sm:$0xf]
    %v2765 = vld [vmem:[#allocation2 + $0x520] sm:$0xf]
    %v2766 = vld [vmem:[#allocation2 + $0x524] sm:$0xf]
    %v2767 = vld [vmem:[#allocation2 + $0x528] sm:$0xf]
    %v2768 = vld [vmem:[#allocation2 + $0x52c] sm:$0xf]
    %v2769 = vld [vmem:[#allocation2 + $0x530] sm:$0xf]
    %v2770 = vld [vmem:[#allocation2 + $0x534] sm:$0xf]
    %v2771 = vld [vmem:[#allocation2 + $0x538] sm:$0xf]
    %v2772 = vld [vmem:[#allocation2 + $0x53c] sm:$0xf]
    %v2773 = vld [vmem:[#allocation5 + $0xa] sm:$0x1]
    %v2774 = vpack.c.bf16 %v2755, %v2754
    %v2775 = vpack.c.bf16 %v2756, %v2756
    %v2776 = vlaneseq
    %v2777 = vshrl.u32 %v2776, 7
    %v2778 = vsub.s32 0, %v2777
    %v2779 = vrot.slane %v2773, %v2778
    %v2796 = vunpack.c.l.b16 %v2757
    %v2797 = vunpack.c.l.b16 %v2758
    %v2798 = vunpack.c.l.b16 %v2759
    %v2799 = vunpack.c.l.b16 %v2760
    %v2800 = vunpack.c.l.b16 %v2761
    %v2801 = vunpack.c.l.b16 %v2762
    %v2802 = vunpack.c.l.b16 %v2763
    %v2803 = vunpack.c.l.b16 %v2764
    %v2804 = vunpack.c.l.b16 %v2765
    %v2805 = vunpack.c.l.b16 %v2766
    %v2806 = vunpack.c.l.b16 %v2767
    %v2807 = vunpack.c.l.b16 %v2768
    %v2808 = vunpack.c.l.b16 %v2769
    %v2809 = vunpack.c.l.b16 %v2770
    %v2810 = vunpack.c.l.b16 %v2771
    %v2811 = vunpack.c.l.b16 %v2772
    %v2812 = vpack.c.b16 %v2797, %v2796
    %v2813 = vpack.c.b16 %v2799, %v2798
    %v2814 = vpack.c.b16 %v2801, %v2800
    %v2815 = vpack.c.b16 %v2803, %v2802
    %v2816 = vpack.c.b16 %v2805, %v2804
    %v2817 = vpack.c.b16 %v2807, %v2806
    %v2818 = vpack.c.b16 %v2809, %v2808
    %v2819 = vpack.c.b16 %v2811, %v2810
    %2828 = vmatprep.subr.bf16.mxu0 0
    %2829 = vmatpush1.bf16.msra.mxu0 %v2812
    %2830 = vmatprep.subr.bf16.mxu0 0
    %2831 = vmatpush1.bf16.msra.mxu0 %v2813
    %2832 = vmatprep.subr.bf16.mxu0 0
    %2833 = vmatpush1.bf16.msra.mxu0 %v2814
    %2834 = vmatprep.subr.bf16.mxu0 0
    %2835 = vmatpush1.bf16.msra.mxu0 %v2815
    %2836 = vmatprep.subr.bf16.mxu0 0
    %2837 = vmatpush1.bf16.msra.mxu0 %v2816
    %2838 = vmatprep.subr.bf16.mxu0 0
    %2839 = vmatpush1.bf16.msra.mxu0 %v2817
    %2840 = vmatprep.subr.bf16.mxu0 0
    %2841 = vmatpush1.bf16.msra.mxu0 %v2818
    %2842 = vmatprep.subr.bf16.mxu0 0
    %2843 = vmatpush1.bf16.msra.mxu0 %v2819
    %2844 = vmatprep.subr.bf16.mxu0 0
    %2845 = vmatpush1.bf16.msra.mxu0 0
    %2846 = vmatprep.subr.bf16.mxu0 0
    %2847 = vmatpush1.bf16.msra.mxu0 0
    %2848 = vmatprep.subr.bf16.mxu0 0
    %2849 = vmatpush1.bf16.msra.mxu0 0
    %2850 = vmatprep.subr.bf16.mxu0 0
    %2851 = vmatpush1.bf16.msra.mxu0 0
    %2852 = vmatprep.subr.bf16.mxu0 0
    %2853 = vmatpush1.bf16.msra.mxu0 0
    %2854 = vmatprep.subr.bf16.mxu0 0
    %2855 = vmatpush1.bf16.msra.mxu0 0
    %2856 = vmatprep.subr.bf16.mxu0 0
    %2857 = vmatpush1.bf16.msra.mxu0 0
    %2858 = vmatprep.subr.bf16.mxu0 0
    %2859 = vmatpush1.bf16.msra.mxu0 0
    %2860 = vmatprep.mubr.bf16.mxu0 0
    %2861 = vmatmul.mubr.bf16.gmra.mrb[0].mxu0 %v2774
    %v2862 = vpop.f32.mrb[0].mxu0
    %v2863 = vadd.f32 %v2779, %v2862
    %v2864 = vpop.f32.mrb[0].mxu0
    %v2865 = vpop.f32.mrb[0].mxu0
    %v2866 = vadd.f32 %v2779, %v2865
    %v2867 = vpop.f32.mrb[0].mxu0
    %2868 = vmatprep.mubr.bf16.mxu0 0
    %2869 = vmatmul.mubr.bf16.gmra.mrb[0].mxu0 %v2775
    %v2870 = vpop.f32.mrb[0].mxu0
    %v2871 = vadd.f32 %v2779, %v2870
    %v2872 = vpop.f32.mrb[0].mxu0
    %v2873 = vpop.f32.mrb[0].mxu0
    %v2874 = vpop.f32.mrb[0].mxu0
    %2875 = vdwg.mxu0
    %vm2876 = vcmp.gt.f32.partialorder %v2863, 0.0
    %vm2877 = vcmp.gt.f32.partialorder %v2866, 0.0
    %vm2878 = vcmp.gt.f32.partialorder %v2871, 0.0
    %v2879 = vmul.f32 %v2863, 1.442695
    %v2880 = vpow.pop %v2879
    %v2881 = vmul.f32 %v2866, 1.442695
    %v2882 = vpow.pop %v2881
    %v2883 = vmul.f32 %v2871, 1.442695
    %v2884 = vpow.pop %v2883
    %v2885 = vsub.f32 %v2880, 1.0
    %v2886 = vsub.f32 %v2882, 1.0
    %v2887 = vsub.f32 %v2884, 1.0
    %v2888 = vsel %vm2876, %v2863, %v2885
    %v2889 = vsel %vm2877, %v2866, %v2886
    %v2890 = vsel %vm2878, %v2871, %v2887
    %v2891 = vld [vmem:[#allocation2 + $0x540] sm:$0xf]
    %v2892 = vld [vmem:[#allocation2 + $0x544] sm:$0xf]
    %v2893 = vld [vmem:[#allocation2 + $0x548] sm:$0xf]
    %v2894 = vld [vmem:[#allocation2 + $0x54c] sm:$0xf]
    %v2895 = vld [vmem:[#allocation2 + $0x550] sm:$0xf]
    %v2896 = vld [vmem:[#allocation2 + $0x554] sm:$0xf]
    %v2897 = vld [vmem:[#allocation2 + $0x558] sm:$0xf]
    %v2898 = vld [vmem:[#allocation2 + $0x55c] sm:$0xf]
    %v2899 = vld [vmem:[#allocation2 + $0x560] sm:$0xf]
    %v2900 = vld [vmem:[#allocation2 + $0x564] sm:$0xf]
    %v2901 = vld [vmem:[#allocation2 + $0x568] sm:$0xf]
    %v2902 = vld [vmem:[#allocation2 + $0x56c] sm:$0xf]
    %v2903 = vld [vmem:[#allocation2 + $0x570] sm:$0xf]
    %v2904 = vld [vmem:[#allocation2 + $0x574] sm:$0xf]
    %v2905 = vld [vmem:[#allocation2 + $0x578] sm:$0xf]
    %v2906 = vld [vmem:[#allocation2 + $0x57c] sm:$0xf]
    %v2907 = vld [vmem:[#allocation5 + $0xb] sm:$0x1]
    %v2908 = vpack.c.bf16 %v2889, %v2888
    %v2909 = vpack.c.bf16 %v2890, %v2890
    %v2910 = vlaneseq
    %v2911 = vshrl.u32 %v2910, 7
    %v2912 = vsub.s32 0, %v2911
    %v2913 = vrot.slane %v2907, %v2912
    %v2930 = vunpack.c.l.b16 %v2891
    %v2931 = vunpack.c.l.b16 %v2892
    %v2932 = vunpack.c.l.b16 %v2893
    %v2933 = vunpack.c.l.b16 %v2894
    %v2934 = vunpack.c.l.b16 %v2895
    %v2935 = vunpack.c.l.b16 %v2896
    %v2936 = vunpack.c.l.b16 %v2897
    %v2937 = vunpack.c.l.b16 %v2898
    %v2938 = vunpack.c.l.b16 %v2899
    %v2939 = vunpack.c.l.b16 %v2900
    %v2940 = vunpack.c.l.b16 %v2901
    %v2941 = vunpack.c.l.b16 %v2902
    %v2942 = vunpack.c.l.b16 %v2903
    %v2943 = vunpack.c.l.b16 %v2904
    %v2944 = vunpack.c.l.b16 %v2905
    %v2945 = vunpack.c.l.b16 %v2906
    %v2946 = vpack.c.b16 %v2931, %v2930
    %v2947 = vpack.c.b16 %v2933, %v2932
    %v2948 = vpack.c.b16 %v2935, %v2934
    %v2949 = vpack.c.b16 %v2937, %v2936
    %v2950 = vpack.c.b16 %v2939, %v2938
    %v2951 = vpack.c.b16 %v2941, %v2940
    %v2952 = vpack.c.b16 %v2943, %v2942
    %v2953 = vpack.c.b16 %v2945, %v2944
    %2962 = vmatprep.subr.bf16.mxu0 0
    %2963 = vmatpush1.bf16.msra.mxu0 %v2946
    %2964 = vmatprep.subr.bf16.mxu0 0
    %2965 = vmatpush1.bf16.msra.mxu0 %v2947
    %2966 = vmatprep.subr.bf16.mxu0 0
    %2967 = vmatpush1.bf16.msra.mxu0 %v2948
    %2968 = vmatprep.subr.bf16.mxu0 0
    %2969 = vmatpush1.bf16.msra.mxu0 %v2949
    %2970 = vmatprep.subr.bf16.mxu0 0
    %2971 = vmatpush1.bf16.msra.mxu0 %v2950
    %2972 = vmatprep.subr.bf16.mxu0 0
    %2973 = vmatpush1.bf16.msra.mxu0 %v2951
    %2974 = vmatprep.subr.bf16.mxu0 0
    %2975 = vmatpush1.bf16.msra.mxu0 %v2952
    %2976 = vmatprep.subr.bf16.mxu0 0
    %2977 = vmatpush1.bf16.msra.mxu0 %v2953
    %2978 = vmatprep.subr.bf16.mxu0 0
    %2979 = vmatpush1.bf16.msra.mxu0 0
    %2980 = vmatprep.subr.bf16.mxu0 0
    %2981 = vmatpush1.bf16.msra.mxu0 0
    %2982 = vmatprep.subr.bf16.mxu0 0
    %2983 = vmatpush1.bf16.msra.mxu0 0
    %2984 = vmatprep.subr.bf16.mxu0 0
    %2985 = vmatpush1.bf16.msra.mxu0 0
    %2986 = vmatprep.subr.bf16.mxu0 0
    %2987 = vmatpush1.bf16.msra.mxu0 0
    %2988 = vmatprep.subr.bf16.mxu0 0
    %2989 = vmatpush1.bf16.msra.mxu0 0
    %2990 = vmatprep.subr.bf16.mxu0 0
    %2991 = vmatpush1.bf16.msra.mxu0 0
    %2992 = vmatprep.subr.bf16.mxu0 0
    %2993 = vmatpush1.bf16.msra.mxu0 0
    %2994 = vmatprep.mubr.bf16.mxu0 0
    %2995 = vmatmul.mubr.bf16.gmra.mrb[0].mxu0 %v2908
    %v2996 = vpop.f32.mrb[0].mxu0
    %v2997 = vadd.f32 %v2913, %v2996
    %v2998 = vpop.f32.mrb[0].mxu0
    %v2999 = vpop.f32.mrb[0].mxu0
    %v3000 = vadd.f32 %v2913, %v2999
    %v3001 = vpop.f32.mrb[0].mxu0
    %3002 = vmatprep.mubr.bf16.mxu0 0
    %3003 = vmatmul.mubr.bf16.gmra.mrb[0].mxu0 %v2909
    %v3004 = vpop.f32.mrb[0].mxu0
    %v3005 = vadd.f32 %v2913, %v3004
    %v3006 = vpop.f32.mrb[0].mxu0
    %v3007 = vpop.f32.mrb[0].mxu0
    %v3008 = vpop.f32.mrb[0].mxu0
    %3009 = vdwg.mxu0
    %v3010 = vpack.c.bf16 %v3000, %v2997
    %v3011 = vpack.c.bf16 %v3005, %v3005
    %v3013 = vsel %vm217, %v3011, 0
    %3015 = vmatprep.subr.bf16.mxu0 0
    %3016 = vmatpush1.bf16.msra.mxu0 %v3010
    %3017 = vmatprep.subr.bf16.mxu0 0
    %3018 = vmatpush1.bf16.msra.mxu0 %v3013
    %3019 = vmatprep.subr.bf16.mxu0 0
    %3020 = vmatpush1.bf16.msra.mxu0 0
    %3021 = vmatprep.subr.bf16.mxu0 0
    %3022 = vmatpush1.bf16.msra.mxu0 0
    %3023 = vmatprep.subr.bf16.mxu0 0
    %3024 = vmatpush1.bf16.msra.mxu0 0
    %3025 = vmatprep.subr.bf16.mxu0 0
    %3026 = vmatpush1.bf16.msra.mxu0 0
    %3027 = vmatprep.subr.bf16.mxu0 0
    %3028 = vmatpush1.bf16.msra.mxu0 0
    %3029 = vmatprep.subr.bf16.mxu0 0
    %3030 = vmatpush1.bf16.msra.mxu0 0
    %3031 = vmatprep.subr.bf16.mxu0 0
    %3032 = vmatpush1.bf16.msra.mxu0 0
    %3033 = vmatprep.subr.bf16.mxu0 0
    %3034 = vmatpush1.bf16.msra.mxu0 0
    %3035 = vmatprep.subr.bf16.mxu0 0
    %3036 = vmatpush1.bf16.msra.mxu0 0
    %3037 = vmatprep.subr.bf16.mxu0 0
    %3038 = vmatpush1.bf16.msra.mxu0 0
    %3039 = vmatprep.subr.bf16.mxu0 0
    %3040 = vmatpush1.bf16.msra.mxu0 0
    %3041 = vmatprep.subr.bf16.mxu0 0
    %3042 = vmatpush1.bf16.msra.mxu0 0
    %3043 = vmatprep.subr.bf16.mxu0 0
    %3044 = vmatpush1.bf16.msra.mxu0 0
    %3045 = vmatprep.subr.bf16.mxu0 0
    %3046 = vmatpush1.bf16.msra.mxu0 0
    %3047 = vmatprep.mubr.bf16.mxu0 0
    %3048 = vmatmul.mubr.bf16.gmra.mrb[0].mxu0 %v1017
    %v3049 = vpop.f32.mrb[0].mxu0
    %v3050 = vadd.f32 0.0, %v3049
    %v3051 = vpop.f32.mrb[0].mxu0
    %v3052 = vpop.f32.mrb[0].mxu0
    %v3053 = vpop.f32.mrb[0].mxu0
    %3054 = vdwg.mxu0
    %v3055 = vmul.f32 %v3050, %v1065
    %v3056 = vpack.c.bf16 %v3055, %v3055
    %v3057 = vld [vmem:[#allocation2 + $0x580] sm:$0xf]
    %v3058 = vld [vmem:[#allocation2 + $0x584] sm:$0xf]
    %v3059 = vld [vmem:[#allocation2 + $0x588] sm:$0xf]
    %v3060 = vld [vmem:[#allocation2 + $0x58c] sm:$0xf]
    %v3061 = vld [vmem:[#allocation2 + $0x590] sm:$0xf]
    %v3062 = vld [vmem:[#allocation2 + $0x594] sm:$0xf]
    %v3063 = vld [vmem:[#allocation2 + $0x598] sm:$0xf]
    %v3064 = vld [vmem:[#allocation2 + $0x59c] sm:$0xf]
    %v3065 = vld [vmem:[#allocation2 + $0x5a0] sm:$0xf]
    %v3066 = vld [vmem:[#allocation2 + $0x5a4] sm:$0xf]
    %v3067 = vld [vmem:[#allocation2 + $0x5a8] sm:$0xf]
    %v3068 = vld [vmem:[#allocation2 + $0x5ac] sm:$0xf]
    %v3069 = vld [vmem:[#allocation2 + $0x5b0] sm:$0xf]
    %v3070 = vld [vmem:[#allocation2 + $0x5b4] sm:$0xf]
    %v3071 = vld [vmem:[#allocation2 + $0x5b8] sm:$0xf]
    %v3072 = vld [vmem:[#allocation2 + $0x5bc] sm:$0xf]
    %v3073 = vld [vmem:[#allocation2 + $0x5c0] sm:$0xf]
    %v3074 = vld [vmem:[#allocation2 + $0x5c4] sm:$0xf]
    %v3075 = vld [vmem:[#allocation2 + $0x5c8] sm:$0xf]
    %v3076 = vld [vmem:[#allocation2 + $0x5cc] sm:$0xf]
    %v3077 = vld [vmem:[#allocation2 + $0x5d0] sm:$0xf]
    %v3078 = vld [vmem:[#allocation2 + $0x5d4] sm:$0xf]
    %v3079 = vld [vmem:[#allocation2 + $0x5d8] sm:$0xf]
    %v3080 = vld [vmem:[#allocation2 + $0x5dc] sm:$0xf]
    %v3081 = vld [vmem:[#allocation2 + $0x5e0] sm:$0xf]
    %v3082 = vld [vmem:[#allocation2 + $0x5e4] sm:$0xf]
    %v3083 = vld [vmem:[#allocation2 + $0x5e8] sm:$0xf]
    %v3084 = vld [vmem:[#allocation2 + $0x5ec] sm:$0xf]
    %v3085 = vld [vmem:[#allocation2 + $0x5f0] sm:$0xf]
    %v3086 = vld [vmem:[#allocation2 + $0x5f4] sm:$0xf]
    %v3087 = vld [vmem:[#allocation2 + $0x5f8] sm:$0xf]
    %v3088 = vld [vmem:[#allocation2 + $0x5fc] sm:$0xf]
    %v3089 = vld [vmem:[#allocation2 + $0x600] sm:$0xf]
    %v3090 = vld [vmem:[#allocation2 + $0x604] sm:$0xf]
    %v3091 = vld [vmem:[#allocation2 + $0x608] sm:$0xf]
    %v3092 = vld [vmem:[#allocation2 + $0x60c] sm:$0xf]
    %v3093 = vld [vmem:[#allocation2 + $0x610] sm:$0xf]
    %v3094 = vld [vmem:[#allocation2 + $0x614] sm:$0xf]
    %v3095 = vld [vmem:[#allocation2 + $0x618] sm:$0xf]
    %v3096 = vld [vmem:[#allocation2 + $0x61c] sm:$0xf]
    %v3097 = vld [vmem:[#allocation2 + $0x620] sm:$0xf]
    %v3098 = vld [vmem:[#allocation2 + $0x624] sm:$0xf]
    %v3099 = vld [vmem:[#allocation2 + $0x628] sm:$0xf]
    %v3100 = vld [vmem:[#allocation2 + $0x62c] sm:$0xf]
    %v3101 = vld [vmem:[#allocation2 + $0x630] sm:$0xf]
    %v3102 = vld [vmem:[#allocation2 + $0x634] sm:$0xf]
    %v3103 = vld [vmem:[#allocation2 + $0x638] sm:$0xf]
    %v3104 = vld [vmem:[#allocation2 + $0x63c] sm:$0xf]
    %v3105 = vld [vmem:[#allocation5 + $0xc] sm:$0x1]
    %v3106 = vlaneseq
    %v3107 = vshrl.u32 %v3106, 7
    %v3108 = vsub.s32 0, %v3107
    %v3109 = vrot.slane %v3105, %v3108
    %v3158 = vunpack.c.l.b16 %v3057
    %v3159 = vunpack.c.l.b16 %v3058
    %v3160 = vunpack.c.l.b16 %v3059
    %v3161 = vunpack.c.l.b16 %v3060
    %v3162 = vunpack.c.l.b16 %v3061
    %v3163 = vunpack.c.l.b16 %v3062
    %v3164 = vunpack.c.l.b16 %v3063
    %v3165 = vunpack.c.l.b16 %v3064
    %v3166 = vunpack.c.l.b16 %v3065
    %v3167 = vunpack.c.l.b16 %v3066
    %v3168 = vunpack.c.l.b16 %v3067
    %v3169 = vunpack.c.l.b16 %v3068
    %v3170 = vunpack.c.l.b16 %v3069
    %v3171 = vunpack.c.l.b16 %v3070
    %v3172 = vunpack.c.l.b16 %v3071
    %v3173 = vunpack.c.l.b16 %v3072
    %v3174 = vunpack.c.l.b16 %v3073
    %v3175 = vunpack.c.l.b16 %v3074
    %v3176 = vunpack.c.l.b16 %v3075
    %v3177 = vunpack.c.l.b16 %v3076
    %v3178 = vunpack.c.l.b16 %v3077
    %v3179 = vunpack.c.l.b16 %v3078
    %v3180 = vunpack.c.l.b16 %v3079
    %v3181 = vunpack.c.l.b16 %v3080
    %v3182 = vunpack.c.l.b16 %v3081
    %v3183 = vunpack.c.l.b16 %v3082
    %v3184 = vunpack.c.l.b16 %v3083
    %v3185 = vunpack.c.l.b16 %v3084
    %v3186 = vunpack.c.l.b16 %v3085
    %v3187 = vunpack.c.l.b16 %v3086
    %v3188 = vunpack.c.l.b16 %v3087
    %v3189 = vunpack.c.l.b16 %v3088
    %v3190 = vunpack.c.l.b16 %v3089
    %v3191 = vunpack.c.l.b16 %v3090
    %v3192 = vunpack.c.l.b16 %v3091
    %v3193 = vunpack.c.l.b16 %v3092
    %v3194 = vunpack.c.l.b16 %v3093
    %v3195 = vunpack.c.l.b16 %v3094
    %v3196 = vunpack.c.l.b16 %v3095
    %v3197 = vunpack.c.l.b16 %v3096
    %v3198 = vunpack.c.l.b16 %v3097
    %v3199 = vunpack.c.l.b16 %v3098
    %v3200 = vunpack.c.l.b16 %v3099
    %v3201 = vunpack.c.l.b16 %v3100
    %v3202 = vunpack.c.l.b16 %v3101
    %v3203 = vunpack.c.l.b16 %v3102
    %v3204 = vunpack.c.l.b16 %v3103
    %v3205 = vunpack.c.l.b16 %v3104
    %v3206 = vpack.c.b16 %v3159, %v3158
    %v3207 = vpack.c.b16 %v3161, %v3160
    %v3208 = vpack.c.b16 %v3163, %v3162
    %v3209 = vpack.c.b16 %v3165, %v3164
    %v3210 = vpack.c.b16 %v3167, %v3166
    %v3211 = vpack.c.b16 %v3169, %v3168
    %v3212 = vpack.c.b16 %v3171, %v3170
    %v3213 = vpack.c.b16 %v3173, %v3172
    %v3214 = vpack.c.b16 %v3175, %v3174
    %v3215 = vpack.c.b16 %v3177, %v3176
    %v3216 = vpack.c.b16 %v3179, %v3178
    %v3217 = vpack.c.b16 %v3181, %v3180
    %v3218 = vpack.c.b16 %v3183, %v3182
    %v3219 = vpack.c.b16 %v3185, %v3184
    %v3220 = vpack.c.b16 %v3187, %v3186
    %v3221 = vpack.c.b16 %v3189, %v3188
    %v3222 = vpack.c.b16 %v3191, %v3190
    %v3223 = vpack.c.b16 %v3193, %v3192
    %v3224 = vpack.c.b16 %v3195, %v3194
    %v3225 = vpack.c.b16 %v3197, %v3196
    %v3226 = vpack.c.b16 %v3199, %v3198
    %v3227 = vpack.c.b16 %v3201, %v3200
    %v3228 = vpack.c.b16 %v3203, %v3202
    %v3229 = vpack.c.b16 %v3205, %v3204
    %3254 = vmatprep.subr.bf16.mxu0 0
    %3255 = vmatpush1.bf16.msra.mxu0 %v3206
    %3256 = vmatprep.subr.bf16.mxu0 0
    %3257 = vmatpush1.bf16.msra.mxu0 %v3207
    %3258 = vmatprep.subr.bf16.mxu0 0
    %3259 = vmatpush1.bf16.msra.mxu0 %v3208
    %3260 = vmatprep.subr.bf16.mxu0 0
    %3261 = vmatpush1.bf16.msra.mxu0 %v3209
    %3262 = vmatprep.subr.bf16.mxu0 0
    %3263 = vmatpush1.bf16.msra.mxu0 %v3210
    %3264 = vmatprep.subr.bf16.mxu0 0
    %3265 = vmatpush1.bf16.msra.mxu0 %v3211
    %3266 = vmatprep.subr.bf16.mxu0 0
    %3267 = vmatpush1.bf16.msra.mxu0 %v3212
    %3268 = vmatprep.subr.bf16.mxu0 0
    %3269 = vmatpush1.bf16.msra.mxu0 %v3213
    %3270 = vmatprep.subr.bf16.mxu0 0
    %3271 = vmatpush1.bf16.msra.mxu0 %v3214
    %3272 = vmatprep.subr.bf16.mxu0 0
    %3273 = vmatpush1.bf16.msra.mxu0 %v3215
    %3274 = vmatprep.subr.bf16.mxu0 0
    %3275 = vmatpush1.bf16.msra.mxu0 %v3216
    %3276 = vmatprep.subr.bf16.mxu0 0
    %3277 = vmatpush1.bf16.msra.mxu0 %v3217
    %3278 = vmatprep.subr.bf16.mxu0 0
    %3279 = vmatpush1.bf16.msra.mxu0 %v3218
    %3280 = vmatprep.subr.bf16.mxu0 0
    %3281 = vmatpush1.bf16.msra.mxu0 %v3219
    %3282 = vmatprep.subr.bf16.mxu0 0
    %3283 = vmatpush1.bf16.msra.mxu0 %v3220
    %3284 = vmatprep.subr.bf16.mxu0 0
    %3285 = vmatpush1.bf16.msra.mxu0 %v3221
    %3286 = vmatprep.mubr.bf16.mxu0 %v3056
    %3287 = vmatmul.mubr.bf16.gmra.mrb[0].mxu0 %v1576
    %v3288 = vpop.f32.mrb[0].mxu0
    %v3289 = vadd.f32 %v3109, %v3288
    %v3290 = vpop.f32.mrb[0].mxu0
    %v3291 = vpop.f32.mrb[0].mxu0
    %v3292 = vpop.f32.mrb[0].mxu0
    %3293 = vdwg.mxu0
    %3294 = vmatprep.subr.bf16.mxu0 0
    %3295 = vmatpush1.bf16.msra.mxu0 %v3222
    %3296 = vmatprep.subr.bf16.mxu0 0
    %3297 = vmatpush1.bf16.msra.mxu0 %v3223
    %3298 = vmatprep.subr.bf16.mxu0 0
    %3299 = vmatpush1.bf16.msra.mxu0 %v3224
    %3300 = vmatprep.subr.bf16.mxu0 0
    %3301 = vmatpush1.bf16.msra.mxu0 %v3225
    %3302 = vmatprep.subr.bf16.mxu0 0
    %3303 = vmatpush1.bf16.msra.mxu0 %v3226
    %3304 = vmatprep.subr.bf16.mxu0 0
    %3305 = vmatpush1.bf16.msra.mxu0 %v3227
    %3306 = vmatprep.subr.bf16.mxu0 0
    %3307 = vmatpush1.bf16.msra.mxu0 %v3228
    %3308 = vmatprep.subr.bf16.mxu0 0
    %3309 = vmatpush1.bf16.msra.mxu0 %v3229
    %3310 = vmatprep.subr.bf16.mxu0 0
    %3311 = vmatpush1.bf16.msra.mxu0 0
    %3312 = vmatprep.subr.bf16.mxu0 0
    %3313 = vmatpush1.bf16.msra.mxu0 0
    %3314 = vmatprep.subr.bf16.mxu0 0
    %3315 = vmatpush1.bf16.msra.mxu0 0
    %3316 = vmatprep.subr.bf16.mxu0 0
    %3317 = vmatpush1.bf16.msra.mxu0 0
    %3318 = vmatprep.subr.bf16.mxu0 0
    %3319 = vmatpush1.bf16.msra.mxu0 0
    %3320 = vmatprep.subr.bf16.mxu0 0
    %3321 = vmatpush1.bf16.msra.mxu0 0
    %3322 = vmatprep.subr.bf16.mxu0 0
    %3323 = vmatpush1.bf16.msra.mxu0 0
    %3324 = vmatprep.subr.bf16.mxu0 0
    %3325 = vmatpush1.bf16.msra.mxu0 0
    %3326 = vmatprep.mubr.bf16.mxu0 0
    %3327 = vmatmul.mubr.bf16.gmra.mrb[0].mxu0 %v2231
    %v3328 = vpop.f32.mrb[0].mxu0
    %v3329 = vadd.f32 %v3289, %v3328
    %v3330 = vpop.f32.mrb[0].mxu0
    %v3331 = vpop.f32.mrb[0].mxu0
    %v3332 = vpop.f32.mrb[0].mxu0
    %3333 = vdwg.mxu0
    %vm3334 = vcmp.gt.f32.partialorder %v3329, 0.0
    %v3335 = vmul.f32 %v3329, 1.442695
    %v3336 = vpow.pop %v3335
    %v3337 = vsub.f32 %v3336, 1.0
    %v3338 = vsel %vm3334, %v3329, %v3337
    %v3339 = vld [vmem:[#allocation2 + $0x640] sm:$0xf]
    %v3340 = vld [vmem:[#allocation2 + $0x644] sm:$0xf]
    %v3341 = vld [vmem:[#allocation2 + $0x648] sm:$0xf]
    %v3342 = vld [vmem:[#allocation2 + $0x64c] sm:$0xf]
    %v3343 = vld [vmem:[#allocation2 + $0x650] sm:$0xf]
    %v3344 = vld [vmem:[#allocation2 + $0x654] sm:$0xf]
    %v3345 = vld [vmem:[#allocation2 + $0x658] sm:$0xf]
    %v3346 = vld [vmem:[#allocation2 + $0x65c] sm:$0xf]
    %v3347 = vld [vmem:[#allocation2 + $0x660] sm:$0xf]
    %v3348 = vld [vmem:[#allocation2 + $0x664] sm:$0xf]
    %v3349 = vld [vmem:[#allocation2 + $0x668] sm:$0xf]
    %v3350 = vld [vmem:[#allocation2 + $0x66c] sm:$0xf]
    %v3351 = vld [vmem:[#allocation2 + $0x670] sm:$0xf]
    %v3352 = vld [vmem:[#allocation2 + $0x674] sm:$0xf]
    %v3353 = vld [vmem:[#allocation2 + $0x678] sm:$0xf]
    %v3354 = vld [vmem:[#allocation2 + $0x67c] sm:$0xf]
    %v3355 = vld [vmem:[#allocation5 + $0xd] sm:$0x1]
    %v3356 = vpack.c.bf16 %v3338, %v3338
    %v3357 = vlaneseq
    %v3358 = vshrl.u32 %v3357, 7
    %v3359 = vsub.s32 0, %v3358
    %v3360 = vrot.slane %v3355, %v3359
    %v3377 = vunpack.c.l.b16 %v3339
    %v3378 = vunpack.c.l.b16 %v3340
    %v3379 = vunpack.c.l.b16 %v3341
    %v3380 = vunpack.c.l.b16 %v3342
    %v3381 = vunpack.c.l.b16 %v3343
    %v3382 = vunpack.c.l.b16 %v3344
    %v3383 = vunpack.c.l.b16 %v3345
    %v3384 = vunpack.c.l.b16 %v3346
    %v3385 = vunpack.c.l.b16 %v3347
    %v3386 = vunpack.c.l.b16 %v3348
    %v3387 = vunpack.c.l.b16 %v3349
    %v3388 = vunpack.c.l.b16 %v3350
    %v3389 = vunpack.c.l.b16 %v3351
    %v3390 = vunpack.c.l.b16 %v3352
    %v3391 = vunpack.c.l.b16 %v3353
    %v3392 = vunpack.c.l.b16 %v3354
    %v3393 = vpack.c.b16 %v3378, %v3377
    %v3394 = vpack.c.b16 %v3380, %v3379
    %v3395 = vpack.c.b16 %v3382, %v3381
    %v3396 = vpack.c.b16 %v3384, %v3383
    %v3397 = vpack.c.b16 %v3386, %v3385
    %v3398 = vpack.c.b16 %v3388, %v3387
    %v3399 = vpack.c.b16 %v3390, %v3389
    %v3400 = vpack.c.b16 %v3392, %v3391
    %3409 = vmatprep.subr.bf16.mxu0 0
    %3410 = vmatpush1.bf16.msra.mxu0 %v3393
    %3411 = vmatprep.subr.bf16.mxu0 0
    %3412 = vmatpush1.bf16.msra.mxu0 %v3394
    %3413 = vmatprep.subr.bf16.mxu0 0
    %3414 = vmatpush1.bf16.msra.mxu0 %v3395
    %3415 = vmatprep.subr.bf16.mxu0 0
    %3416 = vmatpush1.bf16.msra.mxu0 %v3396
    %3417 = vmatprep.subr.bf16.mxu0 0
    %3418 = vmatpush1.bf16.msra.mxu0 %v3397
    %3419 = vmatprep.subr.bf16.mxu0 0
    %3420 = vmatpush1.bf16.msra.mxu0 %v3398
    %3421 = vmatprep.subr.bf16.mxu0 0
    %3422 = vmatpush1.bf16.msra.mxu0 %v3399
    %3423 = vmatprep.subr.bf16.mxu0 0
    %3424 = vmatpush1.bf16.msra.mxu0 %v3400
    %3425 = vmatprep.subr.bf16.mxu0 0
    %3426 = vmatpush1.bf16.msra.mxu0 0
    %3427 = vmatprep.subr.bf16.mxu0 0
    %3428 = vmatpush1.bf16.msra.mxu0 0
    %3429 = vmatprep.subr.bf16.mxu0 0
    %3430 = vmatpush1.bf16.msra.mxu0 0
    %3431 = vmatprep.subr.bf16.mxu0 0
    %3432 = vmatpush1.bf16.msra.mxu0 0
    %3433 = vmatprep.subr.bf16.mxu0 0
    %3434 = vmatpush1.bf16.msra.mxu0 0
    %3435 = vmatprep.subr.bf16.mxu0 0
    %3436 = vmatpush1.bf16.msra.mxu0 0
    %3437 = vmatprep.subr.bf16.mxu0 0
    %3438 = vmatpush1.bf16.msra.mxu0 0
    %3439 = vmatprep.subr.bf16.mxu0 0
    %3440 = vmatpush1.bf16.msra.mxu0 0
    %3441 = vmatprep.mubr.bf16.mxu0 0
    %3442 = vmatmul.mubr.bf16.gmra.mrb[0].mxu0 %v3356
    %v3443 = vpop.f32.mrb[0].mxu0
    %v3444 = vadd.f32 %v3360, %v3443
    %v3445 = vpop.f32.mrb[0].mxu0
    %v3446 = vpop.f32.mrb[0].mxu0
    %v3447 = vpop.f32.mrb[0].mxu0
    %3448 = vdwg.mxu0
    %vm3449 = vcmp.gt.f32.partialorder %v3444, 0.0
    %v3450 = vmul.f32 %v3444, 1.442695
    %v3451 = vpow.pop %v3450
    %v3452 = vsub.f32 %v3451, 1.0
    %v3453 = vsel %vm3449, %v3444, %v3452
    %v3454 = vld [vmem:[#allocation2 + $0x680] sm:$0xf]
    %v3455 = vld [vmem:[#allocation2 + $0x684] sm:$0xf]
    %v3456 = vld [vmem:[#allocation2 + $0x688] sm:$0xf]
    %v3457 = vld [vmem:[#allocation2 + $0x68c] sm:$0xf]
    %v3458 = vld [vmem:[#allocation2 + $0x690] sm:$0xf]
    %v3459 = vld [vmem:[#allocation2 + $0x694] sm:$0xf]
    %v3460 = vld [vmem:[#allocation2 + $0x698] sm:$0xf]
    %v3461 = vld [vmem:[#allocation2 + $0x69c] sm:$0xf]
    %v3462 = vld [vmem:[#allocation2 + $0x6a0] sm:$0xf]
    %v3463 = vld [vmem:[#allocation2 + $0x6a4] sm:$0xf]
    %v3464 = vld [vmem:[#allocation2 + $0x6a8] sm:$0xf]
    %v3465 = vld [vmem:[#allocation2 + $0x6ac] sm:$0xf]
    %v3466 = vld [vmem:[#allocation2 + $0x6b0] sm:$0xf]
    %v3467 = vld [vmem:[#allocation2 + $0x6b4] sm:$0xf]
    %v3468 = vld [vmem:[#allocation2 + $0x6b8] sm:$0xf]
    %v3469 = vld [vmem:[#allocation2 + $0x6bc] sm:$0xf]
    %v3470 = vld [vmem:[#allocation5 + $0xe] sm:$0x1]
    %v3471 = vpack.c.bf16 %v3453, %v3453
    %v3472 = vlaneseq
    %v3473 = vshrl.u32 %v3472, 7
    %v3474 = vsub.s32 0, %v3473
    %v3475 = vrot.slane %v3470, %v3474
    %v3492 = vunpack.c.l.b16 %v3454
    %v3493 = vunpack.c.l.b16 %v3455
    %v3494 = vunpack.c.l.b16 %v3456
    %v3495 = vunpack.c.l.b16 %v3457
    %v3496 = vunpack.c.l.b16 %v3458
    %v3497 = vunpack.c.l.b16 %v3459
    %v3498 = vunpack.c.l.b16 %v3460
    %v3499 = vunpack.c.l.b16 %v3461
    %v3500 = vunpack.c.l.b16 %v3462
    %v3501 = vunpack.c.l.b16 %v3463
    %v3502 = vunpack.c.l.b16 %v3464
    %v3503 = vunpack.c.l.b16 %v3465
    %v3504 = vunpack.c.l.b16 %v3466
    %v3505 = vunpack.c.l.b16 %v3467
    %v3506 = vunpack.c.l.b16 %v3468
    %v3507 = vunpack.c.l.b16 %v3469
    %v3508 = vpack.c.b16 %v3493, %v3492
    %v3509 = vpack.c.b16 %v3495, %v3494
    %v3510 = vpack.c.b16 %v3497, %v3496
    %v3511 = vpack.c.b16 %v3499, %v3498
    %v3512 = vpack.c.b16 %v3501, %v3500
    %v3513 = vpack.c.b16 %v3503, %v3502
    %v3514 = vpack.c.b16 %v3505, %v3504
    %v3515 = vpack.c.b16 %v3507, %v3506
    %3524 = vmatprep.subr.bf16.mxu0 0
    %3525 = vmatpush1.bf16.msra.mxu0 %v3508
    %3526 = vmatprep.subr.bf16.mxu0 0
    %3527 = vmatpush1.bf16.msra.mxu0 %v3509
    %3528 = vmatprep.subr.bf16.mxu0 0
    %3529 = vmatpush1.bf16.msra.mxu0 %v3510
    %3530 = vmatprep.subr.bf16.mxu0 0
    %3531 = vmatpush1.bf16.msra.mxu0 %v3511
    %3532 = vmatprep.subr.bf16.mxu0 0
    %3533 = vmatpush1.bf16.msra.mxu0 %v3512
    %3534 = vmatprep.subr.bf16.mxu0 0
    %3535 = vmatpush1.bf16.msra.mxu0 %v3513
    %3536 = vmatprep.subr.bf16.mxu0 0
    %3537 = vmatpush1.bf16.msra.mxu0 %v3514
    %3538 = vmatprep.subr.bf16.mxu0 0
    %3539 = vmatpush1.bf16.msra.mxu0 %v3515
    %3540 = vmatprep.subr.bf16.mxu0 0
    %3541 = vmatpush1.bf16.msra.mxu0 0
    %3542 = vmatprep.subr.bf16.mxu0 0
    %3543 = vmatpush1.bf16.msra.mxu0 0
    %3544 = vmatprep.subr.bf16.mxu0 0
    %3545 = vmatpush1.bf16.msra.mxu0 0
    %3546 = vmatprep.subr.bf16.mxu0 0
    %3547 = vmatpush1.bf16.msra.mxu0 0
    %3548 = vmatprep.subr.bf16.mxu0 0
    %3549 = vmatpush1.bf16.msra.mxu0 0
    %3550 = vmatprep.subr.bf16.mxu0 0
    %3551 = vmatpush1.bf16.msra.mxu0 0
    %3552 = vmatprep.subr.bf16.mxu0 0
    %3553 = vmatpush1.bf16.msra.mxu0 0
    %3554 = vmatprep.subr.bf16.mxu0 0
    %3555 = vmatpush1.bf16.msra.mxu0 0
    %3556 = vmatprep.mubr.bf16.mxu0 0
    %3557 = vmatmul.mubr.bf16.gmra.mrb[0].mxu0 %v3471
    %v3558 = vpop.f32.mrb[0].mxu0
    %v3559 = vadd.f32 %v3475, %v3558
    %v3560 = vpop.f32.mrb[0].mxu0
    %v3561 = vpop.f32.mrb[0].mxu0
    %v3562 = vpop.f32.mrb[0].mxu0
    %3563 = vdwg.mxu0
    %v3564 = vpack.c.bf16 %v3559, %v3559
    %v3566 = vsel %vm217, %v3564, 0
    %3568 = vmatprep.subr.bf16.mxu0 0
    %3569 = vmatpush1.bf16.msra.mxu0 %v3566
    %3570 = vmatprep.subr.bf16.mxu0 0
    %3571 = vmatpush1.bf16.msra.mxu0 0
    %3572 = vmatprep.subr.bf16.mxu0 0
    %3573 = vmatpush1.bf16.msra.mxu0 0
    %3574 = vmatprep.subr.bf16.mxu0 0
    %3575 = vmatpush1.bf16.msra.mxu0 0
    %3576 = vmatprep.subr.bf16.mxu0 0
    %3577 = vmatpush1.bf16.msra.mxu0 0
    %3578 = vmatprep.subr.bf16.mxu0 0
    %3579 = vmatpush1.bf16.msra.mxu0 0
    %3580 = vmatprep.subr.bf16.mxu0 0
    %3581 = vmatpush1.bf16.msra.mxu0 0
    %3582 = vmatprep.subr.bf16.mxu0 0
    %3583 = vmatpush1.bf16.msra.mxu0 0
    %3584 = vmatprep.subr.bf16.mxu0 0
    %3585 = vmatpush1.bf16.msra.mxu0 0
    %3586 = vmatprep.subr.bf16.mxu0 0
    %3587 = vmatpush1.bf16.msra.mxu0 0
    %3588 = vmatprep.subr.bf16.mxu0 0
    %3589 = vmatpush1.bf16.msra.mxu0 0
    %3590 = vmatprep.subr.bf16.mxu0 0
    %3591 = vmatpush1.bf16.msra.mxu0 0
    %3592 = vmatprep.subr.bf16.mxu0 0
    %3593 = vmatpush1.bf16.msra.mxu0 0
    %3594 = vmatprep.subr.bf16.mxu0 0
    %3595 = vmatpush1.bf16.msra.mxu0 0
    %3596 = vmatprep.subr.bf16.mxu0 0
    %3597 = vmatpush1.bf16.msra.mxu0 0
    %3598 = vmatprep.subr.bf16.mxu0 0
    %3599 = vmatpush1.bf16.msra.mxu0 0
    %3600 = vmatprep.mubr.bf16.mxu0 0
    %3601 = vmatmul.mubr.bf16.gmra.mrb[0].mxu0 %v1578
    %v3602 = vpop.f32.mrb[0].mxu0
    %v3603 = vadd.f32 0.0, %v3602
    %v3604 = vpop.f32.mrb[0].mxu0
    %v3605 = vpop.f32.mrb[0].mxu0
    %v3606 = vpop.f32.mrb[0].mxu0
    %3607 = vdwg.mxu0
    %v3608 = vmul.f32 %v3603, %v1626
    %3609 = vmatprep.subr.bf16.mxu0 0
    %3610 = vmatpush1.bf16.msra.mxu0 %v3010
    %3611 = vmatprep.subr.bf16.mxu0 0
    %3612 = vmatpush1.bf16.msra.mxu0 %v3013
    %3613 = vmatprep.subr.bf16.mxu0 0
    %3614 = vmatpush1.bf16.msra.mxu0 0
    %3615 = vmatprep.subr.bf16.mxu0 0
    %3616 = vmatpush1.bf16.msra.mxu0 0
    %3617 = vmatprep.subr.bf16.mxu0 0
    %3618 = vmatpush1.bf16.msra.mxu0 0
    %3619 = vmatprep.subr.bf16.mxu0 0
    %3620 = vmatpush1.bf16.msra.mxu0 0
    %3621 = vmatprep.subr.bf16.mxu0 0
    %3622 = vmatpush1.bf16.msra.mxu0 0
    %3623 = vmatprep.subr.bf16.mxu0 0
    %3624 = vmatpush1.bf16.msra.mxu0 0
    %3625 = vmatprep.subr.bf16.mxu0 0
    %3626 = vmatpush1.bf16.msra.mxu0 0
    %3627 = vmatprep.subr.bf16.mxu0 0
    %3628 = vmatpush1.bf16.msra.mxu0 0
    %3629 = vmatprep.subr.bf16.mxu0 0
    %3630 = vmatpush1.bf16.msra.mxu0 0
    %3631 = vmatprep.subr.bf16.mxu0 0
    %3632 = vmatpush1.bf16.msra.mxu0 0
    %3633 = vmatprep.subr.bf16.mxu0 0
    %3634 = vmatpush1.bf16.msra.mxu0 0
    %3635 = vmatprep.subr.bf16.mxu0 0
    %3636 = vmatpush1.bf16.msra.mxu0 0
    %3637 = vmatprep.subr.bf16.mxu0 0
    %3638 = vmatpush1.bf16.msra.mxu0 0
    %3639 = vmatprep.subr.bf16.mxu0 0
    %3640 = vmatpush1.bf16.msra.mxu0 0
    %3641 = vmatprep.mubr.bf16.mxu0 0
    %3642 = vmatmul.mubr.bf16.gmra.mrb[0].mxu0 %v1630
    %v3643 = vpop.f32.mrb[0].mxu0
    %v3644 = vadd.f32 0.0, %v3643
    %v3645 = vpop.f32.mrb[0].mxu0
    %v3646 = vpop.f32.mrb[0].mxu0
    %v3647 = vpop.f32.mrb[0].mxu0
    %3648 = vdwg.mxu0
    %v3649 = vmul.f32 %v3644, %v1675
    %v3650 = vpack.c.bf16 %v3608, %v3608
    %v3651 = vpack.c.bf16 %v3649, %v3649
    %v3652 = vld [vmem:[#allocation2 + $0x6c0] sm:$0xf]
    %v3653 = vld [vmem:[#allocation2 + $0x6c4] sm:$0xf]
    %v3654 = vld [vmem:[#allocation2 + $0x6c8] sm:$0xf]
    %v3655 = vld [vmem:[#allocation2 + $0x6cc] sm:$0xf]
    %v3656 = vld [vmem:[#allocation2 + $0x6d0] sm:$0xf]
    %v3657 = vld [vmem:[#allocation2 + $0x6d4] sm:$0xf]
    %v3658 = vld [vmem:[#allocation2 + $0x6d8] sm:$0xf]
    %v3659 = vld [vmem:[#allocation2 + $0x6dc] sm:$0xf]
    %v3660 = vld [vmem:[#allocation2 + $0x6e0] sm:$0xf]
    %v3661 = vld [vmem:[#allocation2 + $0x6e4] sm:$0xf]
    %v3662 = vld [vmem:[#allocation2 + $0x6e8] sm:$0xf]
    %v3663 = vld [vmem:[#allocation2 + $0x6ec] sm:$0xf]
    %v3664 = vld [vmem:[#allocation2 + $0x6f0] sm:$0xf]
    %v3665 = vld [vmem:[#allocation2 + $0x6f4] sm:$0xf]
    %v3666 = vld [vmem:[#allocation2 + $0x6f8] sm:$0xf]
    %v3667 = vld [vmem:[#allocation2 + $0x6fc] sm:$0xf]
    %v3668 = vld [vmem:[#allocation2 + $0x700] sm:$0xf]
    %v3669 = vld [vmem:[#allocation2 + $0x704] sm:$0xf]
    %v3670 = vld [vmem:[#allocation2 + $0x708] sm:$0xf]
    %v3671 = vld [vmem:[#allocation2 + $0x70c] sm:$0xf]
    %v3672 = vld [vmem:[#allocation2 + $0x710] sm:$0xf]
    %v3673 = vld [vmem:[#allocation2 + $0x714] sm:$0xf]
    %v3674 = vld [vmem:[#allocation2 + $0x718] sm:$0xf]
    %v3675 = vld [vmem:[#allocation2 + $0x71c] sm:$0xf]
    %v3676 = vld [vmem:[#allocation2 + $0x720] sm:$0xf]
    %v3677 = vld [vmem:[#allocation2 + $0x724] sm:$0xf]
    %v3678 = vld [vmem:[#allocation2 + $0x728] sm:$0xf]
    %v3679 = vld [vmem:[#allocation2 + $0x72c] sm:$0xf]
    %v3680 = vld [vmem:[#allocation2 + $0x730] sm:$0xf]
    %v3681 = vld [vmem:[#allocation2 + $0x734] sm:$0xf]
    %v3682 = vld [vmem:[#allocation2 + $0x738] sm:$0xf]
    %v3683 = vld [vmem:[#allocation2 + $0x73c] sm:$0xf]
    %v3684 = vld [vmem:[#allocation2 + $0x740] sm:$0xf]
    %v3685 = vld [vmem:[#allocation2 + $0x744] sm:$0xf]
    %v3686 = vld [vmem:[#allocation2 + $0x748] sm:$0xf]
    %v3687 = vld [vmem:[#allocation2 + $0x74c] sm:$0xf]
    %v3688 = vld [vmem:[#allocation2 + $0x750] sm:$0xf]
    %v3689 = vld [vmem:[#allocation2 + $0x754] sm:$0xf]
    %v3690 = vld [vmem:[#allocation2 + $0x758] sm:$0xf]
    %v3691 = vld [vmem:[#allocation2 + $0x75c] sm:$0xf]
    %v3692 = vld [vmem:[#allocation2 + $0x760] sm:$0xf]
    %v3693 = vld [vmem:[#allocation2 + $0x764] sm:$0xf]
    %v3694 = vld [vmem:[#allocation2 + $0x768] sm:$0xf]
    %v3695 = vld [vmem:[#allocation2 + $0x76c] sm:$0xf]
    %v3696 = vld [vmem:[#allocation2 + $0x770] sm:$0xf]
    %v3697 = vld [vmem:[#allocation2 + $0x774] sm:$0xf]
    %v3698 = vld [vmem:[#allocation2 + $0x778] sm:$0xf]
    %v3699 = vld [vmem:[#allocation2 + $0x77c] sm:$0xf]
    %v3700 = vld [vmem:[#allocation5 + $0xf] sm:$0x1]
    %v3701 = vlaneseq
    %v3702 = vshrl.u32 %v3701, 7
    %v3703 = vsub.s32 0, %v3702
    %v3704 = vrot.slane %v3700, %v3703
    %v3753 = vunpack.c.l.b16 %v3652
    %v3754 = vunpack.c.l.b16 %v3653
    %v3755 = vunpack.c.l.b16 %v3654
    %v3756 = vunpack.c.l.b16 %v3655
    %v3757 = vunpack.c.l.b16 %v3656
    %v3758 = vunpack.c.l.b16 %v3657
    %v3759 = vunpack.c.l.b16 %v3658
    %v3760 = vunpack.c.l.b16 %v3659
    %v3761 = vunpack.c.l.b16 %v3660
    %v3762 = vunpack.c.l.b16 %v3661
    %v3763 = vunpack.c.l.b16 %v3662
    %v3764 = vunpack.c.l.b16 %v3663
    %v3765 = vunpack.c.l.b16 %v3664
    %v3766 = vunpack.c.l.b16 %v3665
    %v3767 = vunpack.c.l.b16 %v3666
    %v3768 = vunpack.c.l.b16 %v3667
    %v3769 = vunpack.c.l.b16 %v3668
    %v3770 = vunpack.c.l.b16 %v3669
    %v3771 = vunpack.c.l.b16 %v3670
    %v3772 = vunpack.c.l.b16 %v3671
    %v3773 = vunpack.c.l.b16 %v3672
    %v3774 = vunpack.c.l.b16 %v3673
    %v3775 = vunpack.c.l.b16 %v3674
    %v3776 = vunpack.c.l.b16 %v3675
    %v3777 = vunpack.c.l.b16 %v3676
    %v3778 = vunpack.c.l.b16 %v3677
    %v3779 = vunpack.c.l.b16 %v3678
    %v3780 = vunpack.c.l.b16 %v3679
    %v3781 = vunpack.c.l.b16 %v3680
    %v3782 = vunpack.c.l.b16 %v3681
    %v3783 = vunpack.c.l.b16 %v3682
    %v3784 = vunpack.c.l.b16 %v3683
    %v3785 = vunpack.c.l.b16 %v3684
    %v3786 = vunpack.c.l.b16 %v3685
    %v3787 = vunpack.c.l.b16 %v3686
    %v3788 = vunpack.c.l.b16 %v3687
    %v3789 = vunpack.c.l.b16 %v3688
    %v3790 = vunpack.c.l.b16 %v3689
    %v3791 = vunpack.c.l.b16 %v3690
    %v3792 = vunpack.c.l.b16 %v3691
    %v3793 = vunpack.c.l.b16 %v3692
    %v3794 = vunpack.c.l.b16 %v3693
    %v3795 = vunpack.c.l.b16 %v3694
    %v3796 = vunpack.c.l.b16 %v3695
    %v3797 = vunpack.c.l.b16 %v3696
    %v3798 = vunpack.c.l.b16 %v3697
    %v3799 = vunpack.c.l.b16 %v3698
    %v3800 = vunpack.c.l.b16 %v3699
    %v3801 = vpack.c.b16 %v3754, %v3753
    %v3802 = vpack.c.b16 %v3756, %v3755
    %v3803 = vpack.c.b16 %v3758, %v3757
    %v3804 = vpack.c.b16 %v3760, %v3759
    %v3805 = vpack.c.b16 %v3762, %v3761
    %v3806 = vpack.c.b16 %v3764, %v3763
    %v3807 = vpack.c.b16 %v3766, %v3765
    %v3808 = vpack.c.b16 %v3768, %v3767
    %v3809 = vpack.c.b16 %v3770, %v3769
    %v3810 = vpack.c.b16 %v3772, %v3771
    %v3811 = vpack.c.b16 %v3774, %v3773
    %v3812 = vpack.c.b16 %v3776, %v3775
    %v3813 = vpack.c.b16 %v3778, %v3777
    %v3814 = vpack.c.b16 %v3780, %v3779
    %v3815 = vpack.c.b16 %v3782, %v3781
    %v3816 = vpack.c.b16 %v3784, %v3783
    %v3817 = vpack.c.b16 %v3786, %v3785
    %v3818 = vpack.c.b16 %v3788, %v3787
    %v3819 = vpack.c.b16 %v3790, %v3789
    %v3820 = vpack.c.b16 %v3792, %v3791
    %v3821 = vpack.c.b16 %v3794, %v3793
    %v3822 = vpack.c.b16 %v3796, %v3795
    %v3823 = vpack.c.b16 %v3798, %v3797
    %v3824 = vpack.c.b16 %v3800, %v3799
    %3849 = vmatprep.subr.bf16.mxu0 0
    %3850 = vmatpush1.bf16.msra.mxu0 %v3801
    %3851 = vmatprep.subr.bf16.mxu0 0
    %3852 = vmatpush1.bf16.msra.mxu0 %v3802
    %3853 = vmatprep.subr.bf16.mxu0 0
    %3854 = vmatpush1.bf16.msra.mxu0 %v3803
    %3855 = vmatprep.subr.bf16.mxu0 0
    %3856 = vmatpush1.bf16.msra.mxu0 %v3804
    %3857 = vmatprep.subr.bf16.mxu0 0
    %3858 = vmatpush1.bf16.msra.mxu0 %v3805
    %3859 = vmatprep.subr.bf16.mxu0 0
    %3860 = vmatpush1.bf16.msra.mxu0 %v3806
    %3861 = vmatprep.subr.bf16.mxu0 0
    %3862 = vmatpush1.bf16.msra.mxu0 %v3807
    %3863 = vmatprep.subr.bf16.mxu0 0
    %3864 = vmatpush1.bf16.msra.mxu0 %v3808
    %3865 = vmatprep.subr.bf16.mxu0 0
    %3866 = vmatpush1.bf16.msra.mxu0 %v3809
    %3867 = vmatprep.subr.bf16.mxu0 0
    %3868 = vmatpush1.bf16.msra.mxu0 %v3810
    %3869 = vmatprep.subr.bf16.mxu0 0
    %3870 = vmatpush1.bf16.msra.mxu0 %v3811
    %3871 = vmatprep.subr.bf16.mxu0 0
    %3872 = vmatpush1.bf16.msra.mxu0 %v3812
    %3873 = vmatprep.subr.bf16.mxu0 0
    %3874 = vmatpush1.bf16.msra.mxu0 %v3813
    %3875 = vmatprep.subr.bf16.mxu0 0
    %3876 = vmatpush1.bf16.msra.mxu0 %v3814
    %3877 = vmatprep.subr.bf16.mxu0 0
    %3878 = vmatpush1.bf16.msra.mxu0 %v3815
    %3879 = vmatprep.subr.bf16.mxu0 0
    %3880 = vmatpush1.bf16.msra.mxu0 %v3816
    %3881 = vmatprep.mubr.bf16.mxu0 %v3650
    %3882 = vmatmul.mubr.bf16.gmra.mrb[0].mxu0 %v2187
    %v3883 = vpop.f32.mrb[0].mxu0
    %v3884 = vadd.f32 %v3704, %v3883
    %v3885 = vpop.f32.mrb[0].mxu0
    %v3886 = vpop.f32.mrb[0].mxu0
    %v3887 = vpop.f32.mrb[0].mxu0
    %3888 = vdwg.mxu0
    %3889 = vmatprep.subr.bf16.mxu0 0
    %3890 = vmatpush1.bf16.msra.mxu0 %v3817
    %3891 = vmatprep.subr.bf16.mxu0 0
    %3892 = vmatpush1.bf16.msra.mxu0 %v3818
    %3893 = vmatprep.subr.bf16.mxu0 0
    %3894 = vmatpush1.bf16.msra.mxu0 %v3819
    %3895 = vmatprep.subr.bf16.mxu0 0
    %3896 = vmatpush1.bf16.msra.mxu0 %v3820
    %3897 = vmatprep.subr.bf16.mxu0 0
    %3898 = vmatpush1.bf16.msra.mxu0 %v3821
    %3899 = vmatprep.subr.bf16.mxu0 0
    %3900 = vmatpush1.bf16.msra.mxu0 %v3822
    %3901 = vmatprep.subr.bf16.mxu0 0
    %3902 = vmatpush1.bf16.msra.mxu0 %v3823
    %3903 = vmatprep.subr.bf16.mxu0 0
    %3904 = vmatpush1.bf16.msra.mxu0 %v3824
    %3905 = vmatprep.subr.bf16.mxu0 0
    %3906 = vmatpush1.bf16.msra.mxu0 0
    %3907 = vmatprep.subr.bf16.mxu0 0
    %3908 = vmatpush1.bf16.msra.mxu0 0
    %3909 = vmatprep.subr.bf16.mxu0 0
    %3910 = vmatpush1.bf16.msra.mxu0 0
    %3911 = vmatprep.subr.bf16.mxu0 0
    %3912 = vmatpush1.bf16.msra.mxu0 0
    %3913 = vmatprep.subr.bf16.mxu0 0
    %3914 = vmatpush1.bf16.msra.mxu0 0
    %3915 = vmatprep.subr.bf16.mxu0 0
    %3916 = vmatpush1.bf16.msra.mxu0 0
    %3917 = vmatprep.subr.bf16.mxu0 0
    %3918 = vmatpush1.bf16.msra.mxu0 0
    %3919 = vmatprep.subr.bf16.mxu0 0
    %3920 = vmatpush1.bf16.msra.mxu0 0
    %3921 = vmatprep.mubr.bf16.mxu0 0
    %3922 = vmatmul.mubr.bf16.gmra.mrb[0].mxu0 %v3651
    %v3923 = vpop.f32.mrb[0].mxu0
    %v3924 = vadd.f32 %v3884, %v3923
    %v3925 = vpop.f32.mrb[0].mxu0
    %v3926 = vpop.f32.mrb[0].mxu0
    %v3927 = vpop.f32.mrb[0].mxu0
    %3928 = vdwg.mxu0
    %vm3929 = vcmp.gt.f32.partialorder %v3924, 0.0
    %v3930 = vmul.f32 %v3924, 1.442695
    %v3931 = vpow.pop %v3930
    %v3932 = vsub.f32 %v3931, 1.0
    %v3933 = vsel %vm3929, %v3924, %v3932
    %v3934 = vld [vmem:[#allocation2 + $0x780] sm:$0xf]
    %v3935 = vld [vmem:[#allocation2 + $0x784] sm:$0xf]
    %v3936 = vld [vmem:[#allocation2 + $0x788] sm:$0xf]
    %v3937 = vld [vmem:[#allocation2 + $0x78c] sm:$0xf]
    %v3938 = vld [vmem:[#allocation2 + $0x790] sm:$0xf]
    %v3939 = vld [vmem:[#allocation2 + $0x794] sm:$0xf]
    %v3940 = vld [vmem:[#allocation2 + $0x798] sm:$0xf]
    %v3941 = vld [vmem:[#allocation2 + $0x79c] sm:$0xf]
    %v3942 = vld [vmem:[#allocation2 + $0x7a0] sm:$0xf]
    %v3943 = vld [vmem:[#allocation2 + $0x7a4] sm:$0xf]
    %v3944 = vld [vmem:[#allocation2 + $0x7a8] sm:$0xf]
    %v3945 = vld [vmem:[#allocation2 + $0x7ac] sm:$0xf]
    %v3946 = vld [vmem:[#allocation2 + $0x7b0] sm:$0xf]
    %v3947 = vld [vmem:[#allocation2 + $0x7b4] sm:$0xf]
    %v3948 = vld [vmem:[#allocation2 + $0x7b8] sm:$0xf]
    %v3949 = vld [vmem:[#allocation2 + $0x7bc] sm:$0xf]
    %v3950 = vld [vmem:[#allocation5 + $0x10] sm:$0x1]
    %v3951 = vpack.c.bf16 %v3933, %v3933
    %v3952 = vlaneseq
    %v3953 = vshrl.u32 %v3952, 7
    %v3954 = vsub.s32 0, %v3953
    %v3955 = vrot.slane %v3950, %v3954
    %v3972 = vunpack.c.l.b16 %v3934
    %v3973 = vunpack.c.l.b16 %v3935
    %v3974 = vunpack.c.l.b16 %v3936
    %v3975 = vunpack.c.l.b16 %v3937
    %v3976 = vunpack.c.l.b16 %v3938
    %v3977 = vunpack.c.l.b16 %v3939
    %v3978 = vunpack.c.l.b16 %v3940
    %v3979 = vunpack.c.l.b16 %v3941
    %v3980 = vunpack.c.l.b16 %v3942
    %v3981 = vunpack.c.l.b16 %v3943
    %v3982 = vunpack.c.l.b16 %v3944
    %v3983 = vunpack.c.l.b16 %v3945
    %v3984 = vunpack.c.l.b16 %v3946
    %v3985 = vunpack.c.l.b16 %v3947
    %v3986 = vunpack.c.l.b16 %v3948
    %v3987 = vunpack.c.l.b16 %v3949
    %v3988 = vpack.c.b16 %v3973, %v3972
    %v3989 = vpack.c.b16 %v3975, %v3974
    %v3990 = vpack.c.b16 %v3977, %v3976
    %v3991 = vpack.c.b16 %v3979, %v3978
    %v3992 = vpack.c.b16 %v3981, %v3980
    %v3993 = vpack.c.b16 %v3983, %v3982
    %v3994 = vpack.c.b16 %v3985, %v3984
    %v3995 = vpack.c.b16 %v3987, %v3986
    %4004 = vmatprep.subr.bf16.mxu0 0
    %4005 = vmatpush1.bf16.msra.mxu0 %v3988
    %4006 = vmatprep.subr.bf16.mxu0 0
    %4007 = vmatpush1.bf16.msra.mxu0 %v3989
    %4008 = vmatprep.subr.bf16.mxu0 0
    %4009 = vmatpush1.bf16.msra.mxu0 %v3990
    %4010 = vmatprep.subr.bf16.mxu0 0
    %4011 = vmatpush1.bf16.msra.mxu0 %v3991
    %4012 = vmatprep.subr.bf16.mxu0 0
    %4013 = vmatpush1.bf16.msra.mxu0 %v3992
    %4014 = vmatprep.subr.bf16.mxu0 0
    %4015 = vmatpush1.bf16.msra.mxu0 %v3993
    %4016 = vmatprep.subr.bf16.mxu0 0
    %4017 = vmatpush1.bf16.msra.mxu0 %v3994
    %4018 = vmatprep.subr.bf16.mxu0 0
    %4019 = vmatpush1.bf16.msra.mxu0 %v3995
    %4020 = vmatprep.subr.bf16.mxu0 0
    %4021 = vmatpush1.bf16.msra.mxu0 0
    %4022 = vmatprep.subr.bf16.mxu0 0
    %4023 = vmatpush1.bf16.msra.mxu0 0
    %4024 = vmatprep.subr.bf16.mxu0 0
    %4025 = vmatpush1.bf16.msra.mxu0 0
    %4026 = vmatprep.subr.bf16.mxu0 0
    %4027 = vmatpush1.bf16.msra.mxu0 0
    %4028 = vmatprep.subr.bf16.mxu0 0
    %4029 = vmatpush1.bf16.msra.mxu0 0
    %4030 = vmatprep.subr.bf16.mxu0 0
    %4031 = vmatpush1.bf16.msra.mxu0 0
    %4032 = vmatprep.subr.bf16.mxu0 0
    %4033 = vmatpush1.bf16.msra.mxu0 0
    %4034 = vmatprep.subr.bf16.mxu0 0
    %4035 = vmatpush1.bf16.msra.mxu0 0
    %4036 = vmatprep.mubr.bf16.mxu0 0
    %4037 = vmatmul.mubr.bf16.gmra.mrb[0].mxu0 %v3951
    %v4038 = vpop.f32.mrb[0].mxu0
    %v4039 = vadd.f32 %v3955, %v4038
    %v4040 = vpop.f32.mrb[0].mxu0
    %v4041 = vpop.f32.mrb[0].mxu0
    %v4042 = vpop.f32.mrb[0].mxu0
    %4043 = vdwg.mxu0
    %vm4044 = vcmp.gt.f32.partialorder %v4039, 0.0
    %v4045 = vmul.f32 %v4039, 1.442695
    %v4046 = vpow.pop %v4045
    %v4047 = vsub.f32 %v4046, 1.0
    %v4048 = vsel %vm4044, %v4039, %v4047
    %v4049 = vld [vmem:[#allocation2 + $0x7c0] sm:$0xf]
    %v4050 = vld [vmem:[#allocation2 + $0x7c4] sm:$0xf]
    %v4051 = vld [vmem:[#allocation2 + $0x7c8] sm:$0xf]
    %v4052 = vld [vmem:[#allocation2 + $0x7cc] sm:$0xf]
    %v4053 = vld [vmem:[#allocation2 + $0x7d0] sm:$0xf]
    %v4054 = vld [vmem:[#allocation2 + $0x7d4] sm:$0xf]
    %v4055 = vld [vmem:[#allocation2 + $0x7d8] sm:$0xf]
    %v4056 = vld [vmem:[#allocation2 + $0x7dc] sm:$0xf]
    %v4057 = vld [vmem:[#allocation2 + $0x7e0] sm:$0xf]
    %v4058 = vld [vmem:[#allocation2 + $0x7e4] sm:$0xf]
    %v4059 = vld [vmem:[#allocation2 + $0x7e8] sm:$0xf]
    %v4060 = vld [vmem:[#allocation2 + $0x7ec] sm:$0xf]
    %v4061 = vld [vmem:[#allocation2 + $0x7f0] sm:$0xf]
    %v4062 = vld [vmem:[#allocation2 + $0x7f4] sm:$0xf]
    %v4063 = vld [vmem:[#allocation2 + $0x7f8] sm:$0xf]
    %v4064 = vld [vmem:[#allocation2 + $0x7fc] sm:$0xf]
    %v4065 = vld [vmem:[#allocation5 + $0x11] sm:$0x1]
    %v4066 = vpack.c.bf16 %v4048, %v4048
    %v4067 = vlaneseq
    %v4068 = vshrl.u32 %v4067, 7
    %v4069 = vsub.s32 0, %v4068
    %v4070 = vrot.slane %v4065, %v4069
    %v4087 = vunpack.c.l.b16 %v4049
    %v4088 = vunpack.c.l.b16 %v4050
    %v4089 = vunpack.c.l.b16 %v4051
    %v4090 = vunpack.c.l.b16 %v4052
    %v4091 = vunpack.c.l.b16 %v4053
    %v4092 = vunpack.c.l.b16 %v4054
    %v4093 = vunpack.c.l.b16 %v4055
    %v4094 = vunpack.c.l.b16 %v4056
    %v4095 = vunpack.c.l.b16 %v4057
    %v4096 = vunpack.c.l.b16 %v4058
    %v4097 = vunpack.c.l.b16 %v4059
    %v4098 = vunpack.c.l.b16 %v4060
    %v4099 = vunpack.c.l.b16 %v4061
    %v4100 = vunpack.c.l.b16 %v4062
    %v4101 = vunpack.c.l.b16 %v4063
    %v4102 = vunpack.c.l.b16 %v4064
    %v4103 = vpack.c.b16 %v4088, %v4087
    %v4104 = vpack.c.b16 %v4090, %v4089
    %v4105 = vpack.c.b16 %v4092, %v4091
    %v4106 = vpack.c.b16 %v4094, %v4093
    %v4107 = vpack.c.b16 %v4096, %v4095
    %v4108 = vpack.c.b16 %v4098, %v4097
    %v4109 = vpack.c.b16 %v4100, %v4099
    %v4110 = vpack.c.b16 %v4102, %v4101
    %4119 = vmatprep.subr.bf16.mxu0 0
    %4120 = vmatpush1.bf16.msra.mxu0 %v4103
    %4121 = vmatprep.subr.bf16.mxu0 0
    %4122 = vmatpush1.bf16.msra.mxu0 %v4104
    %4123 = vmatprep.subr.bf16.mxu0 0
    %4124 = vmatpush1.bf16.msra.mxu0 %v4105
    %4125 = vmatprep.subr.bf16.mxu0 0
    %4126 = vmatpush1.bf16.msra.mxu0 %v4106
    %4127 = vmatprep.subr.bf16.mxu0 0
    %4128 = vmatpush1.bf16.msra.mxu0 %v4107
    %4129 = vmatprep.subr.bf16.mxu0 0
    %4130 = vmatpush1.bf16.msra.mxu0 %v4108
    %4131 = vmatprep.subr.bf16.mxu0 0
    %4132 = vmatpush1.bf16.msra.mxu0 %v4109
    %4133 = vmatprep.subr.bf16.mxu0 0
    %4134 = vmatpush1.bf16.msra.mxu0 %v4110
    %4135 = vmatprep.subr.bf16.mxu0 0
    %4136 = vmatpush1.bf16.msra.mxu0 0
    %4137 = vmatprep.subr.bf16.mxu0 0
    %4138 = vmatpush1.bf16.msra.mxu0 0
    %4139 = vmatprep.subr.bf16.mxu0 0
    %4140 = vmatpush1.bf16.msra.mxu0 0
    %4141 = vmatprep.subr.bf16.mxu0 0
    %4142 = vmatpush1.bf16.msra.mxu0 0
    %4143 = vmatprep.subr.bf16.mxu0 0
    %4144 = vmatpush1.bf16.msra.mxu0 0
    %4145 = vmatprep.subr.bf16.mxu0 0
    %4146 = vmatpush1.bf16.msra.mxu0 0
    %4147 = vmatprep.subr.bf16.mxu0 0
    %4148 = vmatpush1.bf16.msra.mxu0 0
    %4149 = vmatprep.subr.bf16.mxu0 0
    %4150 = vmatpush1.bf16.msra.mxu0 0
    %4151 = vmatprep.mubr.bf16.mxu0 0
    %4152 = vmatmul.mubr.bf16.gmra.mrb[0].mxu0 %v4066
    %v4153 = vpop.f32.mrb[0].mxu0
    %v4154 = vadd.f32 %v4070, %v4153
    %v4155 = vpop.f32.mrb[0].mxu0
    %v4156 = vpop.f32.mrb[0].mxu0
    %v4157 = vpop.f32.mrb[0].mxu0
    %4158 = vdwg.mxu0
    %v4159 = vadd.f32 %v3559, %v1571
    %v4160 = vadd.f32 %v2997, %v1000
    %v4161 = vadd.f32 %v3000, %v1003
    %v4162 = vadd.f32 %v3005, %v1008
    %v4163 = vadd.f32 %v4154, %v2182
    %v4164 = vpack.c.bf16 %v4159, %v4159
    %v4165 = vpack.c.bf16 %v4161, %v4160
    %v4166 = vpack.c.bf16 %v4162, %v4162
    %v4167 = vpack.c.bf16 %v4163, %v4163
    %v4169 = vsel %vm157, %v4167, 0
    %4171 = vmatprep.subr.bf16.mxu0 0
    %4172 = vmatpush1.bf16.msra.mxu0 %v4169
    %4173 = vmatprep.subr.bf16.mxu0 0
    %4174 = vmatpush1.bf16.msra.mxu0 0
    %4175 = vmatprep.subr.bf16.mxu0 0
    %4176 = vmatpush1.bf16.msra.mxu0 0
    %4177 = vmatprep.subr.bf16.mxu0 0
    %4178 = vmatpush1.bf16.msra.mxu0 0
    %4179 = vmatprep.subr.bf16.mxu0 0
    %4180 = vmatpush1.bf16.msra.mxu0 0
    %4181 = vmatprep.subr.bf16.mxu0 0
    %4182 = vmatpush1.bf16.msra.mxu0 0
    %4183 = vmatprep.subr.bf16.mxu0 0
    %4184 = vmatpush1.bf16.msra.mxu0 0
    %4185 = vmatprep.subr.bf16.mxu0 0
    %4186 = vmatpush1.bf16.msra.mxu0 0
    %4187 = vmatprep.subr.bf16.mxu0 0
    %4188 = vmatpush1.bf16.msra.mxu0 0
    %4189 = vmatprep.subr.bf16.mxu0 0
    %4190 = vmatpush1.bf16.msra.mxu0 0
    %4191 = vmatprep.subr.bf16.mxu0 0
    %4192 = vmatpush1.bf16.msra.mxu0 0
    %4193 = vmatprep.subr.bf16.mxu0 0
    %4194 = vmatpush1.bf16.msra.mxu0 0
    %4195 = vmatprep.subr.bf16.mxu0 0
    %4196 = vmatpush1.bf16.msra.mxu0 0
    %4197 = vmatprep.subr.bf16.mxu0 0
    %4198 = vmatpush1.bf16.msra.mxu0 0
    %4199 = vmatprep.subr.bf16.mxu0 0
    %4200 = vmatpush1.bf16.msra.mxu0 0
    %4201 = vmatprep.subr.bf16.mxu0 0
    %4202 = vmatpush1.bf16.msra.mxu0 0
    %4203 = vmatprep.mubr.bf16.mxu0 0
    %4204 = vmatmul.mubr.bf16.gmra.mrb[0].mxu0 %v155
    %v4205 = vpop.f32.mrb[0].mxu0
    %v4206 = vadd.f32 0.0, %v4205
    %v4207 = vpop.f32.mrb[0].mxu0
    %v4208 = vpop.f32.mrb[0].mxu0
    %v4209 = vpop.f32.mrb[0].mxu0
    %4210 = vdwg.mxu0
    %v4211 = vpack.c.bf16 %v4206, %v4206
    %v4213 = vsel %vm217, %v4164, 0
    %4215 = vmatprep.subr.bf16.mxu0 0
    %4216 = vmatpush1.bf16.msra.mxu0 %v4213
    %4217 = vmatprep.subr.bf16.mxu0 0
    %4218 = vmatpush1.bf16.msra.mxu0 0
    %4219 = vmatprep.subr.bf16.mxu0 0
    %4220 = vmatpush1.bf16.msra.mxu0 0
    %4221 = vmatprep.subr.bf16.mxu0 0
    %4222 = vmatpush1.bf16.msra.mxu0 0
    %4223 = vmatprep.subr.bf16.mxu0 0
    %4224 = vmatpush1.bf16.msra.mxu0 0
    %4225 = vmatprep.subr.bf16.mxu0 0
    %4226 = vmatpush1.bf16.msra.mxu0 0
    %4227 = vmatprep.subr.bf16.mxu0 0
    %4228 = vmatpush1.bf16.msra.mxu0 0
    %4229 = vmatprep.subr.bf16.mxu0 0
    %4230 = vmatpush1.bf16.msra.mxu0 0
    %4231 = vmatprep.subr.bf16.mxu0 0
    %4232 = vmatpush1.bf16.msra.mxu0 0
    %4233 = vmatprep.subr.bf16.mxu0 0
    %4234 = vmatpush1.bf16.msra.mxu0 0
    %4235 = vmatprep.subr.bf16.mxu0 0
    %4236 = vmatpush1.bf16.msra.mxu0 0
    %4237 = vmatprep.subr.bf16.mxu0 0
    %4238 = vmatpush1.bf16.msra.mxu0 0
    %4239 = vmatprep.subr.bf16.mxu0 0
    %4240 = vmatpush1.bf16.msra.mxu0 0
    %4241 = vmatprep.subr.bf16.mxu0 0
    %4242 = vmatpush1.bf16.msra.mxu0 0
    %4243 = vmatprep.subr.bf16.mxu0 0
    %4244 = vmatpush1.bf16.msra.mxu0 0
    %4245 = vmatprep.subr.bf16.mxu0 0
    %4246 = vmatpush1.bf16.msra.mxu0 0
    %4247 = vmatprep.mubr.bf16.mxu0 0
    %4248 = vmatmul.mubr.bf16.gmra.mrb[0].mxu0 %v212
    %v4249 = vpop.f32.mrb[0].mxu0
    %v4250 = vadd.f32 0.0, %v4249
    %v4251 = vpop.f32.mrb[0].mxu0
    %v4252 = vpop.f32.mrb[0].mxu0
    %v4253 = vadd.f32 0.0, %v4252
    %v4254 = vpop.f32.mrb[0].mxu0
    %4255 = vmatprep.mubr.bf16.mxu0 0
    %4256 = vmatmul.mubr.bf16.gmra.mrb[0].mxu0 %v215
    %v4257 = vpop.f32.mrb[0].mxu0
    %v4258 = vadd.f32 0.0, %v4257
    %v4259 = vpop.f32.mrb[0].mxu0
    %v4260 = vpop.f32.mrb[0].mxu0
    %v4261 = vpop.f32.mrb[0].mxu0
    %4262 = vdwg.mxu0
    %v4263 = vpack.c.bf16 %v4253, %v4250
    %v4264 = vpack.c.bf16 %v4258, %v4258
    %4265 = vmatprep.subr.bf16.mxu0 0
    %4266 = vmatpush1.bf16.msra.mxu0 %v4213
    %4267 = vmatprep.subr.bf16.mxu0 0
    %4268 = vmatpush1.bf16.msra.mxu0 0
    %4269 = vmatprep.subr.bf16.mxu0 0
    %4270 = vmatpush1.bf16.msra.mxu0 0
    %4271 = vmatprep.subr.bf16.mxu0 0
    %4272 = vmatpush1.bf16.msra.mxu0 0
    %4273 = vmatprep.subr.bf16.mxu0 0
    %4274 = vmatpush1.bf16.msra.mxu0 0
    %4275 = vmatprep.subr.bf16.mxu0 0
    %4276 = vmatpush1.bf16.msra.mxu0 0
    %4277 = vmatprep.subr.bf16.mxu0 0
    %4278 = vmatpush1.bf16.msra.mxu0 0
    %4279 = vmatprep.subr.bf16.mxu0 0
    %4280 = vmatpush1.bf16.msra.mxu0 0
    %4281 = vmatprep.subr.bf16.mxu0 0
    %4282 = vmatpush1.bf16.msra.mxu0 0
    %4283 = vmatprep.subr.bf16.mxu0 0
    %4284 = vmatpush1.bf16.msra.mxu0 0
    %4285 = vmatprep.subr.bf16.mxu0 0
    %4286 = vmatpush1.bf16.msra.mxu0 0
    %4287 = vmatprep.subr.bf16.mxu0 0
    %4288 = vmatpush1.bf16.msra.mxu0 0
    %4289 = vmatprep.subr.bf16.mxu0 0
    %4290 = vmatpush1.bf16.msra.mxu0 0
    %4291 = vmatprep.subr.bf16.mxu0 0
    %4292 = vmatpush1.bf16.msra.mxu0 0
    %4293 = vmatprep.subr.bf16.mxu0 0
    %4294 = vmatpush1.bf16.msra.mxu0 0
    %4295 = vmatprep.subr.bf16.mxu0 0
    %4296 = vmatpush1.bf16.msra.mxu0 0
    %4297 = vmatprep.mubr.bf16.mxu0 0
    %4298 = vmatmul.mubr.bf16.gmra.mrb[0].mxu0 %v280
    %v4299 = vpop.f32.mrb[0].mxu0
    %v4300 = vadd.f32 0.0, %v4299
    %v4301 = vpop.f32.mrb[0].mxu0
    %v4302 = vpop.f32.mrb[0].mxu0
    %v4303 = vadd.f32 0.0, %v4302
    %v4304 = vpop.f32.mrb[0].mxu0
    %4305 = vmatprep.mubr.bf16.mxu0 0
    %4306 = vmatmul.mubr.bf16.gmra.mrb[0].mxu0 %v283
    %v4307 = vpop.f32.mrb[0].mxu0
    %v4308 = vadd.f32 0.0, %v4307
    %v4309 = vpop.f32.mrb[0].mxu0
    %v4310 = vpop.f32.mrb[0].mxu0
    %v4311 = vpop.f32.mrb[0].mxu0
    %4312 = vdwg.mxu0
    %v4313 = vpack.c.bf16 %v4303, %v4300
    %v4314 = vpack.c.bf16 %v4308, %v4308
    %v4316 = vsel %vm217, %v4211, 0
    %4318 = vmatprep.subr.bf16.mxu0 0
    %4319 = vmatpush1.bf16.msra.mxu0 %v4316
    %4320 = vmatprep.subr.bf16.mxu0 0
    %4321 = vmatpush1.bf16.msra.mxu0 0
    %4322 = vmatprep.subr.bf16.mxu0 0
    %4323 = vmatpush1.bf16.msra.mxu0 0
    %4324 = vmatprep.subr.bf16.mxu0 0
    %4325 = vmatpush1.bf16.msra.mxu0 0
    %4326 = vmatprep.subr.bf16.mxu0 0
    %4327 = vmatpush1.bf16.msra.mxu0 0
    %4328 = vmatprep.subr.bf16.mxu0 0
    %4329 = vmatpush1.bf16.msra.mxu0 0
    %4330 = vmatprep.subr.bf16.mxu0 0
    %4331 = vmatpush1.bf16.msra.mxu0 0
    %4332 = vmatprep.subr.bf16.mxu0 0
    %4333 = vmatpush1.bf16.msra.mxu0 0
    %4334 = vmatprep.subr.bf16.mxu0 0
    %4335 = vmatpush1.bf16.msra.mxu0 0
    %4336 = vmatprep.subr.bf16.mxu0 0
    %4337 = vmatpush1.bf16.msra.mxu0 0
    %4338 = vmatprep.subr.bf16.mxu0 0
    %4339 = vmatpush1.bf16.msra.mxu0 0
    %4340 = vmatprep.subr.bf16.mxu0 0
    %4341 = vmatpush1.bf16.msra.mxu0 0
    %4342 = vmatprep.subr.bf16.mxu0 0
    %4343 = vmatpush1.bf16.msra.mxu0 0
    %4344 = vmatprep.subr.bf16.mxu0 0
    %4345 = vmatpush1.bf16.msra.mxu0 0
    %4346 = vmatprep.subr.bf16.mxu0 0
    %4347 = vmatpush1.bf16.msra.mxu0 0
    %4348 = vmatprep.subr.bf16.mxu0 0
    %4349 = vmatpush1.bf16.msra.mxu0 0
    %4350 = vmatprep.mubr.bf16.mxu0 0
    %4351 = vmatmul.mubr.bf16.gmra.mrb[0].mxu0 %v212
    %v4352 = vpop.f32.mrb[0].mxu0
    %v4353 = vadd.f32 0.0, %v4352
    %v4354 = vpop.f32.mrb[0].mxu0
    %v4355 = vpop.f32.mrb[0].mxu0
    %v4356 = vadd.f32 0.0, %v4355
    %v4357 = vpop.f32.mrb[0].mxu0
    %4358 = vmatprep.mubr.bf16.mxu0 0
    %4359 = vmatmul.mubr.bf16.gmra.mrb[0].mxu0 %v215
    %v4360 = vpop.f32.mrb[0].mxu0
    %v4361 = vadd.f32 0.0, %v4360
    %v4362 = vpop.f32.mrb[0].mxu0
    %v4363 = vpop.f32.mrb[0].mxu0
    %v4364 = vpop.f32.mrb[0].mxu0
    %4365 = vdwg.mxu0
    %v4366 = vpack.c.bf16 %v4356, %v4353
    %v4367 = vpack.c.bf16 %v4361, %v4361
    %v4368 = vld [vmem:[#allocation2 + $0x800] sm:$0xf]
    %v4369 = vld [vmem:[#allocation2 + $0x804] sm:$0xf]
    %v4370 = vld [vmem:[#allocation2 + $0x808] sm:$0xf]
    %v4371 = vld [vmem:[#allocation2 + $0x80c] sm:$0xf]
    %v4372 = vld [vmem:[#allocation2 + $0x810] sm:$0xf]
    %v4373 = vld [vmem:[#allocation2 + $0x814] sm:$0xf]
    %v4374 = vld [vmem:[#allocation2 + $0x818] sm:$0xf]
    %v4375 = vld [vmem:[#allocation2 + $0x81c] sm:$0xf]
    %v4376 = vld [vmem:[#allocation2 + $0x820] sm:$0xf]
    %v4377 = vld [vmem:[#allocation2 + $0x824] sm:$0xf]
    %v4378 = vld [vmem:[#allocation2 + $0x828] sm:$0xf]
    %v4379 = vld [vmem:[#allocation2 + $0x82c] sm:$0xf]
    %v4380 = vld [vmem:[#allocation2 + $0x830] sm:$0xf]
    %v4381 = vld [vmem:[#allocation2 + $0x834] sm:$0xf]
    %v4382 = vld [vmem:[#allocation2 + $0x838] sm:$0xf]
    %v4383 = vld [vmem:[#allocation2 + $0x83c] sm:$0xf]
    %v4384 = vld [vmem:[#allocation2 + $0x840] sm:$0xf]
    %v4385 = vld [vmem:[#allocation2 + $0x844] sm:$0xf]
    %v4386 = vld [vmem:[#allocation2 + $0x848] sm:$0xf]
    %v4387 = vld [vmem:[#allocation2 + $0x84c] sm:$0xf]
    %v4388 = vld [vmem:[#allocation2 + $0x850] sm:$0xf]
    %v4389 = vld [vmem:[#allocation2 + $0x854] sm:$0xf]
    %v4390 = vld [vmem:[#allocation2 + $0x858] sm:$0xf]
    %v4391 = vld [vmem:[#allocation2 + $0x85c] sm:$0xf]
    %v4392 = vld [vmem:[#allocation2 + $0x860] sm:$0xf]
    %v4393 = vld [vmem:[#allocation2 + $0x864] sm:$0xf]
    %v4394 = vld [vmem:[#allocation2 + $0x868] sm:$0xf]
    %v4395 = vld [vmem:[#allocation2 + $0x86c] sm:$0xf]
    %v4396 = vld [vmem:[#allocation2 + $0x870] sm:$0xf]
    %v4397 = vld [vmem:[#allocation2 + $0x874] sm:$0xf]
    %v4398 = vld [vmem:[#allocation2 + $0x878] sm:$0xf]
    %v4399 = vld [vmem:[#allocation2 + $0x87c] sm:$0xf]
    %v4400 = vld [vmem:[#allocation2 + $0x880] sm:$0xf]
    %v4401 = vld [vmem:[#allocation2 + $0x884] sm:$0xf]
    %v4402 = vld [vmem:[#allocation2 + $0x888] sm:$0xf]
    %v4403 = vld [vmem:[#allocation2 + $0x88c] sm:$0xf]
    %v4404 = vld [vmem:[#allocation2 + $0x890] sm:$0xf]
    %v4405 = vld [vmem:[#allocation2 + $0x894] sm:$0xf]
    %v4406 = vld [vmem:[#allocation2 + $0x898] sm:$0xf]
    %v4407 = vld [vmem:[#allocation2 + $0x89c] sm:$0xf]
    %v4408 = vld [vmem:[#allocation2 + $0x8a0] sm:$0xf]
    %v4409 = vld [vmem:[#allocation2 + $0x8a4] sm:$0xf]
    %v4410 = vld [vmem:[#allocation2 + $0x8a8] sm:$0xf]
    %v4411 = vld [vmem:[#allocation2 + $0x8ac] sm:$0xf]
    %v4412 = vld [vmem:[#allocation2 + $0x8b0] sm:$0xf]
    %v4413 = vld [vmem:[#allocation2 + $0x8b4] sm:$0xf]
    %v4414 = vld [vmem:[#allocation2 + $0x8b8] sm:$0xf]
    %v4415 = vld [vmem:[#allocation2 + $0x8bc] sm:$0xf]
    %v4416 = vld [vmem:[#allocation2 + $0x8c0] sm:$0xf]
    %v4417 = vld [vmem:[#allocation2 + $0x8c4] sm:$0xf]
    %v4418 = vld [vmem:[#allocation2 + $0x8c8] sm:$0xf]
    %v4419 = vld [vmem:[#allocation2 + $0x8cc] sm:$0xf]
    %v4420 = vld [vmem:[#allocation2 + $0x8d0] sm:$0xf]
    %v4421 = vld [vmem:[#allocation2 + $0x8d4] sm:$0xf]
    %v4422 = vld [vmem:[#allocation2 + $0x8d8] sm:$0xf]
    %v4423 = vld [vmem:[#allocation2 + $0x8dc] sm:$0xf]
    %v4424 = vld [vmem:[#allocation2 + $0x8e0] sm:$0xf]
    %v4425 = vld [vmem:[#allocation2 + $0x8e4] sm:$0xf]
    %v4426 = vld [vmem:[#allocation2 + $0x8e8] sm:$0xf]
    %v4427 = vld [vmem:[#allocation2 + $0x8ec] sm:$0xf]
    %v4428 = vld [vmem:[#allocation2 + $0x8f0] sm:$0xf]
    %v4429 = vld [vmem:[#allocation2 + $0x8f4] sm:$0xf]
    %v4430 = vld [vmem:[#allocation2 + $0x8f8] sm:$0xf]
    %v4431 = vld [vmem:[#allocation2 + $0x8fc] sm:$0xf]
    %v4432 = vld [vmem:[#allocation5 + $0x12] sm:$0x1]
    %v4433 = vlaneseq
    %v4434 = vshrl.u32 %v4433, 7
    %v4435 = vsub.s32 0, %v4434
    %v4436 = vrot.slane %v4432, %v4435
    %v4501 = vunpack.c.l.b16 %v4368
    %v4502 = vunpack.c.l.b16 %v4369
    %v4503 = vunpack.c.l.b16 %v4370
    %v4504 = vunpack.c.l.b16 %v4371
    %v4505 = vunpack.c.l.b16 %v4372
    %v4506 = vunpack.c.l.b16 %v4373
    %v4507 = vunpack.c.l.b16 %v4374
    %v4508 = vunpack.c.l.b16 %v4375
    %v4509 = vunpack.c.l.b16 %v4376
    %v4510 = vunpack.c.l.b16 %v4377
    %v4511 = vunpack.c.l.b16 %v4378
    %v4512 = vunpack.c.l.b16 %v4379
    %v4513 = vunpack.c.l.b16 %v4380
    %v4514 = vunpack.c.l.b16 %v4381
    %v4515 = vunpack.c.l.b16 %v4382
    %v4516 = vunpack.c.l.b16 %v4383
    %v4517 = vunpack.c.l.b16 %v4384
    %v4518 = vunpack.c.l.b16 %v4385
    %v4519 = vunpack.c.l.b16 %v4386
    %v4520 = vunpack.c.l.b16 %v4387
    %v4521 = vunpack.c.l.b16 %v4388
    %v4522 = vunpack.c.l.b16 %v4389
    %v4523 = vunpack.c.l.b16 %v4390
    %v4524 = vunpack.c.l.b16 %v4391
    %v4525 = vunpack.c.l.b16 %v4392
    %v4526 = vunpack.c.l.b16 %v4393
    %v4527 = vunpack.c.l.b16 %v4394
    %v4528 = vunpack.c.l.b16 %v4395
    %v4529 = vunpack.c.l.b16 %v4396
    %v4530 = vunpack.c.l.b16 %v4397
    %v4531 = vunpack.c.l.b16 %v4398
    %v4532 = vunpack.c.l.b16 %v4399
    %v4533 = vunpack.c.l.b16 %v4400
    %v4534 = vunpack.c.l.b16 %v4401
    %v4535 = vunpack.c.l.b16 %v4402
    %v4536 = vunpack.c.l.b16 %v4403
    %v4537 = vunpack.c.l.b16 %v4404
    %v4538 = vunpack.c.l.b16 %v4405
    %v4539 = vunpack.c.l.b16 %v4406
    %v4540 = vunpack.c.l.b16 %v4407
    %v4541 = vunpack.c.l.b16 %v4408
    %v4542 = vunpack.c.l.b16 %v4409
    %v4543 = vunpack.c.l.b16 %v4410
    %v4544 = vunpack.c.l.b16 %v4411
    %v4545 = vunpack.c.l.b16 %v4412
    %v4546 = vunpack.c.l.b16 %v4413
    %v4547 = vunpack.c.l.b16 %v4414
    %v4548 = vunpack.c.l.b16 %v4415
    %v4549 = vunpack.c.l.b16 %v4416
    %v4550 = vunpack.c.l.b16 %v4417
    %v4551 = vunpack.c.l.b16 %v4418
    %v4552 = vunpack.c.l.b16 %v4419
    %v4553 = vunpack.c.l.b16 %v4420
    %v4554 = vunpack.c.l.b16 %v4421
    %v4555 = vunpack.c.l.b16 %v4422
    %v4556 = vunpack.c.l.b16 %v4423
    %v4557 = vunpack.c.l.b16 %v4424
    %v4558 = vunpack.c.l.b16 %v4425
    %v4559 = vunpack.c.l.b16 %v4426
    %v4560 = vunpack.c.l.b16 %v4427
    %v4561 = vunpack.c.l.b16 %v4428
    %v4562 = vunpack.c.l.b16 %v4429
    %v4563 = vunpack.c.l.b16 %v4430
    %v4564 = vunpack.c.l.b16 %v4431
    %v4565 = vpack.c.b16 %v4502, %v4501
    %v4566 = vpack.c.b16 %v4504, %v4503
    %v4567 = vpack.c.b16 %v4506, %v4505
    %v4568 = vpack.c.b16 %v4508, %v4507
    %v4569 = vpack.c.b16 %v4510, %v4509
    %v4570 = vpack.c.b16 %v4512, %v4511
    %v4571 = vpack.c.b16 %v4514, %v4513
    %v4572 = vpack.c.b16 %v4516, %v4515
    %v4573 = vpack.c.b16 %v4518, %v4517
    %v4574 = vpack.c.b16 %v4520, %v4519
    %v4575 = vpack.c.b16 %v4522, %v4521
    %v4576 = vpack.c.b16 %v4524, %v4523
    %v4577 = vpack.c.b16 %v4526, %v4525
    %v4578 = vpack.c.b16 %v4528, %v4527
    %v4579 = vpack.c.b16 %v4530, %v4529
    %v4580 = vpack.c.b16 %v4532, %v4531
    %v4581 = vpack.c.b16 %v4534, %v4533
    %v4582 = vpack.c.b16 %v4536, %v4535
    %v4583 = vpack.c.b16 %v4538, %v4537
    %v4584 = vpack.c.b16 %v4540, %v4539
    %v4585 = vpack.c.b16 %v4542, %v4541
    %v4586 = vpack.c.b16 %v4544, %v4543
    %v4587 = vpack.c.b16 %v4546, %v4545
    %v4588 = vpack.c.b16 %v4548, %v4547
    %v4589 = vpack.c.b16 %v4550, %v4549
    %v4590 = vpack.c.b16 %v4552, %v4551
    %v4591 = vpack.c.b16 %v4554, %v4553
    %v4592 = vpack.c.b16 %v4556, %v4555
    %v4593 = vpack.c.b16 %v4558, %v4557
    %v4594 = vpack.c.b16 %v4560, %v4559
    %v4595 = vpack.c.b16 %v4562, %v4561
    %v4596 = vpack.c.b16 %v4564, %v4563
    %4629 = vmatprep.subr.bf16.mxu0 0
    %4630 = vmatpush1.bf16.msra.mxu0 %v4565
    %4631 = vmatprep.subr.bf16.mxu0 0
    %4632 = vmatpush1.bf16.msra.mxu0 %v4566
    %4633 = vmatprep.subr.bf16.mxu0 0
    %4634 = vmatpush1.bf16.msra.mxu0 %v4567
    %4635 = vmatprep.subr.bf16.mxu0 0
    %4636 = vmatpush1.bf16.msra.mxu0 %v4568
    %4637 = vmatprep.subr.bf16.mxu0 0
    %4638 = vmatpush1.bf16.msra.mxu0 %v4569
    %4639 = vmatprep.subr.bf16.mxu0 0
    %4640 = vmatpush1.bf16.msra.mxu0 %v4570
    %4641 = vmatprep.subr.bf16.mxu0 0
    %4642 = vmatpush1.bf16.msra.mxu0 %v4571
    %4643 = vmatprep.subr.bf16.mxu0 0
    %4644 = vmatpush1.bf16.msra.mxu0 %v4572
    %4645 = vmatprep.subr.bf16.mxu0 0
    %4646 = vmatpush1.bf16.msra.mxu0 %v4573
    %4647 = vmatprep.subr.bf16.mxu0 0
    %4648 = vmatpush1.bf16.msra.mxu0 %v4574
    %4649 = vmatprep.subr.bf16.mxu0 0
    %4650 = vmatpush1.bf16.msra.mxu0 %v4575
    %4651 = vmatprep.subr.bf16.mxu0 0
    %4652 = vmatpush1.bf16.msra.mxu0 %v4576
    %4653 = vmatprep.subr.bf16.mxu0 0
    %4654 = vmatpush1.bf16.msra.mxu0 %v4577
    %4655 = vmatprep.subr.bf16.mxu0 0
    %4656 = vmatpush1.bf16.msra.mxu0 %v4578
    %4657 = vmatprep.subr.bf16.mxu0 0
    %4658 = vmatpush1.bf16.msra.mxu0 %v4579
    %4659 = vmatprep.subr.bf16.mxu0 0
    %4660 = vmatpush1.bf16.msra.mxu0 %v4580
    %4661 = vmatprep.mubr.bf16.mxu0 %v4313
    %4662 = vmatmul.mubr.bf16.gmra.mrb[0].mxu0 %v4263
    %v4663 = vpop.f32.mrb[0].mxu0
    %v4664 = vadd.f32 %v4436, %v4663
    %v4665 = vpop.f32.mrb[0].mxu0
    %v4666 = vpop.f32.mrb[0].mxu0
    %v4667 = vadd.f32 %v4436, %v4666
    %v4668 = vpop.f32.mrb[0].mxu0
    %4669 = vmatprep.mubr.bf16.mxu0 %v4314
    %4670 = vmatmul.mubr.bf16.gmra.mrb[0].mxu0 %v4264
    %v4671 = vpop.f32.mrb[0].mxu0
    %v4672 = vadd.f32 %v4436, %v4671
    %v4673 = vpop.f32.mrb[0].mxu0
    %v4674 = vpop.f32.mrb[0].mxu0
    %v4675 = vpop.f32.mrb[0].mxu0
    %4676 = vdwg.mxu0
    %4677 = vmatprep.subr.bf16.mxu0 0
    %4678 = vmatpush1.bf16.msra.mxu0 %v4581
    %4679 = vmatprep.subr.bf16.mxu0 0
    %4680 = vmatpush1.bf16.msra.mxu0 %v4582
    %4681 = vmatprep.subr.bf16.mxu0 0
    %4682 = vmatpush1.bf16.msra.mxu0 %v4583
    %4683 = vmatprep.subr.bf16.mxu0 0
    %4684 = vmatpush1.bf16.msra.mxu0 %v4584
    %4685 = vmatprep.subr.bf16.mxu0 0
    %4686 = vmatpush1.bf16.msra.mxu0 %v4585
    %4687 = vmatprep.subr.bf16.mxu0 0
    %4688 = vmatpush1.bf16.msra.mxu0 %v4586
    %4689 = vmatprep.subr.bf16.mxu0 0
    %4690 = vmatpush1.bf16.msra.mxu0 %v4587
    %4691 = vmatprep.subr.bf16.mxu0 0
    %4692 = vmatpush1.bf16.msra.mxu0 %v4588
    %4693 = vmatprep.subr.bf16.mxu0 0
    %4694 = vmatpush1.bf16.msra.mxu0 %v4589
    %4695 = vmatprep.subr.bf16.mxu0 0
    %4696 = vmatpush1.bf16.msra.mxu0 %v4590
    %4697 = vmatprep.subr.bf16.mxu0 0
    %4698 = vmatpush1.bf16.msra.mxu0 %v4591
    %4699 = vmatprep.subr.bf16.mxu0 0
    %4700 = vmatpush1.bf16.msra.mxu0 %v4592
    %4701 = vmatprep.subr.bf16.mxu0 0
    %4702 = vmatpush1.bf16.msra.mxu0 %v4593
    %4703 = vmatprep.subr.bf16.mxu0 0
    %4704 = vmatpush1.bf16.msra.mxu0 %v4594
    %4705 = vmatprep.subr.bf16.mxu0 0
    %4706 = vmatpush1.bf16.msra.mxu0 %v4595
    %4707 = vmatprep.subr.bf16.mxu0 0
    %4708 = vmatpush1.bf16.msra.mxu0 %v4596
    %4709 = vmatprep.mubr.bf16.mxu0 %v4366
    %4710 = vmatmul.mubr.bf16.gmra.mrb[0].mxu0 %v4165
    %v4711 = vpop.f32.mrb[0].mxu0
    %v4712 = vadd.f32 %v4664, %v4711
    %v4713 = vpop.f32.mrb[0].mxu0
    %v4714 = vpop.f32.mrb[0].mxu0
    %v4715 = vadd.f32 %v4667, %v4714
    %v4716 = vpop.f32.mrb[0].mxu0
    %4717 = vmatprep.mubr.bf16.mxu0 %v4367
    %4718 = vmatmul.mubr.bf16.gmra.mrb[0].mxu0 %v4166
    %v4719 = vpop.f32.mrb[0].mxu0
    %v4720 = vadd.f32 %v4672, %v4719
    %v4721 = vpop.f32.mrb[0].mxu0
    %v4722 = vpop.f32.mrb[0].mxu0
    %v4723 = vpop.f32.mrb[0].mxu0
    %4724 = vdwg.mxu0
    %vm4725 = vcmp.gt.f32.partialorder %v4712, 0.0
    %vm4726 = vcmp.gt.f32.partialorder %v4715, 0.0
    %vm4727 = vcmp.gt.f32.partialorder %v4720, 0.0
    %v4728 = vmul.f32 %v4712, 1.442695
    %v4729 = vpow.pop %v4728
    %v4730 = vmul.f32 %v4715, 1.442695
    %v4731 = vpow.pop %v4730
    %v4732 = vmul.f32 %v4720, 1.442695
    %v4733 = vpow.pop %v4732
    %v4734 = vsub.f32 %v4729, 1.0
    %v4735 = vsub.f32 %v4731, 1.0
    %v4736 = vsub.f32 %v4733, 1.0
    %v4737 = vsel %vm4725, %v4712, %v4734
    %v4738 = vsel %vm4726, %v4715, %v4735
    %v4739 = vsel %vm4727, %v4720, %v4736
    %v4740 = vld [vmem:[#allocation2 + $0x900] sm:$0xf]
    %v4741 = vld [vmem:[#allocation2 + $0x904] sm:$0xf]
    %v4742 = vld [vmem:[#allocation2 + $0x908] sm:$0xf]
    %v4743 = vld [vmem:[#allocation2 + $0x90c] sm:$0xf]
    %v4744 = vld [vmem:[#allocation2 + $0x910] sm:$0xf]
    %v4745 = vld [vmem:[#allocation2 + $0x914] sm:$0xf]
    %v4746 = vld [vmem:[#allocation2 + $0x918] sm:$0xf]
    %v4747 = vld [vmem:[#allocation2 + $0x91c] sm:$0xf]
    %v4748 = vld [vmem:[#allocation2 + $0x920] sm:$0xf]
    %v4749 = vld [vmem:[#allocation2 + $0x924] sm:$0xf]
    %v4750 = vld [vmem:[#allocation2 + $0x928] sm:$0xf]
    %v4751 = vld [vmem:[#allocation2 + $0x92c] sm:$0xf]
    %v4752 = vld [vmem:[#allocation2 + $0x930] sm:$0xf]
    %v4753 = vld [vmem:[#allocation2 + $0x934] sm:$0xf]
    %v4754 = vld [vmem:[#allocation2 + $0x938] sm:$0xf]
    %v4755 = vld [vmem:[#allocation2 + $0x93c] sm:$0xf]
    %v4756 = vld [vmem:[#allocation5 + $0x13] sm:$0x1]
    %v4757 = vpack.c.bf16 %v4738, %v4737
    %v4758 = vpack.c.bf16 %v4739, %v4739
    %v4759 = vlaneseq
    %v4760 = vshrl.u32 %v4759, 7
    %v4761 = vsub.s32 0, %v4760
    %v4762 = vrot.slane %v4756, %v4761
    %v4779 = vunpack.c.l.b16 %v4740
    %v4780 = vunpack.c.l.b16 %v4741
    %v4781 = vunpack.c.l.b16 %v4742
    %v4782 = vunpack.c.l.b16 %v4743
    %v4783 = vunpack.c.l.b16 %v4744
    %v4784 = vunpack.c.l.b16 %v4745
    %v4785 = vunpack.c.l.b16 %v4746
    %v4786 = vunpack.c.l.b16 %v4747
    %v4787 = vunpack.c.l.b16 %v4748
    %v4788 = vunpack.c.l.b16 %v4749
    %v4789 = vunpack.c.l.b16 %v4750
    %v4790 = vunpack.c.l.b16 %v4751
    %v4791 = vunpack.c.l.b16 %v4752
    %v4792 = vunpack.c.l.b16 %v4753
    %v4793 = vunpack.c.l.b16 %v4754
    %v4794 = vunpack.c.l.b16 %v4755
    %v4795 = vpack.c.b16 %v4780, %v4779
    %v4796 = vpack.c.b16 %v4782, %v4781
    %v4797 = vpack.c.b16 %v4784, %v4783
    %v4798 = vpack.c.b16 %v4786, %v4785
    %v4799 = vpack.c.b16 %v4788, %v4787
    %v4800 = vpack.c.b16 %v4790, %v4789
    %v4801 = vpack.c.b16 %v4792, %v4791
    %v4802 = vpack.c.b16 %v4794, %v4793
    %4811 = vmatprep.subr.bf16.mxu0 0
    %4812 = vmatpush1.bf16.msra.mxu0 %v4795
    %4813 = vmatprep.subr.bf16.mxu0 0
    %4814 = vmatpush1.bf16.msra.mxu0 %v4796
    %4815 = vmatprep.subr.bf16.mxu0 0
    %4816 = vmatpush1.bf16.msra.mxu0 %v4797
    %4817 = vmatprep.subr.bf16.mxu0 0
    %4818 = vmatpush1.bf16.msra.mxu0 %v4798
    %4819 = vmatprep.subr.bf16.mxu0 0
    %4820 = vmatpush1.bf16.msra.mxu0 %v4799
    %4821 = vmatprep.subr.bf16.mxu0 0
    %4822 = vmatpush1.bf16.msra.mxu0 %v4800
    %4823 = vmatprep.subr.bf16.mxu0 0
    %4824 = vmatpush1.bf16.msra.mxu0 %v4801
    %4825 = vmatprep.subr.bf16.mxu0 0
    %4826 = vmatpush1.bf16.msra.mxu0 %v4802
    %4827 = vmatprep.subr.bf16.mxu0 0
    %4828 = vmatpush1.bf16.msra.mxu0 0
    %4829 = vmatprep.subr.bf16.mxu0 0
    %4830 = vmatpush1.bf16.msra.mxu0 0
    %4831 = vmatprep.subr.bf16.mxu0 0
    %4832 = vmatpush1.bf16.msra.mxu0 0
    %4833 = vmatprep.subr.bf16.mxu0 0
    %4834 = vmatpush1.bf16.msra.mxu0 0
    %4835 = vmatprep.subr.bf16.mxu0 0
    %4836 = vmatpush1.bf16.msra.mxu0 0
    %4837 = vmatprep.subr.bf16.mxu0 0
    %4838 = vmatpush1.bf16.msra.mxu0 0
    %4839 = vmatprep.subr.bf16.mxu0 0
    %4840 = vmatpush1.bf16.msra.mxu0 0
    %4841 = vmatprep.subr.bf16.mxu0 0
    %4842 = vmatpush1.bf16.msra.mxu0 0
    %4843 = vmatprep.mubr.bf16.mxu0 0
    %4844 = vmatmul.mubr.bf16.gmra.mrb[0].mxu0 %v4757
    %v4845 = vpop.f32.mrb[0].mxu0
    %v4846 = vadd.f32 %v4762, %v4845
    %v4847 = vpop.f32.mrb[0].mxu0
    %v4848 = vpop.f32.mrb[0].mxu0
    %v4849 = vadd.f32 %v4762, %v4848
    %v4850 = vpop.f32.mrb[0].mxu0
    %4851 = vmatprep.mubr.bf16.mxu0 0
    %4852 = vmatmul.mubr.bf16.gmra.mrb[0].mxu0 %v4758
    %v4853 = vpop.f32.mrb[0].mxu0
    %v4854 = vadd.f32 %v4762, %v4853
    %v4855 = vpop.f32.mrb[0].mxu0
    %v4856 = vpop.f32.mrb[0].mxu0
    %v4857 = vpop.f32.mrb[0].mxu0
    %4858 = vdwg.mxu0
    %vm4859 = vcmp.gt.f32.partialorder %v4846, 0.0
    %vm4860 = vcmp.gt.f32.partialorder %v4849, 0.0
    %vm4861 = vcmp.gt.f32.partialorder %v4854, 0.0
    %v4862 = vmul.f32 %v4846, 1.442695
    %v4863 = vpow.pop %v4862
    %v4864 = vmul.f32 %v4849, 1.442695
    %v4865 = vpow.pop %v4864
    %v4866 = vmul.f32 %v4854, 1.442695
    %v4867 = vpow.pop %v4866
    %v4868 = vsub.f32 %v4863, 1.0
    %v4869 = vsub.f32 %v4865, 1.0
    %v4870 = vsub.f32 %v4867, 1.0
    %v4871 = vsel %vm4859, %v4846, %v4868
    %v4872 = vsel %vm4860, %v4849, %v4869
    %v4873 = vsel %vm4861, %v4854, %v4870
    %v4874 = vld [vmem:[#allocation2 + $0x940] sm:$0xf]
    %v4875 = vld [vmem:[#allocation2 + $0x944] sm:$0xf]
    %v4876 = vld [vmem:[#allocation2 + $0x948] sm:$0xf]
    %v4877 = vld [vmem:[#allocation2 + $0x94c] sm:$0xf]
    %v4878 = vld [vmem:[#allocation2 + $0x950] sm:$0xf]
    %v4879 = vld [vmem:[#allocation2 + $0x954] sm:$0xf]
    %v4880 = vld [vmem:[#allocation2 + $0x958] sm:$0xf]
    %v4881 = vld [vmem:[#allocation2 + $0x95c] sm:$0xf]
    %v4882 = vld [vmem:[#allocation2 + $0x960] sm:$0xf]
    %v4883 = vld [vmem:[#allocation2 + $0x964] sm:$0xf]
    %v4884 = vld [vmem:[#allocation2 + $0x968] sm:$0xf]
    %v4885 = vld [vmem:[#allocation2 + $0x96c] sm:$0xf]
    %v4886 = vld [vmem:[#allocation2 + $0x970] sm:$0xf]
    %v4887 = vld [vmem:[#allocation2 + $0x974] sm:$0xf]
    %v4888 = vld [vmem:[#allocation2 + $0x978] sm:$0xf]
    %v4889 = vld [vmem:[#allocation2 + $0x97c] sm:$0xf]
    %v4890 = vld [vmem:[#allocation5 + $0x14] sm:$0x1]
    %v4891 = vpack.c.bf16 %v4872, %v4871
    %v4892 = vpack.c.bf16 %v4873, %v4873
    %v4893 = vlaneseq
    %v4894 = vshrl.u32 %v4893, 7
    %v4895 = vsub.s32 0, %v4894
    %v4896 = vrot.slane %v4890, %v4895
    %v4913 = vunpack.c.l.b16 %v4874
    %v4914 = vunpack.c.l.b16 %v4875
    %v4915 = vunpack.c.l.b16 %v4876
    %v4916 = vunpack.c.l.b16 %v4877
    %v4917 = vunpack.c.l.b16 %v4878
    %v4918 = vunpack.c.l.b16 %v4879
    %v4919 = vunpack.c.l.b16 %v4880
    %v4920 = vunpack.c.l.b16 %v4881
    %v4921 = vunpack.c.l.b16 %v4882
    %v4922 = vunpack.c.l.b16 %v4883
    %v4923 = vunpack.c.l.b16 %v4884
    %v4924 = vunpack.c.l.b16 %v4885
    %v4925 = vunpack.c.l.b16 %v4886
    %v4926 = vunpack.c.l.b16 %v4887
    %v4927 = vunpack.c.l.b16 %v4888
    %v4928 = vunpack.c.l.b16 %v4889
    %v4929 = vpack.c.b16 %v4914, %v4913
    %v4930 = vpack.c.b16 %v4916, %v4915
    %v4931 = vpack.c.b16 %v4918, %v4917
    %v4932 = vpack.c.b16 %v4920, %v4919
    %v4933 = vpack.c.b16 %v4922, %v4921
    %v4934 = vpack.c.b16 %v4924, %v4923
    %v4935 = vpack.c.b16 %v4926, %v4925
    %v4936 = vpack.c.b16 %v4928, %v4927
    %4945 = vmatprep.subr.bf16.mxu0 0
    %4946 = vmatpush1.bf16.msra.mxu0 %v4929
    %4947 = vmatprep.subr.bf16.mxu0 0
    %4948 = vmatpush1.bf16.msra.mxu0 %v4930
    %4949 = vmatprep.subr.bf16.mxu0 0
    %4950 = vmatpush1.bf16.msra.mxu0 %v4931
    %4951 = vmatprep.subr.bf16.mxu0 0
    %4952 = vmatpush1.bf16.msra.mxu0 %v4932
    %4953 = vmatprep.subr.bf16.mxu0 0
    %4954 = vmatpush1.bf16.msra.mxu0 %v4933
    %4955 = vmatprep.subr.bf16.mxu0 0
    %4956 = vmatpush1.bf16.msra.mxu0 %v4934
    %4957 = vmatprep.subr.bf16.mxu0 0
    %4958 = vmatpush1.bf16.msra.mxu0 %v4935
    %4959 = vmatprep.subr.bf16.mxu0 0
    %4960 = vmatpush1.bf16.msra.mxu0 %v4936
    %4961 = vmatprep.subr.bf16.mxu0 0
    %4962 = vmatpush1.bf16.msra.mxu0 0
    %4963 = vmatprep.subr.bf16.mxu0 0
    %4964 = vmatpush1.bf16.msra.mxu0 0
    %4965 = vmatprep.subr.bf16.mxu0 0
    %4966 = vmatpush1.bf16.msra.mxu0 0
    %4967 = vmatprep.subr.bf16.mxu0 0
    %4968 = vmatpush1.bf16.msra.mxu0 0
    %4969 = vmatprep.subr.bf16.mxu0 0
    %4970 = vmatpush1.bf16.msra.mxu0 0
    %4971 = vmatprep.subr.bf16.mxu0 0
    %4972 = vmatpush1.bf16.msra.mxu0 0
    %4973 = vmatprep.subr.bf16.mxu0 0
    %4974 = vmatpush1.bf16.msra.mxu0 0
    %4975 = vmatprep.subr.bf16.mxu0 0
    %4976 = vmatpush1.bf16.msra.mxu0 0
    %4977 = vmatprep.mubr.bf16.mxu0 0
    %4978 = vmatmul.mubr.bf16.gmra.mrb[0].mxu0 %v4891
    %v4979 = vpop.f32.mrb[0].mxu0
    %v4980 = vadd.f32 %v4896, %v4979
    %v4981 = vpop.f32.mrb[0].mxu0
    %v4982 = vpop.f32.mrb[0].mxu0
    %v4983 = vadd.f32 %v4896, %v4982
    %v4984 = vpop.f32.mrb[0].mxu0
    %4985 = vmatprep.mubr.bf16.mxu0 0
    %4986 = vmatmul.mubr.bf16.gmra.mrb[0].mxu0 %v4892
    %v4987 = vpop.f32.mrb[0].mxu0
    %v4988 = vadd.f32 %v4896, %v4987
    %v4989 = vpop.f32.mrb[0].mxu0
    %v4990 = vpop.f32.mrb[0].mxu0
    %v4991 = vpop.f32.mrb[0].mxu0
    %4992 = vdwg.mxu0
    %v4993 = vpack.c.bf16 %v4983, %v4980
    %v4994 = vpack.c.bf16 %v4988, %v4988
    %v4996 = vsel %vm217, %v4994, 0
    %4998 = vmatprep.subr.bf16.mxu0 0
    %4999 = vmatpush1.bf16.msra.mxu0 %v4993
    %5000 = vmatprep.subr.bf16.mxu0 0
    %5001 = vmatpush1.bf16.msra.mxu0 %v4996
    %5002 = vmatprep.subr.bf16.mxu0 0
    %5003 = vmatpush1.bf16.msra.mxu0 0
    %5004 = vmatprep.subr.bf16.mxu0 0
    %5005 = vmatpush1.bf16.msra.mxu0 0
    %5006 = vmatprep.subr.bf16.mxu0 0
    %5007 = vmatpush1.bf16.msra.mxu0 0
    %5008 = vmatprep.subr.bf16.mxu0 0
    %5009 = vmatpush1.bf16.msra.mxu0 0
    %5010 = vmatprep.subr.bf16.mxu0 0
    %5011 = vmatpush1.bf16.msra.mxu0 0
    %5012 = vmatprep.subr.bf16.mxu0 0
    %5013 = vmatpush1.bf16.msra.mxu0 0
    %5014 = vmatprep.subr.bf16.mxu0 0
    %5015 = vmatpush1.bf16.msra.mxu0 0
    %5016 = vmatprep.subr.bf16.mxu0 0
    %5017 = vmatpush1.bf16.msra.mxu0 0
    %5018 = vmatprep.subr.bf16.mxu0 0
    %5019 = vmatpush1.bf16.msra.mxu0 0
    %5020 = vmatprep.subr.bf16.mxu0 0
    %5021 = vmatpush1.bf16.msra.mxu0 0
    %5022 = vmatprep.subr.bf16.mxu0 0
    %5023 = vmatpush1.bf16.msra.mxu0 0
    %5024 = vmatprep.subr.bf16.mxu0 0
    %5025 = vmatpush1.bf16.msra.mxu0 0
    %5026 = vmatprep.subr.bf16.mxu0 0
    %5027 = vmatpush1.bf16.msra.mxu0 0
    %5028 = vmatprep.subr.bf16.mxu0 0
    %5029 = vmatpush1.bf16.msra.mxu0 0
    %5030 = vmatprep.mubr.bf16.mxu0 0
    %5031 = vmatmul.mubr.bf16.gmra.mrb[0].mxu0 %v1017
    %v5032 = vpop.f32.mrb[0].mxu0
    %v5033 = vadd.f32 0.0, %v5032
    %v5034 = vpop.f32.mrb[0].mxu0
    %v5035 = vpop.f32.mrb[0].mxu0
    %v5036 = vpop.f32.mrb[0].mxu0
    %5037 = vdwg.mxu0
    %v5038 = vmul.f32 %v5033, %v1065
    %v5039 = vpack.c.bf16 %v5038, %v5038
    %v5040 = vld [vmem:[#allocation2 + $0x980] sm:$0xf]
    %v5041 = vld [vmem:[#allocation2 + $0x984] sm:$0xf]
    %v5042 = vld [vmem:[#allocation2 + $0x988] sm:$0xf]
    %v5043 = vld [vmem:[#allocation2 + $0x98c] sm:$0xf]
    %v5044 = vld [vmem:[#allocation2 + $0x990] sm:$0xf]
    %v5045 = vld [vmem:[#allocation2 + $0x994] sm:$0xf]
    %v5046 = vld [vmem:[#allocation2 + $0x998] sm:$0xf]
    %v5047 = vld [vmem:[#allocation2 + $0x99c] sm:$0xf]
    %v5048 = vld [vmem:[#allocation2 + $0x9a0] sm:$0xf]
    %v5049 = vld [vmem:[#allocation2 + $0x9a4] sm:$0xf]
    %v5050 = vld [vmem:[#allocation2 + $0x9a8] sm:$0xf]
    %v5051 = vld [vmem:[#allocation2 + $0x9ac] sm:$0xf]
    %v5052 = vld [vmem:[#allocation2 + $0x9b0] sm:$0xf]
    %v5053 = vld [vmem:[#allocation2 + $0x9b4] sm:$0xf]
    %v5054 = vld [vmem:[#allocation2 + $0x9b8] sm:$0xf]
    %v5055 = vld [vmem:[#allocation2 + $0x9bc] sm:$0xf]
    %v5056 = vld [vmem:[#allocation2 + $0x9c0] sm:$0xf]
    %v5057 = vld [vmem:[#allocation2 + $0x9c4] sm:$0xf]
    %v5058 = vld [vmem:[#allocation2 + $0x9c8] sm:$0xf]
    %v5059 = vld [vmem:[#allocation2 + $0x9cc] sm:$0xf]
    %v5060 = vld [vmem:[#allocation2 + $0x9d0] sm:$0xf]
    %v5061 = vld [vmem:[#allocation2 + $0x9d4] sm:$0xf]
    %v5062 = vld [vmem:[#allocation2 + $0x9d8] sm:$0xf]
    %v5063 = vld [vmem:[#allocation2 + $0x9dc] sm:$0xf]
    %v5064 = vld [vmem:[#allocation2 + $0x9e0] sm:$0xf]
    %v5065 = vld [vmem:[#allocation2 + $0x9e4] sm:$0xf]
    %v5066 = vld [vmem:[#allocation2 + $0x9e8] sm:$0xf]
    %v5067 = vld [vmem:[#allocation2 + $0x9ec] sm:$0xf]
    %v5068 = vld [vmem:[#allocation2 + $0x9f0] sm:$0xf]
    %v5069 = vld [vmem:[#allocation2 + $0x9f4] sm:$0xf]
    %v5070 = vld [vmem:[#allocation2 + $0x9f8] sm:$0xf]
    %v5071 = vld [vmem:[#allocation2 + $0x9fc] sm:$0xf]
    %v5072 = vld [vmem:[#allocation2 + $0xa00] sm:$0xf]
    %v5073 = vld [vmem:[#allocation2 + $0xa04] sm:$0xf]
    %v5074 = vld [vmem:[#allocation2 + $0xa08] sm:$0xf]
    %v5075 = vld [vmem:[#allocation2 + $0xa0c] sm:$0xf]
    %v5076 = vld [vmem:[#allocation2 + $0xa10] sm:$0xf]
    %v5077 = vld [vmem:[#allocation2 + $0xa14] sm:$0xf]
    %v5078 = vld [vmem:[#allocation2 + $0xa18] sm:$0xf]
    %v5079 = vld [vmem:[#allocation2 + $0xa1c] sm:$0xf]
    %v5080 = vld [vmem:[#allocation2 + $0xa20] sm:$0xf]
    %v5081 = vld [vmem:[#allocation2 + $0xa24] sm:$0xf]
    %v5082 = vld [vmem:[#allocation2 + $0xa28] sm:$0xf]
    %v5083 = vld [vmem:[#allocation2 + $0xa2c] sm:$0xf]
    %v5084 = vld [vmem:[#allocation2 + $0xa30] sm:$0xf]
    %v5085 = vld [vmem:[#allocation2 + $0xa34] sm:$0xf]
    %v5086 = vld [vmem:[#allocation2 + $0xa38] sm:$0xf]
    %v5087 = vld [vmem:[#allocation2 + $0xa3c] sm:$0xf]
    %v5088 = vld [vmem:[#allocation5 + $0x15] sm:$0x1]
    %v5089 = vlaneseq
    %v5090 = vshrl.u32 %v5089, 7
    %v5091 = vsub.s32 0, %v5090
    %v5092 = vrot.slane %v5088, %v5091
    %v5141 = vunpack.c.l.b16 %v5040
    %v5142 = vunpack.c.l.b16 %v5041
    %v5143 = vunpack.c.l.b16 %v5042
    %v5144 = vunpack.c.l.b16 %v5043
    %v5145 = vunpack.c.l.b16 %v5044
    %v5146 = vunpack.c.l.b16 %v5045
    %v5147 = vunpack.c.l.b16 %v5046
    %v5148 = vunpack.c.l.b16 %v5047
    %v5149 = vunpack.c.l.b16 %v5048
    %v5150 = vunpack.c.l.b16 %v5049
    %v5151 = vunpack.c.l.b16 %v5050
    %v5152 = vunpack.c.l.b16 %v5051
    %v5153 = vunpack.c.l.b16 %v5052
    %v5154 = vunpack.c.l.b16 %v5053
    %v5155 = vunpack.c.l.b16 %v5054
    %v5156 = vunpack.c.l.b16 %v5055
    %v5157 = vunpack.c.l.b16 %v5056
    %v5158 = vunpack.c.l.b16 %v5057
    %v5159 = vunpack.c.l.b16 %v5058
    %v5160 = vunpack.c.l.b16 %v5059
    %v5161 = vunpack.c.l.b16 %v5060
    %v5162 = vunpack.c.l.b16 %v5061
    %v5163 = vunpack.c.l.b16 %v5062
    %v5164 = vunpack.c.l.b16 %v5063
    %v5165 = vunpack.c.l.b16 %v5064
    %v5166 = vunpack.c.l.b16 %v5065
    %v5167 = vunpack.c.l.b16 %v5066
    %v5168 = vunpack.c.l.b16 %v5067
    %v5169 = vunpack.c.l.b16 %v5068
    %v5170 = vunpack.c.l.b16 %v5069
    %v5171 = vunpack.c.l.b16 %v5070
    %v5172 = vunpack.c.l.b16 %v5071
    %v5173 = vunpack.c.l.b16 %v5072
    %v5174 = vunpack.c.l.b16 %v5073
    %v5175 = vunpack.c.l.b16 %v5074
    %v5176 = vunpack.c.l.b16 %v5075
    %v5177 = vunpack.c.l.b16 %v5076
    %v5178 = vunpack.c.l.b16 %v5077
    %v5179 = vunpack.c.l.b16 %v5078
    %v5180 = vunpack.c.l.b16 %v5079
    %v5181 = vunpack.c.l.b16 %v5080
    %v5182 = vunpack.c.l.b16 %v5081
    %v5183 = vunpack.c.l.b16 %v5082
    %v5184 = vunpack.c.l.b16 %v5083
    %v5185 = vunpack.c.l.b16 %v5084
    %v5186 = vunpack.c.l.b16 %v5085
    %v5187 = vunpack.c.l.b16 %v5086
    %v5188 = vunpack.c.l.b16 %v5087
    %v5189 = vpack.c.b16 %v5142, %v5141
    %v5190 = vpack.c.b16 %v5144, %v5143
    %v5191 = vpack.c.b16 %v5146, %v5145
    %v5192 = vpack.c.b16 %v5148, %v5147
    %v5193 = vpack.c.b16 %v5150, %v5149
    %v5194 = vpack.c.b16 %v5152, %v5151
    %v5195 = vpack.c.b16 %v5154, %v5153
    %v5196 = vpack.c.b16 %v5156, %v5155
    %v5197 = vpack.c.b16 %v5158, %v5157
    %v5198 = vpack.c.b16 %v5160, %v5159
    %v5199 = vpack.c.b16 %v5162, %v5161
    %v5200 = vpack.c.b16 %v5164, %v5163
    %v5201 = vpack.c.b16 %v5166, %v5165
    %v5202 = vpack.c.b16 %v5168, %v5167
    %v5203 = vpack.c.b16 %v5170, %v5169
    %v5204 = vpack.c.b16 %v5172, %v5171
    %v5205 = vpack.c.b16 %v5174, %v5173
    %v5206 = vpack.c.b16 %v5176, %v5175
    %v5207 = vpack.c.b16 %v5178, %v5177
    %v5208 = vpack.c.b16 %v5180, %v5179
    %v5209 = vpack.c.b16 %v5182, %v5181
    %v5210 = vpack.c.b16 %v5184, %v5183
    %v5211 = vpack.c.b16 %v5186, %v5185
    %v5212 = vpack.c.b16 %v5188, %v5187
    %5237 = vmatprep.subr.bf16.mxu0 0
    %5238 = vmatpush1.bf16.msra.mxu0 %v5189
    %5239 = vmatprep.subr.bf16.mxu0 0
    %5240 = vmatpush1.bf16.msra.mxu0 %v5190
    %5241 = vmatprep.subr.bf16.mxu0 0
    %5242 = vmatpush1.bf16.msra.mxu0 %v5191
    %5243 = vmatprep.subr.bf16.mxu0 0
    %5244 = vmatpush1.bf16.msra.mxu0 %v5192
    %5245 = vmatprep.subr.bf16.mxu0 0
    %5246 = vmatpush1.bf16.msra.mxu0 %v5193
    %5247 = vmatprep.subr.bf16.mxu0 0
    %5248 = vmatpush1.bf16.msra.mxu0 %v5194
    %5249 = vmatprep.subr.bf16.mxu0 0
    %5250 = vmatpush1.bf16.msra.mxu0 %v5195
    %5251 = vmatprep.subr.bf16.mxu0 0
    %5252 = vmatpush1.bf16.msra.mxu0 %v5196
    %5253 = vmatprep.subr.bf16.mxu0 0
    %5254 = vmatpush1.bf16.msra.mxu0 %v5197
    %5255 = vmatprep.subr.bf16.mxu0 0
    %5256 = vmatpush1.bf16.msra.mxu0 %v5198
    %5257 = vmatprep.subr.bf16.mxu0 0
    %5258 = vmatpush1.bf16.msra.mxu0 %v5199
    %5259 = vmatprep.subr.bf16.mxu0 0
    %5260 = vmatpush1.bf16.msra.mxu0 %v5200
    %5261 = vmatprep.subr.bf16.mxu0 0
    %5262 = vmatpush1.bf16.msra.mxu0 %v5201
    %5263 = vmatprep.subr.bf16.mxu0 0
    %5264 = vmatpush1.bf16.msra.mxu0 %v5202
    %5265 = vmatprep.subr.bf16.mxu0 0
    %5266 = vmatpush1.bf16.msra.mxu0 %v5203
    %5267 = vmatprep.subr.bf16.mxu0 0
    %5268 = vmatpush1.bf16.msra.mxu0 %v5204
    %5269 = vmatprep.mubr.bf16.mxu0 %v5039
    %5270 = vmatmul.mubr.bf16.gmra.mrb[0].mxu0 %v4164
    %v5271 = vpop.f32.mrb[0].mxu0
    %v5272 = vadd.f32 %v5092, %v5271
    %v5273 = vpop.f32.mrb[0].mxu0
    %v5274 = vpop.f32.mrb[0].mxu0
    %v5275 = vpop.f32.mrb[0].mxu0
    %5276 = vdwg.mxu0
    %5277 = vmatprep.subr.bf16.mxu0 0
    %5278 = vmatpush1.bf16.msra.mxu0 %v5205
    %5279 = vmatprep.subr.bf16.mxu0 0
    %5280 = vmatpush1.bf16.msra.mxu0 %v5206
    %5281 = vmatprep.subr.bf16.mxu0 0
    %5282 = vmatpush1.bf16.msra.mxu0 %v5207
    %5283 = vmatprep.subr.bf16.mxu0 0
    %5284 = vmatpush1.bf16.msra.mxu0 %v5208
    %5285 = vmatprep.subr.bf16.mxu0 0
    %5286 = vmatpush1.bf16.msra.mxu0 %v5209
    %5287 = vmatprep.subr.bf16.mxu0 0
    %5288 = vmatpush1.bf16.msra.mxu0 %v5210
    %5289 = vmatprep.subr.bf16.mxu0 0
    %5290 = vmatpush1.bf16.msra.mxu0 %v5211
    %5291 = vmatprep.subr.bf16.mxu0 0
    %5292 = vmatpush1.bf16.msra.mxu0 %v5212
    %5293 = vmatprep.subr.bf16.mxu0 0
    %5294 = vmatpush1.bf16.msra.mxu0 0
    %5295 = vmatprep.subr.bf16.mxu0 0
    %5296 = vmatpush1.bf16.msra.mxu0 0
    %5297 = vmatprep.subr.bf16.mxu0 0
    %5298 = vmatpush1.bf16.msra.mxu0 0
    %5299 = vmatprep.subr.bf16.mxu0 0
    %5300 = vmatpush1.bf16.msra.mxu0 0
    %5301 = vmatprep.subr.bf16.mxu0 0
    %5302 = vmatpush1.bf16.msra.mxu0 0
    %5303 = vmatprep.subr.bf16.mxu0 0
    %5304 = vmatpush1.bf16.msra.mxu0 0
    %5305 = vmatprep.subr.bf16.mxu0 0
    %5306 = vmatpush1.bf16.msra.mxu0 0
    %5307 = vmatprep.subr.bf16.mxu0 0
    %5308 = vmatpush1.bf16.msra.mxu0 0
    %5309 = vmatprep.mubr.bf16.mxu0 0
    %5310 = vmatmul.mubr.bf16.gmra.mrb[0].mxu0 %v4211
    %v5311 = vpop.f32.mrb[0].mxu0
    %v5312 = vadd.f32 %v5272, %v5311
    %v5313 = vpop.f32.mrb[0].mxu0
    %v5314 = vpop.f32.mrb[0].mxu0
    %v5315 = vpop.f32.mrb[0].mxu0
    %5316 = vdwg.mxu0
    %vm5317 = vcmp.gt.f32.partialorder %v5312, 0.0
    %v5318 = vmul.f32 %v5312, 1.442695
    %v5319 = vpow.pop %v5318
    %v5320 = vsub.f32 %v5319, 1.0
    %v5321 = vsel %vm5317, %v5312, %v5320
    %v5322 = vld [vmem:[#allocation2 + $0xa40] sm:$0xf]
    %v5323 = vld [vmem:[#allocation2 + $0xa44] sm:$0xf]
    %v5324 = vld [vmem:[#allocation2 + $0xa48] sm:$0xf]
    %v5325 = vld [vmem:[#allocation2 + $0xa4c] sm:$0xf]
    %v5326 = vld [vmem:[#allocation2 + $0xa50] sm:$0xf]
    %v5327 = vld [vmem:[#allocation2 + $0xa54] sm:$0xf]
    %v5328 = vld [vmem:[#allocation2 + $0xa58] sm:$0xf]
    %v5329 = vld [vmem:[#allocation2 + $0xa5c] sm:$0xf]
    %v5330 = vld [vmem:[#allocation2 + $0xa60] sm:$0xf]
    %v5331 = vld [vmem:[#allocation2 + $0xa64] sm:$0xf]
    %v5332 = vld [vmem:[#allocation2 + $0xa68] sm:$0xf]
    %v5333 = vld [vmem:[#allocation2 + $0xa6c] sm:$0xf]
    %v5334 = vld [vmem:[#allocation2 + $0xa70] sm:$0xf]
    %v5335 = vld [vmem:[#allocation2 + $0xa74] sm:$0xf]
    %v5336 = vld [vmem:[#allocation2 + $0xa78] sm:$0xf]
    %v5337 = vld [vmem:[#allocation2 + $0xa7c] sm:$0xf]
    %v5338 = vld [vmem:[#allocation5 + $0x16] sm:$0x1]
    %v5339 = vpack.c.bf16 %v5321, %v5321
    %v5340 = vlaneseq
    %v5341 = vshrl.u32 %v5340, 7
    %v5342 = vsub.s32 0, %v5341
    %v5343 = vrot.slane %v5338, %v5342
    %v5360 = vunpack.c.l.b16 %v5322
    %v5361 = vunpack.c.l.b16 %v5323
    %v5362 = vunpack.c.l.b16 %v5324
    %v5363 = vunpack.c.l.b16 %v5325
    %v5364 = vunpack.c.l.b16 %v5326
    %v5365 = vunpack.c.l.b16 %v5327
    %v5366 = vunpack.c.l.b16 %v5328
    %v5367 = vunpack.c.l.b16 %v5329
    %v5368 = vunpack.c.l.b16 %v5330
    %v5369 = vunpack.c.l.b16 %v5331
    %v5370 = vunpack.c.l.b16 %v5332
    %v5371 = vunpack.c.l.b16 %v5333
    %v5372 = vunpack.c.l.b16 %v5334
    %v5373 = vunpack.c.l.b16 %v5335
    %v5374 = vunpack.c.l.b16 %v5336
    %v5375 = vunpack.c.l.b16 %v5337
    %v5376 = vpack.c.b16 %v5361, %v5360
    %v5377 = vpack.c.b16 %v5363, %v5362
    %v5378 = vpack.c.b16 %v5365, %v5364
    %v5379 = vpack.c.b16 %v5367, %v5366
    %v5380 = vpack.c.b16 %v5369, %v5368
    %v5381 = vpack.c.b16 %v5371, %v5370
    %v5382 = vpack.c.b16 %v5373, %v5372
    %v5383 = vpack.c.b16 %v5375, %v5374
    %5392 = vmatprep.subr.bf16.mxu0 0
    %5393 = vmatpush1.bf16.msra.mxu0 %v5376
    %5394 = vmatprep.subr.bf16.mxu0 0
    %5395 = vmatpush1.bf16.msra.mxu0 %v5377
    %5396 = vmatprep.subr.bf16.mxu0 0
    %5397 = vmatpush1.bf16.msra.mxu0 %v5378
    %5398 = vmatprep.subr.bf16.mxu0 0
    %5399 = vmatpush1.bf16.msra.mxu0 %v5379
    %5400 = vmatprep.subr.bf16.mxu0 0
    %5401 = vmatpush1.bf16.msra.mxu0 %v5380
    %5402 = vmatprep.subr.bf16.mxu0 0
    %5403 = vmatpush1.bf16.msra.mxu0 %v5381
    %5404 = vmatprep.subr.bf16.mxu0 0
    %5405 = vmatpush1.bf16.msra.mxu0 %v5382
    %5406 = vmatprep.subr.bf16.mxu0 0
    %5407 = vmatpush1.bf16.msra.mxu0 %v5383
    %5408 = vmatprep.subr.bf16.mxu0 0
    %5409 = vmatpush1.bf16.msra.mxu0 0
    %5410 = vmatprep.subr.bf16.mxu0 0
    %5411 = vmatpush1.bf16.msra.mxu0 0
    %5412 = vmatprep.subr.bf16.mxu0 0
    %5413 = vmatpush1.bf16.msra.mxu0 0
    %5414 = vmatprep.subr.bf16.mxu0 0
    %5415 = vmatpush1.bf16.msra.mxu0 0
    %5416 = vmatprep.subr.bf16.mxu0 0
    %5417 = vmatpush1.bf16.msra.mxu0 0
    %5418 = vmatprep.subr.bf16.mxu0 0
    %5419 = vmatpush1.bf16.msra.mxu0 0
    %5420 = vmatprep.subr.bf16.mxu0 0
    %5421 = vmatpush1.bf16.msra.mxu0 0
    %5422 = vmatprep.subr.bf16.mxu0 0
    %5423 = vmatpush1.bf16.msra.mxu0 0
    %5424 = vmatprep.mubr.bf16.mxu0 0
    %5425 = vmatmul.mubr.bf16.gmra.mrb[0].mxu0 %v5339
    %v5426 = vpop.f32.mrb[0].mxu0
    %v5427 = vadd.f32 %v5343, %v5426
    %v5428 = vpop.f32.mrb[0].mxu0
    %v5429 = vpop.f32.mrb[0].mxu0
    %v5430 = vpop.f32.mrb[0].mxu0
    %5431 = vdwg.mxu0
    %vm5432 = vcmp.gt.f32.partialorder %v5427, 0.0
    %v5433 = vmul.f32 %v5427, 1.442695
    %v5434 = vpow.pop %v5433
    %v5435 = vsub.f32 %v5434, 1.0
    %v5436 = vsel %vm5432, %v5427, %v5435
    %v5437 = vld [vmem:[#allocation2 + $0xa80] sm:$0xf]
    %v5438 = vld [vmem:[#allocation2 + $0xa84] sm:$0xf]
    %v5439 = vld [vmem:[#allocation2 + $0xa88] sm:$0xf]
    %v5440 = vld [vmem:[#allocation2 + $0xa8c] sm:$0xf]
    %v5441 = vld [vmem:[#allocation2 + $0xa90] sm:$0xf]
    %v5442 = vld [vmem:[#allocation2 + $0xa94] sm:$0xf]
    %v5443 = vld [vmem:[#allocation2 + $0xa98] sm:$0xf]
    %v5444 = vld [vmem:[#allocation2 + $0xa9c] sm:$0xf]
    %v5445 = vld [vmem:[#allocation2 + $0xaa0] sm:$0xf]
    %v5446 = vld [vmem:[#allocation2 + $0xaa4] sm:$0xf]
    %v5447 = vld [vmem:[#allocation2 + $0xaa8] sm:$0xf]
    %v5448 = vld [vmem:[#allocation2 + $0xaac] sm:$0xf]
    %v5449 = vld [vmem:[#allocation2 + $0xab0] sm:$0xf]
    %v5450 = vld [vmem:[#allocation2 + $0xab4] sm:$0xf]
    %v5451 = vld [vmem:[#allocation2 + $0xab8] sm:$0xf]
    %v5452 = vld [vmem:[#allocation2 + $0xabc] sm:$0xf]
    %v5453 = vld [vmem:[#allocation5 + $0x17] sm:$0x1]
    %v5454 = vpack.c.bf16 %v5436, %v5436
    %v5455 = vlaneseq
    %v5456 = vshrl.u32 %v5455, 7
    %v5457 = vsub.s32 0, %v5456
    %v5458 = vrot.slane %v5453, %v5457
    %v5475 = vunpack.c.l.b16 %v5437
    %v5476 = vunpack.c.l.b16 %v5438
    %v5477 = vunpack.c.l.b16 %v5439
    %v5478 = vunpack.c.l.b16 %v5440
    %v5479 = vunpack.c.l.b16 %v5441
    %v5480 = vunpack.c.l.b16 %v5442
    %v5481 = vunpack.c.l.b16 %v5443
    %v5482 = vunpack.c.l.b16 %v5444
    %v5483 = vunpack.c.l.b16 %v5445
    %v5484 = vunpack.c.l.b16 %v5446
    %v5485 = vunpack.c.l.b16 %v5447
    %v5486 = vunpack.c.l.b16 %v5448
    %v5487 = vunpack.c.l.b16 %v5449
    %v5488 = vunpack.c.l.b16 %v5450
    %v5489 = vunpack.c.l.b16 %v5451
    %v5490 = vunpack.c.l.b16 %v5452
    %v5491 = vpack.c.b16 %v5476, %v5475
    %v5492 = vpack.c.b16 %v5478, %v5477
    %v5493 = vpack.c.b16 %v5480, %v5479
    %v5494 = vpack.c.b16 %v5482, %v5481
    %v5495 = vpack.c.b16 %v5484, %v5483
    %v5496 = vpack.c.b16 %v5486, %v5485
    %v5497 = vpack.c.b16 %v5488, %v5487
    %v5498 = vpack.c.b16 %v5490, %v5489
    %5507 = vmatprep.subr.bf16.mxu0 0
    %5508 = vmatpush1.bf16.msra.mxu0 %v5491
    %5509 = vmatprep.subr.bf16.mxu0 0
    %5510 = vmatpush1.bf16.msra.mxu0 %v5492
    %5511 = vmatprep.subr.bf16.mxu0 0
    %5512 = vmatpush1.bf16.msra.mxu0 %v5493
    %5513 = vmatprep.subr.bf16.mxu0 0
    %5514 = vmatpush1.bf16.msra.mxu0 %v5494
    %5515 = vmatprep.subr.bf16.mxu0 0
    %5516 = vmatpush1.bf16.msra.mxu0 %v5495
    %5517 = vmatprep.subr.bf16.mxu0 0
    %5518 = vmatpush1.bf16.msra.mxu0 %v5496
    %5519 = vmatprep.subr.bf16.mxu0 0
    %5520 = vmatpush1.bf16.msra.mxu0 %v5497
    %5521 = vmatprep.subr.bf16.mxu0 0
    %5522 = vmatpush1.bf16.msra.mxu0 %v5498
    %5523 = vmatprep.subr.bf16.mxu0 0
    %5524 = vmatpush1.bf16.msra.mxu0 0
    %5525 = vmatprep.subr.bf16.mxu0 0
    %5526 = vmatpush1.bf16.msra.mxu0 0
    %5527 = vmatprep.subr.bf16.mxu0 0
    %5528 = vmatpush1.bf16.msra.mxu0 0
    %5529 = vmatprep.subr.bf16.mxu0 0
    %5530 = vmatpush1.bf16.msra.mxu0 0
    %5531 = vmatprep.subr.bf16.mxu0 0
    %5532 = vmatpush1.bf16.msra.mxu0 0
    %5533 = vmatprep.subr.bf16.mxu0 0
    %5534 = vmatpush1.bf16.msra.mxu0 0
    %5535 = vmatprep.subr.bf16.mxu0 0
    %5536 = vmatpush1.bf16.msra.mxu0 0
    %5537 = vmatprep.subr.bf16.mxu0 0
    %5538 = vmatpush1.bf16.msra.mxu0 0
    %5539 = vmatprep.mubr.bf16.mxu0 0
    %5540 = vmatmul.mubr.bf16.gmra.mrb[0].mxu0 %v5454
    %v5541 = vpop.f32.mrb[0].mxu0
    %v5542 = vadd.f32 %v5458, %v5541
    %v5543 = vpop.f32.mrb[0].mxu0
    %v5544 = vpop.f32.mrb[0].mxu0
    %v5545 = vpop.f32.mrb[0].mxu0
    %5546 = vdwg.mxu0
    %v5547 = vpack.c.bf16 %v5542, %v5542
    %v5549 = vsel %vm217, %v5547, 0
    %5551 = vmatprep.subr.bf16.mxu0 0
    %5552 = vmatpush1.bf16.msra.mxu0 %v5549
    %5553 = vmatprep.subr.bf16.mxu0 0
    %5554 = vmatpush1.bf16.msra.mxu0 0
    %5555 = vmatprep.subr.bf16.mxu0 0
    %5556 = vmatpush1.bf16.msra.mxu0 0
    %5557 = vmatprep.subr.bf16.mxu0 0
    %5558 = vmatpush1.bf16.msra.mxu0 0
    %5559 = vmatprep.subr.bf16.mxu0 0
    %5560 = vmatpush1.bf16.msra.mxu0 0
    %5561 = vmatprep.subr.bf16.mxu0 0
    %5562 = vmatpush1.bf16.msra.mxu0 0
    %5563 = vmatprep.subr.bf16.mxu0 0
    %5564 = vmatpush1.bf16.msra.mxu0 0
    %5565 = vmatprep.subr.bf16.mxu0 0
    %5566 = vmatpush1.bf16.msra.mxu0 0
    %5567 = vmatprep.subr.bf16.mxu0 0
    %5568 = vmatpush1.bf16.msra.mxu0 0
    %5569 = vmatprep.subr.bf16.mxu0 0
    %5570 = vmatpush1.bf16.msra.mxu0 0
    %5571 = vmatprep.subr.bf16.mxu0 0
    %5572 = vmatpush1.bf16.msra.mxu0 0
    %5573 = vmatprep.subr.bf16.mxu0 0
    %5574 = vmatpush1.bf16.msra.mxu0 0
    %5575 = vmatprep.subr.bf16.mxu0 0
    %5576 = vmatpush1.bf16.msra.mxu0 0
    %5577 = vmatprep.subr.bf16.mxu0 0
    %5578 = vmatpush1.bf16.msra.mxu0 0
    %5579 = vmatprep.subr.bf16.mxu0 0
    %5580 = vmatpush1.bf16.msra.mxu0 0
    %5581 = vmatprep.subr.bf16.mxu0 0
    %5582 = vmatpush1.bf16.msra.mxu0 0
    %5583 = vmatprep.mubr.bf16.mxu0 0
    %5584 = vmatmul.mubr.bf16.gmra.mrb[0].mxu0 %v1578
    %v5585 = vpop.f32.mrb[0].mxu0
    %v5586 = vadd.f32 0.0, %v5585
    %v5587 = vpop.f32.mrb[0].mxu0
    %v5588 = vpop.f32.mrb[0].mxu0
    %v5589 = vpop.f32.mrb[0].mxu0
    %5590 = vdwg.mxu0
    %v5591 = vmul.f32 %v5586, %v1626
    %5592 = vmatprep.subr.bf16.mxu0 0
    %5593 = vmatpush1.bf16.msra.mxu0 %v4993
    %5594 = vmatprep.subr.bf16.mxu0 0
    %5595 = vmatpush1.bf16.msra.mxu0 %v4996
    %5596 = vmatprep.subr.bf16.mxu0 0
    %5597 = vmatpush1.bf16.msra.mxu0 0
    %5598 = vmatprep.subr.bf16.mxu0 0
    %5599 = vmatpush1.bf16.msra.mxu0 0
    %5600 = vmatprep.subr.bf16.mxu0 0
    %5601 = vmatpush1.bf16.msra.mxu0 0
    %5602 = vmatprep.subr.bf16.mxu0 0
    %5603 = vmatpush1.bf16.msra.mxu0 0
    %5604 = vmatprep.subr.bf16.mxu0 0
    %5605 = vmatpush1.bf16.msra.mxu0 0
    %5606 = vmatprep.subr.bf16.mxu0 0
    %5607 = vmatpush1.bf16.msra.mxu0 0
    %5608 = vmatprep.subr.bf16.mxu0 0
    %5609 = vmatpush1.bf16.msra.mxu0 0
    %5610 = vmatprep.subr.bf16.mxu0 0
    %5611 = vmatpush1.bf16.msra.mxu0 0
    %5612 = vmatprep.subr.bf16.mxu0 0
    %5613 = vmatpush1.bf16.msra.mxu0 0
    %5614 = vmatprep.subr.bf16.mxu0 0
    %5615 = vmatpush1.bf16.msra.mxu0 0
    %5616 = vmatprep.subr.bf16.mxu0 0
    %5617 = vmatpush1.bf16.msra.mxu0 0
    %5618 = vmatprep.subr.bf16.mxu0 0
    %5619 = vmatpush1.bf16.msra.mxu0 0
    %5620 = vmatprep.subr.bf16.mxu0 0
    %5621 = vmatpush1.bf16.msra.mxu0 0
    %5622 = vmatprep.subr.bf16.mxu0 0
    %5623 = vmatpush1.bf16.msra.mxu0 0
    %5624 = vmatprep.mubr.bf16.mxu0 0
    %5625 = vmatmul.mubr.bf16.gmra.mrb[0].mxu0 %v1630
    %v5626 = vpop.f32.mrb[0].mxu0
    %v5627 = vadd.f32 0.0, %v5626
    %v5628 = vpop.f32.mrb[0].mxu0
    %v5629 = vpop.f32.mrb[0].mxu0
    %v5630 = vpop.f32.mrb[0].mxu0
    %5631 = vdwg.mxu0
    %v5632 = vmul.f32 %v5627, %v1675
    %v5633 = vpack.c.bf16 %v5591, %v5591
    %v5634 = vpack.c.bf16 %v5632, %v5632
    %v5635 = vld [vmem:[#allocation2 + $0xac0] sm:$0xf]
    %v5636 = vld [vmem:[#allocation2 + $0xac4] sm:$0xf]
    %v5637 = vld [vmem:[#allocation2 + $0xac8] sm:$0xf]
    %v5638 = vld [vmem:[#allocation2 + $0xacc] sm:$0xf]
    %v5639 = vld [vmem:[#allocation2 + $0xad0] sm:$0xf]
    %v5640 = vld [vmem:[#allocation2 + $0xad4] sm:$0xf]
    %v5641 = vld [vmem:[#allocation2 + $0xad8] sm:$0xf]
    %v5642 = vld [vmem:[#allocation2 + $0xadc] sm:$0xf]
    %v5643 = vld [vmem:[#allocation2 + $0xae0] sm:$0xf]
    %v5644 = vld [vmem:[#allocation2 + $0xae4] sm:$0xf]
    %v5645 = vld [vmem:[#allocation2 + $0xae8] sm:$0xf]
    %v5646 = vld [vmem:[#allocation2 + $0xaec] sm:$0xf]
    %v5647 = vld [vmem:[#allocation2 + $0xaf0] sm:$0xf]
    %v5648 = vld [vmem:[#allocation2 + $0xaf4] sm:$0xf]
    %v5649 = vld [vmem:[#allocation2 + $0xaf8] sm:$0xf]
    %v5650 = vld [vmem:[#allocation2 + $0xafc] sm:$0xf]
    %v5651 = vld [vmem:[#allocation2 + $0xb00] sm:$0xf]
    %v5652 = vld [vmem:[#allocation2 + $0xb04] sm:$0xf]
    %v5653 = vld [vmem:[#allocation2 + $0xb08] sm:$0xf]
    %v5654 = vld [vmem:[#allocation2 + $0xb0c] sm:$0xf]
    %v5655 = vld [vmem:[#allocation2 + $0xb10] sm:$0xf]
    %v5656 = vld [vmem:[#allocation2 + $0xb14] sm:$0xf]
    %v5657 = vld [vmem:[#allocation2 + $0xb18] sm:$0xf]
    %v5658 = vld [vmem:[#allocation2 + $0xb1c] sm:$0xf]
    %v5659 = vld [vmem:[#allocation2 + $0xb20] sm:$0xf]
    %v5660 = vld [vmem:[#allocation2 + $0xb24] sm:$0xf]
    %v5661 = vld [vmem:[#allocation2 + $0xb28] sm:$0xf]
    %v5662 = vld [vmem:[#allocation2 + $0xb2c] sm:$0xf]
    %v5663 = vld [vmem:[#allocation2 + $0xb30] sm:$0xf]
    %v5664 = vld [vmem:[#allocation2 + $0xb34] sm:$0xf]
    %v5665 = vld [vmem:[#allocation2 + $0xb38] sm:$0xf]
    %v5666 = vld [vmem:[#allocation2 + $0xb3c] sm:$0xf]
    %v5667 = vld [vmem:[#allocation2 + $0xb40] sm:$0xf]
    %v5668 = vld [vmem:[#allocation2 + $0xb44] sm:$0xf]
    %v5669 = vld [vmem:[#allocation2 + $0xb48] sm:$0xf]
    %v5670 = vld [vmem:[#allocation2 + $0xb4c] sm:$0xf]
    %v5671 = vld [vmem:[#allocation2 + $0xb50] sm:$0xf]
    %v5672 = vld [vmem:[#allocation2 + $0xb54] sm:$0xf]
    %v5673 = vld [vmem:[#allocation2 + $0xb58] sm:$0xf]
    %v5674 = vld [vmem:[#allocation2 + $0xb5c] sm:$0xf]
    %v5675 = vld [vmem:[#allocation2 + $0xb60] sm:$0xf]
    %v5676 = vld [vmem:[#allocation2 + $0xb64] sm:$0xf]
    %v5677 = vld [vmem:[#allocation2 + $0xb68] sm:$0xf]
    %v5678 = vld [vmem:[#allocation2 + $0xb6c] sm:$0xf]
    %v5679 = vld [vmem:[#allocation2 + $0xb70] sm:$0xf]
    %v5680 = vld [vmem:[#allocation2 + $0xb74] sm:$0xf]
    %v5681 = vld [vmem:[#allocation2 + $0xb78] sm:$0xf]
    %v5682 = vld [vmem:[#allocation2 + $0xb7c] sm:$0xf]
    %v5683 = vld [vmem:[#allocation5 + $0x18] sm:$0x1]
    %v5684 = vlaneseq
    %v5685 = vshrl.u32 %v5684, 7
    %v5686 = vsub.s32 0, %v5685
    %v5687 = vrot.slane %v5683, %v5686
    %v5736 = vunpack.c.l.b16 %v5635
    %v5737 = vunpack.c.l.b16 %v5636
    %v5738 = vunpack.c.l.b16 %v5637
    %v5739 = vunpack.c.l.b16 %v5638
    %v5740 = vunpack.c.l.b16 %v5639
    %v5741 = vunpack.c.l.b16 %v5640
    %v5742 = vunpack.c.l.b16 %v5641
    %v5743 = vunpack.c.l.b16 %v5642
    %v5744 = vunpack.c.l.b16 %v5643
    %v5745 = vunpack.c.l.b16 %v5644
    %v5746 = vunpack.c.l.b16 %v5645
    %v5747 = vunpack.c.l.b16 %v5646
    %v5748 = vunpack.c.l.b16 %v5647
    %v5749 = vunpack.c.l.b16 %v5648
    %v5750 = vunpack.c.l.b16 %v5649
    %v5751 = vunpack.c.l.b16 %v5650
    %v5752 = vunpack.c.l.b16 %v5651
    %v5753 = vunpack.c.l.b16 %v5652
    %v5754 = vunpack.c.l.b16 %v5653
    %v5755 = vunpack.c.l.b16 %v5654
    %v5756 = vunpack.c.l.b16 %v5655
    %v5757 = vunpack.c.l.b16 %v5656
    %v5758 = vunpack.c.l.b16 %v5657
    %v5759 = vunpack.c.l.b16 %v5658
    %v5760 = vunpack.c.l.b16 %v5659
    %v5761 = vunpack.c.l.b16 %v5660
    %v5762 = vunpack.c.l.b16 %v5661
    %v5763 = vunpack.c.l.b16 %v5662
    %v5764 = vunpack.c.l.b16 %v5663
    %v5765 = vunpack.c.l.b16 %v5664
    %v5766 = vunpack.c.l.b16 %v5665
    %v5767 = vunpack.c.l.b16 %v5666
    %v5768 = vunpack.c.l.b16 %v5667
    %v5769 = vunpack.c.l.b16 %v5668
    %v5770 = vunpack.c.l.b16 %v5669
    %v5771 = vunpack.c.l.b16 %v5670
    %v5772 = vunpack.c.l.b16 %v5671
    %v5773 = vunpack.c.l.b16 %v5672
    %v5774 = vunpack.c.l.b16 %v5673
    %v5775 = vunpack.c.l.b16 %v5674
    %v5776 = vunpack.c.l.b16 %v5675
    %v5777 = vunpack.c.l.b16 %v5676
    %v5778 = vunpack.c.l.b16 %v5677
    %v5779 = vunpack.c.l.b16 %v5678
    %v5780 = vunpack.c.l.b16 %v5679
    %v5781 = vunpack.c.l.b16 %v5680
    %v5782 = vunpack.c.l.b16 %v5681
    %v5783 = vunpack.c.l.b16 %v5682
    %v5784 = vpack.c.b16 %v5737, %v5736
    %v5785 = vpack.c.b16 %v5739, %v5738
    %v5786 = vpack.c.b16 %v5741, %v5740
    %v5787 = vpack.c.b16 %v5743, %v5742
    %v5788 = vpack.c.b16 %v5745, %v5744
    %v5789 = vpack.c.b16 %v5747, %v5746
    %v5790 = vpack.c.b16 %v5749, %v5748
    %v5791 = vpack.c.b16 %v5751, %v5750
    %v5792 = vpack.c.b16 %v5753, %v5752
    %v5793 = vpack.c.b16 %v5755, %v5754
    %v5794 = vpack.c.b16 %v5757, %v5756
    %v5795 = vpack.c.b16 %v5759, %v5758
    %v5796 = vpack.c.b16 %v5761, %v5760
    %v5797 = vpack.c.b16 %v5763, %v5762
    %v5798 = vpack.c.b16 %v5765, %v5764
    %v5799 = vpack.c.b16 %v5767, %v5766
    %v5800 = vpack.c.b16 %v5769, %v5768
    %v5801 = vpack.c.b16 %v5771, %v5770
    %v5802 = vpack.c.b16 %v5773, %v5772
    %v5803 = vpack.c.b16 %v5775, %v5774
    %v5804 = vpack.c.b16 %v5777, %v5776
    %v5805 = vpack.c.b16 %v5779, %v5778
    %v5806 = vpack.c.b16 %v5781, %v5780
    %v5807 = vpack.c.b16 %v5783, %v5782
    %5832 = vmatprep.subr.bf16.mxu0 0
    %5833 = vmatpush1.bf16.msra.mxu0 %v5784
    %5834 = vmatprep.subr.bf16.mxu0 0
    %5835 = vmatpush1.bf16.msra.mxu0 %v5785
    %5836 = vmatprep.subr.bf16.mxu0 0
    %5837 = vmatpush1.bf16.msra.mxu0 %v5786
    %5838 = vmatprep.subr.bf16.mxu0 0
    %5839 = vmatpush1.bf16.msra.mxu0 %v5787
    %5840 = vmatprep.subr.bf16.mxu0 0
    %5841 = vmatpush1.bf16.msra.mxu0 %v5788
    %5842 = vmatprep.subr.bf16.mxu0 0
    %5843 = vmatpush1.bf16.msra.mxu0 %v5789
    %5844 = vmatprep.subr.bf16.mxu0 0
    %5845 = vmatpush1.bf16.msra.mxu0 %v5790
    %5846 = vmatprep.subr.bf16.mxu0 0
    %5847 = vmatpush1.bf16.msra.mxu0 %v5791
    %5848 = vmatprep.subr.bf16.mxu0 0
    %5849 = vmatpush1.bf16.msra.mxu0 %v5792
    %5850 = vmatprep.subr.bf16.mxu0 0
    %5851 = vmatpush1.bf16.msra.mxu0 %v5793
    %5852 = vmatprep.subr.bf16.mxu0 0
    %5853 = vmatpush1.bf16.msra.mxu0 %v5794
    %5854 = vmatprep.subr.bf16.mxu0 0
    %5855 = vmatpush1.bf16.msra.mxu0 %v5795
    %5856 = vmatprep.subr.bf16.mxu0 0
    %5857 = vmatpush1.bf16.msra.mxu0 %v5796
    %5858 = vmatprep.subr.bf16.mxu0 0
    %5859 = vmatpush1.bf16.msra.mxu0 %v5797
    %5860 = vmatprep.subr.bf16.mxu0 0
    %5861 = vmatpush1.bf16.msra.mxu0 %v5798
    %5862 = vmatprep.subr.bf16.mxu0 0
    %5863 = vmatpush1.bf16.msra.mxu0 %v5799
    %5864 = vmatprep.mubr.bf16.mxu0 %v5633
    %5865 = vmatmul.mubr.bf16.gmra.mrb[0].mxu0 %v4167
    %v5866 = vpop.f32.mrb[0].mxu0
    %v5867 = vadd.f32 %v5687, %v5866
    %v5868 = vpop.f32.mrb[0].mxu0
    %v5869 = vpop.f32.mrb[0].mxu0
    %v5870 = vpop.f32.mrb[0].mxu0
    %5871 = vdwg.mxu0
    %5872 = vmatprep.subr.bf16.mxu0 0
    %5873 = vmatpush1.bf16.msra.mxu0 %v5800
    %5874 = vmatprep.subr.bf16.mxu0 0
    %5875 = vmatpush1.bf16.msra.mxu0 %v5801
    %5876 = vmatprep.subr.bf16.mxu0 0
    %5877 = vmatpush1.bf16.msra.mxu0 %v5802
    %5878 = vmatprep.subr.bf16.mxu0 0
    %5879 = vmatpush1.bf16.msra.mxu0 %v5803
    %5880 = vmatprep.subr.bf16.mxu0 0
    %5881 = vmatpush1.bf16.msra.mxu0 %v5804
    %5882 = vmatprep.subr.bf16.mxu0 0
    %5883 = vmatpush1.bf16.msra.mxu0 %v5805
    %5884 = vmatprep.subr.bf16.mxu0 0
    %5885 = vmatpush1.bf16.msra.mxu0 %v5806
    %5886 = vmatprep.subr.bf16.mxu0 0
    %5887 = vmatpush1.bf16.msra.mxu0 %v5807
    %5888 = vmatprep.subr.bf16.mxu0 0
    %5889 = vmatpush1.bf16.msra.mxu0 0
    %5890 = vmatprep.subr.bf16.mxu0 0
    %5891 = vmatpush1.bf16.msra.mxu0 0
    %5892 = vmatprep.subr.bf16.mxu0 0
    %5893 = vmatpush1.bf16.msra.mxu0 0
    %5894 = vmatprep.subr.bf16.mxu0 0
    %5895 = vmatpush1.bf16.msra.mxu0 0
    %5896 = vmatprep.subr.bf16.mxu0 0
    %5897 = vmatpush1.bf16.msra.mxu0 0
    %5898 = vmatprep.subr.bf16.mxu0 0
    %5899 = vmatpush1.bf16.msra.mxu0 0
    %5900 = vmatprep.subr.bf16.mxu0 0
    %5901 = vmatpush1.bf16.msra.mxu0 0
    %5902 = vmatprep.subr.bf16.mxu0 0
    %5903 = vmatpush1.bf16.msra.mxu0 0
    %5904 = vmatprep.mubr.bf16.mxu0 0
    %5905 = vmatmul.mubr.bf16.gmra.mrb[0].mxu0 %v5634
    %v5906 = vpop.f32.mrb[0].mxu0
    %v5907 = vadd.f32 %v5867, %v5906
    %v5908 = vpop.f32.mrb[0].mxu0
    %v5909 = vpop.f32.mrb[0].mxu0
    %v5910 = vpop.f32.mrb[0].mxu0
    %5911 = vdwg.mxu0
    %vm5912 = vcmp.gt.f32.partialorder %v5907, 0.0
    %v5913 = vmul.f32 %v5907, 1.442695
    %v5914 = vpow.pop %v5913
    %v5915 = vsub.f32 %v5914, 1.0
    %v5916 = vsel %vm5912, %v5907, %v5915
    %v5917 = vld [vmem:[#allocation2 + $0xb80] sm:$0xf]
    %v5918 = vld [vmem:[#allocation2 + $0xb84] sm:$0xf]
    %v5919 = vld [vmem:[#allocation2 + $0xb88] sm:$0xf]
    %v5920 = vld [vmem:[#allocation2 + $0xb8c] sm:$0xf]
    %v5921 = vld [vmem:[#allocation2 + $0xb90] sm:$0xf]
    %v5922 = vld [vmem:[#allocation2 + $0xb94] sm:$0xf]
    %v5923 = vld [vmem:[#allocation2 + $0xb98] sm:$0xf]
    %v5924 = vld [vmem:[#allocation2 + $0xb9c] sm:$0xf]
    %v5925 = vld [vmem:[#allocation2 + $0xba0] sm:$0xf]
    %v5926 = vld [vmem:[#allocation2 + $0xba4] sm:$0xf]
    %v5927 = vld [vmem:[#allocation2 + $0xba8] sm:$0xf]
    %v5928 = vld [vmem:[#allocation2 + $0xbac] sm:$0xf]
    %v5929 = vld [vmem:[#allocation2 + $0xbb0] sm:$0xf]
    %v5930 = vld [vmem:[#allocation2 + $0xbb4] sm:$0xf]
    %v5931 = vld [vmem:[#allocation2 + $0xbb8] sm:$0xf]
    %v5932 = vld [vmem:[#allocation2 + $0xbbc] sm:$0xf]
    %v5933 = vld [vmem:[#allocation5 + $0x19] sm:$0x1]
    %v5934 = vpack.c.bf16 %v5916, %v5916
    %v5935 = vlaneseq
    %v5936 = vshrl.u32 %v5935, 7
    %v5937 = vsub.s32 0, %v5936
    %v5938 = vrot.slane %v5933, %v5937
    %v5955 = vunpack.c.l.b16 %v5917
    %v5956 = vunpack.c.l.b16 %v5918
    %v5957 = vunpack.c.l.b16 %v5919
    %v5958 = vunpack.c.l.b16 %v5920
    %v5959 = vunpack.c.l.b16 %v5921
    %v5960 = vunpack.c.l.b16 %v5922
    %v5961 = vunpack.c.l.b16 %v5923
    %v5962 = vunpack.c.l.b16 %v5924
    %v5963 = vunpack.c.l.b16 %v5925
    %v5964 = vunpack.c.l.b16 %v5926
    %v5965 = vunpack.c.l.b16 %v5927
    %v5966 = vunpack.c.l.b16 %v5928
    %v5967 = vunpack.c.l.b16 %v5929
    %v5968 = vunpack.c.l.b16 %v5930
    %v5969 = vunpack.c.l.b16 %v5931
    %v5970 = vunpack.c.l.b16 %v5932
    %v5971 = vpack.c.b16 %v5956, %v5955
    %v5972 = vpack.c.b16 %v5958, %v5957
    %v5973 = vpack.c.b16 %v5960, %v5959
    %v5974 = vpack.c.b16 %v5962, %v5961
    %v5975 = vpack.c.b16 %v5964, %v5963
    %v5976 = vpack.c.b16 %v5966, %v5965
    %v5977 = vpack.c.b16 %v5968, %v5967
    %v5978 = vpack.c.b16 %v5970, %v5969
    %5987 = vmatprep.subr.bf16.mxu0 0
    %5988 = vmatpush1.bf16.msra.mxu0 %v5971
    %5989 = vmatprep.subr.bf16.mxu0 0
    %5990 = vmatpush1.bf16.msra.mxu0 %v5972
    %5991 = vmatprep.subr.bf16.mxu0 0
    %5992 = vmatpush1.bf16.msra.mxu0 %v5973
    %5993 = vmatprep.subr.bf16.mxu0 0
    %5994 = vmatpush1.bf16.msra.mxu0 %v5974
    %5995 = vmatprep.subr.bf16.mxu0 0
    %5996 = vmatpush1.bf16.msra.mxu0 %v5975
    %5997 = vmatprep.subr.bf16.mxu0 0
    %5998 = vmatpush1.bf16.msra.mxu0 %v5976
    %5999 = vmatprep.subr.bf16.mxu0 0
    %6000 = vmatpush1.bf16.msra.mxu0 %v5977
    %6001 = vmatprep.subr.bf16.mxu0 0
    %6002 = vmatpush1.bf16.msra.mxu0 %v5978
    %6003 = vmatprep.subr.bf16.mxu0 0
    %6004 = vmatpush1.bf16.msra.mxu0 0
    %6005 = vmatprep.subr.bf16.mxu0 0
    %6006 = vmatpush1.bf16.msra.mxu0 0
    %6007 = vmatprep.subr.bf16.mxu0 0
    %6008 = vmatpush1.bf16.msra.mxu0 0
    %6009 = vmatprep.subr.bf16.mxu0 0
    %6010 = vmatpush1.bf16.msra.mxu0 0
    %6011 = vmatprep.subr.bf16.mxu0 0
    %6012 = vmatpush1.bf16.msra.mxu0 0
    %6013 = vmatprep.subr.bf16.mxu0 0
    %6014 = vmatpush1.bf16.msra.mxu0 0
    %6015 = vmatprep.subr.bf16.mxu0 0
    %6016 = vmatpush1.bf16.msra.mxu0 0
    %6017 = vmatprep.subr.bf16.mxu0 0
    %6018 = vmatpush1.bf16.msra.mxu0 0
    %6019 = vmatprep.mubr.bf16.mxu0 0
    %6020 = vmatmul.mubr.bf16.gmra.mrb[0].mxu0 %v5934
    %v6021 = vpop.f32.mrb[0].mxu0
    %v6022 = vadd.f32 %v5938, %v6021
    %v6023 = vpop.f32.mrb[0].mxu0
    %v6024 = vpop.f32.mrb[0].mxu0
    %v6025 = vpop.f32.mrb[0].mxu0
    %6026 = vdwg.mxu0
    %vm6027 = vcmp.gt.f32.partialorder %v6022, 0.0
    %v6028 = vmul.f32 %v6022, 1.442695
    %v6029 = vpow.pop %v6028
    %v6030 = vsub.f32 %v6029, 1.0
    %v6031 = vsel %vm6027, %v6022, %v6030
    %v6032 = vld [vmem:[#allocation2 + $0xbc0] sm:$0xf]
    %v6033 = vld [vmem:[#allocation2 + $0xbc4] sm:$0xf]
    %v6034 = vld [vmem:[#allocation2 + $0xbc8] sm:$0xf]
    %v6035 = vld [vmem:[#allocation2 + $0xbcc] sm:$0xf]
    %v6036 = vld [vmem:[#allocation2 + $0xbd0] sm:$0xf]
    %v6037 = vld [vmem:[#allocation2 + $0xbd4] sm:$0xf]
    %v6038 = vld [vmem:[#allocation2 + $0xbd8] sm:$0xf]
    %v6039 = vld [vmem:[#allocation2 + $0xbdc] sm:$0xf]
    %v6040 = vld [vmem:[#allocation2 + $0xbe0] sm:$0xf]
    %v6041 = vld [vmem:[#allocation2 + $0xbe4] sm:$0xf]
    %v6042 = vld [vmem:[#allocation2 + $0xbe8] sm:$0xf]
    %v6043 = vld [vmem:[#allocation2 + $0xbec] sm:$0xf]
    %v6044 = vld [vmem:[#allocation2 + $0xbf0] sm:$0xf]
    %v6045 = vld [vmem:[#allocation2 + $0xbf4] sm:$0xf]
    %v6046 = vld [vmem:[#allocation2 + $0xbf8] sm:$0xf]
    %v6047 = vld [vmem:[#allocation2 + $0xbfc] sm:$0xf]
    %v6048 = vld [vmem:[#allocation5 + $0x1a] sm:$0x1]
    %v6049 = vpack.c.bf16 %v6031, %v6031
    %v6050 = vlaneseq
    %v6051 = vshrl.u32 %v6050, 7
    %v6052 = vsub.s32 0, %v6051
    %v6053 = vrot.slane %v6048, %v6052
    %v6070 = vunpack.c.l.b16 %v6032
    %v6071 = vunpack.c.l.b16 %v6033
    %v6072 = vunpack.c.l.b16 %v6034
    %v6073 = vunpack.c.l.b16 %v6035
    %v6074 = vunpack.c.l.b16 %v6036
    %v6075 = vunpack.c.l.b16 %v6037
    %v6076 = vunpack.c.l.b16 %v6038
    %v6077 = vunpack.c.l.b16 %v6039
    %v6078 = vunpack.c.l.b16 %v6040
    %v6079 = vunpack.c.l.b16 %v6041
    %v6080 = vunpack.c.l.b16 %v6042
    %v6081 = vunpack.c.l.b16 %v6043
    %v6082 = vunpack.c.l.b16 %v6044
    %v6083 = vunpack.c.l.b16 %v6045
    %v6084 = vunpack.c.l.b16 %v6046
    %v6085 = vunpack.c.l.b16 %v6047
    %v6086 = vpack.c.b16 %v6071, %v6070
    %v6087 = vpack.c.b16 %v6073, %v6072
    %v6088 = vpack.c.b16 %v6075, %v6074
    %v6089 = vpack.c.b16 %v6077, %v6076
    %v6090 = vpack.c.b16 %v6079, %v6078
    %v6091 = vpack.c.b16 %v6081, %v6080
    %v6092 = vpack.c.b16 %v6083, %v6082
    %v6093 = vpack.c.b16 %v6085, %v6084
    %6102 = vmatprep.subr.bf16.mxu0 0
    %6103 = vmatpush1.bf16.msra.mxu0 %v6086
    %6104 = vmatprep.subr.bf16.mxu0 0
    %6105 = vmatpush1.bf16.msra.mxu0 %v6087
    %6106 = vmatprep.subr.bf16.mxu0 0
    %6107 = vmatpush1.bf16.msra.mxu0 %v6088
    %6108 = vmatprep.subr.bf16.mxu0 0
    %6109 = vmatpush1.bf16.msra.mxu0 %v6089
    %6110 = vmatprep.subr.bf16.mxu0 0
    %6111 = vmatpush1.bf16.msra.mxu0 %v6090
    %6112 = vmatprep.subr.bf16.mxu0 0
    %6113 = vmatpush1.bf16.msra.mxu0 %v6091
    %6114 = vmatprep.subr.bf16.mxu0 0
    %6115 = vmatpush1.bf16.msra.mxu0 %v6092
    %6116 = vmatprep.subr.bf16.mxu0 0
    %6117 = vmatpush1.bf16.msra.mxu0 %v6093
    %6118 = vmatprep.subr.bf16.mxu0 0
    %6119 = vmatpush1.bf16.msra.mxu0 0
    %6120 = vmatprep.subr.bf16.mxu0 0
    %6121 = vmatpush1.bf16.msra.mxu0 0
    %6122 = vmatprep.subr.bf16.mxu0 0
    %6123 = vmatpush1.bf16.msra.mxu0 0
    %6124 = vmatprep.subr.bf16.mxu0 0
    %6125 = vmatpush1.bf16.msra.mxu0 0
    %6126 = vmatprep.subr.bf16.mxu0 0
    %6127 = vmatpush1.bf16.msra.mxu0 0
    %6128 = vmatprep.subr.bf16.mxu0 0
    %6129 = vmatpush1.bf16.msra.mxu0 0
    %6130 = vmatprep.subr.bf16.mxu0 0
    %6131 = vmatpush1.bf16.msra.mxu0 0
    %6132 = vmatprep.subr.bf16.mxu0 0
    %6133 = vmatpush1.bf16.msra.mxu0 0
    %6134 = vmatprep.mubr.bf16.mxu0 0
    %6135 = vmatmul.mubr.bf16.gmra.mrb[0].mxu0 %v6049
    %v6136 = vpop.f32.mrb[0].mxu0
    %v6137 = vadd.f32 %v6053, %v6136
    %v6138 = vpop.f32.mrb[0].mxu0
    %v6139 = vpop.f32.mrb[0].mxu0
    %v6140 = vpop.f32.mrb[0].mxu0
    %6141 = vdwg.mxu0
    %v6142 = vld [vmem:[#allocation11] sm:$0xf]
    %v6143 = vld [vmem:[#allocation11 + $0x4] sm:$0xf]
    %v6144 = vld [vmem:[#allocation11 + $0x8] sm:$0xf]
    %v6148 = vunpack.c.l.b16 %v6142
    %v6149 = vunpack.c.l.b16 %v6143
    %v6150 = vunpack.c.l.b16 %v6144
    %v6151 = vpack.c.b16 %v6149, %v6148
    %v6152 = vpack.c.b16 %v6150, %v6150
    %v6154 = vsel %vm1015, %v6151, 0
    %v6157 = vsel %vm1015, %v6152, 0
    %6159 = vmatprep.subr.bf16.mxu0 0
    %6160 = vmatpush1.bf16.msra.mxu0 %v4993
    %6161 = vmatprep.subr.bf16.mxu0 0
    %6162 = vmatpush1.bf16.msra.mxu0 %v4996
    %6163 = vmatprep.subr.bf16.mxu0 0
    %6164 = vmatpush1.bf16.msra.mxu0 0
    %6165 = vmatprep.subr.bf16.mxu0 0
    %6166 = vmatpush1.bf16.msra.mxu0 0
    %6167 = vmatprep.subr.bf16.mxu0 0
    %6168 = vmatpush1.bf16.msra.mxu0 0
    %6169 = vmatprep.subr.bf16.mxu0 0
    %6170 = vmatpush1.bf16.msra.mxu0 0
    %6171 = vmatprep.subr.bf16.mxu0 0
    %6172 = vmatpush1.bf16.msra.mxu0 0
    %6173 = vmatprep.subr.bf16.mxu0 0
    %6174 = vmatpush1.bf16.msra.mxu0 0
    %6175 = vmatprep.subr.bf16.mxu0 0
    %6176 = vmatpush1.bf16.msra.mxu0 0
    %6177 = vmatprep.subr.bf16.mxu0 0
    %6178 = vmatpush1.bf16.msra.mxu0 0
    %6179 = vmatprep.subr.bf16.mxu0 0
    %6180 = vmatpush1.bf16.msra.mxu0 0
    %6181 = vmatprep.subr.bf16.mxu0 0
    %6182 = vmatpush1.bf16.msra.mxu0 0
    %6183 = vmatprep.subr.bf16.mxu0 0
    %6184 = vmatpush1.bf16.msra.mxu0 0
    %6185 = vmatprep.subr.bf16.mxu0 0
    %6186 = vmatpush1.bf16.msra.mxu0 0
    %6187 = vmatprep.subr.bf16.mxu0 0
    %6188 = vmatpush1.bf16.msra.mxu0 0
    %6189 = vmatprep.subr.bf16.mxu0 0
    %6190 = vmatpush1.bf16.msra.mxu0 0
    %6191 = vmatprep.mubr.bf16.mxu0 0
    %6192 = vmatmul.mubr.bf16.gmra.mrb[0].mxu0 %v6154
    %v6193 = vpop.f32.mrb[0].mxu0
    %v6194 = vadd.f32 0.0, %v6193
    %v6195 = vpop.f32.mrb[0].mxu0
    %v6196 = vpop.f32.mrb[0].mxu0
    %v6197 = vadd.f32 0.0, %v6196
    %v6198 = vpop.f32.mrb[0].mxu0
    %6199 = vmatprep.mubr.bf16.mxu0 0
    %6200 = vmatmul.mubr.bf16.gmra.mrb[0].mxu0 %v6157
    %v6201 = vpop.f32.mrb[0].mxu0
    %v6202 = vadd.f32 0.0, %v6201
    %v6203 = vpop.f32.mrb[0].mxu0
    %v6204 = vpop.f32.mrb[0].mxu0
    %v6205 = vpop.f32.mrb[0].mxu0
    %6206 = vdwg.mxu0
    %v6207 = vadd.f32 %v4980, %v6194
    %v6208 = vadd.f32 %v4983, %v6197
    %v6209 = vadd.f32 %v4988, %v6202
    %v6210 = vmul.f32 %v6207, 0.5
    %v6211 = vmul.f32 %v6208, 0.5
    %v6212 = vmul.f32 %v6209, 0.5
    %6213 = vst [vmem:[#allocation13] sm:$0xff] %v5542
    %6214 = vst [vmem:[%s16] sm:$0xff] %v6210
    %6215 = vst [vmem:[%s16 + $0x8] sm:$0xff] %v6211
    %6216 = vst [vmem:[%s16 + $0x10] sm:$0xff] %v6212
    %6217 = vst [vmem:[%s17] sm:$0x3] %v6137
    // Predicated region
    $region86: #{grafei_forward.1} parent=1 // pred_check
      _
    $region87: #{grafei_forward.1} parent=1 // pred_check_branch
      %6219 = sbr.rel (0) target = $region89
    $region88: #{grafei_forward.1} parent=1 // pred_region
      %s6221 = ssub.s32 128, 128
      %6222 = vsyncadd [#allocation4], %s6221
      %s6224 = sshll.u32 [#allocation13], 4
      %s6225 = int_to_ptr.vmem [resolvable:$true] %s6224
      %6227 = dma.vmem_to_hbm [thread:$0]  %s6225, 128, %s15, [#allocation4]
    $region89: #{grafei_forward.1} parent=1 // pred_fallthru
      _
    // Predicated region
    $region90: #{grafei_forward.1} parent=1 // pred_check
      _
    $region91: #{grafei_forward.1} parent=1 // pred_check_branch
      %6229 = sbr.rel (0) target = $region93
    $region92: #{grafei_forward.1} parent=1 // pred_region
      _
    $region93: #{grafei_forward.1} parent=1 // pred_fallthru
      _
    // Predicated region
    $region94: #{grafei_forward.1} parent=1 // pred_check
      _
    $region95: #{grafei_forward.1} parent=1 // pred_check_branch
      %6231 = sbr.rel (0) target = $region97
    $region96: #{grafei_forward.1} parent=1 // pred_region
      _
    $region97: #{grafei_forward.1} parent=1 // pred_fallthru
      _
    // Predicated region
    $region98: #{grafei_forward.1} parent=1 // pred_check
      _
    $region99: #{grafei_forward.1} parent=1 // pred_check_branch
      %6233 = sbr.rel (0) target = $region101
    $region100: #{grafei_forward.1} parent=1 // pred_region
      %6234 = dma.done [#allocation4], 128
    $region101: #{grafei_forward.1} parent=1 // pred_fallthru
      _
    // Predicated region
    $region102: #{grafei_forward.1} parent=1 // pred_check
      _
    $region103: #{grafei_forward.1} parent=1 // pred_check_branch
      %6236 = sbr.rel (0) target = $region105
    $region104: #{grafei_forward.1} parent=1 // pred_region
      _
    $region105: #{grafei_forward.1} parent=1 // pred_fallthru
      _
    // Predicated region
    $region106: #{grafei_forward.1} parent=1 // pred_check
      _
    $region107: #{grafei_forward.1} parent=1 // pred_check_branch
      %6238 = sbr.rel (0) target = $region109
    $region108: #{grafei_forward.1} parent=1 // pred_region
      _
    $region109: #{grafei_forward.1} parent=1 // pred_fallthru
      _
    %6239 = vsyncpa [#allocation3], 1
    %6240 = vsyncpa [#allocation6], 1
    %6241 = vsyncpa [#allocation9], 1
    %6242 = vsyncpa [#allocation12], 1
    %6243 = vsyncpa [#allocation4], 1

</llo_original>
